<compile_context>
chip_gen: v7x
topology: tpu7x:2x2x1
jax: 0.10.0
libtpu: 0.0.40
codegen_flags: <defaults>
</compile_context>

<pallas_src>
import functools
import math

import jax
import jax.numpy as jnp
from jax.experimental import pallas as pl
from jax.experimental.pallas import tpu as pltpu

DW_KERNEL = 31             # depthwise kernel size inside the residual conformer block
BN_EPS = 1e-5              # BatchNorm1d evaluated with batch statistics (fresh module = train mode)
MXU_DTYPE = jnp.bfloat16   # matmul operand dtype (f32 accumulation)
ACT_DTYPE = jnp.bfloat16   # inter-stage activation dtype (final output stays f32)

_CPARAMS = pltpu.CompilerParams(vmem_limit_bytes=48 * 1024 * 1024)


# ----------------------------------------------------------------------------
# in-kernel helpers (operate on 2D values + weight refs; all shapes static)
# ----------------------------------------------------------------------------
def _mm(a, w):
    """MXU matmul: rows of `a` are samples, `w` is a packed (Cin, Cout) matrix."""
    return jnp.dot(a.astype(MXU_DTYPE), w.astype(MXU_DTYPE),
                   preferred_element_type=jnp.float32)


def _swish(y):
    return y * jax.nn.sigmoid(y)


def _bn_list(ys, gamma, beta):
    """BatchNorm1d with batch statistics over a list of (M_i, C) activations."""
    n = float(sum(y.shape[0] for y in ys))
    mean = sum(y.sum(axis=0, keepdims=True) for y in ys) / n
    var = sum(jnp.square(y - mean).sum(axis=0, keepdims=True) for y in ys) / n
    inv = jax.lax.rsqrt(var + BN_EPS)
    return [(y - mean) * inv * gamma + beta for y in ys]


def _rcb_body(xs, L, dwpad_ref,
              wpc1, bpc1, gpc1, betapc1,
              wdw, bdw, gdw, betadw,
              wpc2, bpc2, gpc2, betapc2,
              wres, bres):
    """Residual conformer conv block; `xs` is a length-B list of (L, C) f32 activations."""
    B = len(xs)
    # pointwise conv -> BN -> GLU
    h1 = _bn_list([_mm(x, wpc1[...]) + bpc1[...] for x in xs], gpc1[...], betapc1[...])
    ch = h1[0].shape[-1] // 2
    g = [h[:, :ch] * jax.nn.sigmoid(h[:, ch:]) for h in h1]
    # depthwise 'same' conv: zero only the halo rows of the VMEM scratch, then a
    # fori_loop over taps (dynamic pl.ds read) with a carried accumulator.
    kdw = wdw.shape[0]
    pad = (kdw - 1) // 2
    padr = kdw - 1 - pad
    d = []
    for b in range(B):
        if pad:
            dwpad_ref[b, 0:pad, :] = jnp.zeros((pad, ch), jnp.float32)
        if padr:
            dwpad_ref[b, pad + L:pad + L + padr, :] = jnp.zeros((padr, ch), jnp.float32)
        dwpad_ref[b, pad:pad + L, :] = g[b]

        def tap(k, acc, _b=b):
            return acc + dwpad_ref[_b, pl.ds(k, L), :] * wdw[pl.ds(k, 1), :]

        acc = jax.lax.fori_loop(0, kdw, tap, jnp.zeros((L, ch), jnp.float32))
        d.append(acc + bdw[...])
    d = [_swish(v) for v in _bn_list(d, gdw[...], betadw[...])]
    # pointwise conv -> BN -> swish
    h2 = [_swish(v) for v in
          _bn_list([_mm(v, wpc2[...]) + bpc2[...] for v in d], gpc2[...], betapc2[...])]
    # pointwise residual path on the block input (fused residual add)
    return [h2[b] + _mm(xs[b], wres[...]) + bres[...] for b in range(B)]


# ----------------------------------------------------------------------------
# fused Pallas kernels (one per network stage)
# ----------------------------------------------------------------------------
def _in_conv_kernel(xpad_ref, w_ref, b_ref, g_ref, beta_ref, o_ref, *, B, T, K, cin):
    """Conv1d(k=K, 'same') + BatchNorm + ReLU, fused."""
    cout = o_ref.shape[-1]
    hs = []
    for b in range(B):
        if cin == 1:
            # rank-1 taps: VPU broadcast-MAC, no MXU / bf16 cast for a 3-wide contraction
            acc = jnp.zeros((T, cout), jnp.float32)
            for k in range(K):
                acc = acc + xpad_ref[b, k:k + T, :].astype(jnp.float32) * w_ref[k:k + 1, :]
        else:
            slab = jnp.concatenate([xpad_ref[b, k:k + T, :] for k in range(K)], axis=-1)
            acc = _mm(slab, w_ref[...])
        hs.append(acc + b_ref[...])
    hs = _bn_list(hs, g_ref[...], beta_ref[...])
    for b in range(B):
        o_ref[b] = jnp.maximum(hs[b], 0.0).astype(o_ref.dtype)


def _encoder_kernel(*refs, B, L, stride, kdown):
    """Strided down-conv (single wide dot) + BN + ReLU + full ResConBlock, fused."""
    phases = refs[:stride]                      # polyphase views of the input
    (wdn_p, bdn, gdn, betadn,
     wpc1, bpc1, gpc1, betapc1, wdw, bdw, gdw, betadw,
     wpc2, bpc2, gpc2, betapc2, wres, bres,
     o_ref, dwpad_ref) = refs[stride:]
    hs = []
    for b in range(B):
        slab = jnp.concatenate(
            [phases[k % stride][b, k // stride:k // stride + L, :] for k in range(kdown)],
            axis=-1)                             # (L, kdown*Cin)
        hs.append(_mm(slab, wdn_p[...]) + bdn[...])
    hs = [jnp.maximum(h, 0.0) for h in _bn_list(hs, gdn[...], betadn[...])]
    outs = _rcb_body(hs, L, dwpad_ref, wpc1, bpc1, gpc1, betapc1,
                     wdw, bdw, gdw, betadw, wpc2, bpc2, gpc2, betapc2, wres, bres)
    for b in range(B):
        o_ref[b] = outs[b].astype(o_ref.dtype)


def _decoder_kernel(x_ref, skip_ref,
                    wpc1, bpc1, gpc1, betapc1, wdw, bdw, gdw, betadw,
                    wpc2, bpc2, gpc2, betapc2, wres, bres,
                    wup_all, bup_t, gup_t, betaup_t,
                    o_ref, dwpad_ref, uppad_ref, *, B, Lin, stride, q_taps):
    """Skip-add + ResConBlock + all-phase ConvTranspose1d (one dot) + BN + ReLU, fused."""
    lp = Lin + q_taps - 1
    pc = wup_all.shape[-1]
    cout = pc // stride
    xs = [x_ref[b].astype(jnp.float32) + skip_ref[b].astype(jnp.float32) for b in range(B)]
    rcb = _rcb_body(xs, Lin, dwpad_ref, wpc1, bpc1, gpc1, betapc1,
                    wdw, bdw, gdw, betadw, wpc2, bpc2, gpc2, betapc2, wres, bres)
    cup = rcb[0].shape[-1]
    ys = []
    for b in range(B):
        if q_taps > 1:
            uppad_ref[b, 0:q_taps - 1, :] = jnp.zeros((q_taps - 1, cup), jnp.float32)
            uppad_ref[b, q_taps - 1 + Lin:2 * (q_taps - 1) + Lin, :] = \
                jnp.zeros((q_taps - 1, cup), jnp.float32)
        uppad_ref[b, q_taps - 1:q_taps - 1 + Lin, :] = rcb[b]
        if q_taps > 1:
            slab = jnp.concatenate(
                [uppad_ref[b, q_taps - 1 - q:q_taps - 1 - q + lp, :] for q in range(q_taps)],
                axis=-1)                         # (lp, q_taps*Cup)
        else:
            slab = uppad_ref[b, 0:lp, :]
        # one matmul computes every output phase; columns are phase-major
        ys.append(_mm(slab, wup_all[...]) + bup_t[...])
    # BatchNorm statistics per channel, combined across phases / batch / time, + ReLU
    n = float(B * lp * stride)
    colsum = sum(y.sum(axis=0, keepdims=True) for y in ys)
    mean_c = sum(colsum[:, p * cout:(p + 1) * cout] for p in range(stride)) / n
    mean_t = jnp.concatenate([mean_c] * stride, axis=-1)
    sqcol = sum(jnp.square(y - mean_t).sum(axis=0, keepdims=True) for y in ys)
    var_c = sum(sqcol[:, p * cout:(p + 1) * cout] for p in range(stride)) / n
    inv_t = jnp.concatenate([jax.lax.rsqrt(var_c + BN_EPS)] * stride, axis=-1)
    for b in range(B):
        yb = jnp.maximum((ys[b] - mean_t) * inv_t * gup_t[...] + betaup_t[...], 0.0)
        o_ref[b] = yb.astype(o_ref.dtype)


def _linear_relu_kernel(x_ref, w_ref, o_ref):
    """Linear(hdim, hdim, bias=False) + ReLU over the channel dim, fused."""
    for b in range(x_ref.shape[0]):
        o_ref[b] = jnp.maximum(_mm(x_ref[b], w_ref[...]), 0.0).astype(o_ref.dtype)


def _maskgate_outconv_kernel(x_ref, enc_ref, wt, bt, wg, bg, wm, bm, wo_p, bo,
                             o_ref, pad_ref, *, B, T, K):
    """MaskGate (tanh/sigmoid/relu 1x1 convs) + enc_out*mask + out_conv (one dot), fused."""
    pad = (K - 1) // 2
    padr = K - 1 - pad
    chid = pad_ref.shape[-1]
    for b in range(B):
        xb = x_ref[b]
        t = jnp.tanh(_mm(xb, wt[...]) + bt[...])
        g = jax.nn.sigmoid(_mm(xb, wg[...]) + bg[...])
        mask = jnp.maximum(_mm(t * g, wm[...]) + bm[...], 0.0)
        if pad:
            pad_ref[b, 0:pad, :] = jnp.zeros((pad, chid), jnp.float32)
        if padr:
            pad_ref[b, pad + T:pad + T + padr, :] = jnp.zeros((padr, chid), jnp.float32)
        pad_ref[b, pad:pad + T, :] = enc_ref[b].astype(jnp.float32) * mask   # enc_out * mask
    for b in range(B):
        slab = jnp.concatenate([pad_ref[b, k:k + T, :] for k in range(K)], axis=-1)
        # TODO(synk): for real T run this stage channels-on-sublanes so the
        # 1-channel store is lane-dense; at B*T=36 the masked store is negligible.
        o_ref[b] = (_mm(slab, wo_p[...]) + bo[...]).astype(o_ref.dtype)


# ----------------------------------------------------------------------------
# weight packing + stage wrappers (XLA glue only: pads, transposes, reshapes)
# ----------------------------------------------------------------------------
def _to_mxu(w):
    return w.astype(MXU_DTYPE)


def _w_packed(w):
    """Conv1d weight [Cout, Cin, K] -> packed [K*Cin, Cout] (tap-major rows)."""
    cout, cin, k = w.shape
    return _to_mxu(jnp.transpose(w, (2, 1, 0)).reshape(k * cin, cout))


def _w_packed_t_allphase(w, stride):
    """ConvTranspose1d weight [Cin, Cout, K] -> [q_taps*Cin, stride*Cout] (phase-major cols)."""
    cin, cout, k = w.shape
    q_taps = k // stride
    wt = jnp.transpose(w, (2, 0, 1)).reshape(q_taps, stride, cin, cout)   # [q, p, ci, co]
    wt = jnp.transpose(wt, (0, 2, 1, 3)).reshape(q_taps * cin, stride * cout)
    return _to_mxu(wt)


def _w_pw(w):        # 1x1 Conv1d weight [Cout, Cin, 1] -> [Cin, Cout]
    return _to_mxu(jnp.transpose(w[:, :, 0], (1, 0)))


def _row(v):         # [C] -> [1, C] f32 (biases / BN affine params stay f32)
    return v.reshape(1, -1).astype(jnp.float32)


def _rcb_inputs(p):
    return [
        _w_pw(p["pc1"]["w"]), _row(p["pc1"]["b"]), _row(p["pc1_bn"]["g"]), _row(p["pc1_bn"]["b"]),
        jnp.transpose(p["dw"]["w"][:, 0, :], (1, 0)).astype(jnp.float32), _row(p["dw"]["b"]),
        _row(p["dw_bn"]["g"]), _row(p["dw_bn"]["b"]),
        _w_pw(p["pc2"]["w"]), _row(p["pc2"]["b"]), _row(p["pc2_bn"]["g"]), _row(p["pc2_bn"]["b"]),
        _w_pw(p["res"]["w"]), _row(p["res"]["b"]),
    ]


def in_conv_fwd(x, p):
    """x: [B, T, Cin] -> [B, T, hidden] (bf16)."""
    B, T, cin = x.shape
    w = p["in_conv"]["w"]
    cout, _, K = w.shape
    xpad = jnp.pad(x, ((0, 0), ((K - 1) // 2, K - 1 - (K - 1) // 2), (0, 0)))
    if cin == 1:
        w_in = jnp.transpose(w[:, 0, :], (1, 0)).astype(jnp.float32)   # (K, cout) f32 VPU path
    else:
        w_in = _w_packed(w)
    return pl.pallas_call(
        functools.partial(_in_conv_kernel, B=B, T=T, K=K, cin=cin),
        out_shape=jax.ShapeDtypeStruct((B, T, cout), ACT_DTYPE),
        compiler_params=_CPARAMS,
    )(xpad, w_in, _row(p["in_conv"]["b"]), _row(p["in_bn"]["g"]), _row(p["in_bn"]["b"]))


def encoder_fwd(x, p, stride):
    """Fused encoder stage.  x: [B, Tin, C] -> [B, L, 2C] (bf16)."""
    B, Tin, Cin = x.shape
    kdown = p["down"]["w"].shape[-1]
    L = (Tin - kdown) // stride + 1
    # polyphase split of the time axis: lets the kernel read strided taps as
    # contiguous slices instead of materializing im2col in HBM.
    phase_len = L + (kdown - 1) // stride
    tneed = phase_len * stride
    xp = jnp.pad(x, ((0, 0), (0, tneed - Tin), (0, 0))) if tneed > Tin else x[:, :tneed, :]
    xph = xp.reshape(B, phase_len, stride, Cin)
    phase_inputs = [xph[:, :, s, :] for s in range(stride)]

    kdw = p["rcb"]["dw"]["w"].shape[-1]
    cdw = p["rcb"]["dw"]["w"].shape[0]
    cout = p["rcb"]["pc2"]["w"].shape[0]
    inputs = phase_inputs + [
        _w_packed(p["down"]["w"]), _row(p["down"]["b"]),
        _row(p["down_bn"]["g"]), _row(p["down_bn"]["b"]),
    ] + _rcb_inputs(p["rcb"])
    out = pl.pallas_call(
        functools.partial(_encoder_kernel, B=B, L=L, stride=stride, kdown=kdown),
        out_shape=jax.ShapeDtypeStruct((B, L, cout), ACT_DTYPE),
        scratch_shapes=[pltpu.VMEM((B, L + kdw - 1, cdw), jnp.float32)],
        compiler_params=_CPARAMS,
    )(*inputs)
    # TODO(synk): MultiviewAttentionBlock treated as identity (definition not provided).
    return out


def decoder_fwd(x, skip, p, stride):
    """Fused decoder stage.  x: [B, Lin, C] -> [B, (Lin-1)*stride + K, C/2] (bf16)."""
    B, Lin, _ = x.shape
    skip = skip[:, :Lin, :]
    w = p["up"]["w"]                              # (Cin_up, Cout_up, K)
    cin_up, cout_up, kup = w.shape
    assert kup % stride == 0, "polyphase ConvTranspose path assumes kernel_size % stride == 0"
    q_taps = kup // stride
    lp = Lin + q_taps - 1
    kdw = p["rcb"]["dw"]["w"].shape[-1]
    cdw = p["rcb"]["dw"]["w"].shape[0]
    inputs = [x, skip] + _rcb_inputs(p["rcb"]) + [
        _w_packed_t_allphase(w, stride), jnp.tile(_row(p["up"]["b"]), (1, stride)),
        jnp.tile(_row(p["up_bn"]["g"]), (1, stride)), jnp.tile(_row(p["up_bn"]["b"]), (1, stride)),
    ]
    slab = pl.pallas_call(
        functools.partial(_decoder_kernel, B=B, Lin=Lin, stride=stride, q_taps=q_taps),
        out_shape=jax.ShapeDtypeStruct((B, lp, stride * cout_up), ACT_DTYPE),
        scratch_shapes=[pltpu.VMEM((B, Lin + kdw - 1, cdw), jnp.float32),
                        pltpu.VMEM((B, Lin + 2 * (q_taps - 1), cin_up), jnp.float32)],
        compiler_params=_CPARAMS,
    )(*inputs)
    # phase interleave (time index = m*stride + phase): contiguous, free reshape
    y = slab.reshape(B, lp * stride, cout_up)
    # TODO(synk): MultiviewAttentionBlock treated as identity (definition not provided).
    return y


def linear_relu_fwd(x, w_t):
    B, T, _ = x.shape
    return pl.pallas_call(
        _linear_relu_kernel,
        out_shape=jax.ShapeDtypeStruct((B, T, w_t.shape[-1]), ACT_DTYPE),
        compiler_params=_CPARAMS,
    )(x, _to_mxu(w_t))


def maskgate_outconv_fwd(x, enc_out, params):
    B, T, C = x.shape
    w = params["out_conv"]["w"]
    cout, _, K = w.shape
    return pl.pallas_call(
        functools.partial(_maskgate_outconv_kernel, B=B, T=T, K=K),
        out_shape=jax.ShapeDtypeStruct((B, T, cout), jnp.float32),
        scratch_shapes=[pltpu.VMEM((B, T + K - 1, C), jnp.float32)],
        compiler_params=_CPARAMS,
    )(x, enc_out,
      _w_pw(params["mg_out"]["w"]), _row(params["mg_out"]["b"]),
      _w_pw(params["mg_gate"]["w"]), _row(params["mg_gate"]["b"]),
      _w_pw(params["mg_mask"]["w"]), _row(params["mg_mask"]["b"]),
      _w_packed(w), _row(params["out_conv"]["b"]))


def manner_block_fwd(params, x_nct, cfg):
    """input x: [B, 1, T] -> output: [B, 1, T]."""
    x = jnp.transpose(x_nct, (0, 2, 1))           # NCT -> NTC (size-1 dim: metadata only)
    x = in_conv_fwd(x, params)
    enc_out = x
    skips = []
    for p in params["encoders"]:
        x = encoder_fwd(x, p, cfg["stride"])
        skips.append(x)
    x = linear_relu_fwd(x, params["linear_w_t"])  # Linear over channels + ReLU
    for p in params["decoders"]:
        skip = skips.pop(-1)
        x = decoder_fwd(x, skip, p, cfg["stride"])
    y = maskgate_outconv_fwd(x, enc_out, params)
    return jnp.transpose(y, (0, 2, 1))            # NTC -> NCT (size-1 dim: metadata only)


# ----------------------------------------------------------------------------
# deterministic parameter initialization (synthetic; mirrors the module shapes)
# ----------------------------------------------------------------------------
class _KeyGen:
    def __init__(self, seed):
        self._key = jax.random.PRNGKey(seed)

    def __call__(self):
        self._key, sub = jax.random.split(self._key)
        return sub


def _uniform(kg, shape, fan_in):
    bound = 1.0 / math.sqrt(max(fan_in, 1))
    return jax.random.uniform(kg(), shape, minval=-bound, maxval=bound, dtype=jnp.float32)


def _conv_param(kg, cout, cin, k):
    return {"w": _uniform(kg, (cout, cin, k), cin * k), "b": _uniform(kg, (cout,), cin * k)}


def _dw_param(kg, c, k):
    return {"w": _uniform(kg, (c, 1, k), k), "b": _uniform(kg, (c,), k)}


def _convT_param(kg, cin, cout, k):
    return {"w": _uniform(kg, (cin, cout, k), cin * k), "b": _uniform(kg, (cout,), cin * k)}


def _bn_param(c):
    return {"g": jnp.ones((c,), jnp.float32), "b": jnp.zeros((c,), jnp.float32)}


def _rcb_params(kg, c, g1, g2):
    c1, c2 = int(c * g1), int(c * g2)
    return {
        "pc1": _conv_param(kg, c1, c, 1), "pc1_bn": _bn_param(c1),
        "dw": _dw_param(kg, c, DW_KERNEL), "dw_bn": _bn_param(c),
        "pc2": _conv_param(kg, c2, c, 1), "pc2_bn": _bn_param(c2),
        "res": _conv_param(kg, c2, c, 1),
    }


def make_params(kg, cfg):
    hidden, depth, K, growth = cfg["hidden"], cfg["depth"], cfg["kernel_size"], cfg["growth"]
    p = {
        "in_conv": _conv_param(kg, hidden, cfg["in_channels"], 3),
        "in_bn": _bn_param(hidden),
        "out_conv": _conv_param(kg, cfg["in_channels"], hidden, 3),
    }
    in_ch = cfg["in_channels"] * hidden
    out_ch = cfg["out_channels"] * growth
    encoders, decoders = [], []
    for layer in range(depth):
        enc_in = in_ch
        dec_in, dec_out = out_ch * hidden, in_ch
        encoders.append({
            "down": _conv_param(kg, enc_in, enc_in, K),
            "down_bn": _bn_param(enc_in),
            "rcb": _rcb_params(kg, enc_in, 2.0, 2.0),
        })
        decoders.append({
            "rcb": _rcb_params(kg, dec_in, 2.0, 0.5),
            "up": _convT_param(kg, dec_out, dec_out, K),
            "up_bn": _bn_param(dec_out),
        })
        in_ch = hidden * 2 ** (layer + 1)
        out_ch *= growth
    decoders.reverse()
    p["encoders"] = encoders
    p["decoders"] = decoders
    hdim = hidden * growth ** depth
    p["linear_w_t"] = _uniform(kg, (hdim, hdim), hdim)  # Linear(hdim, hdim, bias=False), [in, out]
    p["mg_out"] = _conv_param(kg, hidden, hidden, 1)
    p["mg_gate"] = _conv_param(kg, hidden, hidden, 1)
    p["mg_mask"] = _conv_param(kg, hidden, hidden, 1)
    return p


# ----------------------------------------------------------------------------
if __name__ == "__main__":
    cfg = dict(in_channels=1, out_channels=1, hidden=8, depth=2,
               kernel_size=4, stride=2, growth=2, head=2, segment_len=8)
    B, T = 2, 18  # T is a "valid length" so down/up conv lengths round-trip exactly

    kg = _KeyGen(0)
    params = make_params(kg, cfg)

    x = jax.random.normal(jax.random.PRNGKey(0), (B, cfg["in_channels"], T), dtype=jnp.float32)
    fwd = jax.jit(functools.partial(manner_block_fwd, cfg=cfg))
    y = jax.block_until_ready(fwd(params, x))

    assert y.shape == (B, cfg["in_channels"], T), y.shape
    assert bool(jnp.all(jnp.isfinite(y)))
    print("KERNEL_OK")
</pallas_src>

<mosaic_0001>
module attributes {stable_mosaic.version = 11 : i64} {
  func.func @_in_conv_kernel(%arg0: memref<2x20x1xf32, #tpu.memory_space<vmem>>, %arg1: memref<3x8xf32, #tpu.memory_space<vmem>>, %arg2: memref<1x8xf32, #tpu.memory_space<vmem>>, %arg3: memref<1x8xf32, #tpu.memory_space<vmem>>, %arg4: memref<1x8xf32, #tpu.memory_space<vmem>>, %arg5: memref<2x18x8xbf16, #tpu.memory_space<vmem>>) attributes {dimension_semantics = [], scalar_prefetch = 0 : i64, scratch_operands = 0 : i64, tpu.core_type = #tpu.core_type<tc>} {
    %cst = arith.constant 0.000000e+00 : f32
    %0 = vector.broadcast %cst : f32 to vector<18x8xf32>
    %c0 = arith.constant 0 : index
    %c0_0 = arith.constant 0 : index
    %c0_1 = arith.constant 0 : index
    %1 = vector.load %arg0[%c0, %c0_0, %c0_1] : memref<2x20x1xf32, #tpu.memory_space<vmem>>, vector<1x18x1xf32>
    %2 = vector.shape_cast %1 : vector<1x18x1xf32> to vector<18x1xf32>
    %c0_2 = arith.constant 0 : index
    %c0_3 = arith.constant 0 : index
    %3 = vector.load %arg1[%c0_2, %c0_3] : memref<3x8xf32, #tpu.memory_space<vmem>>, vector<1x8xf32>
    %4 = vector.broadcast %2 : vector<18x1xf32> to vector<18x8xf32>
    %5 = vector.broadcast %3 : vector<1x8xf32> to vector<18x8xf32>
    %6 = arith.mulf %4, %5 : vector<18x8xf32>
    %7 = arith.addf %0, %6 : vector<18x8xf32>
    %c0_4 = arith.constant 0 : index
    %c1 = arith.constant 1 : index
    %c0_5 = arith.constant 0 : index
    %8 = vector.load %arg0[%c0_4, %c1, %c0_5] : memref<2x20x1xf32, #tpu.memory_space<vmem>>, vector<1x18x1xf32>
    %9 = vector.shape_cast %8 : vector<1x18x1xf32> to vector<18x1xf32>
    %c1_6 = arith.constant 1 : index
    %c0_7 = arith.constant 0 : index
    %10 = vector.load %arg1[%c1_6, %c0_7] : memref<3x8xf32, #tpu.memory_space<vmem>>, vector<1x8xf32>
    %11 = vector.broadcast %9 : vector<18x1xf32> to vector<18x8xf32>
    %12 = vector.broadcast %10 : vector<1x8xf32> to vector<18x8xf32>
    %13 = arith.mulf %11, %12 : vector<18x8xf32>
    %14 = arith.addf %7, %13 : vector<18x8xf32>
    %c0_8 = arith.constant 0 : index
    %c2 = arith.constant 2 : index
    %c0_9 = arith.constant 0 : index
    %15 = vector.load %arg0[%c0_8, %c2, %c0_9] : memref<2x20x1xf32, #tpu.memory_space<vmem>>, vector<1x18x1xf32>
    %16 = vector.shape_cast %15 : vector<1x18x1xf32> to vector<18x1xf32>
    %c2_10 = arith.constant 2 : index
    %c0_11 = arith.constant 0 : index
    %17 = vector.load %arg1[%c2_10, %c0_11] : memref<3x8xf32, #tpu.memory_space<vmem>>, vector<1x8xf32>
    %18 = vector.broadcast %16 : vector<18x1xf32> to vector<18x8xf32>
    %19 = vector.broadcast %17 : vector<1x8xf32> to vector<18x8xf32>
    %20 = arith.mulf %18, %19 : vector<18x8xf32>
    %21 = arith.addf %14, %20 : vector<18x8xf32>
    %c0_12 = arith.constant 0 : index
    %c0_13 = arith.constant 0 : index
    %22 = vector.load %arg2[%c0_12, %c0_13] : memref<1x8xf32, #tpu.memory_space<vmem>>, vector<1x8xf32>
    %23 = vector.broadcast %22 : vector<1x8xf32> to vector<18x8xf32>
    %24 = arith.addf %21, %23 : vector<18x8xf32>
    %cst_14 = arith.constant 0.000000e+00 : f32
    %25 = vector.broadcast %cst_14 : f32 to vector<18x8xf32>
    %c1_15 = arith.constant 1 : index
    %c0_16 = arith.constant 0 : index
    %c0_17 = arith.constant 0 : index
    %26 = vector.load %arg0[%c1_15, %c0_16, %c0_17] : memref<2x20x1xf32, #tpu.memory_space<vmem>>, vector<1x18x1xf32>
    %27 = vector.shape_cast %26 : vector<1x18x1xf32> to vector<18x1xf32>
    %c0_18 = arith.constant 0 : index
    %c0_19 = arith.constant 0 : index
    %28 = vector.load %arg1[%c0_18, %c0_19] : memref<3x8xf32, #tpu.memory_space<vmem>>, vector<1x8xf32>
    %29 = vector.broadcast %27 : vector<18x1xf32> to vector<18x8xf32>
    %30 = vector.broadcast %28 : vector<1x8xf32> to vector<18x8xf32>
    %31 = arith.mulf %29, %30 : vector<18x8xf32>
    %32 = arith.addf %25, %31 : vector<18x8xf32>
    %c1_20 = arith.constant 1 : index
    %c1_21 = arith.constant 1 : index
    %c0_22 = arith.constant 0 : index
    %33 = vector.load %arg0[%c1_20, %c1_21, %c0_22] : memref<2x20x1xf32, #tpu.memory_space<vmem>>, vector<1x18x1xf32>
    %34 = vector.shape_cast %33 : vector<1x18x1xf32> to vector<18x1xf32>
    %c1_23 = arith.constant 1 : index
    %c0_24 = arith.constant 0 : index
    %35 = vector.load %arg1[%c1_23, %c0_24] : memref<3x8xf32, #tpu.memory_space<vmem>>, vector<1x8xf32>
    %36 = vector.broadcast %34 : vector<18x1xf32> to vector<18x8xf32>
    %37 = vector.broadcast %35 : vector<1x8xf32> to vector<18x8xf32>
    %38 = arith.mulf %36, %37 : vector<18x8xf32>
    %39 = arith.addf %32, %38 : vector<18x8xf32>
    %c1_25 = arith.constant 1 : index
    %c2_26 = arith.constant 2 : index
    %c0_27 = arith.constant 0 : index
    %40 = vector.load %arg0[%c1_25, %c2_26, %c0_27] : memref<2x20x1xf32, #tpu.memory_space<vmem>>, vector<1x18x1xf32>
    %41 = vector.shape_cast %40 : vector<1x18x1xf32> to vector<18x1xf32>
    %c2_28 = arith.constant 2 : index
    %c0_29 = arith.constant 0 : index
    %42 = vector.load %arg1[%c2_28, %c0_29] : memref<3x8xf32, #tpu.memory_space<vmem>>, vector<1x8xf32>
    %43 = vector.broadcast %41 : vector<18x1xf32> to vector<18x8xf32>
    %44 = vector.broadcast %42 : vector<1x8xf32> to vector<18x8xf32>
    %45 = arith.mulf %43, %44 : vector<18x8xf32>
    %46 = arith.addf %39, %45 : vector<18x8xf32>
    %c0_30 = arith.constant 0 : index
    %c0_31 = arith.constant 0 : index
    %47 = vector.load %arg2[%c0_30, %c0_31] : memref<1x8xf32, #tpu.memory_space<vmem>>, vector<1x8xf32>
    %48 = vector.broadcast %47 : vector<1x8xf32> to vector<18x8xf32>
    %49 = arith.addf %46, %48 : vector<18x8xf32>
    %c0_32 = arith.constant 0 : index
    %c0_33 = arith.constant 0 : index
    %50 = vector.load %arg3[%c0_32, %c0_33] : memref<1x8xf32, #tpu.memory_space<vmem>>, vector<1x8xf32>
    %c0_34 = arith.constant 0 : index
    %c0_35 = arith.constant 0 : index
    %51 = vector.load %arg4[%c0_34, %c0_35] : memref<1x8xf32, #tpu.memory_space<vmem>>, vector<1x8xf32>
    %cst_36 = arith.constant dense<0.000000e+00> : vector<8xf32>
    %52 = vector.multi_reduction <add>, %24, %cst_36 [0] : vector<18x8xf32> to vector<8xf32>
    %53 = vector.shape_cast %52 : vector<8xf32> to vector<1x8xf32>
    %cst_37 = arith.constant 0.000000e+00 : f32
    %54 = vector.broadcast %cst_37 : f32 to vector<1x8xf32>
    %55 = arith.addf %54, %53 : vector<1x8xf32>
    %cst_38 = arith.constant dense<0.000000e+00> : vector<8xf32>
    %56 = vector.multi_reduction <add>, %49, %cst_38 [0] : vector<18x8xf32> to vector<8xf32>
    %57 = vector.shape_cast %56 : vector<8xf32> to vector<1x8xf32>
    %58 = arith.addf %55, %57 : vector<1x8xf32>
    %cst_39 = arith.constant 3.600000e+01 : f32
    %59 = vector.broadcast %cst_39 : f32 to vector<1x8xf32>
    %60 = arith.divf %58, %59 : vector<1x8xf32>
    %61 = vector.broadcast %60 : vector<1x8xf32> to vector<18x8xf32>
    %62 = arith.subf %24, %61 : vector<18x8xf32>
    %63 = arith.mulf %62, %62 : vector<18x8xf32>
    %cst_40 = arith.constant dense<0.000000e+00> : vector<8xf32>
    %64 = vector.multi_reduction <add>, %63, %cst_40 [0] : vector<18x8xf32> to vector<8xf32>
    %65 = vector.shape_cast %64 : vector<8xf32> to vector<1x8xf32>
    %cst_41 = arith.constant 0.000000e+00 : f32
    %66 = vector.broadcast %cst_41 : f32 to vector<1x8xf32>
    %67 = arith.addf %66, %65 : vector<1x8xf32>
    %68 = vector.broadcast %60 : vector<1x8xf32> to vector<18x8xf32>
    %69 = arith.subf %49, %68 : vector<18x8xf32>
    %70 = arith.mulf %69, %69 : vector<18x8xf32>
    %cst_42 = arith.constant dense<0.000000e+00> : vector<8xf32>
    %71 = vector.multi_reduction <add>, %70, %cst_42 [0] : vector<18x8xf32> to vector<8xf32>
    %72 = vector.shape_cast %71 : vector<8xf32> to vector<1x8xf32>
    %73 = arith.addf %67, %72 : vector<1x8xf32>
    %cst_43 = arith.constant 3.600000e+01 : f32
    %74 = vector.broadcast %cst_43 : f32 to vector<1x8xf32>
    %75 = arith.divf %73, %74 : vector<1x8xf32>
    %cst_44 = arith.constant 9.99999974E-6 : f32
    %76 = vector.broadcast %cst_44 : f32 to vector<1x8xf32>
    %77 = arith.addf %75, %76 : vector<1x8xf32>
    %78 = math.rsqrt %77 : vector<1x8xf32>
    %79 = vector.broadcast %60 : vector<1x8xf32> to vector<18x8xf32>
    %80 = arith.subf %24, %79 : vector<18x8xf32>
    %81 = vector.broadcast %78 : vector<1x8xf32> to vector<18x8xf32>
    %82 = arith.mulf %80, %81 : vector<18x8xf32>
    %83 = vector.broadcast %50 : vector<1x8xf32> to vector<18x8xf32>
    %84 = arith.mulf %82, %83 : vector<18x8xf32>
    %85 = vector.broadcast %51 : vector<1x8xf32> to vector<18x8xf32>
    %86 = arith.addf %84, %85 : vector<18x8xf32>
    %87 = vector.broadcast %60 : vector<1x8xf32> to vector<18x8xf32>
    %88 = arith.subf %49, %87 : vector<18x8xf32>
    %89 = vector.broadcast %78 : vector<1x8xf32> to vector<18x8xf32>
    %90 = arith.mulf %88, %89 : vector<18x8xf32>
    %91 = vector.broadcast %50 : vector<1x8xf32> to vector<18x8xf32>
    %92 = arith.mulf %90, %91 : vector<18x8xf32>
    %93 = vector.broadcast %51 : vector<1x8xf32> to vector<18x8xf32>
    %94 = arith.addf %92, %93 : vector<18x8xf32>
    %cst_45 = arith.constant 0.000000e+00 : f32
    %95 = vector.broadcast %cst_45 : f32 to vector<18x8xf32>
    %96 = arith.maximumf %86, %95 : vector<18x8xf32>
    %97 = arith.truncf %96 : vector<18x8xf32> to vector<18x8xbf16>
    %c0_46 = arith.constant 0 : index
    %c0_47 = arith.constant 0 : index
    %c0_48 = arith.constant 0 : index
    %98 = vector.load %arg5[%c0_46, %c0_47, %c0_48] : memref<2x18x8xbf16, #tpu.memory_space<vmem>>, vector<1x18x8xbf16>
    %99 = vector.shape_cast %98 : vector<1x18x8xbf16> to vector<18x8xbf16>
    %100 = vector.shape_cast %97 : vector<18x8xbf16> to vector<1x18x8xbf16>
    tpu.vector_store %arg5[%c0_46, %c0_47, %c0_48], %100 {strides = array<i32>} : memref<2x18x8xbf16, #tpu.memory_space<vmem>>, vector<1x18x8xbf16>,
    %cst_49 = arith.constant 0.000000e+00 : f32
    %101 = vector.broadcast %cst_49 : f32 to vector<18x8xf32>
    %102 = arith.maximumf %94, %101 : vector<18x8xf32>
    %103 = arith.truncf %102 : vector<18x8xf32> to vector<18x8xbf16>
    %c1_50 = arith.constant 1 : index
    %c0_51 = arith.constant 0 : index
    %c0_52 = arith.constant 0 : index
    %104 = vector.load %arg5[%c1_50, %c0_51, %c0_52] : memref<2x18x8xbf16, #tpu.memory_space<vmem>>, vector<1x18x8xbf16>
    %105 = vector.shape_cast %104 : vector<1x18x8xbf16> to vector<18x8xbf16>
    %106 = vector.shape_cast %103 : vector<18x8xbf16> to vector<1x18x8xbf16>
    tpu.vector_store %arg5[%c1_50, %c0_51, %c0_52], %106 {strides = array<i32>} : memref<2x18x8xbf16, #tpu.memory_space<vmem>>, vector<1x18x8xbf16>,
    return
  }
}

module attributes {stable_mosaic.version = 11 : i64} {
  func.func @_encoder_kernel(%arg0: memref<2x9x8xbf16, #tpu.memory_space<vmem>>, %arg1: memref<2x9x8xbf16, #tpu.memory_space<vmem>>, %arg2: memref<32x8xbf16, #tpu.memory_space<vmem>>, %arg3: memref<1x8xf32, #tpu.memory_space<vmem>>, %arg4: memref<1x8xf32, #tpu.memory_space<vmem>>, %arg5: memref<1x8xf32, #tpu.memory_space<vmem>>, %arg6: memref<8x16xbf16, #tpu.memory_space<vmem>>, %arg7: memref<1x16xf32, #tpu.memory_space<vmem>>, %arg8: memref<1x16xf32, #tpu.memory_space<vmem>>, %arg9: memref<1x16xf32, #tpu.memory_space<vmem>>, %arg10: memref<31x8xf32, #tpu.memory_space<vmem>>, %arg11: memref<1x8xf32, #tpu.memory_space<vmem>>, %arg12: memref<1x8xf32, #tpu.memory_space<vmem>>, %arg13: memref<1x8xf32, #tpu.memory_space<vmem>>, %arg14: memref<8x16xbf16, #tpu.memory_space<vmem>>, %arg15: memref<1x16xf32, #tpu.memory_space<vmem>>, %arg16: memref<1x16xf32, #tpu.memory_space<vmem>>, %arg17: memref<1x16xf32, #tpu.memory_space<vmem>>, %arg18: memref<8x16xbf16, #tpu.memory_space<vmem>>, %arg19: memref<1x16xf32, #tpu.memory_space<vmem>>, %arg20: memref<2x8x16xbf16, #tpu.memory_space<vmem>>, %arg21: memref<2x38x8xf32, #tpu.memory_space<vmem>>) attributes {dimension_semantics = [], scalar_prefetch = 0 : i64, scratch_operands = 1 : i64, tpu.core_type = #tpu.core_type<tc>} {
    %c0 = arith.constant 0 : index
    %c0_0 = arith.constant 0 : index
    %c0_1 = arith.constant 0 : index
    %0 = vector.load %arg0[%c0, %c0_0, %c0_1] : memref<2x9x8xbf16, #tpu.memory_space<vmem>>, vector<1x8x8xbf16>
    %1 = vector.shape_cast %0 : vector<1x8x8xbf16> to vector<8x8xbf16>
    %c0_2 = arith.constant 0 : index
    %c0_3 = arith.constant 0 : index
    %c0_4 = arith.constant 0 : index
    %2 = vector.load %arg1[%c0_2, %c0_3, %c0_4] : memref<2x9x8xbf16, #tpu.memory_space<vmem>>, vector<1x8x8xbf16>
    %3 = vector.shape_cast %2 : vector<1x8x8xbf16> to vector<8x8xbf16>
    %c0_5 = arith.constant 0 : index
    %c1 = arith.constant 1 : index
    %c0_6 = arith.constant 0 : index
    %4 = vector.load %arg0[%c0_5, %c1, %c0_6] : memref<2x9x8xbf16, #tpu.memory_space<vmem>>, vector<1x8x8xbf16>
    %5 = vector.shape_cast %4 : vector<1x8x8xbf16> to vector<8x8xbf16>
    %c0_7 = arith.constant 0 : index
    %c1_8 = arith.constant 1 : index
    %c0_9 = arith.constant 0 : index
    %6 = vector.load %arg1[%c0_7, %c1_8, %c0_9] : memref<2x9x8xbf16, #tpu.memory_space<vmem>>, vector<1x8x8xbf16>
    %7 = vector.shape_cast %6 : vector<1x8x8xbf16> to vector<8x8xbf16>
    %8 = tpu.concatenate %1, %3, %5, %7 in 1 : vector<8x8xbf16>, vector<8x8xbf16>, vector<8x8xbf16>, vector<8x8xbf16> -> vector<8x32xbf16>
    %c0_10 = arith.constant 0 : index
    %c0_11 = arith.constant 0 : index
    %9 = vector.load %arg2[%c0_10, %c0_11] : memref<32x8xbf16, #tpu.memory_space<vmem>>, vector<32x8xbf16>
    %cst = arith.constant dense<0.000000e+00> : vector<8x8xf32>
    %10 = tpu.matmul %8, %9, %cst {dimension_numbers = #tpu.dot_dimension_numbers<[1], [0], [0], [1], [0, 0, 1, 1], [], []>} : vector<8x32xbf16>, vector<32x8xbf16>, vector<8x8xf32> -> vector<8x8xf32>
    %c0_12 = arith.constant 0 : index
    %c0_13 = arith.constant 0 : index
    %11 = vector.load %arg3[%c0_12, %c0_13] : memref<1x8xf32, #tpu.memory_space<vmem>>, vector<1x8xf32>
    %12 = vector.broadcast %11 : vector<1x8xf32> to vector<8x8xf32>
    %13 = arith.addf %10, %12 : vector<8x8xf32>
    %c1_14 = arith.constant 1 : index
    %c0_15 = arith.constant 0 : index
    %c0_16 = arith.constant 0 : index
    %14 = vector.load %arg0[%c1_14, %c0_15, %c0_16] : memref<2x9x8xbf16, #tpu.memory_space<vmem>>, vector<1x8x8xbf16>
    %15 = vector.shape_cast %14 : vector<1x8x8xbf16> to vector<8x8xbf16>
    %c1_17 = arith.constant 1 : index
    %c0_18 = arith.constant 0 : index
    %c0_19 = arith.constant 0 : index
    %16 = vector.load %arg1[%c1_17, %c0_18, %c0_19] : memref<2x9x8xbf16, #tpu.memory_space<vmem>>, vector<1x8x8xbf16>
    %17 = vector.shape_cast %16 : vector<1x8x8xbf16> to vector<8x8xbf16>
    %c1_20 = arith.constant 1 : index
    %c1_21 = arith.constant 1 : index
    %c0_22 = arith.constant 0 : index
    %18 = vector.load %arg0[%c1_20, %c1_21, %c0_22] : memref<2x9x8xbf16, #tpu.memory_space<vmem>>, vector<1x8x8xbf16>
    %19 = vector.shape_cast %18 : vector<1x8x8xbf16> to vector<8x8xbf16>
    %c1_23 = arith.constant 1 : index
    %c1_24 = arith.constant 1 : index
    %c0_25 = arith.constant 0 : index
    %20 = vector.load %arg1[%c1_23, %c1_24, %c0_25] : memref<2x9x8xbf16, #tpu.memory_space<vmem>>, vector<1x8x8xbf16>
    %21 = vector.shape_cast %20 : vector<1x8x8xbf16> to vector<8x8xbf16>
    %22 = tpu.concatenate %15, %17, %19, %21 in 1 : vector<8x8xbf16>, vector<8x8xbf16>, vector<8x8xbf16>, vector<8x8xbf16> -> vector<8x32xbf16>
    %c0_26 = arith.constant 0 : index
    %c0_27 = arith.constant 0 : index
    %23 = vector.load %arg2[%c0_26, %c0_27] : memref<32x8xbf16, #tpu.memory_space<vmem>>, vector<32x8xbf16>
    %cst_28 = arith.constant dense<0.000000e+00> : vector<8x8xf32>
    %24 = tpu.matmul %22, %23, %cst_28 {dimension_numbers = #tpu.dot_dimension_numbers<[1], [0], [0], [1], [0, 0, 1, 1], [], []>} : vector<8x32xbf16>, vector<32x8xbf16>, vector<8x8xf32> -> vector<8x8xf32>
    %c0_29 = arith.constant 0 : index
    %c0_30 = arith.constant 0 : index
    %25 = vector.load %arg3[%c0_29, %c0_30] : memref<1x8xf32, #tpu.memory_space<vmem>>, vector<1x8xf32>
    %26 = vector.broadcast %25 : vector<1x8xf32> to vector<8x8xf32>
    %27 = arith.addf %24, %26 : vector<8x8xf32>
    %c0_31 = arith.constant 0 : index
    %c0_32 = arith.constant 0 : index
    %28 = vector.load %arg4[%c0_31, %c0_32] : memref<1x8xf32, #tpu.memory_space<vmem>>, vector<1x8xf32>
    %c0_33 = arith.constant 0 : index
    %c0_34 = arith.constant 0 : index
    %29 = vector.load %arg5[%c0_33, %c0_34] : memref<1x8xf32, #tpu.memory_space<vmem>>, vector<1x8xf32>
    %cst_35 = arith.constant dense<0.000000e+00> : vector<8xf32>
    %30 = vector.multi_reduction <add>, %13, %cst_35 [0] : vector<8x8xf32> to vector<8xf32>
    %31 = vector.shape_cast %30 : vector<8xf32> to vector<1x8xf32>
    %cst_36 = arith.constant 0.000000e+00 : f32
    %32 = vector.broadcast %cst_36 : f32 to vector<1x8xf32>
    %33 = arith.addf %32, %31 : vector<1x8xf32>
    %cst_37 = arith.constant dense<0.000000e+00> : vector<8xf32>
    %34 = vector.multi_reduction <add>, %27, %cst_37 [0] : vector<8x8xf32> to vector<8xf32>
    %35 = vector.shape_cast %34 : vector<8xf32> to vector<1x8xf32>
    %36 = arith.addf %33, %35 : vector<1x8xf32>
    %cst_38 = arith.constant 1.600000e+01 : f32
    %37 = vector.broadcast %cst_38 : f32 to vector<1x8xf32>
    %38 = arith.divf %36, %37 : vector<1x8xf32>
    %39 = vector.broadcast %38 : vector<1x8xf32> to vector<8x8xf32>
    %40 = arith.subf %13, %39 : vector<8x8xf32>
    %41 = arith.mulf %40, %40 : vector<8x8xf32>
    %cst_39 = arith.constant dense<0.000000e+00> : vector<8xf32>
    %42 = vector.multi_reduction <add>, %41, %cst_39 [0] : vector<8x8xf32> to vector<8xf32>
    %43 = vector.shape_cast %42 : vector<8xf32> to vector<1x8xf32>
    %cst_40 = arith.constant 0.000000e+00 : f32
    %44 = vector.broadcast %cst_40 : f32 to vector<1x8xf32>
    %45 = arith.addf %44, %43 : vector<1x8xf32>
    %46 = vector.broadcast %38 : vector<1x8xf32> to vector<8x8xf32>
    %47 = arith.subf %27, %46 : vector<8x8xf32>
    %48 = arith.mulf %47, %47 : vector<8x8xf32>
    %cst_41 = arith.constant dense<0.000000e+00> : vector<8xf32>
    %49 = vector.multi_reduction <add>, %48, %cst_41 [0] : vector<8x8xf32> to vector<8xf32>
    %50 = vector.shape_cast %49 : vector<8xf32> to vector<1x8xf32>
    %51 = arith.addf %45, %50 : vector<1x8xf32>
    %cst_42 = arith.constant 1.600000e+01 : f32
    %52 = vector.broadcast %cst_42 : f32 to vector<1x8xf32>
    %53 = arith.divf %51, %52 : vector<1x8xf32>
    %cst_43 = arith.constant 9.99999974E-6 : f32
    %54 = vector.broadcast %cst_43 : f32 to vector<1x8xf32>
    %55 = arith.addf %53, %54 : vector<1x8xf32>
    %56 = math.rsqrt %55 : vector<1x8xf32>
    %57 = vector.broadcast %38 : vector<1x8xf32> to vector<8x8xf32>
    %58 = arith.subf %13, %57 : vector<8x8xf32>
    %59 = vector.broadcast %56 : vector<1x8xf32> to vector<8x8xf32>
    %60 = arith.mulf %58, %59 : vector<8x8xf32>
    %61 = vector.broadcast %28 : vector<1x8xf32> to vector<8x8xf32>
    %62 = arith.mulf %60, %61 : vector<8x8xf32>
    %63 = vector.broadcast %29 : vector<1x8xf32> to vector<8x8xf32>
    %64 = arith.addf %62, %63 : vector<8x8xf32>
    %65 = vector.broadcast %38 : vector<1x8xf32> to vector<8x8xf32>
    %66 = arith.subf %27, %65 : vector<8x8xf32>
    %67 = vector.broadcast %56 : vector<1x8xf32> to vector<8x8xf32>
    %68 = arith.mulf %66, %67 : vector<8x8xf32>
    %69 = vector.broadcast %28 : vector<1x8xf32> to vector<8x8xf32>
    %70 = arith.mulf %68, %69 : vector<8x8xf32>
    %71 = vector.broadcast %29 : vector<1x8xf32> to vector<8x8xf32>
    %72 = arith.addf %70, %71 : vector<8x8xf32>
    %cst_44 = arith.constant 0.000000e+00 : f32
    %73 = vector.broadcast %cst_44 : f32 to vector<8x8xf32>
    %74 = arith.maximumf %64, %73 : vector<8x8xf32>
    %cst_45 = arith.constant 0.000000e+00 : f32
    %75 = vector.broadcast %cst_45 : f32 to vector<8x8xf32>
    %76 = arith.maximumf %72, %75 : vector<8x8xf32>
    %c0_46 = arith.constant 0 : index
    %c0_47 = arith.constant 0 : index
    %77 = vector.load %arg6[%c0_46, %c0_47] : memref<8x16xbf16, #tpu.memory_space<vmem>>, vector<8x16xbf16>
    %78 = arith.truncf %74 : vector<8x8xf32> to vector<8x8xbf16>
    %cst_48 = arith.constant dense<0.000000e+00> : vector<8x16xf32>
    %79 = tpu.matmul %78, %77, %cst_48 {dimension_numbers = #tpu.dot_dimension_numbers<[1], [0], [0], [1], [0, 0, 1, 1], [], []>} : vector<8x8xbf16>, vector<8x16xbf16>, vector<8x16xf32> -> vector<8x16xf32>
    %c0_49 = arith.constant 0 : index
    %c0_50 = arith.constant 0 : index
    %80 = vector.load %arg7[%c0_49, %c0_50] : memref<1x16xf32, #tpu.memory_space<vmem>>, vector<1x16xf32>
    %81 = vector.broadcast %80 : vector<1x16xf32> to vector<8x16xf32>
    %82 = arith.addf %79, %81 : vector<8x16xf32>
    %c0_51 = arith.constant 0 : index
    %c0_52 = arith.constant 0 : index
    %83 = vector.load %arg6[%c0_51, %c0_52] : memref<8x16xbf16, #tpu.memory_space<vmem>>, vector<8x16xbf16>
    %84 = arith.truncf %76 : vector<8x8xf32> to vector<8x8xbf16>
    %cst_53 = arith.constant dense<0.000000e+00> : vector<8x16xf32>
    %85 = tpu.matmul %84, %83, %cst_53 {dimension_numbers = #tpu.dot_dimension_numbers<[1], [0], [0], [1], [0, 0, 1, 1], [], []>} : vector<8x8xbf16>, vector<8x16xbf16>, vector<8x16xf32> -> vector<8x16xf32>
    %c0_54 = arith.constant 0 : index
    %c0_55 = arith.constant 0 : index
    %86 = vector.load %arg7[%c0_54, %c0_55] : memref<1x16xf32, #tpu.memory_space<vmem>>, vector<1x16xf32>
    %87 = vector.broadcast %86 : vector<1x16xf32> to vector<8x16xf32>
    %88 = arith.addf %85, %87 : vector<8x16xf32>
    %c0_56 = arith.constant 0 : index
    %c0_57 = arith.constant 0 : index
    %89 = vector.load %arg8[%c0_56, %c0_57] : memref<1x16xf32, #tpu.memory_space<vmem>>, vector<1x16xf32>
    %c0_58 = arith.constant 0 : index
    %c0_59 = arith.constant 0 : index
    %90 = vector.load %arg9[%c0_58, %c0_59] : memref<1x16xf32, #tpu.memory_space<vmem>>, vector<1x16xf32>
    %cst_60 = arith.constant dense<0.000000e+00> : vector<16xf32>
    %91 = vector.multi_reduction <add>, %82, %cst_60 [0] : vector<8x16xf32> to vector<16xf32>
    %92 = vector.shape_cast %91 : vector<16xf32> to vector<1x16xf32>
    %cst_61 = arith.constant 0.000000e+00 : f32
    %93 = vector.broadcast %cst_61 : f32 to vector<1x16xf32>
    %94 = arith.addf %93, %92 : vector<1x16xf32>
    %cst_62 = arith.constant dense<0.000000e+00> : vector<16xf32>
    %95 = vector.multi_reduction <add>, %88, %cst_62 [0] : vector<8x16xf32> to vector<16xf32>
    %96 = vector.shape_cast %95 : vector<16xf32> to vector<1x16xf32>
    %97 = arith.addf %94, %96 : vector<1x16xf32>
    %cst_63 = arith.constant 1.600000e+01 : f32
    %98 = vector.broadcast %cst_63 : f32 to vector<1x16xf32>
    %99 = arith.divf %97, %98 : vector<1x16xf32>
    %100 = vector.broadcast %99 : vector<1x16xf32> to vector<8x16xf32>
    %101 = arith.subf %82, %100 : vector<8x16xf32>
    %102 = arith.mulf %101, %101 : vector<8x16xf32>
    %cst_64 = arith.constant dense<0.000000e+00> : vector<16xf32>
    %103 = vector.multi_reduction <add>, %102, %cst_64 [0] : vector<8x16xf32> to vector<16xf32>
    %104 = vector.shape_cast %103 : vector<16xf32> to vector<1x16xf32>
    %cst_65 = arith.constant 0.000000e+00 : f32
    %105 = vector.broadcast %cst_65 : f32 to vector<1x16xf32>
    %106 = arith.addf %105, %104 : vector<1x16xf32>
    %107 = vector.broadcast %99 : vector<1x16xf32> to vector<8x16xf32>
    %108 = arith.subf %88, %107 : vector<8x16xf32>
    %109 = arith.mulf %108, %108 : vector<8x16xf32>
    %cst_66 = arith.constant dense<0.000000e+00> : vector<16xf32>
    %110 = vector.multi_reduction <add>, %109, %cst_66 [0] : vector<8x16xf32> to vector<16xf32>
    %111 = vector.shape_cast %110 : vector<16xf32> to vector<1x16xf32>
    %112 = arith.addf %106, %111 : vector<1x16xf32>
    %cst_67 = arith.constant 1.600000e+01 : f32
    %113 = vector.broadcast %cst_67 : f32 to vector<1x16xf32>
    %114 = arith.divf %112, %113 : vector<1x16xf32>
    %cst_68 = arith.constant 9.99999974E-6 : f32
    %115 = vector.broadcast %cst_68 : f32 to vector<1x16xf32>
    %116 = arith.addf %114, %115 : vector<1x16xf32>
    %117 = math.rsqrt %116 : vector<1x16xf32>
    %118 = vector.broadcast %99 : vector<1x16xf32> to vector<8x16xf32>
    %119 = arith.subf %82, %118 : vector<8x16xf32>
    %120 = vector.broadcast %117 : vector<1x16xf32> to vector<8x16xf32>
    %121 = arith.mulf %119, %120 : vector<8x16xf32>
    %122 = vector.broadcast %89 : vector<1x16xf32> to vector<8x16xf32>
    %123 = arith.mulf %121, %122 : vector<8x16xf32>
    %124 = vector.broadcast %90 : vector<1x16xf32> to vector<8x16xf32>
    %125 = arith.addf %123, %124 : vector<8x16xf32>
    %126 = vector.broadcast %99 : vector<1x16xf32> to vector<8x16xf32>
    %127 = arith.subf %88, %126 : vector<8x16xf32>
    %128 = vector.broadcast %117 : vector<1x16xf32> to vector<8x16xf32>
    %129 = arith.mulf %127, %128 : vector<8x16xf32>
    %130 = vector.broadcast %89 : vector<1x16xf32> to vector<8x16xf32>
    %131 = arith.mulf %129, %130 : vector<8x16xf32>
    %132 = vector.broadcast %90 : vector<1x16xf32> to vector<8x16xf32>
    %133 = arith.addf %131, %132 : vector<8x16xf32>
    %134 = vector.extract_strided_slice %125 {offsets = [0, 0], sizes = [8, 8], strides = [1, 1]} : vector<8x16xf32> to vector<8x8xf32>
    %135 = vector.extract_strided_slice %125 {offsets = [0, 8], sizes = [8, 8], strides = [1, 1]} : vector<8x16xf32> to vector<8x8xf32>
    %136 = arith.negf %135 : vector<8x8xf32>
    %137 = math.exp %136 : vector<8x8xf32>
    %cst_69 = arith.constant 1.000000e+00 : f32
    %138 = vector.broadcast %cst_69 : f32 to vector<8x8xf32>
    %139 = arith.addf %138, %137 : vector<8x8xf32>
    %140 = arith.divf %138, %139 : vector<8x8xf32>
    %141 = arith.mulf %134, %140 : vector<8x8xf32>
    %142 = vector.extract_strided_slice %133 {offsets = [0, 0], sizes = [8, 8], strides = [1, 1]} : vector<8x16xf32> to vector<8x8xf32>
    %143 = vector.extract_strided_slice %133 {offsets = [0, 8], sizes = [8, 8], strides = [1, 1]} : vector<8x16xf32> to vector<8x8xf32>
    %144 = arith.negf %143 : vector<8x8xf32>
    %145 = math.exp %144 : vector<8x8xf32>
    %cst_70 = arith.constant 1.000000e+00 : f32
    %146 = vector.broadcast %cst_70 : f32 to vector<8x8xf32>
    %147 = arith.addf %146, %145 : vector<8x8xf32>
    %148 = arith.divf %146, %147 : vector<8x8xf32>
    %149 = arith.mulf %142, %148 : vector<8x8xf32>
    %cst_71 = arith.constant 0.000000e+00 : f32
    %150 = vector.broadcast %cst_71 : f32 to vector<15x8xf32>
    %c0_72 = arith.constant 0 : index
    %c0_73 = arith.constant 0 : index
    %c0_74 = arith.constant 0 : index
    %151 = vector.load %arg21[%c0_72, %c0_73, %c0_74] : memref<2x38x8xf32, #tpu.memory_space<vmem>>, vector<1x15x8xf32>
    %152 = vector.shape_cast %151 : vector<1x15x8xf32> to vector<15x8xf32>
    %153 = vector.shape_cast %150 : vector<15x8xf32> to vector<1x15x8xf32>
    tpu.vector_store %arg21[%c0_72, %c0_73, %c0_74], %153 {strides = array<i32>} : memref<2x38x8xf32, #tpu.memory_space<vmem>>, vector<1x15x8xf32>,
    %cst_75 = arith.constant 0.000000e+00 : f32
    %154 = vector.broadcast %cst_75 : f32 to vector<15x8xf32>
    %c0_76 = arith.constant 0 : index
    %c23 = arith.constant 23 : index
    %c0_77 = arith.constant 0 : index
    %155 = vector.load %arg21[%c0_76, %c23, %c0_77] : memref<2x38x8xf32, #tpu.memory_space<vmem>>, vector<1x15x8xf32>
    %156 = vector.shape_cast %155 : vector<1x15x8xf32> to vector<15x8xf32>
    %157 = vector.shape_cast %154 : vector<15x8xf32> to vector<1x15x8xf32>
    tpu.vector_store %arg21[%c0_76, %c23, %c0_77], %157 {strides = array<i32>} : memref<2x38x8xf32, #tpu.memory_space<vmem>>, vector<1x15x8xf32>,
    %c0_78 = arith.constant 0 : index
    %c15 = arith.constant 15 : index
    %c0_79 = arith.constant 0 : index
    %158 = vector.load %arg21[%c0_78, %c15, %c0_79] : memref<2x38x8xf32, #tpu.memory_space<vmem>>, vector<1x8x8xf32>
    %159 = vector.shape_cast %158 : vector<1x8x8xf32> to vector<8x8xf32>
    %160 = vector.shape_cast %141 : vector<8x8xf32> to vector<1x8x8xf32>
    tpu.vector_store %arg21[%c0_78, %c15, %c0_79], %160 {strides = array<i32>} : memref<2x38x8xf32, #tpu.memory_space<vmem>>, vector<1x8x8xf32>,
    %cst_80 = arith.constant 0.000000e+00 : f32
    %161 = vector.broadcast %cst_80 : f32 to vector<8x8xf32>
    %c0_i32 = arith.constant 0 : i32
    %c31_i32 = arith.constant 31 : i32
    %162 = arith.addi %c0_i32, %c31_i32 : i32
    %c1_i32 = arith.constant 1 : i32
    %163 = scf.for %arg22 = %c0_i32 to %162 step %c1_i32 iter_args(%arg23 = %161) -> (vector<8x8xf32>)  : i32 {
      %c0_158 = arith.constant 0 : index
      %332 = arith.index_cast %arg22 : i32 to index
      %c0_159 = arith.constant 0 : index
      %333 = vector.load %arg21[%c0_158, %332, %c0_159] : memref<2x38x8xf32, #tpu.memory_space<vmem>>, vector<1x8x8xf32>
      %334 = vector.shape_cast %333 : vector<1x8x8xf32> to vector<8x8xf32>
      %335 = arith.index_cast %arg22 : i32 to index
      %c0_160 = arith.constant 0 : index
      %336 = vector.load %arg10[%335, %c0_160] : memref<31x8xf32, #tpu.memory_space<vmem>>, vector<1x8xf32>
      %337 = vector.broadcast %336 : vector<1x8xf32> to vector<8x8xf32>
      %338 = arith.mulf %334, %337 : vector<8x8xf32>
      %339 = arith.addf %arg23, %338 : vector<8x8xf32>
      scf.yield %339 : vector<8x8xf32>
    }
    %c31_i32_81 = arith.constant 31 : i32
    %c0_82 = arith.constant 0 : index
    %c0_83 = arith.constant 0 : index
    %164 = vector.load %arg11[%c0_82, %c0_83] : memref<1x8xf32, #tpu.memory_space<vmem>>, vector<1x8xf32>
    %165 = vector.broadcast %164 : vector<1x8xf32> to vector<8x8xf32>
    %166 = arith.addf %163, %165 : vector<8x8xf32>
    %cst_84 = arith.constant 0.000000e+00 : f32
    %167 = vector.broadcast %cst_84 : f32 to vector<15x8xf32>
    %c1_85 = arith.constant 1 : index
    %c0_86 = arith.constant 0 : index
    %c0_87 = arith.constant 0 : index
    %168 = vector.load %arg21[%c1_85, %c0_86, %c0_87] : memref<2x38x8xf32, #tpu.memory_space<vmem>>, vector<1x15x8xf32>
    %169 = vector.shape_cast %168 : vector<1x15x8xf32> to vector<15x8xf32>
    %170 = vector.shape_cast %167 : vector<15x8xf32> to vector<1x15x8xf32>
    tpu.vector_store %arg21[%c1_85, %c0_86, %c0_87], %170 {strides = array<i32>} : memref<2x38x8xf32, #tpu.memory_space<vmem>>, vector<1x15x8xf32>,
    %cst_88 = arith.constant 0.000000e+00 : f32
    %171 = vector.broadcast %cst_88 : f32 to vector<15x8xf32>
    %c1_89 = arith.constant 1 : index
    %c23_90 = arith.constant 23 : index
    %c0_91 = arith.constant 0 : index
    %172 = vector.load %arg21[%c1_89, %c23_90, %c0_91] : memref<2x38x8xf32, #tpu.memory_space<vmem>>, vector<1x15x8xf32>
    %173 = vector.shape_cast %172 : vector<1x15x8xf32> to vector<15x8xf32>
    %174 = vector.shape_cast %171 : vector<15x8xf32> to vector<1x15x8xf32>
    tpu.vector_store %arg21[%c1_89, %c23_90, %c0_91], %174 {strides = array<i32>} : memref<2x38x8xf32, #tpu.memory_space<vmem>>, vector<1x15x8xf32>,
    %c1_92 = arith.constant 1 : index
    %c15_93 = arith.constant 15 : index
    %c0_94 = arith.constant 0 : index
    %175 = vector.load %arg21[%c1_92, %c15_93, %c0_94] : memref<2x38x8xf32, #tpu.memory_space<vmem>>, vector<1x8x8xf32>
    %176 = vector.shape_cast %175 : vector<1x8x8xf32> to vector<8x8xf32>
    %177 = vector.shape_cast %149 : vector<8x8xf32> to vector<1x8x8xf32>
    tpu.vector_store %arg21[%c1_92, %c15_93, %c0_94], %177 {strides = array<i32>} : memref<2x38x8xf32, #tpu.memory_space<vmem>>, vector<1x8x8xf32>,
    %cst_95 = arith.constant 0.000000e+00 : f32
    %178 = vector.broadcast %cst_95 : f32 to vector<8x8xf32>
    %c0_i32_96 = arith.constant 0 : i32
    %c31_i32_97 = arith.constant 31 : i32
    %179 = arith.addi %c0_i32_96, %c31_i32_97 : i32
    %c1_i32_98 = arith.constant 1 : i32
    %180 = scf.for %arg22 = %c0_i32_96 to %179 step %c1_i32_98 iter_args(%arg23 = %178) -> (vector<8x8xf32>)  : i32 {
      %c1_158 = arith.constant 1 : index
      %332 = arith.index_cast %arg22 : i32 to index
      %c0_159 = arith.constant 0 : index
      %333 = vector.load %arg21[%c1_158, %332, %c0_159] : memref<2x38x8xf32, #tpu.memory_space<vmem>>, vector<1x8x8xf32>
      %334 = vector.shape_cast %333 : vector<1x8x8xf32> to vector<8x8xf32>
      %335 = arith.index_cast %arg22 : i32 to index
      %c0_160 = arith.constant 0 : index
      %336 = vector.load %arg10[%335, %c0_160] : memref<31x8xf32, #tpu.memory_space<vmem>>, vector<1x8xf32>
      %337 = vector.broadcast %336 : vector<1x8xf32> to vector<8x8xf32>
      %338 = arith.mulf %334, %337 : vector<8x8xf32>
      %339 = arith.addf %arg23, %338 : vector<8x8xf32>
      scf.yield %339 : vector<8x8xf32>
    }
    %c31_i32_99 = arith.constant 31 : i32
    %c0_100 = arith.constant 0 : index
    %c0_101 = arith.constant 0 : index
    %181 = vector.load %arg11[%c0_100, %c0_101] : memref<1x8xf32, #tpu.memory_space<vmem>>, vector<1x8xf32>
    %182 = vector.broadcast %181 : vector<1x8xf32> to vector<8x8xf32>
    %183 = arith.addf %180, %182 : vector<8x8xf32>
    %c0_102 = arith.constant 0 : index
    %c0_103 = arith.constant 0 : index
    %184 = vector.load %arg12[%c0_102, %c0_103] : memref<1x8xf32, #tpu.memory_space<vmem>>, vector<1x8xf32>
    %c0_104 = arith.constant 0 : index
    %c0_105 = arith.constant 0 : index
    %185 = vector.load %arg13[%c0_104, %c0_105] : memref<1x8xf32, #tpu.memory_space<vmem>>, vector<1x8xf32>
    %cst_106 = arith.constant dense<0.000000e+00> : vector<8xf32>
    %186 = vector.multi_reduction <add>, %166, %cst_106 [0] : vector<8x8xf32> to vector<8xf32>
    %187 = vector.shape_cast %186 : vector<8xf32> to vector<1x8xf32>
    %cst_107 = arith.constant 0.000000e+00 : f32
    %188 = vector.broadcast %cst_107 : f32 to vector<1x8xf32>
    %189 = arith.addf %188, %187 : vector<1x8xf32>
    %cst_108 = arith.constant dense<0.000000e+00> : vector<8xf32>
    %190 = vector.multi_reduction <add>, %183, %cst_108 [0] : vector<8x8xf32> to vector<8xf32>
    %191 = vector.shape_cast %190 : vector<8xf32> to vector<1x8xf32>
    %192 = arith.addf %189, %191 : vector<1x8xf32>
    %cst_109 = arith.constant 1.600000e+01 : f32
    %193 = vector.broadcast %cst_109 : f32 to vector<1x8xf32>
    %194 = arith.divf %192, %193 : vector<1x8xf32>
    %195 = vector.broadcast %194 : vector<1x8xf32> to vector<8x8xf32>
    %196 = arith.subf %166, %195 : vector<8x8xf32>
    %197 = arith.mulf %196, %196 : vector<8x8xf32>
    %cst_110 = arith.constant dense<0.000000e+00> : vector<8xf32>
    %198 = vector.multi_reduction <add>, %197, %cst_110 [0] : vector<8x8xf32> to vector<8xf32>
    %199 = vector.shape_cast %198 : vector<8xf32> to vector<1x8xf32>
    %cst_111 = arith.constant 0.000000e+00 : f32
    %200 = vector.broadcast %cst_111 : f32 to vector<1x8xf32>
    %201 = arith.addf %200, %199 : vector<1x8xf32>
    %202 = vector.broadcast %194 : vector<1x8xf32> to vector<8x8xf32>
    %203 = arith.subf %183, %202 : vector<8x8xf32>
    %204 = arith.mulf %203, %203 : vector<8x8xf32>
    %cst_112 = arith.constant dense<0.000000e+00> : vector<8xf32>
    %205 = vector.multi_reduction <add>, %204, %cst_112 [0] : vector<8x8xf32> to vector<8xf32>
    %206 = vector.shape_cast %205 : vector<8xf32> to vector<1x8xf32>
    %207 = arith.addf %201, %206 : vector<1x8xf32>
    %cst_113 = arith.constant 1.600000e+01 : f32
    %208 = vector.broadcast %cst_113 : f32 to vector<1x8xf32>
    %209 = arith.divf %207, %208 : vector<1x8xf32>
    %cst_114 = arith.constant 9.99999974E-6 : f32
    %210 = vector.broadcast %cst_114 : f32 to vector<1x8xf32>
    %211 = arith.addf %209, %210 : vector<1x8xf32>
    %212 = math.rsqrt %211 : vector<1x8xf32>
    %213 = vector.broadcast %194 : vector<1x8xf32> to vector<8x8xf32>
    %214 = arith.subf %166, %213 : vector<8x8xf32>
    %215 = vector.broadcast %212 : vector<1x8xf32> to vector<8x8xf32>
    %216 = arith.mulf %214, %215 : vector<8x8xf32>
    %217 = vector.broadcast %184 : vector<1x8xf32> to vector<8x8xf32>
    %218 = arith.mulf %216, %217 : vector<8x8xf32>
    %219 = vector.broadcast %185 : vector<1x8xf32> to vector<8x8xf32>
    %220 = arith.addf %218, %219 : vector<8x8xf32>
    %221 = vector.broadcast %194 : vector<1x8xf32> to vector<8x8xf32>
    %222 = arith.subf %183, %221 : vector<8x8xf32>
    %223 = vector.broadcast %212 : vector<1x8xf32> to vector<8x8xf32>
    %224 = arith.mulf %222, %223 : vector<8x8xf32>
    %225 = vector.broadcast %184 : vector<1x8xf32> to vector<8x8xf32>
    %226 = arith.mulf %224, %225 : vector<8x8xf32>
    %227 = vector.broadcast %185 : vector<1x8xf32> to vector<8x8xf32>
    %228 = arith.addf %226, %227 : vector<8x8xf32>
    %229 = arith.negf %220 : vector<8x8xf32>
    %230 = math.exp %229 : vector<8x8xf32>
    %cst_115 = arith.constant 1.000000e+00 : f32
    %231 = vector.broadcast %cst_115 : f32 to vector<8x8xf32>
    %232 = arith.addf %231, %230 : vector<8x8xf32>
    %233 = arith.divf %231, %232 : vector<8x8xf32>
    %234 = arith.mulf %220, %233 : vector<8x8xf32>
    %235 = arith.negf %228 : vector<8x8xf32>
    %236 = math.exp %235 : vector<8x8xf32>
    %cst_116 = arith.constant 1.000000e+00 : f32
    %237 = vector.broadcast %cst_116 : f32 to vector<8x8xf32>
    %238 = arith.addf %237, %236 : vector<8x8xf32>
    %239 = arith.divf %237, %238 : vector<8x8xf32>
    %240 = arith.mulf %228, %239 : vector<8x8xf32>
    %c0_117 = arith.constant 0 : index
    %c0_118 = arith.constant 0 : index
    %241 = vector.load %arg14[%c0_117, %c0_118] : memref<8x16xbf16, #tpu.memory_space<vmem>>, vector<8x16xbf16>
    %242 = arith.truncf %234 : vector<8x8xf32> to vector<8x8xbf16>
    %cst_119 = arith.constant dense<0.000000e+00> : vector<8x16xf32>
    %243 = tpu.matmul %242, %241, %cst_119 {dimension_numbers = #tpu.dot_dimension_numbers<[1], [0], [0], [1], [0, 0, 1, 1], [], []>} : vector<8x8xbf16>, vector<8x16xbf16>, vector<8x16xf32> -> vector<8x16xf32>
    %c0_120 = arith.constant 0 : index
    %c0_121 = arith.constant 0 : index
    %244 = vector.load %arg15[%c0_120, %c0_121] : memref<1x16xf32, #tpu.memory_space<vmem>>, vector<1x16xf32>
    %245 = vector.broadcast %244 : vector<1x16xf32> to vector<8x16xf32>
    %246 = arith.addf %243, %245 : vector<8x16xf32>
    %c0_122 = arith.constant 0 : index
    %c0_123 = arith.constant 0 : index
    %247 = vector.load %arg14[%c0_122, %c0_123] : memref<8x16xbf16, #tpu.memory_space<vmem>>, vector<8x16xbf16>
    %248 = arith.truncf %240 : vector<8x8xf32> to vector<8x8xbf16>
    %cst_124 = arith.constant dense<0.000000e+00> : vector<8x16xf32>
    %249 = tpu.matmul %248, %247, %cst_124 {dimension_numbers = #tpu.dot_dimension_numbers<[1], [0], [0], [1], [0, 0, 1, 1], [], []>} : vector<8x8xbf16>, vector<8x16xbf16>, vector<8x16xf32> -> vector<8x16xf32>
    %c0_125 = arith.constant 0 : index
    %c0_126 = arith.constant 0 : index
    %250 = vector.load %arg15[%c0_125, %c0_126] : memref<1x16xf32, #tpu.memory_space<vmem>>, vector<1x16xf32>
    %251 = vector.broadcast %250 : vector<1x16xf32> to vector<8x16xf32>
    %252 = arith.addf %249, %251 : vector<8x16xf32>
    %c0_127 = arith.constant 0 : index
    %c0_128 = arith.constant 0 : index
    %253 = vector.load %arg16[%c0_127, %c0_128] : memref<1x16xf32, #tpu.memory_space<vmem>>, vector<1x16xf32>
    %c0_129 = arith.constant 0 : index
    %c0_130 = arith.constant 0 : index
    %254 = vector.load %arg17[%c0_129, %c0_130] : memref<1x16xf32, #tpu.memory_space<vmem>>, vector<1x16xf32>
    %cst_131 = arith.constant dense<0.000000e+00> : vector<16xf32>
    %255 = vector.multi_reduction <add>, %246, %cst_131 [0] : vector<8x16xf32> to vector<16xf32>
    %256 = vector.shape_cast %255 : vector<16xf32> to vector<1x16xf32>
    %cst_132 = arith.constant 0.000000e+00 : f32
    %257 = vector.broadcast %cst_132 : f32 to vector<1x16xf32>
    %258 = arith.addf %257, %256 : vector<1x16xf32>
    %cst_133 = arith.constant dense<0.000000e+00> : vector<16xf32>
    %259 = vector.multi_reduction <add>, %252, %cst_133 [0] : vector<8x16xf32> to vector<16xf32>
    %260 = vector.shape_cast %259 : vector<16xf32> to vector<1x16xf32>
    %261 = arith.addf %258, %260 : vector<1x16xf32>
    %cst_134 = arith.constant 1.600000e+01 : f32
    %262 = vector.broadcast %cst_134 : f32 to vector<1x16xf32>
    %263 = arith.divf %261, %262 : vector<1x16xf32>
    %264 = vector.broadcast %263 : vector<1x16xf32> to vector<8x16xf32>
    %265 = arith.subf %246, %264 : vector<8x16xf32>
    %266 = arith.mulf %265, %265 : vector<8x16xf32>
    %cst_135 = arith.constant dense<0.000000e+00> : vector<16xf32>
    %267 = vector.multi_reduction <add>, %266, %cst_135 [0] : vector<8x16xf32> to vector<16xf32>
    %268 = vector.shape_cast %267 : vector<16xf32> to vector<1x16xf32>
    %cst_136 = arith.constant 0.000000e+00 : f32
    %269 = vector.broadcast %cst_136 : f32 to vector<1x16xf32>
    %270 = arith.addf %269, %268 : vector<1x16xf32>
    %271 = vector.broadcast %263 : vector<1x16xf32> to vector<8x16xf32>
    %272 = arith.subf %252, %271 : vector<8x16xf32>
    %273 = arith.mulf %272, %272 : vector<8x16xf32>
    %cst_137 = arith.constant dense<0.000000e+00> : vector<16xf32>
    %274 = vector.multi_reduction <add>, %273, %cst_137 [0] : vector<8x16xf32> to vector<16xf32>
    %275 = vector.shape_cast %274 : vector<16xf32> to vector<1x16xf32>
    %276 = arith.addf %270, %275 : vector<1x16xf32>
    %cst_138 = arith.constant 1.600000e+01 : f32
    %277 = vector.broadcast %cst_138 : f32 to vector<1x16xf32>
    %278 = arith.divf %276, %277 : vector<1x16xf32>
    %cst_139 = arith.constant 9.99999974E-6 : f32
    %279 = vector.broadcast %cst_139 : f32 to vector<1x16xf32>
    %280 = arith.addf %278, %279 : vector<1x16xf32>
    %281 = math.rsqrt %280 : vector<1x16xf32>
    %282 = vector.broadcast %263 : vector<1x16xf32> to vector<8x16xf32>
    %283 = arith.subf %246, %282 : vector<8x16xf32>
    %284 = vector.broadcast %281 : vector<1x16xf32> to vector<8x16xf32>
    %285 = arith.mulf %283, %284 : vector<8x16xf32>
    %286 = vector.broadcast %253 : vector<1x16xf32> to vector<8x16xf32>
    %287 = arith.mulf %285, %286 : vector<8x16xf32>
    %288 = vector.broadcast %254 : vector<1x16xf32> to vector<8x16xf32>
    %289 = arith.addf %287, %288 : vector<8x16xf32>
    %290 = vector.broadcast %263 : vector<1x16xf32> to vector<8x16xf32>
    %291 = arith.subf %252, %290 : vector<8x16xf32>
    %292 = vector.broadcast %281 : vector<1x16xf32> to vector<8x16xf32>
    %293 = arith.mulf %291, %292 : vector<8x16xf32>
    %294 = vector.broadcast %253 : vector<1x16xf32> to vector<8x16xf32>
    %295 = arith.mulf %293, %294 : vector<8x16xf32>
    %296 = vector.broadcast %254 : vector<1x16xf32> to vector<8x16xf32>
    %297 = arith.addf %295, %296 : vector<8x16xf32>
    %298 = arith.negf %289 : vector<8x16xf32>
    %299 = math.exp %298 : vector<8x16xf32>
    %cst_140 = arith.constant 1.000000e+00 : f32
    %300 = vector.broadcast %cst_140 : f32 to vector<8x16xf32>
    %301 = arith.addf %300, %299 : vector<8x16xf32>
    %302 = arith.divf %300, %301 : vector<8x16xf32>
    %303 = arith.mulf %289, %302 : vector<8x16xf32>
    %304 = arith.negf %297 : vector<8x16xf32>
    %305 = math.exp %304 : vector<8x16xf32>
    %cst_141 = arith.constant 1.000000e+00 : f32
    %306 = vector.broadcast %cst_141 : f32 to vector<8x16xf32>
    %307 = arith.addf %306, %305 : vector<8x16xf32>
    %308 = arith.divf %306, %307 : vector<8x16xf32>
    %309 = arith.mulf %297, %308 : vector<8x16xf32>
    %c0_142 = arith.constant 0 : index
    %c0_143 = arith.constant 0 : index
    %310 = vector.load %arg18[%c0_142, %c0_143] : memref<8x16xbf16, #tpu.memory_space<vmem>>, vector<8x16xbf16>
    %311 = arith.truncf %74 : vector<8x8xf32> to vector<8x8xbf16>
    %cst_144 = arith.constant dense<0.000000e+00> : vector<8x16xf32>
    %312 = tpu.matmul %311, %310, %cst_144 {dimension_numbers = #tpu.dot_dimension_numbers<[1], [0], [0], [1], [0, 0, 1, 1], [], []>} : vector<8x8xbf16>, vector<8x16xbf16>, vector<8x16xf32> -> vector<8x16xf32>
    %313 = arith.addf %303, %312 : vector<8x16xf32>
    %c0_145 = arith.constant 0 : index
    %c0_146 = arith.constant 0 : index
    %314 = vector.load %arg19[%c0_145, %c0_146] : memref<1x16xf32, #tpu.memory_space<vmem>>, vector<1x16xf32>
    %315 = vector.broadcast %314 : vector<1x16xf32> to vector<8x16xf32>
    %316 = arith.addf %313, %315 : vector<8x16xf32>
    %c0_147 = arith.constant 0 : index
    %c0_148 = arith.constant 0 : index
    %317 = vector.load %arg18[%c0_147, %c0_148] : memref<8x16xbf16, #tpu.memory_space<vmem>>, vector<8x16xbf16>
    %318 = arith.truncf %76 : vector<8x8xf32> to vector<8x8xbf16>
    %cst_149 = arith.constant dense<0.000000e+00> : vector<8x16xf32>
    %319 = tpu.matmul %318, %317, %cst_149 {dimension_numbers = #tpu.dot_dimension_numbers<[1], [0], [0], [1], [0, 0, 1, 1], [], []>} : vector<8x8xbf16>, vector<8x16xbf16>, vector<8x16xf32> -> vector<8x16xf32>
    %320 = arith.addf %309, %319 : vector<8x16xf32>
    %c0_150 = arith.constant 0 : index
    %c0_151 = arith.constant 0 : index
    %321 = vector.load %arg19[%c0_150, %c0_151] : memref<1x16xf32, #tpu.memory_space<vmem>>, vector<1x16xf32>
    %322 = vector.broadcast %321 : vector<1x16xf32> to vector<8x16xf32>
    %323 = arith.addf %320, %322 : vector<8x16xf32>
    %324 = arith.truncf %316 : vector<8x16xf32> to vector<8x16xbf16>
    %c0_152 = arith.constant 0 : index
    %c0_153 = arith.constant 0 : index
    %c0_154 = arith.constant 0 : index
    %325 = vector.load %arg20[%c0_152, %c0_153, %c0_154] : memref<2x8x16xbf16, #tpu.memory_space<vmem>>, vector<1x8x16xbf16>
    %326 = vector.shape_cast %325 : vector<1x8x16xbf16> to vector<8x16xbf16>
    %327 = vector.shape_cast %324 : vector<8x16xbf16> to vector<1x8x16xbf16>
    tpu.vector_store %arg20[%c0_152, %c0_153, %c0_154], %327 {strides = array<i32>} : memref<2x8x16xbf16, #tpu.memory_space<vmem>>, vector<1x8x16xbf16>,
    %328 = arith.truncf %323 : vector<8x16xf32> to vector<8x16xbf16>
    %c1_155 = arith.constant 1 : index
    %c0_156 = arith.constant 0 : index
    %c0_157 = arith.constant 0 : index
    %329 = vector.load %arg20[%c1_155, %c0_156, %c0_157] : memref<2x8x16xbf16, #tpu.memory_space<vmem>>, vector<1x8x16xbf16>
    %330 = vector.shape_cast %329 : vector<1x8x16xbf16> to vector<8x16xbf16>
    %331 = vector.shape_cast %328 : vector<8x16xbf16> to vector<1x8x16xbf16>
    tpu.vector_store %arg20[%c1_155, %c0_156, %c0_157], %331 {strides = array<i32>} : memref<2x8x16xbf16, #tpu.memory_space<vmem>>, vector<1x8x16xbf16>,
    return
  }
}

module attributes {stable_mosaic.version = 11 : i64} {
  func.func @_linear_relu_kernel(%arg0: memref<2x3x32xbf16, #tpu.memory_space<vmem>>, %arg1: memref<32x32xbf16, #tpu.memory_space<vmem>>, %arg2: memref<2x3x32xbf16, #tpu.memory_space<vmem>>) attributes {dimension_semantics = [], scalar_prefetch = 0 : i64, scratch_operands = 0 : i64, tpu.core_type = #tpu.core_type<tc>} {
    %c0 = arith.constant 0 : index
    %c0_0 = arith.constant 0 : index
    %c0_1 = arith.constant 0 : index
    %0 = vector.load %arg0[%c0, %c0_0, %c0_1] : memref<2x3x32xbf16, #tpu.memory_space<vmem>>, vector<1x3x32xbf16>
    %1 = vector.shape_cast %0 : vector<1x3x32xbf16> to vector<3x32xbf16>
    %c0_2 = arith.constant 0 : index
    %c0_3 = arith.constant 0 : index
    %2 = vector.load %arg1[%c0_2, %c0_3] : memref<32x32xbf16, #tpu.memory_space<vmem>>, vector<32x32xbf16>
    %cst = arith.constant dense<0.000000e+00> : vector<3x32xf32>
    %3 = tpu.matmul %1, %2, %cst {dimension_numbers = #tpu.dot_dimension_numbers<[1], [0], [0], [1], [0, 0, 1, 1], [], []>} : vector<3x32xbf16>, vector<32x32xbf16>, vector<3x32xf32> -> vector<3x32xf32>
    %cst_4 = arith.constant 0.000000e+00 : f32
    %4 = vector.broadcast %cst_4 : f32 to vector<3x32xf32>
    %5 = arith.maximumf %3, %4 : vector<3x32xf32>
    %6 = arith.truncf %5 : vector<3x32xf32> to vector<3x32xbf16>
    %c0_5 = arith.constant 0 : index
    %c0_6 = arith.constant 0 : index
    %c0_7 = arith.constant 0 : index
    %7 = vector.load %arg2[%c0_5, %c0_6, %c0_7] : memref<2x3x32xbf16, #tpu.memory_space<vmem>>, vector<1x3x32xbf16>
    %8 = vector.shape_cast %7 : vector<1x3x32xbf16> to vector<3x32xbf16>
    %9 = vector.shape_cast %6 : vector<3x32xbf16> to vector<1x3x32xbf16>
    tpu.vector_store %arg2[%c0_5, %c0_6, %c0_7], %9 {strides = array<i32>} : memref<2x3x32xbf16, #tpu.memory_space<vmem>>, vector<1x3x32xbf16>,
    %c1 = arith.constant 1 : index
    %c0_8 = arith.constant 0 : index
    %c0_9 = arith.constant 0 : index
    %10 = vector.load %arg0[%c1, %c0_8, %c0_9] : memref<2x3x32xbf16, #tpu.memory_space<vmem>>, vector<1x3x32xbf16>
    %11 = vector.shape_cast %10 : vector<1x3x32xbf16> to vector<3x32xbf16>
    %c0_10 = arith.constant 0 : index
    %c0_11 = arith.constant 0 : index
    %12 = vector.load %arg1[%c0_10, %c0_11] : memref<32x32xbf16, #tpu.memory_space<vmem>>, vector<32x32xbf16>
    %cst_12 = arith.constant dense<0.000000e+00> : vector<3x32xf32>
    %13 = tpu.matmul %11, %12, %cst_12 {dimension_numbers = #tpu.dot_dimension_numbers<[1], [0], [0], [1], [0, 0, 1, 1], [], []>} : vector<3x32xbf16>, vector<32x32xbf16>, vector<3x32xf32> -> vector<3x32xf32>
    %cst_13 = arith.constant 0.000000e+00 : f32
    %14 = vector.broadcast %cst_13 : f32 to vector<3x32xf32>
    %15 = arith.maximumf %13, %14 : vector<3x32xf32>
    %16 = arith.truncf %15 : vector<3x32xf32> to vector<3x32xbf16>
    %c1_14 = arith.constant 1 : index
    %c0_15 = arith.constant 0 : index
    %c0_16 = arith.constant 0 : index
    %17 = vector.load %arg2[%c1_14, %c0_15, %c0_16] : memref<2x3x32xbf16, #tpu.memory_space<vmem>>, vector<1x3x32xbf16>
    %18 = vector.shape_cast %17 : vector<1x3x32xbf16> to vector<3x32xbf16>
    %19 = vector.shape_cast %16 : vector<3x32xbf16> to vector<1x3x32xbf16>
    tpu.vector_store %arg2[%c1_14, %c0_15, %c0_16], %19 {strides = array<i32>} : memref<2x3x32xbf16, #tpu.memory_space<vmem>>, vector<1x3x32xbf16>,
    return
  }
}

module attributes {stable_mosaic.version = 11 : i64} {
  func.func @_encoder_kernel(%arg0: memref<2x4x16xbf16, #tpu.memory_space<vmem>>, %arg1: memref<2x4x16xbf16, #tpu.memory_space<vmem>>, %arg2: memref<64x16xbf16, #tpu.memory_space<vmem>>, %arg3: memref<1x16xf32, #tpu.memory_space<vmem>>, %arg4: memref<1x16xf32, #tpu.memory_space<vmem>>, %arg5: memref<1x16xf32, #tpu.memory_space<vmem>>, %arg6: memref<16x32xbf16, #tpu.memory_space<vmem>>, %arg7: memref<1x32xf32, #tpu.memory_space<vmem>>, %arg8: memref<1x32xf32, #tpu.memory_space<vmem>>, %arg9: memref<1x32xf32, #tpu.memory_space<vmem>>, %arg10: memref<31x16xf32, #tpu.memory_space<vmem>>, %arg11: memref<1x16xf32, #tpu.memory_space<vmem>>, %arg12: memref<1x16xf32, #tpu.memory_space<vmem>>, %arg13: memref<1x16xf32, #tpu.memory_space<vmem>>, %arg14: memref<16x32xbf16, #tpu.memory_space<vmem>>, %arg15: memref<1x32xf32, #tpu.memory_space<vmem>>, %arg16: memref<1x32xf32, #tpu.memory_space<vmem>>, %arg17: memref<1x32xf32, #tpu.memory_space<vmem>>, %arg18: memref<16x32xbf16, #tpu.memory_space<vmem>>, %arg19: memref<1x32xf32, #tpu.memory_space<vmem>>, %arg20: memref<2x3x32xbf16, #tpu.memory_space<vmem>>, %arg21: memref<2x33x16xf32, #tpu.memory_space<vmem>>) attributes {dimension_semantics = [], scalar_prefetch = 0 : i64, scratch_operands = 1 : i64, tpu.core_type = #tpu.core_type<tc>} {
    %c0 = arith.constant 0 : index
    %c0_0 = arith.constant 0 : index
    %c0_1 = arith.constant 0 : index
    %0 = vector.load %arg0[%c0, %c0_0, %c0_1] : memref<2x4x16xbf16, #tpu.memory_space<vmem>>, vector<1x3x16xbf16>
    %1 = vector.shape_cast %0 : vector<1x3x16xbf16> to vector<3x16xbf16>
    %c0_2 = arith.constant 0 : index
    %c0_3 = arith.constant 0 : index
    %c0_4 = arith.constant 0 : index
    %2 = vector.load %arg1[%c0_2, %c0_3, %c0_4] : memref<2x4x16xbf16, #tpu.memory_space<vmem>>, vector<1x3x16xbf16>
    %3 = vector.shape_cast %2 : vector<1x3x16xbf16> to vector<3x16xbf16>
    %c0_5 = arith.constant 0 : index
    %c1 = arith.constant 1 : index
    %c0_6 = arith.constant 0 : index
    %4 = vector.load %arg0[%c0_5, %c1, %c0_6] : memref<2x4x16xbf16, #tpu.memory_space<vmem>>, vector<1x3x16xbf16>
    %5 = vector.shape_cast %4 : vector<1x3x16xbf16> to vector<3x16xbf16>
    %c0_7 = arith.constant 0 : index
    %c1_8 = arith.constant 1 : index
    %c0_9 = arith.constant 0 : index
    %6 = vector.load %arg1[%c0_7, %c1_8, %c0_9] : memref<2x4x16xbf16, #tpu.memory_space<vmem>>, vector<1x3x16xbf16>
    %7 = vector.shape_cast %6 : vector<1x3x16xbf16> to vector<3x16xbf16>
    %8 = tpu.concatenate %1, %3, %5, %7 in 1 : vector<3x16xbf16>, vector<3x16xbf16>, vector<3x16xbf16>, vector<3x16xbf16> -> vector<3x64xbf16>
    %c0_10 = arith.constant 0 : index
    %c0_11 = arith.constant 0 : index
    %9 = vector.load %arg2[%c0_10, %c0_11] : memref<64x16xbf16, #tpu.memory_space<vmem>>, vector<64x16xbf16>
    %cst = arith.constant dense<0.000000e+00> : vector<3x16xf32>
    %10 = tpu.matmul %8, %9, %cst {dimension_numbers = #tpu.dot_dimension_numbers<[1], [0], [0], [1], [0, 0, 1, 1], [], []>} : vector<3x64xbf16>, vector<64x16xbf16>, vector<3x16xf32> -> vector<3x16xf32>
    %c0_12 = arith.constant 0 : index
    %c0_13 = arith.constant 0 : index
    %11 = vector.load %arg3[%c0_12, %c0_13] : memref<1x16xf32, #tpu.memory_space<vmem>>, vector<1x16xf32>
    %12 = vector.broadcast %11 : vector<1x16xf32> to vector<3x16xf32>
    %13 = arith.addf %10, %12 : vector<3x16xf32>
    %c1_14 = arith.constant 1 : index
    %c0_15 = arith.constant 0 : index
    %c0_16 = arith.constant 0 : index
    %14 = vector.load %arg0[%c1_14, %c0_15, %c0_16] : memref<2x4x16xbf16, #tpu.memory_space<vmem>>, vector<1x3x16xbf16>
    %15 = vector.shape_cast %14 : vector<1x3x16xbf16> to vector<3x16xbf16>
    %c1_17 = arith.constant 1 : index
    %c0_18 = arith.constant 0 : index
    %c0_19 = arith.constant 0 : index
    %16 = vector.load %arg1[%c1_17, %c0_18, %c0_19] : memref<2x4x16xbf16, #tpu.memory_space<vmem>>, vector<1x3x16xbf16>
    %17 = vector.shape_cast %16 : vector<1x3x16xbf16> to vector<3x16xbf16>
    %c1_20 = arith.constant 1 : index
    %c1_21 = arith.constant 1 : index
    %c0_22 = arith.constant 0 : index
    %18 = vector.load %arg0[%c1_20, %c1_21, %c0_22] : memref<2x4x16xbf16, #tpu.memory_space<vmem>>, vector<1x3x16xbf16>
    %19 = vector.shape_cast %18 : vector<1x3x16xbf16> to vector<3x16xbf16>
    %c1_23 = arith.constant 1 : index
    %c1_24 = arith.constant 1 : index
    %c0_25 = arith.constant 0 : index
    %20 = vector.load %arg1[%c1_23, %c1_24, %c0_25] : memref<2x4x16xbf16, #tpu.memory_space<vmem>>, vector<1x3x16xbf16>
    %21 = vector.shape_cast %20 : vector<1x3x16xbf16> to vector<3x16xbf16>
    %22 = tpu.concatenate %15, %17, %19, %21 in 1 : vector<3x16xbf16>, vector<3x16xbf16>, vector<3x16xbf16>, vector<3x16xbf16> -> vector<3x64xbf16>
    %c0_26 = arith.constant 0 : index
    %c0_27 = arith.constant 0 : index
    %23 = vector.load %arg2[%c0_26, %c0_27] : memref<64x16xbf16, #tpu.memory_space<vmem>>, vector<64x16xbf16>
    %cst_28 = arith.constant dense<0.000000e+00> : vector<3x16xf32>
    %24 = tpu.matmul %22, %23, %cst_28 {dimension_numbers = #tpu.dot_dimension_numbers<[1], [0], [0], [1], [0, 0, 1, 1], [], []>} : vector<3x64xbf16>, vector<64x16xbf16>, vector<3x16xf32> -> vector<3x16xf32>
    %c0_29 = arith.constant 0 : index
    %c0_30 = arith.constant 0 : index
    %25 = vector.load %arg3[%c0_29, %c0_30] : memref<1x16xf32, #tpu.memory_space<vmem>>, vector<1x16xf32>
    %26 = vector.broadcast %25 : vector<1x16xf32> to vector<3x16xf32>
    %27 = arith.addf %24, %26 : vector<3x16xf32>
    %c0_31 = arith.constant 0 : index
    %c0_32 = arith.constant 0 : index
    %28 = vector.load %arg4[%c0_31, %c0_32] : memref<1x16xf32, #tpu.memory_space<vmem>>, vector<1x16xf32>
    %c0_33 = arith.constant 0 : index
    %c0_34 = arith.constant 0 : index
    %29 = vector.load %arg5[%c0_33, %c0_34] : memref<1x16xf32, #tpu.memory_space<vmem>>, vector<1x16xf32>
    %cst_35 = arith.constant dense<0.000000e+00> : vector<16xf32>
    %30 = vector.multi_reduction <add>, %13, %cst_35 [0] : vector<3x16xf32> to vector<16xf32>
    %31 = vector.shape_cast %30 : vector<16xf32> to vector<1x16xf32>
    %cst_36 = arith.constant 0.000000e+00 : f32
    %32 = vector.broadcast %cst_36 : f32 to vector<1x16xf32>
    %33 = arith.addf %32, %31 : vector<1x16xf32>
    %cst_37 = arith.constant dense<0.000000e+00> : vector<16xf32>
    %34 = vector.multi_reduction <add>, %27, %cst_37 [0] : vector<3x16xf32> to vector<16xf32>
    %35 = vector.shape_cast %34 : vector<16xf32> to vector<1x16xf32>
    %36 = arith.addf %33, %35 : vector<1x16xf32>
    %cst_38 = arith.constant 6.000000e+00 : f32
    %37 = vector.broadcast %cst_38 : f32 to vector<1x16xf32>
    %38 = arith.divf %36, %37 : vector<1x16xf32>
    %39 = vector.broadcast %38 : vector<1x16xf32> to vector<3x16xf32>
    %40 = arith.subf %13, %39 : vector<3x16xf32>
    %41 = arith.mulf %40, %40 : vector<3x16xf32>
    %cst_39 = arith.constant dense<0.000000e+00> : vector<16xf32>
    %42 = vector.multi_reduction <add>, %41, %cst_39 [0] : vector<3x16xf32> to vector<16xf32>
    %43 = vector.shape_cast %42 : vector<16xf32> to vector<1x16xf32>
    %cst_40 = arith.constant 0.000000e+00 : f32
    %44 = vector.broadcast %cst_40 : f32 to vector<1x16xf32>
    %45 = arith.addf %44, %43 : vector<1x16xf32>
    %46 = vector.broadcast %38 : vector<1x16xf32> to vector<3x16xf32>
    %47 = arith.subf %27, %46 : vector<3x16xf32>
    %48 = arith.mulf %47, %47 : vector<3x16xf32>
    %cst_41 = arith.constant dense<0.000000e+00> : vector<16xf32>
    %49 = vector.multi_reduction <add>, %48, %cst_41 [0] : vector<3x16xf32> to vector<16xf32>
    %50 = vector.shape_cast %49 : vector<16xf32> to vector<1x16xf32>
    %51 = arith.addf %45, %50 : vector<1x16xf32>
    %cst_42 = arith.constant 6.000000e+00 : f32
    %52 = vector.broadcast %cst_42 : f32 to vector<1x16xf32>
    %53 = arith.divf %51, %52 : vector<1x16xf32>
    %cst_43 = arith.constant 9.99999974E-6 : f32
    %54 = vector.broadcast %cst_43 : f32 to vector<1x16xf32>
    %55 = arith.addf %53, %54 : vector<1x16xf32>
    %56 = math.rsqrt %55 : vector<1x16xf32>
    %57 = vector.broadcast %38 : vector<1x16xf32> to vector<3x16xf32>
    %58 = arith.subf %13, %57 : vector<3x16xf32>
    %59 = vector.broadcast %56 : vector<1x16xf32> to vector<3x16xf32>
    %60 = arith.mulf %58, %59 : vector<3x16xf32>
    %61 = vector.broadcast %28 : vector<1x16xf32> to vector<3x16xf32>
    %62 = arith.mulf %60, %61 : vector<3x16xf32>
    %63 = vector.broadcast %29 : vector<1x16xf32> to vector<3x16xf32>
    %64 = arith.addf %62, %63 : vector<3x16xf32>
    %65 = vector.broadcast %38 : vector<1x16xf32> to vector<3x16xf32>
    %66 = arith.subf %27, %65 : vector<3x16xf32>
    %67 = vector.broadcast %56 : vector<1x16xf32> to vector<3x16xf32>
    %68 = arith.mulf %66, %67 : vector<3x16xf32>
    %69 = vector.broadcast %28 : vector<1x16xf32> to vector<3x16xf32>
    %70 = arith.mulf %68, %69 : vector<3x16xf32>
    %71 = vector.broadcast %29 : vector<1x16xf32> to vector<3x16xf32>
    %72 = arith.addf %70, %71 : vector<3x16xf32>
    %cst_44 = arith.constant 0.000000e+00 : f32
    %73 = vector.broadcast %cst_44 : f32 to vector<3x16xf32>
    %74 = arith.maximumf %64, %73 : vector<3x16xf32>
    %cst_45 = arith.constant 0.000000e+00 : f32
    %75 = vector.broadcast %cst_45 : f32 to vector<3x16xf32>
    %76 = arith.maximumf %72, %75 : vector<3x16xf32>
    %c0_46 = arith.constant 0 : index
    %c0_47 = arith.constant 0 : index
    %77 = vector.load %arg6[%c0_46, %c0_47] : memref<16x32xbf16, #tpu.memory_space<vmem>>, vector<16x32xbf16>
    %78 = arith.truncf %74 : vector<3x16xf32> to vector<3x16xbf16>
    %cst_48 = arith.constant dense<0.000000e+00> : vector<3x32xf32>
    %79 = tpu.matmul %78, %77, %cst_48 {dimension_numbers = #tpu.dot_dimension_numbers<[1], [0], [0], [1], [0, 0, 1, 1], [], []>} : vector<3x16xbf16>, vector<16x32xbf16>, vector<3x32xf32> -> vector<3x32xf32>
    %c0_49 = arith.constant 0 : index
    %c0_50 = arith.constant 0 : index
    %80 = vector.load %arg7[%c0_49, %c0_50] : memref<1x32xf32, #tpu.memory_space<vmem>>, vector<1x32xf32>
    %81 = vector.broadcast %80 : vector<1x32xf32> to vector<3x32xf32>
    %82 = arith.addf %79, %81 : vector<3x32xf32>
    %c0_51 = arith.constant 0 : index
    %c0_52 = arith.constant 0 : index
    %83 = vector.load %arg6[%c0_51, %c0_52] : memref<16x32xbf16, #tpu.memory_space<vmem>>, vector<16x32xbf16>
    %84 = arith.truncf %76 : vector<3x16xf32> to vector<3x16xbf16>
    %cst_53 = arith.constant dense<0.000000e+00> : vector<3x32xf32>
    %85 = tpu.matmul %84, %83, %cst_53 {dimension_numbers = #tpu.dot_dimension_numbers<[1], [0], [0], [1], [0, 0, 1, 1], [], []>} : vector<3x16xbf16>, vector<16x32xbf16>, vector<3x32xf32> -> vector<3x32xf32>
    %c0_54 = arith.constant 0 : index
    %c0_55 = arith.constant 0 : index
    %86 = vector.load %arg7[%c0_54, %c0_55] : memref<1x32xf32, #tpu.memory_space<vmem>>, vector<1x32xf32>
    %87 = vector.broadcast %86 : vector<1x32xf32> to vector<3x32xf32>
    %88 = arith.addf %85, %87 : vector<3x32xf32>
    %c0_56 = arith.constant 0 : index
    %c0_57 = arith.constant 0 : index
    %89 = vector.load %arg8[%c0_56, %c0_57] : memref<1x32xf32, #tpu.memory_space<vmem>>, vector<1x32xf32>
    %c0_58 = arith.constant 0 : index
    %c0_59 = arith.constant 0 : index
    %90 = vector.load %arg9[%c0_58, %c0_59] : memref<1x32xf32, #tpu.memory_space<vmem>>, vector<1x32xf32>
    %cst_60 = arith.constant dense<0.000000e+00> : vector<32xf32>
    %91 = vector.multi_reduction <add>, %82, %cst_60 [0] : vector<3x32xf32> to vector<32xf32>
    %92 = vector.shape_cast %91 : vector<32xf32> to vector<1x32xf32>
    %cst_61 = arith.constant 0.000000e+00 : f32
    %93 = vector.broadcast %cst_61 : f32 to vector<1x32xf32>
    %94 = arith.addf %93, %92 : vector<1x32xf32>
    %cst_62 = arith.constant dense<0.000000e+00> : vector<32xf32>
    %95 = vector.multi_reduction <add>, %88, %cst_62 [0] : vector<3x32xf32> to vector<32xf32>
    %96 = vector.shape_cast %95 : vector<32xf32> to vector<1x32xf32>
    %97 = arith.addf %94, %96 : vector<1x32xf32>
    %cst_63 = arith.constant 6.000000e+00 : f32
    %98 = vector.broadcast %cst_63 : f32 to vector<1x32xf32>
    %99 = arith.divf %97, %98 : vector<1x32xf32>
    %100 = vector.broadcast %99 : vector<1x32xf32> to vector<3x32xf32>
    %101 = arith.subf %82, %100 : vector<3x32xf32>
    %102 = arith.mulf %101, %101 : vector<3x32xf32>
    %cst_64 = arith.constant dense<0.000000e+00> : vector<32xf32>
    %103 = vector.multi_reduction <add>, %102, %cst_64 [0] : vector<3x32xf32> to vector<32xf32>
    %104 = vector.shape_cast %103 : vector<32xf32> to vector<1x32xf32>
    %cst_65 = arith.constant 0.000000e+00 : f32
    %105 = vector.broadcast %cst_65 : f32 to vector<1x32xf32>
    %106 = arith.addf %105, %104 : vector<1x32xf32>
    %107 = vector.broadcast %99 : vector<1x32xf32> to vector<3x32xf32>
    %108 = arith.subf %88, %107 : vector<3x32xf32>
    %109 = arith.mulf %108, %108 : vector<3x32xf32>
    %cst_66 = arith.constant dense<0.000000e+00> : vector<32xf32>
    %110 = vector.multi_reduction <add>, %109, %cst_66 [0] : vector<3x32xf32> to vector<32xf32>
    %111 = vector.shape_cast %110 : vector<32xf32> to vector<1x32xf32>
    %112 = arith.addf %106, %111 : vector<1x32xf32>
    %cst_67 = arith.constant 6.000000e+00 : f32
    %113 = vector.broadcast %cst_67 : f32 to vector<1x32xf32>
    %114 = arith.divf %112, %113 : vector<1x32xf32>
    %cst_68 = arith.constant 9.99999974E-6 : f32
    %115 = vector.broadcast %cst_68 : f32 to vector<1x32xf32>
    %116 = arith.addf %114, %115 : vector<1x32xf32>
    %117 = math.rsqrt %116 : vector<1x32xf32>
    %118 = vector.broadcast %99 : vector<1x32xf32> to vector<3x32xf32>
    %119 = arith.subf %82, %118 : vector<3x32xf32>
    %120 = vector.broadcast %117 : vector<1x32xf32> to vector<3x32xf32>
    %121 = arith.mulf %119, %120 : vector<3x32xf32>
    %122 = vector.broadcast %89 : vector<1x32xf32> to vector<3x32xf32>
    %123 = arith.mulf %121, %122 : vector<3x32xf32>
    %124 = vector.broadcast %90 : vector<1x32xf32> to vector<3x32xf32>
    %125 = arith.addf %123, %124 : vector<3x32xf32>
    %126 = vector.broadcast %99 : vector<1x32xf32> to vector<3x32xf32>
    %127 = arith.subf %88, %126 : vector<3x32xf32>
    %128 = vector.broadcast %117 : vector<1x32xf32> to vector<3x32xf32>
    %129 = arith.mulf %127, %128 : vector<3x32xf32>
    %130 = vector.broadcast %89 : vector<1x32xf32> to vector<3x32xf32>
    %131 = arith.mulf %129, %130 : vector<3x32xf32>
    %132 = vector.broadcast %90 : vector<1x32xf32> to vector<3x32xf32>
    %133 = arith.addf %131, %132 : vector<3x32xf32>
    %134 = vector.extract_strided_slice %125 {offsets = [0, 0], sizes = [3, 16], strides = [1, 1]} : vector<3x32xf32> to vector<3x16xf32>
    %135 = vector.extract_strided_slice %125 {offsets = [0, 16], sizes = [3, 16], strides = [1, 1]} : vector<3x32xf32> to vector<3x16xf32>
    %136 = arith.negf %135 : vector<3x16xf32>
    %137 = math.exp %136 : vector<3x16xf32>
    %cst_69 = arith.constant 1.000000e+00 : f32
    %138 = vector.broadcast %cst_69 : f32 to vector<3x16xf32>
    %139 = arith.addf %138, %137 : vector<3x16xf32>
    %140 = arith.divf %138, %139 : vector<3x16xf32>
    %141 = arith.mulf %134, %140 : vector<3x16xf32>
    %142 = vector.extract_strided_slice %133 {offsets = [0, 0], sizes = [3, 16], strides = [1, 1]} : vector<3x32xf32> to vector<3x16xf32>
    %143 = vector.extract_strided_slice %133 {offsets = [0, 16], sizes = [3, 16], strides = [1, 1]} : vector<3x32xf32> to vector<3x16xf32>
    %144 = arith.negf %143 : vector<3x16xf32>
    %145 = math.exp %144 : vector<3x16xf32>
    %cst_70 = arith.constant 1.000000e+00 : f32
    %146 = vector.broadcast %cst_70 : f32 to vector<3x16xf32>
    %147 = arith.addf %146, %145 : vector<3x16xf32>
    %148 = arith.divf %146, %147 : vector<3x16xf32>
    %149 = arith.mulf %142, %148 : vector<3x16xf32>
    %cst_71 = arith.constant 0.000000e+00 : f32
    %150 = vector.broadcast %cst_71 : f32 to vector<15x16xf32>
    %c0_72 = arith.constant 0 : index
    %c0_73 = arith.constant 0 : index
    %c0_74 = arith.constant 0 : index
    %151 = vector.load %arg21[%c0_72, %c0_73, %c0_74] : memref<2x33x16xf32, #tpu.memory_space<vmem>>, vector<1x15x16xf32>
    %152 = vector.shape_cast %151 : vector<1x15x16xf32> to vector<15x16xf32>
    %153 = vector.shape_cast %150 : vector<15x16xf32> to vector<1x15x16xf32>
    tpu.vector_store %arg21[%c0_72, %c0_73, %c0_74], %153 {strides = array<i32>} : memref<2x33x16xf32, #tpu.memory_space<vmem>>, vector<1x15x16xf32>,
    %cst_75 = arith.constant 0.000000e+00 : f32
    %154 = vector.broadcast %cst_75 : f32 to vector<15x16xf32>
    %c0_76 = arith.constant 0 : index
    %c18 = arith.constant 18 : index
    %c0_77 = arith.constant 0 : index
    %155 = vector.load %arg21[%c0_76, %c18, %c0_77] : memref<2x33x16xf32, #tpu.memory_space<vmem>>, vector<1x15x16xf32>
    %156 = vector.shape_cast %155 : vector<1x15x16xf32> to vector<15x16xf32>
    %157 = vector.shape_cast %154 : vector<15x16xf32> to vector<1x15x16xf32>
    tpu.vector_store %arg21[%c0_76, %c18, %c0_77], %157 {strides = array<i32>} : memref<2x33x16xf32, #tpu.memory_space<vmem>>, vector<1x15x16xf32>,
    %c0_78 = arith.constant 0 : index
    %c15 = arith.constant 15 : index
    %c0_79 = arith.constant 0 : index
    %158 = vector.load %arg21[%c0_78, %c15, %c0_79] : memref<2x33x16xf32, #tpu.memory_space<vmem>>, vector<1x3x16xf32>
    %159 = vector.shape_cast %158 : vector<1x3x16xf32> to vector<3x16xf32>
    %160 = vector.shape_cast %141 : vector<3x16xf32> to vector<1x3x16xf32>
    tpu.vector_store %arg21[%c0_78, %c15, %c0_79], %160 {strides = array<i32>} : memref<2x33x16xf32, #tpu.memory_space<vmem>>, vector<1x3x16xf32>,
    %cst_80 = arith.constant 0.000000e+00 : f32
    %161 = vector.broadcast %cst_80 : f32 to vector<3x16xf32>
    %c0_i32 = arith.constant 0 : i32
    %c31_i32 = arith.constant 31 : i32
    %162 = arith.addi %c0_i32, %c31_i32 : i32
    %c1_i32 = arith.constant 1 : i32
    %163 = scf.for %arg22 = %c0_i32 to %162 step %c1_i32 iter_args(%arg23 = %161) -> (vector<3x16xf32>)  : i32 {
      %c0_158 = arith.constant 0 : index
      %332 = arith.index_cast %arg22 : i32 to index
      %c0_159 = arith.constant 0 : index
      %333 = vector.load %arg21[%c0_158, %332, %c0_159] : memref<2x33x16xf32, #tpu.memory_space<vmem>>, vector<1x3x16xf32>
      %334 = vector.shape_cast %333 : vector<1x3x16xf32> to vector<3x16xf32>
      %335 = arith.index_cast %arg22 : i32 to index
      %c0_160 = arith.constant 0 : index
      %336 = vector.load %arg10[%335, %c0_160] : memref<31x16xf32, #tpu.memory_space<vmem>>, vector<1x16xf32>
      %337 = vector.broadcast %336 : vector<1x16xf32> to vector<3x16xf32>
      %338 = arith.mulf %334, %337 : vector<3x16xf32>
      %339 = arith.addf %arg23, %338 : vector<3x16xf32>
      scf.yield %339 : vector<3x16xf32>
    }
    %c31_i32_81 = arith.constant 31 : i32
    %c0_82 = arith.constant 0 : index
    %c0_83 = arith.constant 0 : index
    %164 = vector.load %arg11[%c0_82, %c0_83] : memref<1x16xf32, #tpu.memory_space<vmem>>, vector<1x16xf32>
    %165 = vector.broadcast %164 : vector<1x16xf32> to vector<3x16xf32>
    %166 = arith.addf %163, %165 : vector<3x16xf32>
    %cst_84 = arith.constant 0.000000e+00 : f32
    %167 = vector.broadcast %cst_84 : f32 to vector<15x16xf32>
    %c1_85 = arith.constant 1 : index
    %c0_86 = arith.constant 0 : index
    %c0_87 = arith.constant 0 : index
    %168 = vector.load %arg21[%c1_85, %c0_86, %c0_87] : memref<2x33x16xf32, #tpu.memory_space<vmem>>, vector<1x15x16xf32>
    %169 = vector.shape_cast %168 : vector<1x15x16xf32> to vector<15x16xf32>
    %170 = vector.shape_cast %167 : vector<15x16xf32> to vector<1x15x16xf32>
    tpu.vector_store %arg21[%c1_85, %c0_86, %c0_87], %170 {strides = array<i32>} : memref<2x33x16xf32, #tpu.memory_space<vmem>>, vector<1x15x16xf32>,
    %cst_88 = arith.constant 0.000000e+00 : f32
    %171 = vector.broadcast %cst_88 : f32 to vector<15x16xf32>
    %c1_89 = arith.constant 1 : index
    %c18_90 = arith.constant 18 : index
    %c0_91 = arith.constant 0 : index
    %172 = vector.load %arg21[%c1_89, %c18_90, %c0_91] : memref<2x33x16xf32, #tpu.memory_space<vmem>>, vector<1x15x16xf32>
    %173 = vector.shape_cast %172 : vector<1x15x16xf32> to vector<15x16xf32>
    %174 = vector.shape_cast %171 : vector<15x16xf32> to vector<1x15x16xf32>
    tpu.vector_store %arg21[%c1_89, %c18_90, %c0_91], %174 {strides = array<i32>} : memref<2x33x16xf32, #tpu.memory_space<vmem>>, vector<1x15x16xf32>,
    %c1_92 = arith.constant 1 : index
    %c15_93 = arith.constant 15 : index
    %c0_94 = arith.constant 0 : index
    %175 = vector.load %arg21[%c1_92, %c15_93, %c0_94] : memref<2x33x16xf32, #tpu.memory_space<vmem>>, vector<1x3x16xf32>
    %176 = vector.shape_cast %175 : vector<1x3x16xf32> to vector<3x16xf32>
    %177 = vector.shape_cast %149 : vector<3x16xf32> to vector<1x3x16xf32>
    tpu.vector_store %arg21[%c1_92, %c15_93, %c0_94], %177 {strides = array<i32>} : memref<2x33x16xf32, #tpu.memory_space<vmem>>, vector<1x3x16xf32>,
    %cst_95 = arith.constant 0.000000e+00 : f32
    %178 = vector.broadcast %cst_95 : f32 to vector<3x16xf32>
    %c0_i32_96 = arith.constant 0 : i32
    %c31_i32_97 = arith.constant 31 : i32
    %179 = arith.addi %c0_i32_96, %c31_i32_97 : i32
    %c1_i32_98 = arith.constant 1 : i32
    %180 = scf.for %arg22 = %c0_i32_96 to %179 step %c1_i32_98 iter_args(%arg23 = %178) -> (vector<3x16xf32>)  : i32 {
      %c1_158 = arith.constant 1 : index
      %332 = arith.index_cast %arg22 : i32 to index
      %c0_159 = arith.constant 0 : index
      %333 = vector.load %arg21[%c1_158, %332, %c0_159] : memref<2x33x16xf32, #tpu.memory_space<vmem>>, vector<1x3x16xf32>
      %334 = vector.shape_cast %333 : vector<1x3x16xf32> to vector<3x16xf32>
      %335 = arith.index_cast %arg22 : i32 to index
      %c0_160 = arith.constant 0 : index
      %336 = vector.load %arg10[%335, %c0_160] : memref<31x16xf32, #tpu.memory_space<vmem>>, vector<1x16xf32>
      %337 = vector.broadcast %336 : vector<1x16xf32> to vector<3x16xf32>
      %338 = arith.mulf %334, %337 : vector<3x16xf32>
      %339 = arith.addf %arg23, %338 : vector<3x16xf32>
      scf.yield %339 : vector<3x16xf32>
    }
    %c31_i32_99 = arith.constant 31 : i32
    %c0_100 = arith.constant 0 : index
    %c0_101 = arith.constant 0 : index
    %181 = vector.load %arg11[%c0_100, %c0_101] : memref<1x16xf32, #tpu.memory_space<vmem>>, vector<1x16xf32>
    %182 = vector.broadcast %181 : vector<1x16xf32> to vector<3x16xf32>
    %183 = arith.addf %180, %182 : vector<3x16xf32>
    %c0_102 = arith.constant 0 : index
    %c0_103 = arith.constant 0 : index
    %184 = vector.load %arg12[%c0_102, %c0_103] : memref<1x16xf32, #tpu.memory_space<vmem>>, vector<1x16xf32>
    %c0_104 = arith.constant 0 : index
    %c0_105 = arith.constant 0 : index
    %185 = vector.load %arg13[%c0_104, %c0_105] : memref<1x16xf32, #tpu.memory_space<vmem>>, vector<1x16xf32>
    %cst_106 = arith.constant dense<0.000000e+00> : vector<16xf32>
    %186 = vector.multi_reduction <add>, %166, %cst_106 [0] : vector<3x16xf32> to vector<16xf32>
    %187 = vector.shape_cast %186 : vector<16xf32> to vector<1x16xf32>
    %cst_107 = arith.constant 0.000000e+00 : f32
    %188 = vector.broadcast %cst_107 : f32 to vector<1x16xf32>
    %189 = arith.addf %188, %187 : vector<1x16xf32>
    %cst_108 = arith.constant dense<0.000000e+00> : vector<16xf32>
    %190 = vector.multi_reduction <add>, %183, %cst_108 [0] : vector<3x16xf32> to vector<16xf32>
    %191 = vector.shape_cast %190 : vector<16xf32> to vector<1x16xf32>
    %192 = arith.addf %189, %191 : vector<1x16xf32>
    %cst_109 = arith.constant 6.000000e+00 : f32
    %193 = vector.broadcast %cst_109 : f32 to vector<1x16xf32>
    %194 = arith.divf %192, %193 : vector<1x16xf32>
    %195 = vector.broadcast %194 : vector<1x16xf32> to vector<3x16xf32>
    %196 = arith.subf %166, %195 : vector<3x16xf32>
    %197 = arith.mulf %196, %196 : vector<3x16xf32>
    %cst_110 = arith.constant dense<0.000000e+00> : vector<16xf32>
    %198 = vector.multi_reduction <add>, %197, %cst_110 [0] : vector<3x16xf32> to vector<16xf32>
    %199 = vector.shape_cast %198 : vector<16xf32> to vector<1x16xf32>
    %cst_111 = arith.constant 0.000000e+00 : f32
    %200 = vector.broadcast %cst_111 : f32 to vector<1x16xf32>
    %201 = arith.addf %200, %199 : vector<1x16xf32>
    %202 = vector.broadcast %194 : vector<1x16xf32> to vector<3x16xf32>
    %203 = arith.subf %183, %202 : vector<3x16xf32>
    %204 = arith.mulf %203, %203 : vector<3x16xf32>
    %cst_112 = arith.constant dense<0.000000e+00> : vector<16xf32>
    %205 = vector.multi_reduction <add>, %204, %cst_112 [0] : vector<3x16xf32> to vector<16xf32>
    %206 = vector.shape_cast %205 : vector<16xf32> to vector<1x16xf32>
    %207 = arith.addf %201, %206 : vector<1x16xf32>
    %cst_113 = arith.constant 6.000000e+00 : f32
    %208 = vector.broadcast %cst_113 : f32 to vector<1x16xf32>
    %209 = arith.divf %207, %208 : vector<1x16xf32>
    %cst_114 = arith.constant 9.99999974E-6 : f32
    %210 = vector.broadcast %cst_114 : f32 to vector<1x16xf32>
    %211 = arith.addf %209, %210 : vector<1x16xf32>
    %212 = math.rsqrt %211 : vector<1x16xf32>
    %213 = vector.broadcast %194 : vector<1x16xf32> to vector<3x16xf32>
    %214 = arith.subf %166, %213 : vector<3x16xf32>
    %215 = vector.broadcast %212 : vector<1x16xf32> to vector<3x16xf32>
    %216 = arith.mulf %214, %215 : vector<3x16xf32>
    %217 = vector.broadcast %184 : vector<1x16xf32> to vector<3x16xf32>
    %218 = arith.mulf %216, %217 : vector<3x16xf32>
    %219 = vector.broadcast %185 : vector<1x16xf32> to vector<3x16xf32>
    %220 = arith.addf %218, %219 : vector<3x16xf32>
    %221 = vector.broadcast %194 : vector<1x16xf32> to vector<3x16xf32>
    %222 = arith.subf %183, %221 : vector<3x16xf32>
    %223 = vector.broadcast %212 : vector<1x16xf32> to vector<3x16xf32>
    %224 = arith.mulf %222, %223 : vector<3x16xf32>
    %225 = vector.broadcast %184 : vector<1x16xf32> to vector<3x16xf32>
    %226 = arith.mulf %224, %225 : vector<3x16xf32>
    %227 = vector.broadcast %185 : vector<1x16xf32> to vector<3x16xf32>
    %228 = arith.addf %226, %227 : vector<3x16xf32>
    %229 = arith.negf %220 : vector<3x16xf32>
    %230 = math.exp %229 : vector<3x16xf32>
    %cst_115 = arith.constant 1.000000e+00 : f32
    %231 = vector.broadcast %cst_115 : f32 to vector<3x16xf32>
    %232 = arith.addf %231, %230 : vector<3x16xf32>
    %233 = arith.divf %231, %232 : vector<3x16xf32>
    %234 = arith.mulf %220, %233 : vector<3x16xf32>
    %235 = arith.negf %228 : vector<3x16xf32>
    %236 = math.exp %235 : vector<3x16xf32>
    %cst_116 = arith.constant 1.000000e+00 : f32
    %237 = vector.broadcast %cst_116 : f32 to vector<3x16xf32>
    %238 = arith.addf %237, %236 : vector<3x16xf32>
    %239 = arith.divf %237, %238 : vector<3x16xf32>
    %240 = arith.mulf %228, %239 : vector<3x16xf32>
    %c0_117 = arith.constant 0 : index
    %c0_118 = arith.constant 0 : index
    %241 = vector.load %arg14[%c0_117, %c0_118] : memref<16x32xbf16, #tpu.memory_space<vmem>>, vector<16x32xbf16>
    %242 = arith.truncf %234 : vector<3x16xf32> to vector<3x16xbf16>
    %cst_119 = arith.constant dense<0.000000e+00> : vector<3x32xf32>
    %243 = tpu.matmul %242, %241, %cst_119 {dimension_numbers = #tpu.dot_dimension_numbers<[1], [0], [0], [1], [0, 0, 1, 1], [], []>} : vector<3x16xbf16>, vector<16x32xbf16>, vector<3x32xf32> -> vector<3x32xf32>
    %c0_120 = arith.constant 0 : index
    %c0_121 = arith.constant 0 : index
    %244 = vector.load %arg15[%c0_120, %c0_121] : memref<1x32xf32, #tpu.memory_space<vmem>>, vector<1x32xf32>
    %245 = vector.broadcast %244 : vector<1x32xf32> to vector<3x32xf32>
    %246 = arith.addf %243, %245 : vector<3x32xf32>
    %c0_122 = arith.constant 0 : index
    %c0_123 = arith.constant 0 : index
    %247 = vector.load %arg14[%c0_122, %c0_123] : memref<16x32xbf16, #tpu.memory_space<vmem>>, vector<16x32xbf16>
    %248 = arith.truncf %240 : vector<3x16xf32> to vector<3x16xbf16>
    %cst_124 = arith.constant dense<0.000000e+00> : vector<3x32xf32>
    %249 = tpu.matmul %248, %247, %cst_124 {dimension_numbers = #tpu.dot_dimension_numbers<[1], [0], [0], [1], [0, 0, 1, 1], [], []>} : vector<3x16xbf16>, vector<16x32xbf16>, vector<3x32xf32> -> vector<3x32xf32>
    %c0_125 = arith.constant 0 : index
    %c0_126 = arith.constant 0 : index
    %250 = vector.load %arg15[%c0_125, %c0_126] : memref<1x32xf32, #tpu.memory_space<vmem>>, vector<1x32xf32>
    %251 = vector.broadcast %250 : vector<1x32xf32> to vector<3x32xf32>
    %252 = arith.addf %249, %251 : vector<3x32xf32>
    %c0_127 = arith.constant 0 : index
    %c0_128 = arith.constant 0 : index
    %253 = vector.load %arg16[%c0_127, %c0_128] : memref<1x32xf32, #tpu.memory_space<vmem>>, vector<1x32xf32>
    %c0_129 = arith.constant 0 : index
    %c0_130 = arith.constant 0 : index
    %254 = vector.load %arg17[%c0_129, %c0_130] : memref<1x32xf32, #tpu.memory_space<vmem>>, vector<1x32xf32>
    %cst_131 = arith.constant dense<0.000000e+00> : vector<32xf32>
    %255 = vector.multi_reduction <add>, %246, %cst_131 [0] : vector<3x32xf32> to vector<32xf32>
    %256 = vector.shape_cast %255 : vector<32xf32> to vector<1x32xf32>
    %cst_132 = arith.constant 0.000000e+00 : f32
    %257 = vector.broadcast %cst_132 : f32 to vector<1x32xf32>
    %258 = arith.addf %257, %256 : vector<1x32xf32>
    %cst_133 = arith.constant dense<0.000000e+00> : vector<32xf32>
    %259 = vector.multi_reduction <add>, %252, %cst_133 [0] : vector<3x32xf32> to vector<32xf32>
    %260 = vector.shape_cast %259 : vector<32xf32> to vector<1x32xf32>
    %261 = arith.addf %258, %260 : vector<1x32xf32>
    %cst_134 = arith.constant 6.000000e+00 : f32
    %262 = vector.broadcast %cst_134 : f32 to vector<1x32xf32>
    %263 = arith.divf %261, %262 : vector<1x32xf32>
    %264 = vector.broadcast %263 : vector<1x32xf32> to vector<3x32xf32>
    %265 = arith.subf %246, %264 : vector<3x32xf32>
    %266 = arith.mulf %265, %265 : vector<3x32xf32>
    %cst_135 = arith.constant dense<0.000000e+00> : vector<32xf32>
    %267 = vector.multi_reduction <add>, %266, %cst_135 [0] : vector<3x32xf32> to vector<32xf32>
    %268 = vector.shape_cast %267 : vector<32xf32> to vector<1x32xf32>
    %cst_136 = arith.constant 0.000000e+00 : f32
    %269 = vector.broadcast %cst_136 : f32 to vector<1x32xf32>
    %270 = arith.addf %269, %268 : vector<1x32xf32>
    %271 = vector.broadcast %263 : vector<1x32xf32> to vector<3x32xf32>
    %272 = arith.subf %252, %271 : vector<3x32xf32>
    %273 = arith.mulf %272, %272 : vector<3x32xf32>
    %cst_137 = arith.constant dense<0.000000e+00> : vector<32xf32>
    %274 = vector.multi_reduction <add>, %273, %cst_137 [0] : vector<3x32xf32> to vector<32xf32>
    %275 = vector.shape_cast %274 : vector<32xf32> to vector<1x32xf32>
    %276 = arith.addf %270, %275 : vector<1x32xf32>
    %cst_138 = arith.constant 6.000000e+00 : f32
    %277 = vector.broadcast %cst_138 : f32 to vector<1x32xf32>
    %278 = arith.divf %276, %277 : vector<1x32xf32>
    %cst_139 = arith.constant 9.99999974E-6 : f32
    %279 = vector.broadcast %cst_139 : f32 to vector<1x32xf32>
    %280 = arith.addf %278, %279 : vector<1x32xf32>
    %281 = math.rsqrt %280 : vector<1x32xf32>
    %282 = vector.broadcast %263 : vector<1x32xf32> to vector<3x32xf32>
    %283 = arith.subf %246, %282 : vector<3x32xf32>
    %284 = vector.broadcast %281 : vector<1x32xf32> to vector<3x32xf32>
    %285 = arith.mulf %283, %284 : vector<3x32xf32>
    %286 = vector.broadcast %253 : vector<1x32xf32> to vector<3x32xf32>
    %287 = arith.mulf %285, %286 : vector<3x32xf32>
    %288 = vector.broadcast %254 : vector<1x32xf32> to vector<3x32xf32>
    %289 = arith.addf %287, %288 : vector<3x32xf32>
    %290 = vector.broadcast %263 : vector<1x32xf32> to vector<3x32xf32>
    %291 = arith.subf %252, %290 : vector<3x32xf32>
    %292 = vector.broadcast %281 : vector<1x32xf32> to vector<3x32xf32>
    %293 = arith.mulf %291, %292 : vector<3x32xf32>
    %294 = vector.broadcast %253 : vector<1x32xf32> to vector<3x32xf32>
    %295 = arith.mulf %293, %294 : vector<3x32xf32>
    %296 = vector.broadcast %254 : vector<1x32xf32> to vector<3x32xf32>
    %297 = arith.addf %295, %296 : vector<3x32xf32>
    %298 = arith.negf %289 : vector<3x32xf32>
    %299 = math.exp %298 : vector<3x32xf32>
    %cst_140 = arith.constant 1.000000e+00 : f32
    %300 = vector.broadcast %cst_140 : f32 to vector<3x32xf32>
    %301 = arith.addf %300, %299 : vector<3x32xf32>
    %302 = arith.divf %300, %301 : vector<3x32xf32>
    %303 = arith.mulf %289, %302 : vector<3x32xf32>
    %304 = arith.negf %297 : vector<3x32xf32>
    %305 = math.exp %304 : vector<3x32xf32>
    %cst_141 = arith.constant 1.000000e+00 : f32
    %306 = vector.broadcast %cst_141 : f32 to vector<3x32xf32>
    %307 = arith.addf %306, %305 : vector<3x32xf32>
    %308 = arith.divf %306, %307 : vector<3x32xf32>
    %309 = arith.mulf %297, %308 : vector<3x32xf32>
    %c0_142 = arith.constant 0 : index
    %c0_143 = arith.constant 0 : index
    %310 = vector.load %arg18[%c0_142, %c0_143] : memref<16x32xbf16, #tpu.memory_space<vmem>>, vector<16x32xbf16>
    %311 = arith.truncf %74 : vector<3x16xf32> to vector<3x16xbf16>
    %cst_144 = arith.constant dense<0.000000e+00> : vector<3x32xf32>
    %312 = tpu.matmul %311, %310, %cst_144 {dimension_numbers = #tpu.dot_dimension_numbers<[1], [0], [0], [1], [0, 0, 1, 1], [], []>} : vector<3x16xbf16>, vector<16x32xbf16>, vector<3x32xf32> -> vector<3x32xf32>
    %313 = arith.addf %303, %312 : vector<3x32xf32>
    %c0_145 = arith.constant 0 : index
    %c0_146 = arith.constant 0 : index
    %314 = vector.load %arg19[%c0_145, %c0_146] : memref<1x32xf32, #tpu.memory_space<vmem>>, vector<1x32xf32>
    %315 = vector.broadcast %314 : vector<1x32xf32> to vector<3x32xf32>
    %316 = arith.addf %313, %315 : vector<3x32xf32>
    %c0_147 = arith.constant 0 : index
    %c0_148 = arith.constant 0 : index
    %317 = vector.load %arg18[%c0_147, %c0_148] : memref<16x32xbf16, #tpu.memory_space<vmem>>, vector<16x32xbf16>
    %318 = arith.truncf %76 : vector<3x16xf32> to vector<3x16xbf16>
    %cst_149 = arith.constant dense<0.000000e+00> : vector<3x32xf32>
    %319 = tpu.matmul %318, %317, %cst_149 {dimension_numbers = #tpu.dot_dimension_numbers<[1], [0], [0], [1], [0, 0, 1, 1], [], []>} : vector<3x16xbf16>, vector<16x32xbf16>, vector<3x32xf32> -> vector<3x32xf32>
    %320 = arith.addf %309, %319 : vector<3x32xf32>
    %c0_150 = arith.constant 0 : index
    %c0_151 = arith.constant 0 : index
    %321 = vector.load %arg19[%c0_150, %c0_151] : memref<1x32xf32, #tpu.memory_space<vmem>>, vector<1x32xf32>
    %322 = vector.broadcast %321 : vector<1x32xf32> to vector<3x32xf32>
    %323 = arith.addf %320, %322 : vector<3x32xf32>
    %324 = arith.truncf %316 : vector<3x32xf32> to vector<3x32xbf16>
    %c0_152 = arith.constant 0 : index
    %c0_153 = arith.constant 0 : index
    %c0_154 = arith.constant 0 : index
    %325 = vector.load %arg20[%c0_152, %c0_153, %c0_154] : memref<2x3x32xbf16, #tpu.memory_space<vmem>>, vector<1x3x32xbf16>
    %326 = vector.shape_cast %325 : vector<1x3x32xbf16> to vector<3x32xbf16>
    %327 = vector.shape_cast %324 : vector<3x32xbf16> to vector<1x3x32xbf16>
    tpu.vector_store %arg20[%c0_152, %c0_153, %c0_154], %327 {strides = array<i32>} : memref<2x3x32xbf16, #tpu.memory_space<vmem>>, vector<1x3x32xbf16>,
    %328 = arith.truncf %323 : vector<3x32xf32> to vector<3x32xbf16>
    %c1_155 = arith.constant 1 : index
    %c0_156 = arith.constant 0 : index
    %c0_157 = arith.constant 0 : index
    %329 = vector.load %arg20[%c1_155, %c0_156, %c0_157] : memref<2x3x32xbf16, #tpu.memory_space<vmem>>, vector<1x3x32xbf16>
    %330 = vector.shape_cast %329 : vector<1x3x32xbf16> to vector<3x32xbf16>
    %331 = vector.shape_cast %328 : vector<3x32xbf16> to vector<1x3x32xbf16>
    tpu.vector_store %arg20[%c1_155, %c0_156, %c0_157], %331 {strides = array<i32>} : memref<2x3x32xbf16, #tpu.memory_space<vmem>>, vector<1x3x32xbf16>,
    return
  }
}

module attributes {stable_mosaic.version = 11 : i64} {
  func.func @_decoder_kernel(%arg0: memref<2x3x32xbf16, #tpu.memory_space<vmem>>, %arg1: memref<2x3x32xbf16, #tpu.memory_space<vmem>>, %arg2: memref<32x64xbf16, #tpu.memory_space<vmem>>, %arg3: memref<1x64xf32, #tpu.memory_space<vmem>>, %arg4: memref<1x64xf32, #tpu.memory_space<vmem>>, %arg5: memref<1x64xf32, #tpu.memory_space<vmem>>, %arg6: memref<31x32xf32, #tpu.memory_space<vmem>>, %arg7: memref<1x32xf32, #tpu.memory_space<vmem>>, %arg8: memref<1x32xf32, #tpu.memory_space<vmem>>, %arg9: memref<1x32xf32, #tpu.memory_space<vmem>>, %arg10: memref<32x16xbf16, #tpu.memory_space<vmem>>, %arg11: memref<1x16xf32, #tpu.memory_space<vmem>>, %arg12: memref<1x16xf32, #tpu.memory_space<vmem>>, %arg13: memref<1x16xf32, #tpu.memory_space<vmem>>, %arg14: memref<32x16xbf16, #tpu.memory_space<vmem>>, %arg15: memref<1x16xf32, #tpu.memory_space<vmem>>, %arg16: memref<32x32xbf16, #tpu.memory_space<vmem>>, %arg17: memref<1x32xf32, #tpu.memory_space<vmem>>, %arg18: memref<1x32xf32, #tpu.memory_space<vmem>>, %arg19: memref<1x32xf32, #tpu.memory_space<vmem>>, %arg20: memref<2x4x32xbf16, #tpu.memory_space<vmem>>, %arg21: memref<2x33x32xf32, #tpu.memory_space<vmem>>, %arg22: memref<2x5x16xf32, #tpu.memory_space<vmem>>) attributes {dimension_semantics = [], scalar_prefetch = 0 : i64, scratch_operands = 2 : i64, tpu.core_type = #tpu.core_type<tc>} {
    %c0 = arith.constant 0 : index
    %c0_0 = arith.constant 0 : index
    %c0_1 = arith.constant 0 : index
    %0 = vector.load %arg0[%c0, %c0_0, %c0_1] : memref<2x3x32xbf16, #tpu.memory_space<vmem>>, vector<1x3x32xbf16>
    %1 = vector.shape_cast %0 : vector<1x3x32xbf16> to vector<3x32xbf16>
    %2 = arith.extf %1 : vector<3x32xbf16> to vector<3x32xf32>
    %c0_2 = arith.constant 0 : index
    %c0_3 = arith.constant 0 : index
    %c0_4 = arith.constant 0 : index
    %3 = vector.load %arg1[%c0_2, %c0_3, %c0_4] : memref<2x3x32xbf16, #tpu.memory_space<vmem>>, vector<1x3x32xbf16>
    %4 = vector.shape_cast %3 : vector<1x3x32xbf16> to vector<3x32xbf16>
    %5 = arith.extf %4 : vector<3x32xbf16> to vector<3x32xf32>
    %6 = arith.addf %2, %5 : vector<3x32xf32>
    %c1 = arith.constant 1 : index
    %c0_5 = arith.constant 0 : index
    %c0_6 = arith.constant 0 : index
    %7 = vector.load %arg0[%c1, %c0_5, %c0_6] : memref<2x3x32xbf16, #tpu.memory_space<vmem>>, vector<1x3x32xbf16>
    %8 = vector.shape_cast %7 : vector<1x3x32xbf16> to vector<3x32xbf16>
    %9 = arith.extf %8 : vector<3x32xbf16> to vector<3x32xf32>
    %c1_7 = arith.constant 1 : index
    %c0_8 = arith.constant 0 : index
    %c0_9 = arith.constant 0 : index
    %10 = vector.load %arg1[%c1_7, %c0_8, %c0_9] : memref<2x3x32xbf16, #tpu.memory_space<vmem>>, vector<1x3x32xbf16>
    %11 = vector.shape_cast %10 : vector<1x3x32xbf16> to vector<3x32xbf16>
    %12 = arith.extf %11 : vector<3x32xbf16> to vector<3x32xf32>
    %13 = arith.addf %9, %12 : vector<3x32xf32>
    %c0_10 = arith.constant 0 : index
    %c0_11 = arith.constant 0 : index
    %14 = vector.load %arg2[%c0_10, %c0_11] : memref<32x64xbf16, #tpu.memory_space<vmem>>, vector<32x64xbf16>
    %15 = arith.truncf %6 : vector<3x32xf32> to vector<3x32xbf16>
    %cst = arith.constant dense<0.000000e+00> : vector<3x64xf32>
    %16 = tpu.matmul %15, %14, %cst {dimension_numbers = #tpu.dot_dimension_numbers<[1], [0], [0], [1], [0, 0, 1, 1], [], []>} : vector<3x32xbf16>, vector<32x64xbf16>, vector<3x64xf32> -> vector<3x64xf32>
    %c0_12 = arith.constant 0 : index
    %c0_13 = arith.constant 0 : index
    %17 = vector.load %arg3[%c0_12, %c0_13] : memref<1x64xf32, #tpu.memory_space<vmem>>, vector<1x64xf32>
    %18 = vector.broadcast %17 : vector<1x64xf32> to vector<3x64xf32>
    %19 = arith.addf %16, %18 : vector<3x64xf32>
    %c0_14 = arith.constant 0 : index
    %c0_15 = arith.constant 0 : index
    %20 = vector.load %arg2[%c0_14, %c0_15] : memref<32x64xbf16, #tpu.memory_space<vmem>>, vector<32x64xbf16>
    %21 = arith.truncf %13 : vector<3x32xf32> to vector<3x32xbf16>
    %cst_16 = arith.constant dense<0.000000e+00> : vector<3x64xf32>
    %22 = tpu.matmul %21, %20, %cst_16 {dimension_numbers = #tpu.dot_dimension_numbers<[1], [0], [0], [1], [0, 0, 1, 1], [], []>} : vector<3x32xbf16>, vector<32x64xbf16>, vector<3x64xf32> -> vector<3x64xf32>
    %c0_17 = arith.constant 0 : index
    %c0_18 = arith.constant 0 : index
    %23 = vector.load %arg3[%c0_17, %c0_18] : memref<1x64xf32, #tpu.memory_space<vmem>>, vector<1x64xf32>
    %24 = vector.broadcast %23 : vector<1x64xf32> to vector<3x64xf32>
    %25 = arith.addf %22, %24 : vector<3x64xf32>
    %c0_19 = arith.constant 0 : index
    %c0_20 = arith.constant 0 : index
    %26 = vector.load %arg4[%c0_19, %c0_20] : memref<1x64xf32, #tpu.memory_space<vmem>>, vector<1x64xf32>
    %c0_21 = arith.constant 0 : index
    %c0_22 = arith.constant 0 : index
    %27 = vector.load %arg5[%c0_21, %c0_22] : memref<1x64xf32, #tpu.memory_space<vmem>>, vector<1x64xf32>
    %cst_23 = arith.constant dense<0.000000e+00> : vector<64xf32>
    %28 = vector.multi_reduction <add>, %19, %cst_23 [0] : vector<3x64xf32> to vector<64xf32>
    %29 = vector.shape_cast %28 : vector<64xf32> to vector<1x64xf32>
    %cst_24 = arith.constant 0.000000e+00 : f32
    %30 = vector.broadcast %cst_24 : f32 to vector<1x64xf32>
    %31 = arith.addf %30, %29 : vector<1x64xf32>
    %cst_25 = arith.constant dense<0.000000e+00> : vector<64xf32>
    %32 = vector.multi_reduction <add>, %25, %cst_25 [0] : vector<3x64xf32> to vector<64xf32>
    %33 = vector.shape_cast %32 : vector<64xf32> to vector<1x64xf32>
    %34 = arith.addf %31, %33 : vector<1x64xf32>
    %cst_26 = arith.constant 6.000000e+00 : f32
    %35 = vector.broadcast %cst_26 : f32 to vector<1x64xf32>
    %36 = arith.divf %34, %35 : vector<1x64xf32>
    %37 = vector.broadcast %36 : vector<1x64xf32> to vector<3x64xf32>
    %38 = arith.subf %19, %37 : vector<3x64xf32>
    %39 = arith.mulf %38, %38 : vector<3x64xf32>
    %cst_27 = arith.constant dense<0.000000e+00> : vector<64xf32>
    %40 = vector.multi_reduction <add>, %39, %cst_27 [0] : vector<3x64xf32> to vector<64xf32>
    %41 = vector.shape_cast %40 : vector<64xf32> to vector<1x64xf32>
    %cst_28 = arith.constant 0.000000e+00 : f32
    %42 = vector.broadcast %cst_28 : f32 to vector<1x64xf32>
    %43 = arith.addf %42, %41 : vector<1x64xf32>
    %44 = vector.broadcast %36 : vector<1x64xf32> to vector<3x64xf32>
    %45 = arith.subf %25, %44 : vector<3x64xf32>
    %46 = arith.mulf %45, %45 : vector<3x64xf32>
    %cst_29 = arith.constant dense<0.000000e+00> : vector<64xf32>
    %47 = vector.multi_reduction <add>, %46, %cst_29 [0] : vector<3x64xf32> to vector<64xf32>
    %48 = vector.shape_cast %47 : vector<64xf32> to vector<1x64xf32>
    %49 = arith.addf %43, %48 : vector<1x64xf32>
    %cst_30 = arith.constant 6.000000e+00 : f32
    %50 = vector.broadcast %cst_30 : f32 to vector<1x64xf32>
    %51 = arith.divf %49, %50 : vector<1x64xf32>
    %cst_31 = arith.constant 9.99999974E-6 : f32
    %52 = vector.broadcast %cst_31 : f32 to vector<1x64xf32>
    %53 = arith.addf %51, %52 : vector<1x64xf32>
    %54 = math.rsqrt %53 : vector<1x64xf32>
    %55 = vector.broadcast %36 : vector<1x64xf32> to vector<3x64xf32>
    %56 = arith.subf %19, %55 : vector<3x64xf32>
    %57 = vector.broadcast %54 : vector<1x64xf32> to vector<3x64xf32>
    %58 = arith.mulf %56, %57 : vector<3x64xf32>
    %59 = vector.broadcast %26 : vector<1x64xf32> to vector<3x64xf32>
    %60 = arith.mulf %58, %59 : vector<3x64xf32>
    %61 = vector.broadcast %27 : vector<1x64xf32> to vector<3x64xf32>
    %62 = arith.addf %60, %61 : vector<3x64xf32>
    %63 = vector.broadcast %36 : vector<1x64xf32> to vector<3x64xf32>
    %64 = arith.subf %25, %63 : vector<3x64xf32>
    %65 = vector.broadcast %54 : vector<1x64xf32> to vector<3x64xf32>
    %66 = arith.mulf %64, %65 : vector<3x64xf32>
    %67 = vector.broadcast %26 : vector<1x64xf32> to vector<3x64xf32>
    %68 = arith.mulf %66, %67 : vector<3x64xf32>
    %69 = vector.broadcast %27 : vector<1x64xf32> to vector<3x64xf32>
    %70 = arith.addf %68, %69 : vector<3x64xf32>
    %71 = vector.extract_strided_slice %62 {offsets = [0, 0], sizes = [3, 32], strides = [1, 1]} : vector<3x64xf32> to vector<3x32xf32>
    %72 = vector.extract_strided_slice %62 {offsets = [0, 32], sizes = [3, 32], strides = [1, 1]} : vector<3x64xf32> to vector<3x32xf32>
    %73 = arith.negf %72 : vector<3x32xf32>
    %74 = math.exp %73 : vector<3x32xf32>
    %cst_32 = arith.constant 1.000000e+00 : f32
    %75 = vector.broadcast %cst_32 : f32 to vector<3x32xf32>
    %76 = arith.addf %75, %74 : vector<3x32xf32>
    %77 = arith.divf %75, %76 : vector<3x32xf32>
    %78 = arith.mulf %71, %77 : vector<3x32xf32>
    %79 = vector.extract_strided_slice %70 {offsets = [0, 0], sizes = [3, 32], strides = [1, 1]} : vector<3x64xf32> to vector<3x32xf32>
    %80 = vector.extract_strided_slice %70 {offsets = [0, 32], sizes = [3, 32], strides = [1, 1]} : vector<3x64xf32> to vector<3x32xf32>
    %81 = arith.negf %80 : vector<3x32xf32>
    %82 = math.exp %81 : vector<3x32xf32>
    %cst_33 = arith.constant 1.000000e+00 : f32
    %83 = vector.broadcast %cst_33 : f32 to vector<3x32xf32>
    %84 = arith.addf %83, %82 : vector<3x32xf32>
    %85 = arith.divf %83, %84 : vector<3x32xf32>
    %86 = arith.mulf %79, %85 : vector<3x32xf32>
    %cst_34 = arith.constant 0.000000e+00 : f32
    %87 = vector.broadcast %cst_34 : f32 to vector<15x32xf32>
    %c0_35 = arith.constant 0 : index
    %c0_36 = arith.constant 0 : index
    %c0_37 = arith.constant 0 : index
    %88 = vector.load %arg21[%c0_35, %c0_36, %c0_37] : memref<2x33x32xf32, #tpu.memory_space<vmem>>, vector<1x15x32xf32>
    %89 = vector.shape_cast %88 : vector<1x15x32xf32> to vector<15x32xf32>
    %90 = vector.shape_cast %87 : vector<15x32xf32> to vector<1x15x32xf32>
    tpu.vector_store %arg21[%c0_35, %c0_36, %c0_37], %90 {strides = array<i32>} : memref<2x33x32xf32, #tpu.memory_space<vmem>>, vector<1x15x32xf32>,
    %cst_38 = arith.constant 0.000000e+00 : f32
    %91 = vector.broadcast %cst_38 : f32 to vector<15x32xf32>
    %c0_39 = arith.constant 0 : index
    %c18 = arith.constant 18 : index
    %c0_40 = arith.constant 0 : index
    %92 = vector.load %arg21[%c0_39, %c18, %c0_40] : memref<2x33x32xf32, #tpu.memory_space<vmem>>, vector<1x15x32xf32>
    %93 = vector.shape_cast %92 : vector<1x15x32xf32> to vector<15x32xf32>
    %94 = vector.shape_cast %91 : vector<15x32xf32> to vector<1x15x32xf32>
    tpu.vector_store %arg21[%c0_39, %c18, %c0_40], %94 {strides = array<i32>} : memref<2x33x32xf32, #tpu.memory_space<vmem>>, vector<1x15x32xf32>,
    %c0_41 = arith.constant 0 : index
    %c15 = arith.constant 15 : index
    %c0_42 = arith.constant 0 : index
    %95 = vector.load %arg21[%c0_41, %c15, %c0_42] : memref<2x33x32xf32, #tpu.memory_space<vmem>>, vector<1x3x32xf32>
    %96 = vector.shape_cast %95 : vector<1x3x32xf32> to vector<3x32xf32>
    %97 = vector.shape_cast %78 : vector<3x32xf32> to vector<1x3x32xf32>
    tpu.vector_store %arg21[%c0_41, %c15, %c0_42], %97 {strides = array<i32>} : memref<2x33x32xf32, #tpu.memory_space<vmem>>, vector<1x3x32xf32>,
    %cst_43 = arith.constant 0.000000e+00 : f32
    %98 = vector.broadcast %cst_43 : f32 to vector<3x32xf32>
    %c0_i32 = arith.constant 0 : i32
    %c31_i32 = arith.constant 31 : i32
    %99 = arith.addi %c0_i32, %c31_i32 : i32
    %c1_i32 = arith.constant 1 : i32
    %100 = scf.for %arg23 = %c0_i32 to %99 step %c1_i32 iter_args(%arg24 = %98) -> (vector<3x32xf32>)  : i32 {
      %c0_185 = arith.constant 0 : index
      %376 = arith.index_cast %arg23 : i32 to index
      %c0_186 = arith.constant 0 : index
      %377 = vector.load %arg21[%c0_185, %376, %c0_186] : memref<2x33x32xf32, #tpu.memory_space<vmem>>, vector<1x3x32xf32>
      %378 = vector.shape_cast %377 : vector<1x3x32xf32> to vector<3x32xf32>
      %379 = arith.index_cast %arg23 : i32 to index
      %c0_187 = arith.constant 0 : index
      %380 = vector.load %arg6[%379, %c0_187] : memref<31x32xf32, #tpu.memory_space<vmem>>, vector<1x32xf32>
      %381 = vector.broadcast %380 : vector<1x32xf32> to vector<3x32xf32>
      %382 = arith.mulf %378, %381 : vector<3x32xf32>
      %383 = arith.addf %arg24, %382 : vector<3x32xf32>
      scf.yield %383 : vector<3x32xf32>
    }
    %c31_i32_44 = arith.constant 31 : i32
    %c0_45 = arith.constant 0 : index
    %c0_46 = arith.constant 0 : index
    %101 = vector.load %arg7[%c0_45, %c0_46] : memref<1x32xf32, #tpu.memory_space<vmem>>, vector<1x32xf32>
    %102 = vector.broadcast %101 : vector<1x32xf32> to vector<3x32xf32>
    %103 = arith.addf %100, %102 : vector<3x32xf32>
    %cst_47 = arith.constant 0.000000e+00 : f32
    %104 = vector.broadcast %cst_47 : f32 to vector<15x32xf32>
    %c1_48 = arith.constant 1 : index
    %c0_49 = arith.constant 0 : index
    %c0_50 = arith.constant 0 : index
    %105 = vector.load %arg21[%c1_48, %c0_49, %c0_50] : memref<2x33x32xf32, #tpu.memory_space<vmem>>, vector<1x15x32xf32>
    %106 = vector.shape_cast %105 : vector<1x15x32xf32> to vector<15x32xf32>
    %107 = vector.shape_cast %104 : vector<15x32xf32> to vector<1x15x32xf32>
    tpu.vector_store %arg21[%c1_48, %c0_49, %c0_50], %107 {strides = array<i32>} : memref<2x33x32xf32, #tpu.memory_space<vmem>>, vector<1x15x32xf32>,
    %cst_51 = arith.constant 0.000000e+00 : f32
    %108 = vector.broadcast %cst_51 : f32 to vector<15x32xf32>
    %c1_52 = arith.constant 1 : index
    %c18_53 = arith.constant 18 : index
    %c0_54 = arith.constant 0 : index
    %109 = vector.load %arg21[%c1_52, %c18_53, %c0_54] : memref<2x33x32xf32, #tpu.memory_space<vmem>>, vector<1x15x32xf32>
    %110 = vector.shape_cast %109 : vector<1x15x32xf32> to vector<15x32xf32>
    %111 = vector.shape_cast %108 : vector<15x32xf32> to vector<1x15x32xf32>
    tpu.vector_store %arg21[%c1_52, %c18_53, %c0_54], %111 {strides = array<i32>} : memref<2x33x32xf32, #tpu.memory_space<vmem>>, vector<1x15x32xf32>,
    %c1_55 = arith.constant 1 : index
    %c15_56 = arith.constant 15 : index
    %c0_57 = arith.constant 0 : index
    %112 = vector.load %arg21[%c1_55, %c15_56, %c0_57] : memref<2x33x32xf32, #tpu.memory_space<vmem>>, vector<1x3x32xf32>
    %113 = vector.shape_cast %112 : vector<1x3x32xf32> to vector<3x32xf32>
    %114 = vector.shape_cast %86 : vector<3x32xf32> to vector<1x3x32xf32>
    tpu.vector_store %arg21[%c1_55, %c15_56, %c0_57], %114 {strides = array<i32>} : memref<2x33x32xf32, #tpu.memory_space<vmem>>, vector<1x3x32xf32>,
    %cst_58 = arith.constant 0.000000e+00 : f32
    %115 = vector.broadcast %cst_58 : f32 to vector<3x32xf32>
    %c0_i32_59 = arith.constant 0 : i32
    %c31_i32_60 = arith.constant 31 : i32
    %116 = arith.addi %c0_i32_59, %c31_i32_60 : i32
    %c1_i32_61 = arith.constant 1 : i32
    %117 = scf.for %arg23 = %c0_i32_59 to %116 step %c1_i32_61 iter_args(%arg24 = %115) -> (vector<3x32xf32>)  : i32 {
      %c1_185 = arith.constant 1 : index
      %376 = arith.index_cast %arg23 : i32 to index
      %c0_186 = arith.constant 0 : index
      %377 = vector.load %arg21[%c1_185, %376, %c0_186] : memref<2x33x32xf32, #tpu.memory_space<vmem>>, vector<1x3x32xf32>
      %378 = vector.shape_cast %377 : vector<1x3x32xf32> to vector<3x32xf32>
      %379 = arith.index_cast %arg23 : i32 to index
      %c0_187 = arith.constant 0 : index
      %380 = vector.load %arg6[%379, %c0_187] : memref<31x32xf32, #tpu.memory_space<vmem>>, vector<1x32xf32>
      %381 = vector.broadcast %380 : vector<1x32xf32> to vector<3x32xf32>
      %382 = arith.mulf %378, %381 : vector<3x32xf32>
      %383 = arith.addf %arg24, %382 : vector<3x32xf32>
      scf.yield %383 : vector<3x32xf32>
    }
    %c31_i32_62 = arith.constant 31 : i32
    %c0_63 = arith.constant 0 : index
    %c0_64 = arith.constant 0 : index
    %118 = vector.load %arg7[%c0_63, %c0_64] : memref<1x32xf32, #tpu.memory_space<vmem>>, vector<1x32xf32>
    %119 = vector.broadcast %118 : vector<1x32xf32> to vector<3x32xf32>
    %120 = arith.addf %117, %119 : vector<3x32xf32>
    %c0_65 = arith.constant 0 : index
    %c0_66 = arith.constant 0 : index
    %121 = vector.load %arg8[%c0_65, %c0_66] : memref<1x32xf32, #tpu.memory_space<vmem>>, vector<1x32xf32>
    %c0_67 = arith.constant 0 : index
    %c0_68 = arith.constant 0 : index
    %122 = vector.load %arg9[%c0_67, %c0_68] : memref<1x32xf32, #tpu.memory_space<vmem>>, vector<1x32xf32>
    %cst_69 = arith.constant dense<0.000000e+00> : vector<32xf32>
    %123 = vector.multi_reduction <add>, %103, %cst_69 [0] : vector<3x32xf32> to vector<32xf32>
    %124 = vector.shape_cast %123 : vector<32xf32> to vector<1x32xf32>
    %cst_70 = arith.constant 0.000000e+00 : f32
    %125 = vector.broadcast %cst_70 : f32 to vector<1x32xf32>
    %126 = arith.addf %125, %124 : vector<1x32xf32>
    %cst_71 = arith.constant dense<0.000000e+00> : vector<32xf32>
    %127 = vector.multi_reduction <add>, %120, %cst_71 [0] : vector<3x32xf32> to vector<32xf32>
    %128 = vector.shape_cast %127 : vector<32xf32> to vector<1x32xf32>
    %129 = arith.addf %126, %128 : vector<1x32xf32>
    %cst_72 = arith.constant 6.000000e+00 : f32
    %130 = vector.broadcast %cst_72 : f32 to vector<1x32xf32>
    %131 = arith.divf %129, %130 : vector<1x32xf32>
    %132 = vector.broadcast %131 : vector<1x32xf32> to vector<3x32xf32>
    %133 = arith.subf %103, %132 : vector<3x32xf32>
    %134 = arith.mulf %133, %133 : vector<3x32xf32>
    %cst_73 = arith.constant dense<0.000000e+00> : vector<32xf32>
    %135 = vector.multi_reduction <add>, %134, %cst_73 [0] : vector<3x32xf32> to vector<32xf32>
    %136 = vector.shape_cast %135 : vector<32xf32> to vector<1x32xf32>
    %cst_74 = arith.constant 0.000000e+00 : f32
    %137 = vector.broadcast %cst_74 : f32 to vector<1x32xf32>
    %138 = arith.addf %137, %136 : vector<1x32xf32>
    %139 = vector.broadcast %131 : vector<1x32xf32> to vector<3x32xf32>
    %140 = arith.subf %120, %139 : vector<3x32xf32>
    %141 = arith.mulf %140, %140 : vector<3x32xf32>
    %cst_75 = arith.constant dense<0.000000e+00> : vector<32xf32>
    %142 = vector.multi_reduction <add>, %141, %cst_75 [0] : vector<3x32xf32> to vector<32xf32>
    %143 = vector.shape_cast %142 : vector<32xf32> to vector<1x32xf32>
    %144 = arith.addf %138, %143 : vector<1x32xf32>
    %cst_76 = arith.constant 6.000000e+00 : f32
    %145 = vector.broadcast %cst_76 : f32 to vector<1x32xf32>
    %146 = arith.divf %144, %145 : vector<1x32xf32>
    %cst_77 = arith.constant 9.99999974E-6 : f32
    %147 = vector.broadcast %cst_77 : f32 to vector<1x32xf32>
    %148 = arith.addf %146, %147 : vector<1x32xf32>
    %149 = math.rsqrt %148 : vector<1x32xf32>
    %150 = vector.broadcast %131 : vector<1x32xf32> to vector<3x32xf32>
    %151 = arith.subf %103, %150 : vector<3x32xf32>
    %152 = vector.broadcast %149 : vector<1x32xf32> to vector<3x32xf32>
    %153 = arith.mulf %151, %152 : vector<3x32xf32>
    %154 = vector.broadcast %121 : vector<1x32xf32> to vector<3x32xf32>
    %155 = arith.mulf %153, %154 : vector<3x32xf32>
    %156 = vector.broadcast %122 : vector<1x32xf32> to vector<3x32xf32>
    %157 = arith.addf %155, %156 : vector<3x32xf32>
    %158 = vector.broadcast %131 : vector<1x32xf32> to vector<3x32xf32>
    %159 = arith.subf %120, %158 : vector<3x32xf32>
    %160 = vector.broadcast %149 : vector<1x32xf32> to vector<3x32xf32>
    %161 = arith.mulf %159, %160 : vector<3x32xf32>
    %162 = vector.broadcast %121 : vector<1x32xf32> to vector<3x32xf32>
    %163 = arith.mulf %161, %162 : vector<3x32xf32>
    %164 = vector.broadcast %122 : vector<1x32xf32> to vector<3x32xf32>
    %165 = arith.addf %163, %164 : vector<3x32xf32>
    %166 = arith.negf %157 : vector<3x32xf32>
    %167 = math.exp %166 : vector<3x32xf32>
    %cst_78 = arith.constant 1.000000e+00 : f32
    %168 = vector.broadcast %cst_78 : f32 to vector<3x32xf32>
    %169 = arith.addf %168, %167 : vector<3x32xf32>
    %170 = arith.divf %168, %169 : vector<3x32xf32>
    %171 = arith.mulf %157, %170 : vector<3x32xf32>
    %172 = arith.negf %165 : vector<3x32xf32>
    %173 = math.exp %172 : vector<3x32xf32>
    %cst_79 = arith.constant 1.000000e+00 : f32
    %174 = vector.broadcast %cst_79 : f32 to vector<3x32xf32>
    %175 = arith.addf %174, %173 : vector<3x32xf32>
    %176 = arith.divf %174, %175 : vector<3x32xf32>
    %177 = arith.mulf %165, %176 : vector<3x32xf32>
    %c0_80 = arith.constant 0 : index
    %c0_81 = arith.constant 0 : index
    %178 = vector.load %arg10[%c0_80, %c0_81] : memref<32x16xbf16, #tpu.memory_space<vmem>>, vector<32x16xbf16>
    %179 = arith.truncf %171 : vector<3x32xf32> to vector<3x32xbf16>
    %cst_82 = arith.constant dense<0.000000e+00> : vector<3x16xf32>
    %180 = tpu.matmul %179, %178, %cst_82 {dimension_numbers = #tpu.dot_dimension_numbers<[1], [0], [0], [1], [0, 0, 1, 1], [], []>} : vector<3x32xbf16>, vector<32x16xbf16>, vector<3x16xf32> -> vector<3x16xf32>
    %c0_83 = arith.constant 0 : index
    %c0_84 = arith.constant 0 : index
    %181 = vector.load %arg11[%c0_83, %c0_84] : memref<1x16xf32, #tpu.memory_space<vmem>>, vector<1x16xf32>
    %182 = vector.broadcast %181 : vector<1x16xf32> to vector<3x16xf32>
    %183 = arith.addf %180, %182 : vector<3x16xf32>
    %c0_85 = arith.constant 0 : index
    %c0_86 = arith.constant 0 : index
    %184 = vector.load %arg10[%c0_85, %c0_86] : memref<32x16xbf16, #tpu.memory_space<vmem>>, vector<32x16xbf16>
    %185 = arith.truncf %177 : vector<3x32xf32> to vector<3x32xbf16>
    %cst_87 = arith.constant dense<0.000000e+00> : vector<3x16xf32>
    %186 = tpu.matmul %185, %184, %cst_87 {dimension_numbers = #tpu.dot_dimension_numbers<[1], [0], [0], [1], [0, 0, 1, 1], [], []>} : vector<3x32xbf16>, vector<32x16xbf16>, vector<3x16xf32> -> vector<3x16xf32>
    %c0_88 = arith.constant 0 : index
    %c0_89 = arith.constant 0 : index
    %187 = vector.load %arg11[%c0_88, %c0_89] : memref<1x16xf32, #tpu.memory_space<vmem>>, vector<1x16xf32>
    %188 = vector.broadcast %187 : vector<1x16xf32> to vector<3x16xf32>
    %189 = arith.addf %186, %188 : vector<3x16xf32>
    %c0_90 = arith.constant 0 : index
    %c0_91 = arith.constant 0 : index
    %190 = vector.load %arg12[%c0_90, %c0_91] : memref<1x16xf32, #tpu.memory_space<vmem>>, vector<1x16xf32>
    %c0_92 = arith.constant 0 : index
    %c0_93 = arith.constant 0 : index
    %191 = vector.load %arg13[%c0_92, %c0_93] : memref<1x16xf32, #tpu.memory_space<vmem>>, vector<1x16xf32>
    %cst_94 = arith.constant dense<0.000000e+00> : vector<16xf32>
    %192 = vector.multi_reduction <add>, %183, %cst_94 [0] : vector<3x16xf32> to vector<16xf32>
    %193 = vector.shape_cast %192 : vector<16xf32> to vector<1x16xf32>
    %cst_95 = arith.constant 0.000000e+00 : f32
    %194 = vector.broadcast %cst_95 : f32 to vector<1x16xf32>
    %195 = arith.addf %194, %193 : vector<1x16xf32>
    %cst_96 = arith.constant dense<0.000000e+00> : vector<16xf32>
    %196 = vector.multi_reduction <add>, %189, %cst_96 [0] : vector<3x16xf32> to vector<16xf32>
    %197 = vector.shape_cast %196 : vector<16xf32> to vector<1x16xf32>
    %198 = arith.addf %195, %197 : vector<1x16xf32>
    %cst_97 = arith.constant 6.000000e+00 : f32
    %199 = vector.broadcast %cst_97 : f32 to vector<1x16xf32>
    %200 = arith.divf %198, %199 : vector<1x16xf32>
    %201 = vector.broadcast %200 : vector<1x16xf32> to vector<3x16xf32>
    %202 = arith.subf %183, %201 : vector<3x16xf32>
    %203 = arith.mulf %202, %202 : vector<3x16xf32>
    %cst_98 = arith.constant dense<0.000000e+00> : vector<16xf32>
    %204 = vector.multi_reduction <add>, %203, %cst_98 [0] : vector<3x16xf32> to vector<16xf32>
    %205 = vector.shape_cast %204 : vector<16xf32> to vector<1x16xf32>
    %cst_99 = arith.constant 0.000000e+00 : f32
    %206 = vector.broadcast %cst_99 : f32 to vector<1x16xf32>
    %207 = arith.addf %206, %205 : vector<1x16xf32>
    %208 = vector.broadcast %200 : vector<1x16xf32> to vector<3x16xf32>
    %209 = arith.subf %189, %208 : vector<3x16xf32>
    %210 = arith.mulf %209, %209 : vector<3x16xf32>
    %cst_100 = arith.constant dense<0.000000e+00> : vector<16xf32>
    %211 = vector.multi_reduction <add>, %210, %cst_100 [0] : vector<3x16xf32> to vector<16xf32>
    %212 = vector.shape_cast %211 : vector<16xf32> to vector<1x16xf32>
    %213 = arith.addf %207, %212 : vector<1x16xf32>
    %cst_101 = arith.constant 6.000000e+00 : f32
    %214 = vector.broadcast %cst_101 : f32 to vector<1x16xf32>
    %215 = arith.divf %213, %214 : vector<1x16xf32>
    %cst_102 = arith.constant 9.99999974E-6 : f32
    %216 = vector.broadcast %cst_102 : f32 to vector<1x16xf32>
    %217 = arith.addf %215, %216 : vector<1x16xf32>
    %218 = math.rsqrt %217 : vector<1x16xf32>
    %219 = vector.broadcast %200 : vector<1x16xf32> to vector<3x16xf32>
    %220 = arith.subf %183, %219 : vector<3x16xf32>
    %221 = vector.broadcast %218 : vector<1x16xf32> to vector<3x16xf32>
    %222 = arith.mulf %220, %221 : vector<3x16xf32>
    %223 = vector.broadcast %190 : vector<1x16xf32> to vector<3x16xf32>
    %224 = arith.mulf %222, %223 : vector<3x16xf32>
    %225 = vector.broadcast %191 : vector<1x16xf32> to vector<3x16xf32>
    %226 = arith.addf %224, %225 : vector<3x16xf32>
    %227 = vector.broadcast %200 : vector<1x16xf32> to vector<3x16xf32>
    %228 = arith.subf %189, %227 : vector<3x16xf32>
    %229 = vector.broadcast %218 : vector<1x16xf32> to vector<3x16xf32>
    %230 = arith.mulf %228, %229 : vector<3x16xf32>
    %231 = vector.broadcast %190 : vector<1x16xf32> to vector<3x16xf32>
    %232 = arith.mulf %230, %231 : vector<3x16xf32>
    %233 = vector.broadcast %191 : vector<1x16xf32> to vector<3x16xf32>
    %234 = arith.addf %232, %233 : vector<3x16xf32>
    %235 = arith.negf %226 : vector<3x16xf32>
    %236 = math.exp %235 : vector<3x16xf32>
    %cst_103 = arith.constant 1.000000e+00 : f32
    %237 = vector.broadcast %cst_103 : f32 to vector<3x16xf32>
    %238 = arith.addf %237, %236 : vector<3x16xf32>
    %239 = arith.divf %237, %238 : vector<3x16xf32>
    %240 = arith.mulf %226, %239 : vector<3x16xf32>
    %241 = arith.negf %234 : vector<3x16xf32>
    %242 = math.exp %241 : vector<3x16xf32>
    %cst_104 = arith.constant 1.000000e+00 : f32
    %243 = vector.broadcast %cst_104 : f32 to vector<3x16xf32>
    %244 = arith.addf %243, %242 : vector<3x16xf32>
    %245 = arith.divf %243, %244 : vector<3x16xf32>
    %246 = arith.mulf %234, %245 : vector<3x16xf32>
    %c0_105 = arith.constant 0 : index
    %c0_106 = arith.constant 0 : index
    %247 = vector.load %arg14[%c0_105, %c0_106] : memref<32x16xbf16, #tpu.memory_space<vmem>>, vector<32x16xbf16>
    %248 = arith.truncf %6 : vector<3x32xf32> to vector<3x32xbf16>
    %cst_107 = arith.constant dense<0.000000e+00> : vector<3x16xf32>
    %249 = tpu.matmul %248, %247, %cst_107 {dimension_numbers = #tpu.dot_dimension_numbers<[1], [0], [0], [1], [0, 0, 1, 1], [], []>} : vector<3x32xbf16>, vector<32x16xbf16>, vector<3x16xf32> -> vector<3x16xf32>
    %250 = arith.addf %240, %249 : vector<3x16xf32>
    %c0_108 = arith.constant 0 : index
    %c0_109 = arith.constant 0 : index
    %251 = vector.load %arg15[%c0_108, %c0_109] : memref<1x16xf32, #tpu.memory_space<vmem>>, vector<1x16xf32>
    %252 = vector.broadcast %251 : vector<1x16xf32> to vector<3x16xf32>
    %253 = arith.addf %250, %252 : vector<3x16xf32>
    %c0_110 = arith.constant 0 : index
    %c0_111 = arith.constant 0 : index
    %254 = vector.load %arg14[%c0_110, %c0_111] : memref<32x16xbf16, #tpu.memory_space<vmem>>, vector<32x16xbf16>
    %255 = arith.truncf %13 : vector<3x32xf32> to vector<3x32xbf16>
    %cst_112 = arith.constant dense<0.000000e+00> : vector<3x16xf32>
    %256 = tpu.matmul %255, %254, %cst_112 {dimension_numbers = #tpu.dot_dimension_numbers<[1], [0], [0], [1], [0, 0, 1, 1], [], []>} : vector<3x32xbf16>, vector<32x16xbf16>, vector<3x16xf32> -> vector<3x16xf32>
    %257 = arith.addf %246, %256 : vector<3x16xf32>
    %c0_113 = arith.constant 0 : index
    %c0_114 = arith.constant 0 : index
    %258 = vector.load %arg15[%c0_113, %c0_114] : memref<1x16xf32, #tpu.memory_space<vmem>>, vector<1x16xf32>
    %259 = vector.broadcast %258 : vector<1x16xf32> to vector<3x16xf32>
    %260 = arith.addf %257, %259 : vector<3x16xf32>
    %cst_115 = arith.constant 0.000000e+00 : f32
    %261 = vector.broadcast %cst_115 : f32 to vector<1x16xf32>
    %c0_116 = arith.constant 0 : index
    %c0_117 = arith.constant 0 : index
    %c0_118 = arith.constant 0 : index
    %262 = vector.load %arg22[%c0_116, %c0_117, %c0_118] : memref<2x5x16xf32, #tpu.memory_space<vmem>>, vector<1x1x16xf32>
    %263 = vector.shape_cast %262 : vector<1x1x16xf32> to vector<1x16xf32>
    %264 = vector.shape_cast %261 : vector<1x16xf32> to vector<1x1x16xf32>
    tpu.vector_store %arg22[%c0_116, %c0_117, %c0_118], %264 {strides = array<i32>} : memref<2x5x16xf32, #tpu.memory_space<vmem>>, vector<1x1x16xf32>,
    %cst_119 = arith.constant 0.000000e+00 : f32
    %265 = vector.broadcast %cst_119 : f32 to vector<1x16xf32>
    %c0_120 = arith.constant 0 : index
    %c4 = arith.constant 4 : index
    %c0_121 = arith.constant 0 : index
    %266 = vector.load %arg22[%c0_120, %c4, %c0_121] : memref<2x5x16xf32, #tpu.memory_space<vmem>>, vector<1x1x16xf32>
    %267 = vector.shape_cast %266 : vector<1x1x16xf32> to vector<1x16xf32>
    %268 = vector.shape_cast %265 : vector<1x16xf32> to vector<1x1x16xf32>
    tpu.vector_store %arg22[%c0_120, %c4, %c0_121], %268 {strides = array<i32>} : memref<2x5x16xf32, #tpu.memory_space<vmem>>, vector<1x1x16xf32>,
    %c0_122 = arith.constant 0 : index
    %c1_123 = arith.constant 1 : index
    %c0_124 = arith.constant 0 : index
    %269 = vector.load %arg22[%c0_122, %c1_123, %c0_124] : memref<2x5x16xf32, #tpu.memory_space<vmem>>, vector<1x3x16xf32>
    %270 = vector.shape_cast %269 : vector<1x3x16xf32> to vector<3x16xf32>
    %271 = vector.shape_cast %253 : vector<3x16xf32> to vector<1x3x16xf32>
    tpu.vector_store %arg22[%c0_122, %c1_123, %c0_124], %271 {strides = array<i32>} : memref<2x5x16xf32, #tpu.memory_space<vmem>>, vector<1x3x16xf32>,
    %c0_125 = arith.constant 0 : index
    %c1_126 = arith.constant 1 : index
    %c0_127 = arith.constant 0 : index
    %272 = vector.load %arg22[%c0_125, %c1_126, %c0_127] : memref<2x5x16xf32, #tpu.memory_space<vmem>>, vector<1x4x16xf32>
    %273 = vector.shape_cast %272 : vector<1x4x16xf32> to vector<4x16xf32>
    %c0_128 = arith.constant 0 : index
    %c0_129 = arith.constant 0 : index
    %c0_130 = arith.constant 0 : index
    %274 = vector.load %arg22[%c0_128, %c0_129, %c0_130] : memref<2x5x16xf32, #tpu.memory_space<vmem>>, vector<1x4x16xf32>
    %275 = vector.shape_cast %274 : vector<1x4x16xf32> to vector<4x16xf32>
    %276 = tpu.concatenate %273, %275 in 1 : vector<4x16xf32>, vector<4x16xf32> -> vector<4x32xf32>
    %c0_131 = arith.constant 0 : index
    %c0_132 = arith.constant 0 : index
    %277 = vector.load %arg16[%c0_131, %c0_132] : memref<32x32xbf16, #tpu.memory_space<vmem>>, vector<32x32xbf16>
    %278 = arith.truncf %276 : vector<4x32xf32> to vector<4x32xbf16>
    %cst_133 = arith.constant dense<0.000000e+00> : vector<4x32xf32>
    %279 = tpu.matmul %278, %277, %cst_133 {dimension_numbers = #tpu.dot_dimension_numbers<[1], [0], [0], [1], [0, 0, 1, 1], [], []>} : vector<4x32xbf16>, vector<32x32xbf16>, vector<4x32xf32> -> vector<4x32xf32>
    %c0_134 = arith.constant 0 : index
    %c0_135 = arith.constant 0 : index
    %280 = vector.load %arg17[%c0_134, %c0_135] : memref<1x32xf32, #tpu.memory_space<vmem>>, vector<1x32xf32>
    %281 = vector.broadcast %280 : vector<1x32xf32> to vector<4x32xf32>
    %282 = arith.addf %279, %281 : vector<4x32xf32>
    %cst_136 = arith.constant 0.000000e+00 : f32
    %283 = vector.broadcast %cst_136 : f32 to vector<1x16xf32>
    %c1_137 = arith.constant 1 : index
    %c0_138 = arith.constant 0 : index
    %c0_139 = arith.constant 0 : index
    %284 = vector.load %arg22[%c1_137, %c0_138, %c0_139] : memref<2x5x16xf32, #tpu.memory_space<vmem>>, vector<1x1x16xf32>
    %285 = vector.shape_cast %284 : vector<1x1x16xf32> to vector<1x16xf32>
    %286 = vector.shape_cast %283 : vector<1x16xf32> to vector<1x1x16xf32>
    tpu.vector_store %arg22[%c1_137, %c0_138, %c0_139], %286 {strides = array<i32>} : memref<2x5x16xf32, #tpu.memory_space<vmem>>, vector<1x1x16xf32>,
    %cst_140 = arith.constant 0.000000e+00 : f32
    %287 = vector.broadcast %cst_140 : f32 to vector<1x16xf32>
    %c1_141 = arith.constant 1 : index
    %c4_142 = arith.constant 4 : index
    %c0_143 = arith.constant 0 : index
    %288 = vector.load %arg22[%c1_141, %c4_142, %c0_143] : memref<2x5x16xf32, #tpu.memory_space<vmem>>, vector<1x1x16xf32>
    %289 = vector.shape_cast %288 : vector<1x1x16xf32> to vector<1x16xf32>
    %290 = vector.shape_cast %287 : vector<1x16xf32> to vector<1x1x16xf32>
    tpu.vector_store %arg22[%c1_141, %c4_142, %c0_143], %290 {strides = array<i32>} : memref<2x5x16xf32, #tpu.memory_space<vmem>>, vector<1x1x16xf32>,
    %c1_144 = arith.constant 1 : index
    %c1_145 = arith.constant 1 : index
    %c0_146 = arith.constant 0 : index
    %291 = vector.load %arg22[%c1_144, %c1_145, %c0_146] : memref<2x5x16xf32, #tpu.memory_space<vmem>>, vector<1x3x16xf32>
    %292 = vector.shape_cast %291 : vector<1x3x16xf32> to vector<3x16xf32>
    %293 = vector.shape_cast %260 : vector<3x16xf32> to vector<1x3x16xf32>
    tpu.vector_store %arg22[%c1_144, %c1_145, %c0_146], %293 {strides = array<i32>} : memref<2x5x16xf32, #tpu.memory_space<vmem>>, vector<1x3x16xf32>,
    %c1_147 = arith.constant 1 : index
    %c1_148 = arith.constant 1 : index
    %c0_149 = arith.constant 0 : index
    %294 = vector.load %arg22[%c1_147, %c1_148, %c0_149] : memref<2x5x16xf32, #tpu.memory_space<vmem>>, vector<1x4x16xf32>
    %295 = vector.shape_cast %294 : vector<1x4x16xf32> to vector<4x16xf32>
    %c1_150 = arith.constant 1 : index
    %c0_151 = arith.constant 0 : index
    %c0_152 = arith.constant 0 : index
    %296 = vector.load %arg22[%c1_150, %c0_151, %c0_152] : memref<2x5x16xf32, #tpu.memory_space<vmem>>, vector<1x4x16xf32>
    %297 = vector.shape_cast %296 : vector<1x4x16xf32> to vector<4x16xf32>
    %298 = tpu.concatenate %295, %297 in 1 : vector<4x16xf32>, vector<4x16xf32> -> vector<4x32xf32>
    %c0_153 = arith.constant 0 : index
    %c0_154 = arith.constant 0 : index
    %299 = vector.load %arg16[%c0_153, %c0_154] : memref<32x32xbf16, #tpu.memory_space<vmem>>, vector<32x32xbf16>
    %300 = arith.truncf %298 : vector<4x32xf32> to vector<4x32xbf16>
    %cst_155 = arith.constant dense<0.000000e+00> : vector<4x32xf32>
    %301 = tpu.matmul %300, %299, %cst_155 {dimension_numbers = #tpu.dot_dimension_numbers<[1], [0], [0], [1], [0, 0, 1, 1], [], []>} : vector<4x32xbf16>, vector<32x32xbf16>, vector<4x32xf32> -> vector<4x32xf32>
    %c0_156 = arith.constant 0 : index
    %c0_157 = arith.constant 0 : index
    %302 = vector.load %arg17[%c0_156, %c0_157] : memref<1x32xf32, #tpu.memory_space<vmem>>, vector<1x32xf32>
    %303 = vector.broadcast %302 : vector<1x32xf32> to vector<4x32xf32>
    %304 = arith.addf %301, %303 : vector<4x32xf32>
    %cst_158 = arith.constant dense<0.000000e+00> : vector<32xf32>
    %305 = vector.multi_reduction <add>, %282, %cst_158 [0] : vector<4x32xf32> to vector<32xf32>
    %306 = vector.shape_cast %305 : vector<32xf32> to vector<1x32xf32>
    %cst_159 = arith.constant 0.000000e+00 : f32
    %307 = vector.broadcast %cst_159 : f32 to vector<1x32xf32>
    %308 = arith.addf %307, %306 : vector<1x32xf32>
    %cst_160 = arith.constant dense<0.000000e+00> : vector<32xf32>
    %309 = vector.multi_reduction <add>, %304, %cst_160 [0] : vector<4x32xf32> to vector<32xf32>
    %310 = vector.shape_cast %309 : vector<32xf32> to vector<1x32xf32>
    %311 = arith.addf %308, %310 : vector<1x32xf32>
    %312 = vector.extract_strided_slice %311 {offsets = [0, 0], sizes = [1, 16], strides = [1, 1]} : vector<1x32xf32> to vector<1x16xf32>
    %cst_161 = arith.constant 0.000000e+00 : f32
    %313 = vector.broadcast %cst_161 : f32 to vector<1x16xf32>
    %314 = arith.addf %313, %312 : vector<1x16xf32>
    %315 = vector.extract_strided_slice %311 {offsets = [0, 16], sizes = [1, 16], strides = [1, 1]} : vector<1x32xf32> to vector<1x16xf32>
    %316 = arith.addf %314, %315 : vector<1x16xf32>
    %cst_162 = arith.constant 1.600000e+01 : f32
    %317 = vector.broadcast %cst_162 : f32 to vector<1x16xf32>
    %318 = arith.divf %316, %317 : vector<1x16xf32>
    %319 = tpu.concatenate %318, %318 in 1 : vector<1x16xf32>, vector<1x16xf32> -> vector<1x32xf32>
    %320 = vector.broadcast %319 : vector<1x32xf32> to vector<4x32xf32>
    %321 = arith.subf %282, %320 : vector<4x32xf32>
    %322 = arith.mulf %321, %321 : vector<4x32xf32>
    %cst_163 = arith.constant dense<0.000000e+00> : vector<32xf32>
    %323 = vector.multi_reduction <add>, %322, %cst_163 [0] : vector<4x32xf32> to vector<32xf32>
    %324 = vector.shape_cast %323 : vector<32xf32> to vector<1x32xf32>
    %cst_164 = arith.constant 0.000000e+00 : f32
    %325 = vector.broadcast %cst_164 : f32 to vector<1x32xf32>
    %326 = arith.addf %325, %324 : vector<1x32xf32>
    %327 = vector.broadcast %319 : vector<1x32xf32> to vector<4x32xf32>
    %328 = arith.subf %304, %327 : vector<4x32xf32>
    %329 = arith.mulf %328, %328 : vector<4x32xf32>
    %cst_165 = arith.constant dense<0.000000e+00> : vector<32xf32>
    %330 = vector.multi_reduction <add>, %329, %cst_165 [0] : vector<4x32xf32> to vector<32xf32>
    %331 = vector.shape_cast %330 : vector<32xf32> to vector<1x32xf32>
    %332 = arith.addf %326, %331 : vector<1x32xf32>
    %333 = vector.extract_strided_slice %332 {offsets = [0, 0], sizes = [1, 16], strides = [1, 1]} : vector<1x32xf32> to vector<1x16xf32>
    %cst_166 = arith.constant 0.000000e+00 : f32
    %334 = vector.broadcast %cst_166 : f32 to vector<1x16xf32>
    %335 = arith.addf %334, %333 : vector<1x16xf32>
    %336 = vector.extract_strided_slice %332 {offsets = [0, 16], sizes = [1, 16], strides = [1, 1]} : vector<1x32xf32> to vector<1x16xf32>
    %337 = arith.addf %335, %336 : vector<1x16xf32>
    %cst_167 = arith.constant 1.600000e+01 : f32
    %338 = vector.broadcast %cst_167 : f32 to vector<1x16xf32>
    %339 = arith.divf %337, %338 : vector<1x16xf32>
    %cst_168 = arith.constant 9.99999974E-6 : f32
    %340 = vector.broadcast %cst_168 : f32 to vector<1x16xf32>
    %341 = arith.addf %339, %340 : vector<1x16xf32>
    %342 = math.rsqrt %341 : vector<1x16xf32>
    %343 = tpu.concatenate %342, %342 in 1 : vector<1x16xf32>, vector<1x16xf32> -> vector<1x32xf32>
    %344 = vector.broadcast %319 : vector<1x32xf32> to vector<4x32xf32>
    %345 = arith.subf %282, %344 : vector<4x32xf32>
    %346 = vector.broadcast %343 : vector<1x32xf32> to vector<4x32xf32>
    %347 = arith.mulf %345, %346 : vector<4x32xf32>
    %c0_169 = arith.constant 0 : index
    %c0_170 = arith.constant 0 : index
    %348 = vector.load %arg18[%c0_169, %c0_170] : memref<1x32xf32, #tpu.memory_space<vmem>>, vector<1x32xf32>
    %349 = vector.broadcast %348 : vector<1x32xf32> to vector<4x32xf32>
    %350 = arith.mulf %347, %349 : vector<4x32xf32>
    %c0_171 = arith.constant 0 : index
    %c0_172 = arith.constant 0 : index
    %351 = vector.load %arg19[%c0_171, %c0_172] : memref<1x32xf32, #tpu.memory_space<vmem>>, vector<1x32xf32>
    %352 = vector.broadcast %351 : vector<1x32xf32> to vector<4x32xf32>
    %353 = arith.addf %350, %352 : vector<4x32xf32>
    %cst_173 = arith.constant 0.000000e+00 : f32
    %354 = vector.broadcast %cst_173 : f32 to vector<4x32xf32>
    %355 = arith.maximumf %353, %354 : vector<4x32xf32>
    %356 = arith.truncf %355 : vector<4x32xf32> to vector<4x32xbf16>
    %c0_174 = arith.constant 0 : index
    %c0_175 = arith.constant 0 : index
    %c0_176 = arith.constant 0 : index
    %357 = vector.load %arg20[%c0_174, %c0_175, %c0_176] : memref<2x4x32xbf16, #tpu.memory_space<vmem>>, vector<1x4x32xbf16>
    %358 = vector.shape_cast %357 : vector<1x4x32xbf16> to vector<4x32xbf16>
    %359 = vector.shape_cast %356 : vector<4x32xbf16> to vector<1x4x32xbf16>
    tpu.vector_store %arg20[%c0_174, %c0_175, %c0_176], %359 {strides = array<i32>} : memref<2x4x32xbf16, #tpu.memory_space<vmem>>, vector<1x4x32xbf16>,
    %360 = vector.broadcast %319 : vector<1x32xf32> to vector<4x32xf32>
    %361 = arith.subf %304, %360 : vector<4x32xf32>
    %362 = vector.broadcast %343 : vector<1x32xf32> to vector<4x32xf32>
    %363 = arith.mulf %361, %362 : vector<4x32xf32>
    %c0_177 = arith.constant 0 : index
    %c0_178 = arith.constant 0 : index
    %364 = vector.load %arg18[%c0_177, %c0_178] : memref<1x32xf32, #tpu.memory_space<vmem>>, vector<1x32xf32>
    %365 = vector.broadcast %364 : vector<1x32xf32> to vector<4x32xf32>
    %366 = arith.mulf %363, %365 : vector<4x32xf32>
    %c0_179 = arith.constant 0 : index
    %c0_180 = arith.constant 0 : index
    %367 = vector.load %arg19[%c0_179, %c0_180] : memref<1x32xf32, #tpu.memory_space<vmem>>, vector<1x32xf32>
    %368 = vector.broadcast %367 : vector<1x32xf32> to vector<4x32xf32>
    %369 = arith.addf %366, %368 : vector<4x32xf32>
    %cst_181 = arith.constant 0.000000e+00 : f32
    %370 = vector.broadcast %cst_181 : f32 to vector<4x32xf32>
    %371 = arith.maximumf %369, %370 : vector<4x32xf32>
    %372 = arith.truncf %371 : vector<4x32xf32> to vector<4x32xbf16>
    %c1_182 = arith.constant 1 : index
    %c0_183 = arith.constant 0 : index
    %c0_184 = arith.constant 0 : index
    %373 = vector.load %arg20[%c1_182, %c0_183, %c0_184] : memref<2x4x32xbf16, #tpu.memory_space<vmem>>, vector<1x4x32xbf16>
    %374 = vector.shape_cast %373 : vector<1x4x32xbf16> to vector<4x32xbf16>
    %375 = vector.shape_cast %372 : vector<4x32xbf16> to vector<1x4x32xbf16>
    tpu.vector_store %arg20[%c1_182, %c0_183, %c0_184], %375 {strides = array<i32>} : memref<2x4x32xbf16, #tpu.memory_space<vmem>>, vector<1x4x32xbf16>,
    return
  }
}

module attributes {stable_mosaic.version = 11 : i64} {
  func.func @_maskgate_outconv_kernel(%arg0: memref<2x18x8xbf16, #tpu.memory_space<vmem>>, %arg1: memref<2x18x8xbf16, #tpu.memory_space<vmem>>, %arg2: memref<8x8xbf16, #tpu.memory_space<vmem>>, %arg3: memref<1x8xf32, #tpu.memory_space<vmem>>, %arg4: memref<8x8xbf16, #tpu.memory_space<vmem>>, %arg5: memref<1x8xf32, #tpu.memory_space<vmem>>, %arg6: memref<8x8xbf16, #tpu.memory_space<vmem>>, %arg7: memref<1x8xf32, #tpu.memory_space<vmem>>, %arg8: memref<24x1xbf16, #tpu.memory_space<vmem>>, %arg9: memref<1x1xf32, #tpu.memory_space<vmem>>, %arg10: memref<2x18x1xf32, #tpu.memory_space<vmem>>, %arg11: memref<2x20x8xf32, #tpu.memory_space<vmem>>) attributes {dimension_semantics = [], scalar_prefetch = 0 : i64, scratch_operands = 1 : i64, tpu.core_type = #tpu.core_type<tc>} {
    %c0 = arith.constant 0 : index
    %c0_0 = arith.constant 0 : index
    %c0_1 = arith.constant 0 : index
    %0 = vector.load %arg0[%c0, %c0_0, %c0_1] : memref<2x18x8xbf16, #tpu.memory_space<vmem>>, vector<1x18x8xbf16>
    %1 = vector.shape_cast %0 : vector<1x18x8xbf16> to vector<18x8xbf16>
    %c0_2 = arith.constant 0 : index
    %c0_3 = arith.constant 0 : index
    %2 = vector.load %arg2[%c0_2, %c0_3] : memref<8x8xbf16, #tpu.memory_space<vmem>>, vector<8x8xbf16>
    %cst = arith.constant dense<0.000000e+00> : vector<18x8xf32>
    %3 = tpu.matmul %1, %2, %cst {dimension_numbers = #tpu.dot_dimension_numbers<[1], [0], [0], [1], [0, 0, 1, 1], [], []>} : vector<18x8xbf16>, vector<8x8xbf16>, vector<18x8xf32> -> vector<18x8xf32>
    %c0_4 = arith.constant 0 : index
    %c0_5 = arith.constant 0 : index
    %4 = vector.load %arg3[%c0_4, %c0_5] : memref<1x8xf32, #tpu.memory_space<vmem>>, vector<1x8xf32>
    %5 = vector.broadcast %4 : vector<1x8xf32> to vector<18x8xf32>
    %6 = arith.addf %3, %5 : vector<18x8xf32>
    %7 = math.tanh %6 : vector<18x8xf32>
    %c0_6 = arith.constant 0 : index
    %c0_7 = arith.constant 0 : index
    %8 = vector.load %arg4[%c0_6, %c0_7] : memref<8x8xbf16, #tpu.memory_space<vmem>>, vector<8x8xbf16>
    %cst_8 = arith.constant dense<0.000000e+00> : vector<18x8xf32>
    %9 = tpu.matmul %1, %8, %cst_8 {dimension_numbers = #tpu.dot_dimension_numbers<[1], [0], [0], [1], [0, 0, 1, 1], [], []>} : vector<18x8xbf16>, vector<8x8xbf16>, vector<18x8xf32> -> vector<18x8xf32>
    %c0_9 = arith.constant 0 : index
    %c0_10 = arith.constant 0 : index
    %10 = vector.load %arg5[%c0_9, %c0_10] : memref<1x8xf32, #tpu.memory_space<vmem>>, vector<1x8xf32>
    %11 = vector.broadcast %10 : vector<1x8xf32> to vector<18x8xf32>
    %12 = arith.addf %9, %11 : vector<18x8xf32>
    %13 = arith.negf %12 : vector<18x8xf32>
    %14 = math.exp %13 : vector<18x8xf32>
    %cst_11 = arith.constant 1.000000e+00 : f32
    %15 = vector.broadcast %cst_11 : f32 to vector<18x8xf32>
    %16 = arith.addf %15, %14 : vector<18x8xf32>
    %17 = arith.divf %15, %16 : vector<18x8xf32>
    %18 = arith.mulf %7, %17 : vector<18x8xf32>
    %c0_12 = arith.constant 0 : index
    %c0_13 = arith.constant 0 : index
    %19 = vector.load %arg6[%c0_12, %c0_13] : memref<8x8xbf16, #tpu.memory_space<vmem>>, vector<8x8xbf16>
    %20 = arith.truncf %18 : vector<18x8xf32> to vector<18x8xbf16>
    %cst_14 = arith.constant dense<0.000000e+00> : vector<18x8xf32>
    %21 = tpu.matmul %20, %19, %cst_14 {dimension_numbers = #tpu.dot_dimension_numbers<[1], [0], [0], [1], [0, 0, 1, 1], [], []>} : vector<18x8xbf16>, vector<8x8xbf16>, vector<18x8xf32> -> vector<18x8xf32>
    %c0_15 = arith.constant 0 : index
    %c0_16 = arith.constant 0 : index
    %22 = vector.load %arg7[%c0_15, %c0_16] : memref<1x8xf32, #tpu.memory_space<vmem>>, vector<1x8xf32>
    %23 = vector.broadcast %22 : vector<1x8xf32> to vector<18x8xf32>
    %24 = arith.addf %21, %23 : vector<18x8xf32>
    %cst_17 = arith.constant 0.000000e+00 : f32
    %25 = vector.broadcast %cst_17 : f32 to vector<18x8xf32>
    %26 = arith.maximumf %24, %25 : vector<18x8xf32>
    %cst_18 = arith.constant 0.000000e+00 : f32
    %27 = vector.broadcast %cst_18 : f32 to vector<1x8xf32>
    %c0_19 = arith.constant 0 : index
    %c0_20 = arith.constant 0 : index
    %c0_21 = arith.constant 0 : index
    %28 = vector.load %arg11[%c0_19, %c0_20, %c0_21] : memref<2x20x8xf32, #tpu.memory_space<vmem>>, vector<1x1x8xf32>
    %29 = vector.shape_cast %28 : vector<1x1x8xf32> to vector<1x8xf32>
    %30 = vector.shape_cast %27 : vector<1x8xf32> to vector<1x1x8xf32>
    tpu.vector_store %arg11[%c0_19, %c0_20, %c0_21], %30 {strides = array<i32>} : memref<2x20x8xf32, #tpu.memory_space<vmem>>, vector<1x1x8xf32>,
    %cst_22 = arith.constant 0.000000e+00 : f32
    %31 = vector.broadcast %cst_22 : f32 to vector<1x8xf32>
    %c0_23 = arith.constant 0 : index
    %c19 = arith.constant 19 : index
    %c0_24 = arith.constant 0 : index
    %32 = vector.load %arg11[%c0_23, %c19, %c0_24] : memref<2x20x8xf32, #tpu.memory_space<vmem>>, vector<1x1x8xf32>
    %33 = vector.shape_cast %32 : vector<1x1x8xf32> to vector<1x8xf32>
    %34 = vector.shape_cast %31 : vector<1x8xf32> to vector<1x1x8xf32>
    tpu.vector_store %arg11[%c0_23, %c19, %c0_24], %34 {strides = array<i32>} : memref<2x20x8xf32, #tpu.memory_space<vmem>>, vector<1x1x8xf32>,
    %c0_25 = arith.constant 0 : index
    %c0_26 = arith.constant 0 : index
    %c0_27 = arith.constant 0 : index
    %35 = vector.load %arg1[%c0_25, %c0_26, %c0_27] : memref<2x18x8xbf16, #tpu.memory_space<vmem>>, vector<1x18x8xbf16>
    %36 = vector.shape_cast %35 : vector<1x18x8xbf16> to vector<18x8xbf16>
    %37 = arith.extf %36 : vector<18x8xbf16> to vector<18x8xf32>
    %38 = arith.mulf %37, %26 : vector<18x8xf32>
    %c0_28 = arith.constant 0 : index
    %c1 = arith.constant 1 : index
    %c0_29 = arith.constant 0 : index
    %39 = vector.load %arg11[%c0_28, %c1, %c0_29] : memref<2x20x8xf32, #tpu.memory_space<vmem>>, vector<1x18x8xf32>
    %40 = vector.shape_cast %39 : vector<1x18x8xf32> to vector<18x8xf32>
    %41 = vector.shape_cast %38 : vector<18x8xf32> to vector<1x18x8xf32>
    tpu.vector_store %arg11[%c0_28, %c1, %c0_29], %41 {strides = array<i32>} : memref<2x20x8xf32, #tpu.memory_space<vmem>>, vector<1x18x8xf32>,
    %c1_30 = arith.constant 1 : index
    %c0_31 = arith.constant 0 : index
    %c0_32 = arith.constant 0 : index
    %42 = vector.load %arg0[%c1_30, %c0_31, %c0_32] : memref<2x18x8xbf16, #tpu.memory_space<vmem>>, vector<1x18x8xbf16>
    %43 = vector.shape_cast %42 : vector<1x18x8xbf16> to vector<18x8xbf16>
    %c0_33 = arith.constant 0 : index
    %c0_34 = arith.constant 0 : index
    %44 = vector.load %arg2[%c0_33, %c0_34] : memref<8x8xbf16, #tpu.memory_space<vmem>>, vector<8x8xbf16>
    %cst_35 = arith.constant dense<0.000000e+00> : vector<18x8xf32>
    %45 = tpu.matmul %43, %44, %cst_35 {dimension_numbers = #tpu.dot_dimension_numbers<[1], [0], [0], [1], [0, 0, 1, 1], [], []>} : vector<18x8xbf16>, vector<8x8xbf16>, vector<18x8xf32> -> vector<18x8xf32>
    %c0_36 = arith.constant 0 : index
    %c0_37 = arith.constant 0 : index
    %46 = vector.load %arg3[%c0_36, %c0_37] : memref<1x8xf32, #tpu.memory_space<vmem>>, vector<1x8xf32>
    %47 = vector.broadcast %46 : vector<1x8xf32> to vector<18x8xf32>
    %48 = arith.addf %45, %47 : vector<18x8xf32>
    %49 = math.tanh %48 : vector<18x8xf32>
    %c0_38 = arith.constant 0 : index
    %c0_39 = arith.constant 0 : index
    %50 = vector.load %arg4[%c0_38, %c0_39] : memref<8x8xbf16, #tpu.memory_space<vmem>>, vector<8x8xbf16>
    %cst_40 = arith.constant dense<0.000000e+00> : vector<18x8xf32>
    %51 = tpu.matmul %43, %50, %cst_40 {dimension_numbers = #tpu.dot_dimension_numbers<[1], [0], [0], [1], [0, 0, 1, 1], [], []>} : vector<18x8xbf16>, vector<8x8xbf16>, vector<18x8xf32> -> vector<18x8xf32>
    %c0_41 = arith.constant 0 : index
    %c0_42 = arith.constant 0 : index
    %52 = vector.load %arg5[%c0_41, %c0_42] : memref<1x8xf32, #tpu.memory_space<vmem>>, vector<1x8xf32>
    %53 = vector.broadcast %52 : vector<1x8xf32> to vector<18x8xf32>
    %54 = arith.addf %51, %53 : vector<18x8xf32>
    %55 = arith.negf %54 : vector<18x8xf32>
    %56 = math.exp %55 : vector<18x8xf32>
    %cst_43 = arith.constant 1.000000e+00 : f32
    %57 = vector.broadcast %cst_43 : f32 to vector<18x8xf32>
    %58 = arith.addf %57, %56 : vector<18x8xf32>
    %59 = arith.divf %57, %58 : vector<18x8xf32>
    %60 = arith.mulf %49, %59 : vector<18x8xf32>
    %c0_44 = arith.constant 0 : index
    %c0_45 = arith.constant 0 : index
    %61 = vector.load %arg6[%c0_44, %c0_45] : memref<8x8xbf16, #tpu.memory_space<vmem>>, vector<8x8xbf16>
    %62 = arith.truncf %60 : vector<18x8xf32> to vector<18x8xbf16>
    %cst_46 = arith.constant dense<0.000000e+00> : vector<18x8xf32>
    %63 = tpu.matmul %62, %61, %cst_46 {dimension_numbers = #tpu.dot_dimension_numbers<[1], [0], [0], [1], [0, 0, 1, 1], [], []>} : vector<18x8xbf16>, vector<8x8xbf16>, vector<18x8xf32> -> vector<18x8xf32>
    %c0_47 = arith.constant 0 : index
    %c0_48 = arith.constant 0 : index
    %64 = vector.load %arg7[%c0_47, %c0_48] : memref<1x8xf32, #tpu.memory_space<vmem>>, vector<1x8xf32>
    %65 = vector.broadcast %64 : vector<1x8xf32> to vector<18x8xf32>
    %66 = arith.addf %63, %65 : vector<18x8xf32>
    %cst_49 = arith.constant 0.000000e+00 : f32
    %67 = vector.broadcast %cst_49 : f32 to vector<18x8xf32>
    %68 = arith.maximumf %66, %67 : vector<18x8xf32>
    %cst_50 = arith.constant 0.000000e+00 : f32
    %69 = vector.broadcast %cst_50 : f32 to vector<1x8xf32>
    %c1_51 = arith.constant 1 : index
    %c0_52 = arith.constant 0 : index
    %c0_53 = arith.constant 0 : index
    %70 = vector.load %arg11[%c1_51, %c0_52, %c0_53] : memref<2x20x8xf32, #tpu.memory_space<vmem>>, vector<1x1x8xf32>
    %71 = vector.shape_cast %70 : vector<1x1x8xf32> to vector<1x8xf32>
    %72 = vector.shape_cast %69 : vector<1x8xf32> to vector<1x1x8xf32>
    tpu.vector_store %arg11[%c1_51, %c0_52, %c0_53], %72 {strides = array<i32>} : memref<2x20x8xf32, #tpu.memory_space<vmem>>, vector<1x1x8xf32>,
    %cst_54 = arith.constant 0.000000e+00 : f32
    %73 = vector.broadcast %cst_54 : f32 to vector<1x8xf32>
    %c1_55 = arith.constant 1 : index
    %c19_56 = arith.constant 19 : index
    %c0_57 = arith.constant 0 : index
    %74 = vector.load %arg11[%c1_55, %c19_56, %c0_57] : memref<2x20x8xf32, #tpu.memory_space<vmem>>, vector<1x1x8xf32>
    %75 = vector.shape_cast %74 : vector<1x1x8xf32> to vector<1x8xf32>
    %76 = vector.shape_cast %73 : vector<1x8xf32> to vector<1x1x8xf32>
    tpu.vector_store %arg11[%c1_55, %c19_56, %c0_57], %76 {strides = array<i32>} : memref<2x20x8xf32, #tpu.memory_space<vmem>>, vector<1x1x8xf32>,
    %c1_58 = arith.constant 1 : index
    %c0_59 = arith.constant 0 : index
    %c0_60 = arith.constant 0 : index
    %77 = vector.load %arg1[%c1_58, %c0_59, %c0_60] : memref<2x18x8xbf16, #tpu.memory_space<vmem>>, vector<1x18x8xbf16>
    %78 = vector.shape_cast %77 : vector<1x18x8xbf16> to vector<18x8xbf16>
    %79 = arith.extf %78 : vector<18x8xbf16> to vector<18x8xf32>
    %80 = arith.mulf %79, %68 : vector<18x8xf32>
    %c1_61 = arith.constant 1 : index
    %c1_62 = arith.constant 1 : index
    %c0_63 = arith.constant 0 : index
    %81 = vector.load %arg11[%c1_61, %c1_62, %c0_63] : memref<2x20x8xf32, #tpu.memory_space<vmem>>, vector<1x18x8xf32>
    %82 = vector.shape_cast %81 : vector<1x18x8xf32> to vector<18x8xf32>
    %83 = vector.shape_cast %80 : vector<18x8xf32> to vector<1x18x8xf32>
    tpu.vector_store %arg11[%c1_61, %c1_62, %c0_63], %83 {strides = array<i32>} : memref<2x20x8xf32, #tpu.memory_space<vmem>>, vector<1x18x8xf32>,
    %c0_64 = arith.constant 0 : index
    %c0_65 = arith.constant 0 : index
    %c0_66 = arith.constant 0 : index
    %84 = vector.load %arg11[%c0_64, %c0_65, %c0_66] : memref<2x20x8xf32, #tpu.memory_space<vmem>>, vector<1x18x8xf32>
    %85 = vector.shape_cast %84 : vector<1x18x8xf32> to vector<18x8xf32>
    %c0_67 = arith.constant 0 : index
    %c1_68 = arith.constant 1 : index
    %c0_69 = arith.constant 0 : index
    %86 = vector.load %arg11[%c0_67, %c1_68, %c0_69] : memref<2x20x8xf32, #tpu.memory_space<vmem>>, vector<1x18x8xf32>
    %87 = vector.shape_cast %86 : vector<1x18x8xf32> to vector<18x8xf32>
    %c0_70 = arith.constant 0 : index
    %c2 = arith.constant 2 : index
    %c0_71 = arith.constant 0 : index
    %88 = vector.load %arg11[%c0_70, %c2, %c0_71] : memref<2x20x8xf32, #tpu.memory_space<vmem>>, vector<1x18x8xf32>
    %89 = vector.shape_cast %88 : vector<1x18x8xf32> to vector<18x8xf32>
    %90 = tpu.concatenate %85, %87, %89 in 1 : vector<18x8xf32>, vector<18x8xf32>, vector<18x8xf32> -> vector<18x24xf32>
    %c0_72 = arith.constant 0 : index
    %c0_73 = arith.constant 0 : index
    %91 = vector.load %arg8[%c0_72, %c0_73] : memref<24x1xbf16, #tpu.memory_space<vmem>>, vector<24x1xbf16>
    %92 = arith.truncf %90 : vector<18x24xf32> to vector<18x24xbf16>
    %cst_74 = arith.constant dense<0.000000e+00> : vector<18x1xf32>
    %93 = tpu.matmul %92, %91, %cst_74 {dimension_numbers = #tpu.dot_dimension_numbers<[1], [0], [0], [1], [0, 0, 1, 1], [], []>} : vector<18x24xbf16>, vector<24x1xbf16>, vector<18x1xf32> -> vector<18x1xf32>
    %c0_75 = arith.constant 0 : index
    %c0_76 = arith.constant 0 : index
    %94 = vector.load %arg9[%c0_75, %c0_76] : memref<1x1xf32, #tpu.memory_space<vmem>>, vector<1x1xf32>
    %95 = vector.broadcast %94 : vector<1x1xf32> to vector<18x1xf32>
    %96 = arith.addf %93, %95 : vector<18x1xf32>
    %c0_77 = arith.constant 0 : index
    %c0_78 = arith.constant 0 : index
    %c0_79 = arith.constant 0 : index
    %97 = vector.load %arg10[%c0_77, %c0_78, %c0_79] : memref<2x18x1xf32, #tpu.memory_space<vmem>>, vector<1x18x1xf32>
    %98 = vector.shape_cast %97 : vector<1x18x1xf32> to vector<18x1xf32>
    %99 = vector.shape_cast %96 : vector<18x1xf32> to vector<1x18x1xf32>
    tpu.vector_store %arg10[%c0_77, %c0_78, %c0_79], %99 {strides = array<i32>} : memref<2x18x1xf32, #tpu.memory_space<vmem>>, vector<1x18x1xf32>,
    %c1_80 = arith.constant 1 : index
    %c0_81 = arith.constant 0 : index
    %c0_82 = arith.constant 0 : index
    %100 = vector.load %arg11[%c1_80, %c0_81, %c0_82] : memref<2x20x8xf32, #tpu.memory_space<vmem>>, vector<1x18x8xf32>
    %101 = vector.shape_cast %100 : vector<1x18x8xf32> to vector<18x8xf32>
    %c1_83 = arith.constant 1 : index
    %c1_84 = arith.constant 1 : index
    %c0_85 = arith.constant 0 : index
    %102 = vector.load %arg11[%c1_83, %c1_84, %c0_85] : memref<2x20x8xf32, #tpu.memory_space<vmem>>, vector<1x18x8xf32>
    %103 = vector.shape_cast %102 : vector<1x18x8xf32> to vector<18x8xf32>
    %c1_86 = arith.constant 1 : index
    %c2_87 = arith.constant 2 : index
    %c0_88 = arith.constant 0 : index
    %104 = vector.load %arg11[%c1_86, %c2_87, %c0_88] : memref<2x20x8xf32, #tpu.memory_space<vmem>>, vector<1x18x8xf32>
    %105 = vector.shape_cast %104 : vector<1x18x8xf32> to vector<18x8xf32>
    %106 = tpu.concatenate %101, %103, %105 in 1 : vector<18x8xf32>, vector<18x8xf32>, vector<18x8xf32> -> vector<18x24xf32>
    %c0_89 = arith.constant 0 : index
    %c0_90 = arith.constant 0 : index
    %107 = vector.load %arg8[%c0_89, %c0_90] : memref<24x1xbf16, #tpu.memory_space<vmem>>, vector<24x1xbf16>
    %108 = arith.truncf %106 : vector<18x24xf32> to vector<18x24xbf16>
    %cst_91 = arith.constant dense<0.000000e+00> : vector<18x1xf32>
    %109 = tpu.matmul %108, %107, %cst_91 {dimension_numbers = #tpu.dot_dimension_numbers<[1], [0], [0], [1], [0, 0, 1, 1], [], []>} : vector<18x24xbf16>, vector<24x1xbf16>, vector<18x1xf32> -> vector<18x1xf32>
    %c0_92 = arith.constant 0 : index
    %c0_93 = arith.constant 0 : index
    %110 = vector.load %arg9[%c0_92, %c0_93] : memref<1x1xf32, #tpu.memory_space<vmem>>, vector<1x1xf32>
    %111 = vector.broadcast %110 : vector<1x1xf32> to vector<18x1xf32>
    %112 = arith.addf %109, %111 : vector<18x1xf32>
    %c1_94 = arith.constant 1 : index
    %c0_95 = arith.constant 0 : index
    %c0_96 = arith.constant 0 : index
    %113 = vector.load %arg10[%c1_94, %c0_95, %c0_96] : memref<2x18x1xf32, #tpu.memory_space<vmem>>, vector<1x18x1xf32>
    %114 = vector.shape_cast %113 : vector<1x18x1xf32> to vector<18x1xf32>
    %115 = vector.shape_cast %112 : vector<18x1xf32> to vector<1x18x1xf32>
    tpu.vector_store %arg10[%c1_94, %c0_95, %c0_96], %115 {strides = array<i32>} : memref<2x18x1xf32, #tpu.memory_space<vmem>>, vector<1x18x1xf32>,
    return
  }
}

module attributes {stable_mosaic.version = 11 : i64} {
  func.func @_decoder_kernel(%arg0: memref<2x8x16xbf16, #tpu.memory_space<vmem>>, %arg1: memref<2x8x16xbf16, #tpu.memory_space<vmem>>, %arg2: memref<16x32xbf16, #tpu.memory_space<vmem>>, %arg3: memref<1x32xf32, #tpu.memory_space<vmem>>, %arg4: memref<1x32xf32, #tpu.memory_space<vmem>>, %arg5: memref<1x32xf32, #tpu.memory_space<vmem>>, %arg6: memref<31x16xf32, #tpu.memory_space<vmem>>, %arg7: memref<1x16xf32, #tpu.memory_space<vmem>>, %arg8: memref<1x16xf32, #tpu.memory_space<vmem>>, %arg9: memref<1x16xf32, #tpu.memory_space<vmem>>, %arg10: memref<16x8xbf16, #tpu.memory_space<vmem>>, %arg11: memref<1x8xf32, #tpu.memory_space<vmem>>, %arg12: memref<1x8xf32, #tpu.memory_space<vmem>>, %arg13: memref<1x8xf32, #tpu.memory_space<vmem>>, %arg14: memref<16x8xbf16, #tpu.memory_space<vmem>>, %arg15: memref<1x8xf32, #tpu.memory_space<vmem>>, %arg16: memref<16x16xbf16, #tpu.memory_space<vmem>>, %arg17: memref<1x16xf32, #tpu.memory_space<vmem>>, %arg18: memref<1x16xf32, #tpu.memory_space<vmem>>, %arg19: memref<1x16xf32, #tpu.memory_space<vmem>>, %arg20: memref<2x9x16xbf16, #tpu.memory_space<vmem>>, %arg21: memref<2x38x16xf32, #tpu.memory_space<vmem>>, %arg22: memref<2x10x8xf32, #tpu.memory_space<vmem>>) attributes {dimension_semantics = [], scalar_prefetch = 0 : i64, scratch_operands = 2 : i64, tpu.core_type = #tpu.core_type<tc>} {
    %c0 = arith.constant 0 : index
    %c0_0 = arith.constant 0 : index
    %c0_1 = arith.constant 0 : index
    %0 = vector.load %arg0[%c0, %c0_0, %c0_1] : memref<2x8x16xbf16, #tpu.memory_space<vmem>>, vector<1x8x16xbf16>
    %1 = vector.shape_cast %0 : vector<1x8x16xbf16> to vector<8x16xbf16>
    %2 = arith.extf %1 : vector<8x16xbf16> to vector<8x16xf32>
    %c0_2 = arith.constant 0 : index
    %c0_3 = arith.constant 0 : index
    %c0_4 = arith.constant 0 : index
    %3 = vector.load %arg1[%c0_2, %c0_3, %c0_4] : memref<2x8x16xbf16, #tpu.memory_space<vmem>>, vector<1x8x16xbf16>
    %4 = vector.shape_cast %3 : vector<1x8x16xbf16> to vector<8x16xbf16>
    %5 = arith.extf %4 : vector<8x16xbf16> to vector<8x16xf32>
    %6 = arith.addf %2, %5 : vector<8x16xf32>
    %c1 = arith.constant 1 : index
    %c0_5 = arith.constant 0 : index
    %c0_6 = arith.constant 0 : index
    %7 = vector.load %arg0[%c1, %c0_5, %c0_6] : memref<2x8x16xbf16, #tpu.memory_space<vmem>>, vector<1x8x16xbf16>
    %8 = vector.shape_cast %7 : vector<1x8x16xbf16> to vector<8x16xbf16>
    %9 = arith.extf %8 : vector<8x16xbf16> to vector<8x16xf32>
    %c1_7 = arith.constant 1 : index
    %c0_8 = arith.constant 0 : index
    %c0_9 = arith.constant 0 : index
    %10 = vector.load %arg1[%c1_7, %c0_8, %c0_9] : memref<2x8x16xbf16, #tpu.memory_space<vmem>>, vector<1x8x16xbf16>
    %11 = vector.shape_cast %10 : vector<1x8x16xbf16> to vector<8x16xbf16>
    %12 = arith.extf %11 : vector<8x16xbf16> to vector<8x16xf32>
    %13 = arith.addf %9, %12 : vector<8x16xf32>
    %c0_10 = arith.constant 0 : index
    %c0_11 = arith.constant 0 : index
    %14 = vector.load %arg2[%c0_10, %c0_11] : memref<16x32xbf16, #tpu.memory_space<vmem>>, vector<16x32xbf16>
    %15 = arith.truncf %6 : vector<8x16xf32> to vector<8x16xbf16>
    %cst = arith.constant dense<0.000000e+00> : vector<8x32xf32>
    %16 = tpu.matmul %15, %14, %cst {dimension_numbers = #tpu.dot_dimension_numbers<[1], [0], [0], [1], [0, 0, 1, 1], [], []>} : vector<8x16xbf16>, vector<16x32xbf16>, vector<8x32xf32> -> vector<8x32xf32>
    %c0_12 = arith.constant 0 : index
    %c0_13 = arith.constant 0 : index
    %17 = vector.load %arg3[%c0_12, %c0_13] : memref<1x32xf32, #tpu.memory_space<vmem>>, vector<1x32xf32>
    %18 = vector.broadcast %17 : vector<1x32xf32> to vector<8x32xf32>
    %19 = arith.addf %16, %18 : vector<8x32xf32>
    %c0_14 = arith.constant 0 : index
    %c0_15 = arith.constant 0 : index
    %20 = vector.load %arg2[%c0_14, %c0_15] : memref<16x32xbf16, #tpu.memory_space<vmem>>, vector<16x32xbf16>
    %21 = arith.truncf %13 : vector<8x16xf32> to vector<8x16xbf16>
    %cst_16 = arith.constant dense<0.000000e+00> : vector<8x32xf32>
    %22 = tpu.matmul %21, %20, %cst_16 {dimension_numbers = #tpu.dot_dimension_numbers<[1], [0], [0], [1], [0, 0, 1, 1], [], []>} : vector<8x16xbf16>, vector<16x32xbf16>, vector<8x32xf32> -> vector<8x32xf32>
    %c0_17 = arith.constant 0 : index
    %c0_18 = arith.constant 0 : index
    %23 = vector.load %arg3[%c0_17, %c0_18] : memref<1x32xf32, #tpu.memory_space<vmem>>, vector<1x32xf32>
    %24 = vector.broadcast %23 : vector<1x32xf32> to vector<8x32xf32>
    %25 = arith.addf %22, %24 : vector<8x32xf32>
    %c0_19 = arith.constant 0 : index
    %c0_20 = arith.constant 0 : index
    %26 = vector.load %arg4[%c0_19, %c0_20] : memref<1x32xf32, #tpu.memory_space<vmem>>, vector<1x32xf32>
    %c0_21 = arith.constant 0 : index
    %c0_22 = arith.constant 0 : index
    %27 = vector.load %arg5[%c0_21, %c0_22] : memref<1x32xf32, #tpu.memory_space<vmem>>, vector<1x32xf32>
    %cst_23 = arith.constant dense<0.000000e+00> : vector<32xf32>
    %28 = vector.multi_reduction <add>, %19, %cst_23 [0] : vector<8x32xf32> to vector<32xf32>
    %29 = vector.shape_cast %28 : vector<32xf32> to vector<1x32xf32>
    %cst_24 = arith.constant 0.000000e+00 : f32
    %30 = vector.broadcast %cst_24 : f32 to vector<1x32xf32>
    %31 = arith.addf %30, %29 : vector<1x32xf32>
    %cst_25 = arith.constant dense<0.000000e+00> : vector<32xf32>
    %32 = vector.multi_reduction <add>, %25, %cst_25 [0] : vector<8x32xf32> to vector<32xf32>
    %33 = vector.shape_cast %32 : vector<32xf32> to vector<1x32xf32>
    %34 = arith.addf %31, %33 : vector<1x32xf32>
    %cst_26 = arith.constant 1.600000e+01 : f32
    %35 = vector.broadcast %cst_26 : f32 to vector<1x32xf32>
    %36 = arith.divf %34, %35 : vector<1x32xf32>
    %37 = vector.broadcast %36 : vector<1x32xf32> to vector<8x32xf32>
    %38 = arith.subf %19, %37 : vector<8x32xf32>
    %39 = arith.mulf %38, %38 : vector<8x32xf32>
    %cst_27 = arith.constant dense<0.000000e+00> : vector<32xf32>
    %40 = vector.multi_reduction <add>, %39, %cst_27 [0] : vector<8x32xf32> to vector<32xf32>
    %41 = vector.shape_cast %40 : vector<32xf32> to vector<1x32xf32>
    %cst_28 = arith.constant 0.000000e+00 : f32
    %42 = vector.broadcast %cst_28 : f32 to vector<1x32xf32>
    %43 = arith.addf %42, %41 : vector<1x32xf32>
    %44 = vector.broadcast %36 : vector<1x32xf32> to vector<8x32xf32>
    %45 = arith.subf %25, %44 : vector<8x32xf32>
    %46 = arith.mulf %45, %45 : vector<8x32xf32>
    %cst_29 = arith.constant dense<0.000000e+00> : vector<32xf32>
    %47 = vector.multi_reduction <add>, %46, %cst_29 [0] : vector<8x32xf32> to vector<32xf32>
    %48 = vector.shape_cast %47 : vector<32xf32> to vector<1x32xf32>
    %49 = arith.addf %43, %48 : vector<1x32xf32>
    %cst_30 = arith.constant 1.600000e+01 : f32
    %50 = vector.broadcast %cst_30 : f32 to vector<1x32xf32>
    %51 = arith.divf %49, %50 : vector<1x32xf32>
    %cst_31 = arith.constant 9.99999974E-6 : f32
    %52 = vector.broadcast %cst_31 : f32 to vector<1x32xf32>
    %53 = arith.addf %51, %52 : vector<1x32xf32>
    %54 = math.rsqrt %53 : vector<1x32xf32>
    %55 = vector.broadcast %36 : vector<1x32xf32> to vector<8x32xf32>
    %56 = arith.subf %19, %55 : vector<8x32xf32>
    %57 = vector.broadcast %54 : vector<1x32xf32> to vector<8x32xf32>
    %58 = arith.mulf %56, %57 : vector<8x32xf32>
    %59 = vector.broadcast %26 : vector<1x32xf32> to vector<8x32xf32>
    %60 = arith.mulf %58, %59 : vector<8x32xf32>
    %61 = vector.broadcast %27 : vector<1x32xf32> to vector<8x32xf32>
    %62 = arith.addf %60, %61 : vector<8x32xf32>
    %63 = vector.broadcast %36 : vector<1x32xf32> to vector<8x32xf32>
    %64 = arith.subf %25, %63 : vector<8x32xf32>
    %65 = vector.broadcast %54 : vector<1x32xf32> to vector<8x32xf32>
    %66 = arith.mulf %64, %65 : vector<8x32xf32>
    %67 = vector.broadcast %26 : vector<1x32xf32> to vector<8x32xf32>
    %68 = arith.mulf %66, %67 : vector<8x32xf32>
    %69 = vector.broadcast %27 : vector<1x32xf32> to vector<8x32xf32>
    %70 = arith.addf %68, %69 : vector<8x32xf32>
    %71 = vector.extract_strided_slice %62 {offsets = [0, 0], sizes = [8, 16], strides = [1, 1]} : vector<8x32xf32> to vector<8x16xf32>
    %72 = vector.extract_strided_slice %62 {offsets = [0, 16], sizes = [8, 16], strides = [1, 1]} : vector<8x32xf32> to vector<8x16xf32>
    %73 = arith.negf %72 : vector<8x16xf32>
    %74 = math.exp %73 : vector<8x16xf32>
    %cst_32 = arith.constant 1.000000e+00 : f32
    %75 = vector.broadcast %cst_32 : f32 to vector<8x16xf32>
    %76 = arith.addf %75, %74 : vector<8x16xf32>
    %77 = arith.divf %75, %76 : vector<8x16xf32>
    %78 = arith.mulf %71, %77 : vector<8x16xf32>
    %79 = vector.extract_strided_slice %70 {offsets = [0, 0], sizes = [8, 16], strides = [1, 1]} : vector<8x32xf32> to vector<8x16xf32>
    %80 = vector.extract_strided_slice %70 {offsets = [0, 16], sizes = [8, 16], strides = [1, 1]} : vector<8x32xf32> to vector<8x16xf32>
    %81 = arith.negf %80 : vector<8x16xf32>
    %82 = math.exp %81 : vector<8x16xf32>
    %cst_33 = arith.constant 1.000000e+00 : f32
    %83 = vector.broadcast %cst_33 : f32 to vector<8x16xf32>
    %84 = arith.addf %83, %82 : vector<8x16xf32>
    %85 = arith.divf %83, %84 : vector<8x16xf32>
    %86 = arith.mulf %79, %85 : vector<8x16xf32>
    %cst_34 = arith.constant 0.000000e+00 : f32
    %87 = vector.broadcast %cst_34 : f32 to vector<15x16xf32>
    %c0_35 = arith.constant 0 : index
    %c0_36 = arith.constant 0 : index
    %c0_37 = arith.constant 0 : index
    %88 = vector.load %arg21[%c0_35, %c0_36, %c0_37] : memref<2x38x16xf32, #tpu.memory_space<vmem>>, vector<1x15x16xf32>
    %89 = vector.shape_cast %88 : vector<1x15x16xf32> to vector<15x16xf32>
    %90 = vector.shape_cast %87 : vector<15x16xf32> to vector<1x15x16xf32>
    tpu.vector_store %arg21[%c0_35, %c0_36, %c0_37], %90 {strides = array<i32>} : memref<2x38x16xf32, #tpu.memory_space<vmem>>, vector<1x15x16xf32>,
    %cst_38 = arith.constant 0.000000e+00 : f32
    %91 = vector.broadcast %cst_38 : f32 to vector<15x16xf32>
    %c0_39 = arith.constant 0 : index
    %c23 = arith.constant 23 : index
    %c0_40 = arith.constant 0 : index
    %92 = vector.load %arg21[%c0_39, %c23, %c0_40] : memref<2x38x16xf32, #tpu.memory_space<vmem>>, vector<1x15x16xf32>
    %93 = vector.shape_cast %92 : vector<1x15x16xf32> to vector<15x16xf32>
    %94 = vector.shape_cast %91 : vector<15x16xf32> to vector<1x15x16xf32>
    tpu.vector_store %arg21[%c0_39, %c23, %c0_40], %94 {strides = array<i32>} : memref<2x38x16xf32, #tpu.memory_space<vmem>>, vector<1x15x16xf32>,
    %c0_41 = arith.constant 0 : index
    %c15 = arith.constant 15 : index
    %c0_42 = arith.constant 0 : index
    %95 = vector.load %arg21[%c0_41, %c15, %c0_42] : memref<2x38x16xf32, #tpu.memory_space<vmem>>, vector<1x8x16xf32>
    %96 = vector.shape_cast %95 : vector<1x8x16xf32> to vector<8x16xf32>
    %97 = vector.shape_cast %78 : vector<8x16xf32> to vector<1x8x16xf32>
    tpu.vector_store %arg21[%c0_41, %c15, %c0_42], %97 {strides = array<i32>} : memref<2x38x16xf32, #tpu.memory_space<vmem>>, vector<1x8x16xf32>,
    %cst_43 = arith.constant 0.000000e+00 : f32
    %98 = vector.broadcast %cst_43 : f32 to vector<8x16xf32>
    %c0_i32 = arith.constant 0 : i32
    %c31_i32 = arith.constant 31 : i32
    %99 = arith.addi %c0_i32, %c31_i32 : i32
    %c1_i32 = arith.constant 1 : i32
    %100 = scf.for %arg23 = %c0_i32 to %99 step %c1_i32 iter_args(%arg24 = %98) -> (vector<8x16xf32>)  : i32 {
      %c0_185 = arith.constant 0 : index
      %376 = arith.index_cast %arg23 : i32 to index
      %c0_186 = arith.constant 0 : index
      %377 = vector.load %arg21[%c0_185, %376, %c0_186] : memref<2x38x16xf32, #tpu.memory_space<vmem>>, vector<1x8x16xf32>
      %378 = vector.shape_cast %377 : vector<1x8x16xf32> to vector<8x16xf32>
      %379 = arith.index_cast %arg23 : i32 to index
      %c0_187 = arith.constant 0 : index
      %380 = vector.load %arg6[%379, %c0_187] : memref<31x16xf32, #tpu.memory_space<vmem>>, vector<1x16xf32>
      %381 = vector.broadcast %380 : vector<1x16xf32> to vector<8x16xf32>
      %382 = arith.mulf %378, %381 : vector<8x16xf32>
      %383 = arith.addf %arg24, %382 : vector<8x16xf32>
      scf.yield %383 : vector<8x16xf32>
    }
    %c31_i32_44 = arith.constant 31 : i32
    %c0_45 = arith.constant 0 : index
    %c0_46 = arith.constant 0 : index
    %101 = vector.load %arg7[%c0_45, %c0_46] : memref<1x16xf32, #tpu.memory_space<vmem>>, vector<1x16xf32>
    %102 = vector.broadcast %101 : vector<1x16xf32> to vector<8x16xf32>
    %103 = arith.addf %100, %102 : vector<8x16xf32>
    %cst_47 = arith.constant 0.000000e+00 : f32
    %104 = vector.broadcast %cst_47 : f32 to vector<15x16xf32>
    %c1_48 = arith.constant 1 : index
    %c0_49 = arith.constant 0 : index
    %c0_50 = arith.constant 0 : index
    %105 = vector.load %arg21[%c1_48, %c0_49, %c0_50] : memref<2x38x16xf32, #tpu.memory_space<vmem>>, vector<1x15x16xf32>
    %106 = vector.shape_cast %105 : vector<1x15x16xf32> to vector<15x16xf32>
    %107 = vector.shape_cast %104 : vector<15x16xf32> to vector<1x15x16xf32>
    tpu.vector_store %arg21[%c1_48, %c0_49, %c0_50], %107 {strides = array<i32>} : memref<2x38x16xf32, #tpu.memory_space<vmem>>, vector<1x15x16xf32>,
    %cst_51 = arith.constant 0.000000e+00 : f32
    %108 = vector.broadcast %cst_51 : f32 to vector<15x16xf32>
    %c1_52 = arith.constant 1 : index
    %c23_53 = arith.constant 23 : index
    %c0_54 = arith.constant 0 : index
    %109 = vector.load %arg21[%c1_52, %c23_53, %c0_54] : memref<2x38x16xf32, #tpu.memory_space<vmem>>, vector<1x15x16xf32>
    %110 = vector.shape_cast %109 : vector<1x15x16xf32> to vector<15x16xf32>
    %111 = vector.shape_cast %108 : vector<15x16xf32> to vector<1x15x16xf32>
    tpu.vector_store %arg21[%c1_52, %c23_53, %c0_54], %111 {strides = array<i32>} : memref<2x38x16xf32, #tpu.memory_space<vmem>>, vector<1x15x16xf32>,
    %c1_55 = arith.constant 1 : index
    %c15_56 = arith.constant 15 : index
    %c0_57 = arith.constant 0 : index
    %112 = vector.load %arg21[%c1_55, %c15_56, %c0_57] : memref<2x38x16xf32, #tpu.memory_space<vmem>>, vector<1x8x16xf32>
    %113 = vector.shape_cast %112 : vector<1x8x16xf32> to vector<8x16xf32>
    %114 = vector.shape_cast %86 : vector<8x16xf32> to vector<1x8x16xf32>
    tpu.vector_store %arg21[%c1_55, %c15_56, %c0_57], %114 {strides = array<i32>} : memref<2x38x16xf32, #tpu.memory_space<vmem>>, vector<1x8x16xf32>,
    %cst_58 = arith.constant 0.000000e+00 : f32
    %115 = vector.broadcast %cst_58 : f32 to vector<8x16xf32>
    %c0_i32_59 = arith.constant 0 : i32
    %c31_i32_60 = arith.constant 31 : i32
    %116 = arith.addi %c0_i32_59, %c31_i32_60 : i32
    %c1_i32_61 = arith.constant 1 : i32
    %117 = scf.for %arg23 = %c0_i32_59 to %116 step %c1_i32_61 iter_args(%arg24 = %115) -> (vector<8x16xf32>)  : i32 {
      %c1_185 = arith.constant 1 : index
      %376 = arith.index_cast %arg23 : i32 to index
      %c0_186 = arith.constant 0 : index
      %377 = vector.load %arg21[%c1_185, %376, %c0_186] : memref<2x38x16xf32, #tpu.memory_space<vmem>>, vector<1x8x16xf32>
      %378 = vector.shape_cast %377 : vector<1x8x16xf32> to vector<8x16xf32>
      %379 = arith.index_cast %arg23 : i32 to index
      %c0_187 = arith.constant 0 : index
      %380 = vector.load %arg6[%379, %c0_187] : memref<31x16xf32, #tpu.memory_space<vmem>>, vector<1x16xf32>
      %381 = vector.broadcast %380 : vector<1x16xf32> to vector<8x16xf32>
      %382 = arith.mulf %378, %381 : vector<8x16xf32>
      %383 = arith.addf %arg24, %382 : vector<8x16xf32>
      scf.yield %383 : vector<8x16xf32>
    }
    %c31_i32_62 = arith.constant 31 : i32
    %c0_63 = arith.constant 0 : index
    %c0_64 = arith.constant 0 : index
    %118 = vector.load %arg7[%c0_63, %c0_64] : memref<1x16xf32, #tpu.memory_space<vmem>>, vector<1x16xf32>
    %119 = vector.broadcast %118 : vector<1x16xf32> to vector<8x16xf32>
    %120 = arith.addf %117, %119 : vector<8x16xf32>
    %c0_65 = arith.constant 0 : index
    %c0_66 = arith.constant 0 : index
    %121 = vector.load %arg8[%c0_65, %c0_66] : memref<1x16xf32, #tpu.memory_space<vmem>>, vector<1x16xf32>
    %c0_67 = arith.constant 0 : index
    %c0_68 = arith.constant 0 : index
    %122 = vector.load %arg9[%c0_67, %c0_68] : memref<1x16xf32, #tpu.memory_space<vmem>>, vector<1x16xf32>
    %cst_69 = arith.constant dense<0.000000e+00> : vector<16xf32>
    %123 = vector.multi_reduction <add>, %103, %cst_69 [0] : vector<8x16xf32> to vector<16xf32>
    %124 = vector.shape_cast %123 : vector<16xf32> to vector<1x16xf32>
    %cst_70 = arith.constant 0.000000e+00 : f32
    %125 = vector.broadcast %cst_70 : f32 to vector<1x16xf32>
    %126 = arith.addf %125, %124 : vector<1x16xf32>
    %cst_71 = arith.constant dense<0.000000e+00> : vector<16xf32>
    %127 = vector.multi_reduction <add>, %120, %cst_71 [0] : vector<8x16xf32> to vector<16xf32>
    %128 = vector.shape_cast %127 : vector<16xf32> to vector<1x16xf32>
    %129 = arith.addf %126, %128 : vector<1x16xf32>
    %cst_72 = arith.constant 1.600000e+01 : f32
    %130 = vector.broadcast %cst_72 : f32 to vector<1x16xf32>
    %131 = arith.divf %129, %130 : vector<1x16xf32>
    %132 = vector.broadcast %131 : vector<1x16xf32> to vector<8x16xf32>
    %133 = arith.subf %103, %132 : vector<8x16xf32>
    %134 = arith.mulf %133, %133 : vector<8x16xf32>
    %cst_73 = arith.constant dense<0.000000e+00> : vector<16xf32>
    %135 = vector.multi_reduction <add>, %134, %cst_73 [0] : vector<8x16xf32> to vector<16xf32>
    %136 = vector.shape_cast %135 : vector<16xf32> to vector<1x16xf32>
    %cst_74 = arith.constant 0.000000e+00 : f32
    %137 = vector.broadcast %cst_74 : f32 to vector<1x16xf32>
    %138 = arith.addf %137, %136 : vector<1x16xf32>
    %139 = vector.broadcast %131 : vector<1x16xf32> to vector<8x16xf32>
    %140 = arith.subf %120, %139 : vector<8x16xf32>
    %141 = arith.mulf %140, %140 : vector<8x16xf32>
    %cst_75 = arith.constant dense<0.000000e+00> : vector<16xf32>
    %142 = vector.multi_reduction <add>, %141, %cst_75 [0] : vector<8x16xf32> to vector<16xf32>
    %143 = vector.shape_cast %142 : vector<16xf32> to vector<1x16xf32>
    %144 = arith.addf %138, %143 : vector<1x16xf32>
    %cst_76 = arith.constant 1.600000e+01 : f32
    %145 = vector.broadcast %cst_76 : f32 to vector<1x16xf32>
    %146 = arith.divf %144, %145 : vector<1x16xf32>
    %cst_77 = arith.constant 9.99999974E-6 : f32
    %147 = vector.broadcast %cst_77 : f32 to vector<1x16xf32>
    %148 = arith.addf %146, %147 : vector<1x16xf32>
    %149 = math.rsqrt %148 : vector<1x16xf32>
    %150 = vector.broadcast %131 : vector<1x16xf32> to vector<8x16xf32>
    %151 = arith.subf %103, %150 : vector<8x16xf32>
    %152 = vector.broadcast %149 : vector<1x16xf32> to vector<8x16xf32>
    %153 = arith.mulf %151, %152 : vector<8x16xf32>
    %154 = vector.broadcast %121 : vector<1x16xf32> to vector<8x16xf32>
    %155 = arith.mulf %153, %154 : vector<8x16xf32>
    %156 = vector.broadcast %122 : vector<1x16xf32> to vector<8x16xf32>
    %157 = arith.addf %155, %156 : vector<8x16xf32>
    %158 = vector.broadcast %131 : vector<1x16xf32> to vector<8x16xf32>
    %159 = arith.subf %120, %158 : vector<8x16xf32>
    %160 = vector.broadcast %149 : vector<1x16xf32> to vector<8x16xf32>
    %161 = arith.mulf %159, %160 : vector<8x16xf32>
    %162 = vector.broadcast %121 : vector<1x16xf32> to vector<8x16xf32>
    %163 = arith.mulf %161, %162 : vector<8x16xf32>
    %164 = vector.broadcast %122 : vector<1x16xf32> to vector<8x16xf32>
    %165 = arith.addf %163, %164 : vector<8x16xf32>
    %166 = arith.negf %157 : vector<8x16xf32>
    %167 = math.exp %166 : vector<8x16xf32>
    %cst_78 = arith.constant 1.000000e+00 : f32
    %168 = vector.broadcast %cst_78 : f32 to vector<8x16xf32>
    %169 = arith.addf %168, %167 : vector<8x16xf32>
    %170 = arith.divf %168, %169 : vector<8x16xf32>
    %171 = arith.mulf %157, %170 : vector<8x16xf32>
    %172 = arith.negf %165 : vector<8x16xf32>
    %173 = math.exp %172 : vector<8x16xf32>
    %cst_79 = arith.constant 1.000000e+00 : f32
    %174 = vector.broadcast %cst_79 : f32 to vector<8x16xf32>
    %175 = arith.addf %174, %173 : vector<8x16xf32>
    %176 = arith.divf %174, %175 : vector<8x16xf32>
    %177 = arith.mulf %165, %176 : vector<8x16xf32>
    %c0_80 = arith.constant 0 : index
    %c0_81 = arith.constant 0 : index
    %178 = vector.load %arg10[%c0_80, %c0_81] : memref<16x8xbf16, #tpu.memory_space<vmem>>, vector<16x8xbf16>
    %179 = arith.truncf %171 : vector<8x16xf32> to vector<8x16xbf16>
    %cst_82 = arith.constant dense<0.000000e+00> : vector<8x8xf32>
    %180 = tpu.matmul %179, %178, %cst_82 {dimension_numbers = #tpu.dot_dimension_numbers<[1], [0], [0], [1], [0, 0, 1, 1], [], []>} : vector<8x16xbf16>, vector<16x8xbf16>, vector<8x8xf32> -> vector<8x8xf32>
    %c0_83 = arith.constant 0 : index
    %c0_84 = arith.constant 0 : index
    %181 = vector.load %arg11[%c0_83, %c0_84] : memref<1x8xf32, #tpu.memory_space<vmem>>, vector<1x8xf32>
    %182 = vector.broadcast %181 : vector<1x8xf32> to vector<8x8xf32>
    %183 = arith.addf %180, %182 : vector<8x8xf32>
    %c0_85 = arith.constant 0 : index
    %c0_86 = arith.constant 0 : index
    %184 = vector.load %arg10[%c0_85, %c0_86] : memref<16x8xbf16, #tpu.memory_space<vmem>>, vector<16x8xbf16>
    %185 = arith.truncf %177 : vector<8x16xf32> to vector<8x16xbf16>
    %cst_87 = arith.constant dense<0.000000e+00> : vector<8x8xf32>
    %186 = tpu.matmul %185, %184, %cst_87 {dimension_numbers = #tpu.dot_dimension_numbers<[1], [0], [0], [1], [0, 0, 1, 1], [], []>} : vector<8x16xbf16>, vector<16x8xbf16>, vector<8x8xf32> -> vector<8x8xf32>
    %c0_88 = arith.constant 0 : index
    %c0_89 = arith.constant 0 : index
    %187 = vector.load %arg11[%c0_88, %c0_89] : memref<1x8xf32, #tpu.memory_space<vmem>>, vector<1x8xf32>
    %188 = vector.broadcast %187 : vector<1x8xf32> to vector<8x8xf32>
    %189 = arith.addf %186, %188 : vector<8x8xf32>
    %c0_90 = arith.constant 0 : index
    %c0_91 = arith.constant 0 : index
    %190 = vector.load %arg12[%c0_90, %c0_91] : memref<1x8xf32, #tpu.memory_space<vmem>>, vector<1x8xf32>
    %c0_92 = arith.constant 0 : index
    %c0_93 = arith.constant 0 : index
    %191 = vector.load %arg13[%c0_92, %c0_93] : memref<1x8xf32, #tpu.memory_space<vmem>>, vector<1x8xf32>
    %cst_94 = arith.constant dense<0.000000e+00> : vector<8xf32>
    %192 = vector.multi_reduction <add>, %183, %cst_94 [0] : vector<8x8xf32> to vector<8xf32>
    %193 = vector.shape_cast %192 : vector<8xf32> to vector<1x8xf32>
    %cst_95 = arith.constant 0.000000e+00 : f32
    %194 = vector.broadcast %cst_95 : f32 to vector<1x8xf32>
    %195 = arith.addf %194, %193 : vector<1x8xf32>
    %cst_96 = arith.constant dense<0.000000e+00> : vector<8xf32>
    %196 = vector.multi_reduction <add>, %189, %cst_96 [0] : vector<8x8xf32> to vector<8xf32>
    %197 = vector.shape_cast %196 : vector<8xf32> to vector<1x8xf32>
    %198 = arith.addf %195, %197 : vector<1x8xf32>
    %cst_97 = arith.constant 1.600000e+01 : f32
    %199 = vector.broadcast %cst_97 : f32 to vector<1x8xf32>
    %200 = arith.divf %198, %199 : vector<1x8xf32>
    %201 = vector.broadcast %200 : vector<1x8xf32> to vector<8x8xf32>
    %202 = arith.subf %183, %201 : vector<8x8xf32>
    %203 = arith.mulf %202, %202 : vector<8x8xf32>
    %cst_98 = arith.constant dense<0.000000e+00> : vector<8xf32>
    %204 = vector.multi_reduction <add>, %203, %cst_98 [0] : vector<8x8xf32> to vector<8xf32>
    %205 = vector.shape_cast %204 : vector<8xf32> to vector<1x8xf32>
    %cst_99 = arith.constant 0.000000e+00 : f32
    %206 = vector.broadcast %cst_99 : f32 to vector<1x8xf32>
    %207 = arith.addf %206, %205 : vector<1x8xf32>
    %208 = vector.broadcast %200 : vector<1x8xf32> to vector<8x8xf32>
    %209 = arith.subf %189, %208 : vector<8x8xf32>
    %210 = arith.mulf %209, %209 : vector<8x8xf32>
    %cst_100 = arith.constant dense<0.000000e+00> : vector<8xf32>
    %211 = vector.multi_reduction <add>, %210, %cst_100 [0] : vector<8x8xf32> to vector<8xf32>
    %212 = vector.shape_cast %211 : vector<8xf32> to vector<1x8xf32>
    %213 = arith.addf %207, %212 : vector<1x8xf32>
    %cst_101 = arith.constant 1.600000e+01 : f32
    %214 = vector.broadcast %cst_101 : f32 to vector<1x8xf32>
    %215 = arith.divf %213, %214 : vector<1x8xf32>
    %cst_102 = arith.constant 9.99999974E-6 : f32
    %216 = vector.broadcast %cst_102 : f32 to vector<1x8xf32>
    %217 = arith.addf %215, %216 : vector<1x8xf32>
    %218 = math.rsqrt %217 : vector<1x8xf32>
    %219 = vector.broadcast %200 : vector<1x8xf32> to vector<8x8xf32>
    %220 = arith.subf %183, %219 : vector<8x8xf32>
    %221 = vector.broadcast %218 : vector<1x8xf32> to vector<8x8xf32>
    %222 = arith.mulf %220, %221 : vector<8x8xf32>
    %223 = vector.broadcast %190 : vector<1x8xf32> to vector<8x8xf32>
    %224 = arith.mulf %222, %223 : vector<8x8xf32>
    %225 = vector.broadcast %191 : vector<1x8xf32> to vector<8x8xf32>
    %226 = arith.addf %224, %225 : vector<8x8xf32>
    %227 = vector.broadcast %200 : vector<1x8xf32> to vector<8x8xf32>
    %228 = arith.subf %189, %227 : vector<8x8xf32>
    %229 = vector.broadcast %218 : vector<1x8xf32> to vector<8x8xf32>
    %230 = arith.mulf %228, %229 : vector<8x8xf32>
    %231 = vector.broadcast %190 : vector<1x8xf32> to vector<8x8xf32>
    %232 = arith.mulf %230, %231 : vector<8x8xf32>
    %233 = vector.broadcast %191 : vector<1x8xf32> to vector<8x8xf32>
    %234 = arith.addf %232, %233 : vector<8x8xf32>
    %235 = arith.negf %226 : vector<8x8xf32>
    %236 = math.exp %235 : vector<8x8xf32>
    %cst_103 = arith.constant 1.000000e+00 : f32
    %237 = vector.broadcast %cst_103 : f32 to vector<8x8xf32>
    %238 = arith.addf %237, %236 : vector<8x8xf32>
    %239 = arith.divf %237, %238 : vector<8x8xf32>
    %240 = arith.mulf %226, %239 : vector<8x8xf32>
    %241 = arith.negf %234 : vector<8x8xf32>
    %242 = math.exp %241 : vector<8x8xf32>
    %cst_104 = arith.constant 1.000000e+00 : f32
    %243 = vector.broadcast %cst_104 : f32 to vector<8x8xf32>
    %244 = arith.addf %243, %242 : vector<8x8xf32>
    %245 = arith.divf %243, %244 : vector<8x8xf32>
    %246 = arith.mulf %234, %245 : vector<8x8xf32>
    %c0_105 = arith.constant 0 : index
    %c0_106 = arith.constant 0 : index
    %247 = vector.load %arg14[%c0_105, %c0_106] : memref<16x8xbf16, #tpu.memory_space<vmem>>, vector<16x8xbf16>
    %248 = arith.truncf %6 : vector<8x16xf32> to vector<8x16xbf16>
    %cst_107 = arith.constant dense<0.000000e+00> : vector<8x8xf32>
    %249 = tpu.matmul %248, %247, %cst_107 {dimension_numbers = #tpu.dot_dimension_numbers<[1], [0], [0], [1], [0, 0, 1, 1], [], []>} : vector<8x16xbf16>, vector<16x8xbf16>, vector<8x8xf32> -> vector<8x8xf32>
    %250 = arith.addf %240, %249 : vector<8x8xf32>
    %c0_108 = arith.constant 0 : index
    %c0_109 = arith.constant 0 : index
    %251 = vector.load %arg15[%c0_108, %c0_109] : memref<1x8xf32, #tpu.memory_space<vmem>>, vector<1x8xf32>
    %252 = vector.broadcast %251 : vector<1x8xf32> to vector<8x8xf32>
    %253 = arith.addf %250, %252 : vector<8x8xf32>
    %c0_110 = arith.constant 0 : index
    %c0_111 = arith.constant 0 : index
    %254 = vector.load %arg14[%c0_110, %c0_111] : memref<16x8xbf16, #tpu.memory_space<vmem>>, vector<16x8xbf16>
    %255 = arith.truncf %13 : vector<8x16xf32> to vector<8x16xbf16>
    %cst_112 = arith.constant dense<0.000000e+00> : vector<8x8xf32>
    %256 = tpu.matmul %255, %254, %cst_112 {dimension_numbers = #tpu.dot_dimension_numbers<[1], [0], [0], [1], [0, 0, 1, 1], [], []>} : vector<8x16xbf16>, vector<16x8xbf16>, vector<8x8xf32> -> vector<8x8xf32>
    %257 = arith.addf %246, %256 : vector<8x8xf32>
    %c0_113 = arith.constant 0 : index
    %c0_114 = arith.constant 0 : index
    %258 = vector.load %arg15[%c0_113, %c0_114] : memref<1x8xf32, #tpu.memory_space<vmem>>, vector<1x8xf32>
    %259 = vector.broadcast %258 : vector<1x8xf32> to vector<8x8xf32>
    %260 = arith.addf %257, %259 : vector<8x8xf32>
    %cst_115 = arith.constant 0.000000e+00 : f32
    %261 = vector.broadcast %cst_115 : f32 to vector<1x8xf32>
    %c0_116 = arith.constant 0 : index
    %c0_117 = arith.constant 0 : index
    %c0_118 = arith.constant 0 : index
    %262 = vector.load %arg22[%c0_116, %c0_117, %c0_118] : memref<2x10x8xf32, #tpu.memory_space<vmem>>, vector<1x1x8xf32>
    %263 = vector.shape_cast %262 : vector<1x1x8xf32> to vector<1x8xf32>
    %264 = vector.shape_cast %261 : vector<1x8xf32> to vector<1x1x8xf32>
    tpu.vector_store %arg22[%c0_116, %c0_117, %c0_118], %264 {strides = array<i32>} : memref<2x10x8xf32, #tpu.memory_space<vmem>>, vector<1x1x8xf32>,
    %cst_119 = arith.constant 0.000000e+00 : f32
    %265 = vector.broadcast %cst_119 : f32 to vector<1x8xf32>
    %c0_120 = arith.constant 0 : index
    %c9 = arith.constant 9 : index
    %c0_121 = arith.constant 0 : index
    %266 = vector.load %arg22[%c0_120, %c9, %c0_121] : memref<2x10x8xf32, #tpu.memory_space<vmem>>, vector<1x1x8xf32>
    %267 = vector.shape_cast %266 : vector<1x1x8xf32> to vector<1x8xf32>
    %268 = vector.shape_cast %265 : vector<1x8xf32> to vector<1x1x8xf32>
    tpu.vector_store %arg22[%c0_120, %c9, %c0_121], %268 {strides = array<i32>} : memref<2x10x8xf32, #tpu.memory_space<vmem>>, vector<1x1x8xf32>,
    %c0_122 = arith.constant 0 : index
    %c1_123 = arith.constant 1 : index
    %c0_124 = arith.constant 0 : index
    %269 = vector.load %arg22[%c0_122, %c1_123, %c0_124] : memref<2x10x8xf32, #tpu.memory_space<vmem>>, vector<1x8x8xf32>
    %270 = vector.shape_cast %269 : vector<1x8x8xf32> to vector<8x8xf32>
    %271 = vector.shape_cast %253 : vector<8x8xf32> to vector<1x8x8xf32>
    tpu.vector_store %arg22[%c0_122, %c1_123, %c0_124], %271 {strides = array<i32>} : memref<2x10x8xf32, #tpu.memory_space<vmem>>, vector<1x8x8xf32>,
    %c0_125 = arith.constant 0 : index
    %c1_126 = arith.constant 1 : index
    %c0_127 = arith.constant 0 : index
    %272 = vector.load %arg22[%c0_125, %c1_126, %c0_127] : memref<2x10x8xf32, #tpu.memory_space<vmem>>, vector<1x9x8xf32>
    %273 = vector.shape_cast %272 : vector<1x9x8xf32> to vector<9x8xf32>
    %c0_128 = arith.constant 0 : index
    %c0_129 = arith.constant 0 : index
    %c0_130 = arith.constant 0 : index
    %274 = vector.load %arg22[%c0_128, %c0_129, %c0_130] : memref<2x10x8xf32, #tpu.memory_space<vmem>>, vector<1x9x8xf32>
    %275 = vector.shape_cast %274 : vector<1x9x8xf32> to vector<9x8xf32>
    %276 = tpu.concatenate %273, %275 in 1 : vector<9x8xf32>, vector<9x8xf32> -> vector<9x16xf32>
    %c0_131 = arith.constant 0 : index
    %c0_132 = arith.constant 0 : index
    %277 = vector.load %arg16[%c0_131, %c0_132] : memref<16x16xbf16, #tpu.memory_space<vmem>>, vector<16x16xbf16>
    %278 = arith.truncf %276 : vector<9x16xf32> to vector<9x16xbf16>
    %cst_133 = arith.constant dense<0.000000e+00> : vector<9x16xf32>
    %279 = tpu.matmul %278, %277, %cst_133 {dimension_numbers = #tpu.dot_dimension_numbers<[1], [0], [0], [1], [0, 0, 1, 1], [], []>} : vector<9x16xbf16>, vector<16x16xbf16>, vector<9x16xf32> -> vector<9x16xf32>
    %c0_134 = arith.constant 0 : index
    %c0_135 = arith.constant 0 : index
    %280 = vector.load %arg17[%c0_134, %c0_135] : memref<1x16xf32, #tpu.memory_space<vmem>>, vector<1x16xf32>
    %281 = vector.broadcast %280 : vector<1x16xf32> to vector<9x16xf32>
    %282 = arith.addf %279, %281 : vector<9x16xf32>
    %cst_136 = arith.constant 0.000000e+00 : f32
    %283 = vector.broadcast %cst_136 : f32 to vector<1x8xf32>
    %c1_137 = arith.constant 1 : index
    %c0_138 = arith.constant 0 : index
    %c0_139 = arith.constant 0 : index
    %284 = vector.load %arg22[%c1_137, %c0_138, %c0_139] : memref<2x10x8xf32, #tpu.memory_space<vmem>>, vector<1x1x8xf32>
    %285 = vector.shape_cast %284 : vector<1x1x8xf32> to vector<1x8xf32>
    %286 = vector.shape_cast %283 : vector<1x8xf32> to vector<1x1x8xf32>
    tpu.vector_store %arg22[%c1_137, %c0_138, %c0_139], %286 {strides = array<i32>} : memref<2x10x8xf32, #tpu.memory_space<vmem>>, vector<1x1x8xf32>,
    %cst_140 = arith.constant 0.000000e+00 : f32
    %287 = vector.broadcast %cst_140 : f32 to vector<1x8xf32>
    %c1_141 = arith.constant 1 : index
    %c9_142 = arith.constant 9 : index
    %c0_143 = arith.constant 0 : index
    %288 = vector.load %arg22[%c1_141, %c9_142, %c0_143] : memref<2x10x8xf32, #tpu.memory_space<vmem>>, vector<1x1x8xf32>
    %289 = vector.shape_cast %288 : vector<1x1x8xf32> to vector<1x8xf32>
    %290 = vector.shape_cast %287 : vector<1x8xf32> to vector<1x1x8xf32>
    tpu.vector_store %arg22[%c1_141, %c9_142, %c0_143], %290 {strides = array<i32>} : memref<2x10x8xf32, #tpu.memory_space<vmem>>, vector<1x1x8xf32>,
    %c1_144 = arith.constant 1 : index
    %c1_145 = arith.constant 1 : index
    %c0_146 = arith.constant 0 : index
    %291 = vector.load %arg22[%c1_144, %c1_145, %c0_146] : memref<2x10x8xf32, #tpu.memory_space<vmem>>, vector<1x8x8xf32>
    %292 = vector.shape_cast %291 : vector<1x8x8xf32> to vector<8x8xf32>
    %293 = vector.shape_cast %260 : vector<8x8xf32> to vector<1x8x8xf32>
    tpu.vector_store %arg22[%c1_144, %c1_145, %c0_146], %293 {strides = array<i32>} : memref<2x10x8xf32, #tpu.memory_space<vmem>>, vector<1x8x8xf32>,
    %c1_147 = arith.constant 1 : index
    %c1_148 = arith.constant 1 : index
    %c0_149 = arith.constant 0 : index
    %294 = vector.load %arg22[%c1_147, %c1_148, %c0_149] : memref<2x10x8xf32, #tpu.memory_space<vmem>>, vector<1x9x8xf32>
    %295 = vector.shape_cast %294 : vector<1x9x8xf32> to vector<9x8xf32>
    %c1_150 = arith.constant 1 : index
    %c0_151 = arith.constant 0 : index
    %c0_152 = arith.constant 0 : index
    %296 = vector.load %arg22[%c1_150, %c0_151, %c0_152] : memref<2x10x8xf32, #tpu.memory_space<vmem>>, vector<1x9x8xf32>
    %297 = vector.shape_cast %296 : vector<1x9x8xf32> to vector<9x8xf32>
    %298 = tpu.concatenate %295, %297 in 1 : vector<9x8xf32>, vector<9x8xf32> -> vector<9x16xf32>
    %c0_153 = arith.constant 0 : index
    %c0_154 = arith.constant 0 : index
    %299 = vector.load %arg16[%c0_153, %c0_154] : memref<16x16xbf16, #tpu.memory_space<vmem>>, vector<16x16xbf16>
    %300 = arith.truncf %298 : vector<9x16xf32> to vector<9x16xbf16>
    %cst_155 = arith.constant dense<0.000000e+00> : vector<9x16xf32>
    %301 = tpu.matmul %300, %299, %cst_155 {dimension_numbers = #tpu.dot_dimension_numbers<[1], [0], [0], [1], [0, 0, 1, 1], [], []>} : vector<9x16xbf16>, vector<16x16xbf16>, vector<9x16xf32> -> vector<9x16xf32>
    %c0_156 = arith.constant 0 : index
    %c0_157 = arith.constant 0 : index
    %302 = vector.load %arg17[%c0_156, %c0_157] : memref<1x16xf32, #tpu.memory_space<vmem>>, vector<1x16xf32>
    %303 = vector.broadcast %302 : vector<1x16xf32> to vector<9x16xf32>
    %304 = arith.addf %301, %303 : vector<9x16xf32>
    %cst_158 = arith.constant dense<0.000000e+00> : vector<16xf32>
    %305 = vector.multi_reduction <add>, %282, %cst_158 [0] : vector<9x16xf32> to vector<16xf32>
    %306 = vector.shape_cast %305 : vector<16xf32> to vector<1x16xf32>
    %cst_159 = arith.constant 0.000000e+00 : f32
    %307 = vector.broadcast %cst_159 : f32 to vector<1x16xf32>
    %308 = arith.addf %307, %306 : vector<1x16xf32>
    %cst_160 = arith.constant dense<0.000000e+00> : vector<16xf32>
    %309 = vector.multi_reduction <add>, %304, %cst_160 [0] : vector<9x16xf32> to vector<16xf32>
    %310 = vector.shape_cast %309 : vector<16xf32> to vector<1x16xf32>
    %311 = arith.addf %308, %310 : vector<1x16xf32>
    %312 = vector.extract_strided_slice %311 {offsets = [0, 0], sizes = [1, 8], strides = [1, 1]} : vector<1x16xf32> to vector<1x8xf32>
    %cst_161 = arith.constant 0.000000e+00 : f32
    %313 = vector.broadcast %cst_161 : f32 to vector<1x8xf32>
    %314 = arith.addf %313, %312 : vector<1x8xf32>
    %315 = vector.extract_strided_slice %311 {offsets = [0, 8], sizes = [1, 8], strides = [1, 1]} : vector<1x16xf32> to vector<1x8xf32>
    %316 = arith.addf %314, %315 : vector<1x8xf32>
    %cst_162 = arith.constant 3.600000e+01 : f32
    %317 = vector.broadcast %cst_162 : f32 to vector<1x8xf32>
    %318 = arith.divf %316, %317 : vector<1x8xf32>
    %319 = tpu.concatenate %318, %318 in 1 : vector<1x8xf32>, vector<1x8xf32> -> vector<1x16xf32>
    %320 = vector.broadcast %319 : vector<1x16xf32> to vector<9x16xf32>
    %321 = arith.subf %282, %320 : vector<9x16xf32>
    %322 = arith.mulf %321, %321 : vector<9x16xf32>
    %cst_163 = arith.constant dense<0.000000e+00> : vector<16xf32>
    %323 = vector.multi_reduction <add>, %322, %cst_163 [0] : vector<9x16xf32> to vector<16xf32>
    %324 = vector.shape_cast %323 : vector<16xf32> to vector<1x16xf32>
    %cst_164 = arith.constant 0.000000e+00 : f32
    %325 = vector.broadcast %cst_164 : f32 to vector<1x16xf32>
    %326 = arith.addf %325, %324 : vector<1x16xf32>
    %327 = vector.broadcast %319 : vector<1x16xf32> to vector<9x16xf32>
    %328 = arith.subf %304, %327 : vector<9x16xf32>
    %329 = arith.mulf %328, %328 : vector<9x16xf32>
    %cst_165 = arith.constant dense<0.000000e+00> : vector<16xf32>
    %330 = vector.multi_reduction <add>, %329, %cst_165 [0] : vector<9x16xf32> to vector<16xf32>
    %331 = vector.shape_cast %330 : vector<16xf32> to vector<1x16xf32>
    %332 = arith.addf %326, %331 : vector<1x16xf32>
    %333 = vector.extract_strided_slice %332 {offsets = [0, 0], sizes = [1, 8], strides = [1, 1]} : vector<1x16xf32> to vector<1x8xf32>
    %cst_166 = arith.constant 0.000000e+00 : f32
    %334 = vector.broadcast %cst_166 : f32 to vector<1x8xf32>
    %335 = arith.addf %334, %333 : vector<1x8xf32>
    %336 = vector.extract_strided_slice %332 {offsets = [0, 8], sizes = [1, 8], strides = [1, 1]} : vector<1x16xf32> to vector<1x8xf32>
    %337 = arith.addf %335, %336 : vector<1x8xf32>
    %cst_167 = arith.constant 3.600000e+01 : f32
    %338 = vector.broadcast %cst_167 : f32 to vector<1x8xf32>
    %339 = arith.divf %337, %338 : vector<1x8xf32>
    %cst_168 = arith.constant 9.99999974E-6 : f32
    %340 = vector.broadcast %cst_168 : f32 to vector<1x8xf32>
    %341 = arith.addf %339, %340 : vector<1x8xf32>
    %342 = math.rsqrt %341 : vector<1x8xf32>
    %343 = tpu.concatenate %342, %342 in 1 : vector<1x8xf32>, vector<1x8xf32> -> vector<1x16xf32>
    %344 = vector.broadcast %319 : vector<1x16xf32> to vector<9x16xf32>
    %345 = arith.subf %282, %344 : vector<9x16xf32>
    %346 = vector.broadcast %343 : vector<1x16xf32> to vector<9x16xf32>
    %347 = arith.mulf %345, %346 : vector<9x16xf32>
    %c0_169 = arith.constant 0 : index
    %c0_170 = arith.constant 0 : index
    %348 = vector.load %arg18[%c0_169, %c0_170] : memref<1x16xf32, #tpu.memory_space<vmem>>, vector<1x16xf32>
    %349 = vector.broadcast %348 : vector<1x16xf32> to vector<9x16xf32>
    %350 = arith.mulf %347, %349 : vector<9x16xf32>
    %c0_171 = arith.constant 0 : index
    %c0_172 = arith.constant 0 : index
    %351 = vector.load %arg19[%c0_171, %c0_172] : memref<1x16xf32, #tpu.memory_space<vmem>>, vector<1x16xf32>
    %352 = vector.broadcast %351 : vector<1x16xf32> to vector<9x16xf32>
    %353 = arith.addf %350, %352 : vector<9x16xf32>
    %cst_173 = arith.constant 0.000000e+00 : f32
    %354 = vector.broadcast %cst_173 : f32 to vector<9x16xf32>
    %355 = arith.maximumf %353, %354 : vector<9x16xf32>
    %356 = arith.truncf %355 : vector<9x16xf32> to vector<9x16xbf16>
    %c0_174 = arith.constant 0 : index
    %c0_175 = arith.constant 0 : index
    %c0_176 = arith.constant 0 : index
    %357 = vector.load %arg20[%c0_174, %c0_175, %c0_176] : memref<2x9x16xbf16, #tpu.memory_space<vmem>>, vector<1x9x16xbf16>
    %358 = vector.shape_cast %357 : vector<1x9x16xbf16> to vector<9x16xbf16>
    %359 = vector.shape_cast %356 : vector<9x16xbf16> to vector<1x9x16xbf16>
    tpu.vector_store %arg20[%c0_174, %c0_175, %c0_176], %359 {strides = array<i32>} : memref<2x9x16xbf16, #tpu.memory_space<vmem>>, vector<1x9x16xbf16>,
    %360 = vector.broadcast %319 : vector<1x16xf32> to vector<9x16xf32>
    %361 = arith.subf %304, %360 : vector<9x16xf32>
    %362 = vector.broadcast %343 : vector<1x16xf32> to vector<9x16xf32>
    %363 = arith.mulf %361, %362 : vector<9x16xf32>
    %c0_177 = arith.constant 0 : index
    %c0_178 = arith.constant 0 : index
    %364 = vector.load %arg18[%c0_177, %c0_178] : memref<1x16xf32, #tpu.memory_space<vmem>>, vector<1x16xf32>
    %365 = vector.broadcast %364 : vector<1x16xf32> to vector<9x16xf32>
    %366 = arith.mulf %363, %365 : vector<9x16xf32>
    %c0_179 = arith.constant 0 : index
    %c0_180 = arith.constant 0 : index
    %367 = vector.load %arg19[%c0_179, %c0_180] : memref<1x16xf32, #tpu.memory_space<vmem>>, vector<1x16xf32>
    %368 = vector.broadcast %367 : vector<1x16xf32> to vector<9x16xf32>
    %369 = arith.addf %366, %368 : vector<9x16xf32>
    %cst_181 = arith.constant 0.000000e+00 : f32
    %370 = vector.broadcast %cst_181 : f32 to vector<9x16xf32>
    %371 = arith.maximumf %369, %370 : vector<9x16xf32>
    %372 = arith.truncf %371 : vector<9x16xf32> to vector<9x16xbf16>
    %c1_182 = arith.constant 1 : index
    %c0_183 = arith.constant 0 : index
    %c0_184 = arith.constant 0 : index
    %373 = vector.load %arg20[%c1_182, %c0_183, %c0_184] : memref<2x9x16xbf16, #tpu.memory_space<vmem>>, vector<1x9x16xbf16>
    %374 = vector.shape_cast %373 : vector<1x9x16xbf16> to vector<9x16xbf16>
    %375 = vector.shape_cast %372 : vector<9x16xbf16> to vector<1x9x16xbf16>
    tpu.vector_store %arg20[%c1_182, %c0_183, %c0_184], %375 {strides = array<i32>} : memref<2x9x16xbf16, #tpu.memory_space<vmem>>, vector<1x9x16xbf16>,
    return
  }
}

</mosaic_0001>

<llo_original>
// kernel: manner_block_fwd.7
$region0: #{manner_block_fwd.7}
  #allocation0 [shape = 'u32[]', space=smem, size = 0x4, offset = 0x4, fixed_abs, tag = 'smem constant byte address 0x4 - core index']
  #allocation1 [shape = 'u32[144,128]{1,0:T(1,128)}', space=vmem, size = 0x12000, scoped, tag = 'internal scratch']
  %s0 = inlined_call_operand.vmem [shape: f32[2,20,1], index: 0, kind: input, shape index: {}]
  %s1 = inlined_call_operand.vmem [shape: f32[3,8], index: 1, kind: input, shape index: {}]
  %s2 = inlined_call_operand.vmem [shape: f32[1,8], index: 2, kind: input, shape index: {}]
  %s3 = inlined_call_operand.vmem [shape: f32[1,8], index: 3, kind: input, shape index: {}]
  %s4 = inlined_call_operand.vmem [shape: f32[1,8], index: 4, kind: input, shape index: {}]
  %s5 = inlined_call_operand.vmem [shape: bf16[2,18,8], index: 5, kind: output, shape index: {}]
  %s6 = sld [smem:[#allocation0]]
  $region30: #{manner_block_fwd.7} parent=0
    _
  %s8 = ssub.s32 1, %s6
  %s9 = scalar_select 0, %s8, %s6
  // Predicated region
  $region2: #{manner_block_fwd.7} parent=0 // pred_check
    _
  $region3: #{manner_block_fwd.7} parent=0 // pred_check_branch
    %11 = sbr.rel (0) target = $region5
  $region4: #{manner_block_fwd.7} parent=0 // pred_region
    _
  $region5: #{manner_block_fwd.7} parent=0 // pred_fallthru
    _
  // Predicated region
  $region6: #{manner_block_fwd.7} parent=0 // pred_check
    _
  $region7: #{manner_block_fwd.7} parent=0 // pred_check_branch
    %13 = sbr.rel (0) target = $region9
  $region8: #{manner_block_fwd.7} parent=0 // pred_region
    _
  $region9: #{manner_block_fwd.7} parent=0 // pred_fallthru
    _
  // Predicated region
  $region10: #{manner_block_fwd.7} parent=0 // pred_check
    _
  $region11: #{manner_block_fwd.7} parent=0 // pred_check_branch
    %15 = sbr.rel (0) target = $region13
  $region12: #{manner_block_fwd.7} parent=0 // pred_region
    _
  $region13: #{manner_block_fwd.7} parent=0 // pred_fallthru
    _
  // Predicated region
  $region14: #{manner_block_fwd.7} parent=0 // pred_check
    _
  $region15: #{manner_block_fwd.7} parent=0 // pred_check_branch
    %17 = sbr.rel (0) target = $region17
  $region16: #{manner_block_fwd.7} parent=0 // pred_region
    _
  $region17: #{manner_block_fwd.7} parent=0 // pred_fallthru
    _
  // Predicated region
  $region18: #{manner_block_fwd.7} parent=0 // pred_check
    _
  $region19: #{manner_block_fwd.7} parent=0 // pred_check_branch
    %19 = sbr.rel (0) target = $region21
  $region20: #{manner_block_fwd.7} parent=0 // pred_region
    _
  $region21: #{manner_block_fwd.7} parent=0 // pred_fallthru
    _
  %v20 = vld [vmem:[%s0] sm:$0xff]
  %v21 = vld [vmem:[%s0 + $0x8] sm:$0xff]
  %v22 = vld [vmem:[%s0 + $0x10] sm:$0x3]
  %v23 = vld [vmem:[%s1] sm:$0x1]
  %25 = vset.pattern.permute.xlu0 0
  %26 = vperm.xlu0 %25, %v20
  %v27 = vpop.permute.xlu0 %26
  %30 = vset.pattern.permute.xlu0 0
  %31 = vperm.xlu0 %30, %v21
  %v32 = vpop.permute.xlu0 %31
  %35 = vset.pattern.permute.xlu0 0
  %36 = vperm.xlu0 %35, %v22
  %v37 = vpop.permute.xlu0 %36
  %v39 = vlaneseq
  %v40 = vshrl.u32 %v39, 7
  %v41 = vsub.s32 0, %v40
  %v42 = vrot.slane %v23, %v41
  %v43 = vmul.f32 %v27, %v42
  %v44 = vmul.f32 %v32, %v42
  %v45 = vmul.f32 %v37, %v42
  %v46 = vadd.f32 %v43, 0.0
  %v47 = vadd.f32 %v44, 0.0
  %v48 = vadd.f32 %v45, 0.0
  %v49 = vld [vmem:[%s0 + $0x1] sm:$0xff]
  %v50 = vld [vmem:[%s0 + $0x9] sm:$0xff]
  %v51 = vld [vmem:[%s0 + $0x11] sm:$0x3]
  %v52 = vld [vmem:[%s1 + $0x1] sm:$0x1]
  %54 = vset.pattern.permute.xlu0 0
  %55 = vperm.xlu0 %54, %v49
  %v56 = vpop.permute.xlu0 %55
  %59 = vset.pattern.permute.xlu0 0
  %60 = vperm.xlu0 %59, %v50
  %v61 = vpop.permute.xlu0 %60
  %64 = vset.pattern.permute.xlu0 0
  %65 = vperm.xlu0 %64, %v51
  %v66 = vpop.permute.xlu0 %65
  %v68 = vlaneseq
  %v69 = vshrl.u32 %v68, 7
  %v70 = vsub.s32 0, %v69
  %v71 = vrot.slane %v52, %v70
  %v72 = vmul.f32 %v56, %v71
  %v73 = vmul.f32 %v61, %v71
  %v74 = vmul.f32 %v66, %v71
  %v75 = vadd.f32 %v46, %v72
  %v76 = vadd.f32 %v47, %v73
  %v77 = vadd.f32 %v48, %v74
  %v78 = vld [vmem:[%s0 + $0x2] sm:$0xff]
  %v79 = vld [vmem:[%s0 + $0xa] sm:$0xff]
  %v80 = vld [vmem:[%s0 + $0x12] sm:$0x3]
  %v81 = vld [vmem:[%s1 + $0x2] sm:$0x1]
  %83 = vset.pattern.permute.xlu0 0
  %84 = vperm.xlu0 %83, %v78
  %v85 = vpop.permute.xlu0 %84
  %88 = vset.pattern.permute.xlu0 0
  %89 = vperm.xlu0 %88, %v79
  %v90 = vpop.permute.xlu0 %89
  %93 = vset.pattern.permute.xlu0 0
  %94 = vperm.xlu0 %93, %v80
  %v95 = vpop.permute.xlu0 %94
  %v97 = vlaneseq
  %v98 = vshrl.u32 %v97, 7
  %v99 = vsub.s32 0, %v98
  %v100 = vrot.slane %v81, %v99
  %v101 = vmul.f32 %v85, %v100
  %v102 = vmul.f32 %v90, %v100
  %v103 = vmul.f32 %v95, %v100
  %v104 = vadd.f32 %v75, %v101
  %v105 = vadd.f32 %v76, %v102
  %v106 = vadd.f32 %v77, %v103
  %v107 = vld [vmem:[%s2] sm:$0x1]
  %v109 = vlaneseq
  %v110 = vshrl.u32 %v109, 7
  %v111 = vsub.s32 0, %v110
  %v112 = vrot.slane %v107, %v111
  %v114 = vadd.f32 %v104, %v112
  %v115 = vadd.f32 %v105, %v112
  %v116 = vadd.f32 %v106, %v112
  %s117 = scalar_lea.vmem %s0, 24
  %v118 = vld [vmem:[%s117] sm:$0xff]
  %v119 = vld [vmem:[%s117 + $0x8] sm:$0xff]
  %v120 = vld [vmem:[%s117 + $0x10] sm:$0x3]
  %122 = vset.pattern.permute.xlu0 0
  %123 = vperm.xlu0 %122, %v118
  %v124 = vpop.permute.xlu0 %123
  %127 = vset.pattern.permute.xlu0 0
  %128 = vperm.xlu0 %127, %v119
  %v129 = vpop.permute.xlu0 %128
  %132 = vset.pattern.permute.xlu0 0
  %133 = vperm.xlu0 %132, %v120
  %v134 = vpop.permute.xlu0 %133
  %v136 = vmul.f32 %v124, %v42
  %v137 = vmul.f32 %v129, %v42
  %v138 = vmul.f32 %v134, %v42
  %v139 = vadd.f32 %v136, 0.0
  %v140 = vadd.f32 %v137, 0.0
  %v141 = vadd.f32 %v138, 0.0
  %v142 = vld [vmem:[%s117 + $0x1] sm:$0xff]
  %v143 = vld [vmem:[%s117 + $0x9] sm:$0xff]
  %v144 = vld [vmem:[%s117 + $0x11] sm:$0x3]
  %146 = vset.pattern.permute.xlu0 0
  %147 = vperm.xlu0 %146, %v142
  %v148 = vpop.permute.xlu0 %147
  %151 = vset.pattern.permute.xlu0 0
  %152 = vperm.xlu0 %151, %v143
  %v153 = vpop.permute.xlu0 %152
  %156 = vset.pattern.permute.xlu0 0
  %157 = vperm.xlu0 %156, %v144
  %v158 = vpop.permute.xlu0 %157
  %v160 = vmul.f32 %v148, %v71
  %v161 = vmul.f32 %v153, %v71
  %v162 = vmul.f32 %v158, %v71
  %v163 = vadd.f32 %v139, %v160
  %v164 = vadd.f32 %v140, %v161
  %v165 = vadd.f32 %v141, %v162
  %v166 = vld [vmem:[%s117 + $0x2] sm:$0xff]
  %v167 = vld [vmem:[%s117 + $0xa] sm:$0xff]
  %v168 = vld [vmem:[%s117 + $0x12] sm:$0x3]
  %170 = vset.pattern.permute.xlu0 0
  %171 = vperm.xlu0 %170, %v166
  %v172 = vpop.permute.xlu0 %171
  %175 = vset.pattern.permute.xlu0 0
  %176 = vperm.xlu0 %175, %v167
  %v177 = vpop.permute.xlu0 %176
  %180 = vset.pattern.permute.xlu0 0
  %181 = vperm.xlu0 %180, %v168
  %v182 = vpop.permute.xlu0 %181
  %v184 = vmul.f32 %v172, %v100
  %v185 = vmul.f32 %v177, %v100
  %v186 = vmul.f32 %v182, %v100
  %v187 = vadd.f32 %v163, %v184
  %v188 = vadd.f32 %v164, %v185
  %v189 = vadd.f32 %v165, %v186
  %v190 = vadd.f32 %v187, %v112
  %v191 = vadd.f32 %v188, %v112
  %v192 = vadd.f32 %v189, %v112
  %v193 = vld [vmem:[%s3] sm:$0x1]
  %v194 = vld [vmem:[%s4] sm:$0x1]
  %vm195 = vcmask 64512
  %v196 = vsel %vm195, %v114, 0.0
  %v197 = vsel %vm195, %v115, 0.0
  %v198 = vadd.f32 %v196, %v197
  %vm199 = vcmask 58368
  %v200 = vsel %vm199, %v116, 0.0
  %v201 = vadd.f32 %v198, %v200
  %v202 = vrot.slane %v201, 4
  %v203 = vadd.f32 %v201, %v202
  %v204 = vrot.slane %v203, 2
  %v205 = vadd.f32 %v203, %v204
  %v206 = vrot.slane %v205, 1
  %v207 = vadd.f32 %v205, %v206
  %v208 = vadd.f32 %v207, 0.0
  %v209 = vsel %vm195, %v190, 0.0
  %v210 = vsel %vm195, %v191, 0.0
  %v211 = vadd.f32 %v209, %v210
  %v212 = vsel %vm199, %v192, 0.0
  %v213 = vadd.f32 %v211, %v212
  %v214 = vrot.slane %v213, 4
  %v215 = vadd.f32 %v213, %v214
  %v216 = vrot.slane %v215, 2
  %v217 = vadd.f32 %v215, %v216
  %v218 = vrot.slane %v217, 1
  %v219 = vadd.f32 %v217, %v218
  %v220 = vadd.f32 %v208, %v219
  %v221 = vrcp.pop 36.0
  %v222 = vmul.f32 %v220, %v221
  %v223 = vsub.f32 %v114, %v222
  %v224 = vsub.f32 %v115, %v222
  %v225 = vsub.f32 %v116, %v222
  %v226 = vmul.f32 %v223, %v223
  %v227 = vmul.f32 %v224, %v224
  %v228 = vmul.f32 %v225, %v225
  %v229 = vsel %vm195, %v226, 0.0
  %v230 = vsel %vm195, %v227, 0.0
  %v231 = vadd.f32 %v229, %v230
  %v232 = vsel %vm199, %v228, 0.0
  %v233 = vadd.f32 %v231, %v232
  %v234 = vrot.slane %v233, 4
  %v235 = vadd.f32 %v233, %v234
  %v236 = vrot.slane %v235, 2
  %v237 = vadd.f32 %v235, %v236
  %v238 = vrot.slane %v237, 1
  %v239 = vadd.f32 %v237, %v238
  %v240 = vadd.f32 %v239, 0.0
  %v241 = vsub.f32 %v190, %v222
  %v242 = vsub.f32 %v191, %v222
  %v243 = vsub.f32 %v192, %v222
  %v244 = vmul.f32 %v241, %v241
  %v245 = vmul.f32 %v242, %v242
  %v246 = vmul.f32 %v243, %v243
  %v247 = vsel %vm195, %v244, 0.0
  %v248 = vsel %vm195, %v245, 0.0
  %v249 = vadd.f32 %v247, %v248
  %v250 = vsel %vm199, %v246, 0.0
  %v251 = vadd.f32 %v249, %v250
  %v252 = vrot.slane %v251, 4
  %v253 = vadd.f32 %v251, %v252
  %v254 = vrot.slane %v253, 2
  %v255 = vadd.f32 %v253, %v254
  %v256 = vrot.slane %v255, 1
  %v257 = vadd.f32 %v255, %v256
  %v258 = vadd.f32 %v240, %v257
  %v259 = vmul.f32 %v258, %v221
  %v260 = vadd.f32 %v259, 1e-05
  %v261 = vrsqrt.pop %v260
  %v262 = vmul.f32 %v223, %v261
  %v263 = vmul.f32 %v224, %v261
  %v264 = vmul.f32 %v225, %v261
  %v266 = vlaneseq
  %v267 = vshrl.u32 %v266, 7
  %v268 = vsub.s32 0, %v267
  %v269 = vrot.slane %v193, %v268
  %v271 = vmul.f32 %v262, %v269
  %v272 = vmul.f32 %v263, %v269
  %v273 = vmul.f32 %v264, %v269
  %v275 = vlaneseq
  %v276 = vshrl.u32 %v275, 7
  %v277 = vsub.s32 0, %v276
  %v278 = vrot.slane %v194, %v277
  %v280 = vadd.f32 %v271, %v278
  %v281 = vadd.f32 %v272, %v278
  %v282 = vadd.f32 %v273, %v278
  %v283 = vmul.f32 %v241, %v261
  %v284 = vmul.f32 %v242, %v261
  %v285 = vmul.f32 %v243, %v261
  %v286 = vmul.f32 %v283, %v269
  %v287 = vmul.f32 %v284, %v269
  %v288 = vmul.f32 %v285, %v269
  %v289 = vadd.f32 %v286, %v278
  %v290 = vadd.f32 %v287, %v278
  %v291 = vadd.f32 %v288, %v278
  %v292 = vmax.f32 %v280, 0.0
  %v293 = vmax.f32 %v281, 0.0
  %v294 = vmax.f32 %v282, 0.0
  %v295 = vpack.c.bf16 %v293, %v292
  %v296 = vpack.c.bf16 %v294, %v294
  %v299 = vunpack.c.l.b16 %v295
  %v300 = vunpack.c.h.b16 %v295
  %v301 = vunpack.c.l.b16 %v296
  %v302 = vpack.c.b16 %v299, %v299
  %v303 = vpack.c.b16 %v300, %v300
  %v304 = vpack.c.b16 %v301, %v301
  %vm308 = vcmask 60416
  %309 = vst.msk [vmem:[%s5] sm:$0xf] %vm308, %v302
  %310 = vst.msk [vmem:[%s5 + $0x4] sm:$0xf] %vm308, %v303
  %vm311 = vcmask 57344
  %312 = vst.msk [vmem:[%s5 + $0x8] sm:$0x1] %vm311, %v304
  %v313 = vmax.f32 %v289, 0.0
  %v314 = vmax.f32 %v290, 0.0
  %v315 = vmax.f32 %v291, 0.0
  %v316 = vpack.c.bf16 %v314, %v313
  %v317 = vpack.c.bf16 %v315, %v315
  %v320 = vunpack.c.l.b16 %v316
  %v321 = vunpack.c.h.b16 %v316
  %v322 = vunpack.c.l.b16 %v317
  %v323 = vpack.c.b16 %v320, %v320
  %v324 = vpack.c.b16 %v321, %v321
  %v325 = vpack.c.b16 %v322, %v322
  %s329 = scalar_lea.vmem %s5, 12
  %330 = vst.msk [vmem:[%s329] sm:$0xf] %vm308, %v323
  %331 = vst.msk [vmem:[%s329 + $0x4] sm:$0xf] %vm308, %v324
  %332 = vst.msk [vmem:[%s329 + $0x8] sm:$0x1] %vm311, %v325
  // Predicated region
  $region22: #{manner_block_fwd.7} parent=0 // pred_check
    _
  $region23: #{manner_block_fwd.7} parent=0 // pred_check_branch
    %334 = sbr.rel (0) target = $region25
  $region24: #{manner_block_fwd.7} parent=0 // pred_region
    _
  $region25: #{manner_block_fwd.7} parent=0 // pred_fallthru
    _
  // Predicated region
  $region26: #{manner_block_fwd.7} parent=0 // pred_check
    _
  $region27: #{manner_block_fwd.7} parent=0 // pred_check_branch
    %336 = sbr.rel (0) target = $region29
  $region28: #{manner_block_fwd.7} parent=0 // pred_region
    _
  $region29: #{manner_block_fwd.7} parent=0 // pred_fallthru
    _

// kernel: manner_block_fwd.10
$region0: #{manner_block_fwd.10}
  #allocation0 [shape = 'u32[]', space=smem, size = 0x4, offset = 0x4, fixed_abs, tag = 'smem constant byte address 0x4 - core index']
  #allocation1 [shape = 'u32[144,128]{1,0:T(1,128)}', space=vmem, size = 0x12000, scoped, tag = 'internal scratch']
  %s0 = inlined_call_operand.vmem [shape: bf16[2,3,32], index: 0, kind: input, shape index: {}]
  %s1 = inlined_call_operand.vmem [shape: bf16[32,32], index: 1, kind: input, shape index: {}]
  %s2 = inlined_call_operand.vmem [shape: bf16[2,3,32], index: 2, kind: output, shape index: {}]
  %s3 = sld [smem:[#allocation0]]
  $region18: #{manner_block_fwd.10} parent=0
    _
  %s5 = ssub.s32 1, %s3
  %s6 = scalar_select 0, %s5, %s3
  // Predicated region
  $region2: #{manner_block_fwd.10} parent=0 // pred_check
    _
  $region3: #{manner_block_fwd.10} parent=0 // pred_check_branch
    %8 = sbr.rel (0) target = $region5
  $region4: #{manner_block_fwd.10} parent=0 // pred_region
    _
  $region5: #{manner_block_fwd.10} parent=0 // pred_fallthru
    _
  // Predicated region
  $region6: #{manner_block_fwd.10} parent=0 // pred_check
    _
  $region7: #{manner_block_fwd.10} parent=0 // pred_check_branch
    %10 = sbr.rel (0) target = $region9
  $region8: #{manner_block_fwd.10} parent=0 // pred_region
    _
  $region9: #{manner_block_fwd.10} parent=0 // pred_fallthru
    _
  %v12 = vld [vmem:[%s0] sm:$0x3]
  %v13 = vld [vmem:[%s1] sm:$0xf]
  %v14 = vld [vmem:[%s1 + $0x4] sm:$0xf]
  %v15 = vld [vmem:[%s1 + $0x8] sm:$0xf]
  %v16 = vld [vmem:[%s1 + $0xc] sm:$0xf]
  %v21 = vunpack.c.l.b16 %v13
  %v22 = vunpack.c.l.b16 %v14
  %v23 = vunpack.c.l.b16 %v15
  %v24 = vunpack.c.l.b16 %v16
  %v25 = vpack.c.b16 %v22, %v21
  %v26 = vpack.c.b16 %v24, %v23
  %vm29 = vcmask 261120
  %v31 = vsel %vm29, %v12, 0
  %33 = vmatprep.subr.bf16.mxu0 0
  %34 = vmatpush1.bf16.msra.mxu0 %v25
  %35 = vmatprep.subr.bf16.mxu0 0
  %36 = vmatpush1.bf16.msra.mxu0 %v26
  %37 = vmatprep.subr.bf16.mxu0 0
  %38 = vmatpush1.bf16.msra.mxu0 0
  %39 = vmatprep.subr.bf16.mxu0 0
  %40 = vmatpush1.bf16.msra.mxu0 0
  %41 = vmatprep.subr.bf16.mxu0 0
  %42 = vmatpush1.bf16.msra.mxu0 0
  %43 = vmatprep.subr.bf16.mxu0 0
  %44 = vmatpush1.bf16.msra.mxu0 0
  %45 = vmatprep.subr.bf16.mxu0 0
  %46 = vmatpush1.bf16.msra.mxu0 0
  %47 = vmatprep.subr.bf16.mxu0 0
  %48 = vmatpush1.bf16.msra.mxu0 0
  %49 = vmatprep.subr.bf16.mxu0 0
  %50 = vmatpush1.bf16.msra.mxu0 0
  %51 = vmatprep.subr.bf16.mxu0 0
  %52 = vmatpush1.bf16.msra.mxu0 0
  %53 = vmatprep.subr.bf16.mxu0 0
  %54 = vmatpush1.bf16.msra.mxu0 0
  %55 = vmatprep.subr.bf16.mxu0 0
  %56 = vmatpush1.bf16.msra.mxu0 0
  %57 = vmatprep.subr.bf16.mxu0 0
  %58 = vmatpush1.bf16.msra.mxu0 0
  %59 = vmatprep.subr.bf16.mxu0 0
  %60 = vmatpush1.bf16.msra.mxu0 0
  %61 = vmatprep.subr.bf16.mxu0 0
  %62 = vmatpush1.bf16.msra.mxu0 0
  %63 = vmatprep.subr.bf16.mxu0 0
  %64 = vmatpush1.bf16.msra.mxu0 0
  %65 = vmatprep.mubr.bf16.mxu0 0
  %66 = vmatmul.mubr.bf16.gmra.mrb[0].mxu0 %v31
  %v67 = vpop.f32.mrb[0].mxu0
  %v68 = vadd.f32 0.0, %v67
  %v69 = vpop.f32.mrb[0].mxu0
  %v70 = vpop.f32.mrb[0].mxu0
  %v71 = vpop.f32.mrb[0].mxu0
  %72 = vdwg.mxu0
  %v73 = vmax.f32 %v68, 0.0
  %v74 = vpack.c.bf16 %v73, %v73
  %vm75 = vcmask 254976
  %vm76 = vsmask.f32 1280
  %vm77 = vmand %vm75, %vm76
  %v78 = vld [vmem:[%s2] sm:$0x3]
  %v79 = vsel %vm77, %v74, %v78
  %80 = vst [vmem:[%s2] sm:$0x3] %v79
  %s81 = scalar_lea.vmem %s0, 2
  %v82 = vld [vmem:[%s81] sm:$0x3]
  %v83 = vld [vmem:[%s1] sm:$0xf]
  %v84 = vld [vmem:[%s1 + $0x4] sm:$0xf]
  %v85 = vld [vmem:[%s1 + $0x8] sm:$0xf]
  %v86 = vld [vmem:[%s1 + $0xc] sm:$0xf]
  %v91 = vunpack.c.l.b16 %v83
  %v92 = vunpack.c.l.b16 %v84
  %v93 = vunpack.c.l.b16 %v85
  %v94 = vunpack.c.l.b16 %v86
  %v95 = vpack.c.b16 %v92, %v91
  %v96 = vpack.c.b16 %v94, %v93
  %v100 = vsel %vm29, %v82, 0
  %102 = vmatprep.subr.bf16.mxu0 0
  %103 = vmatpush1.bf16.msra.mxu0 %v95
  %104 = vmatprep.subr.bf16.mxu0 0
  %105 = vmatpush1.bf16.msra.mxu0 %v96
  %106 = vmatprep.subr.bf16.mxu0 0
  %107 = vmatpush1.bf16.msra.mxu0 0
  %108 = vmatprep.subr.bf16.mxu0 0
  %109 = vmatpush1.bf16.msra.mxu0 0
  %110 = vmatprep.subr.bf16.mxu0 0
  %111 = vmatpush1.bf16.msra.mxu0 0
  %112 = vmatprep.subr.bf16.mxu0 0
  %113 = vmatpush1.bf16.msra.mxu0 0
  %114 = vmatprep.subr.bf16.mxu0 0
  %115 = vmatpush1.bf16.msra.mxu0 0
  %116 = vmatprep.subr.bf16.mxu0 0
  %117 = vmatpush1.bf16.msra.mxu0 0
  %118 = vmatprep.subr.bf16.mxu0 0
  %119 = vmatpush1.bf16.msra.mxu0 0
  %120 = vmatprep.subr.bf16.mxu0 0
  %121 = vmatpush1.bf16.msra.mxu0 0
  %122 = vmatprep.subr.bf16.mxu0 0
  %123 = vmatpush1.bf16.msra.mxu0 0
  %124 = vmatprep.subr.bf16.mxu0 0
  %125 = vmatpush1.bf16.msra.mxu0 0
  %126 = vmatprep.subr.bf16.mxu0 0
  %127 = vmatpush1.bf16.msra.mxu0 0
  %128 = vmatprep.subr.bf16.mxu0 0
  %129 = vmatpush1.bf16.msra.mxu0 0
  %130 = vmatprep.subr.bf16.mxu0 0
  %131 = vmatpush1.bf16.msra.mxu0 0
  %132 = vmatprep.subr.bf16.mxu0 0
  %133 = vmatpush1.bf16.msra.mxu0 0
  %134 = vmatprep.mubr.bf16.mxu0 0
  %135 = vmatmul.mubr.bf16.gmra.mrb[0].mxu0 %v100
  %v136 = vpop.f32.mrb[0].mxu0
  %v137 = vadd.f32 0.0, %v136
  %v138 = vpop.f32.mrb[0].mxu0
  %v139 = vpop.f32.mrb[0].mxu0
  %v140 = vpop.f32.mrb[0].mxu0
  %141 = vdwg.mxu0
  %v142 = vmax.f32 %v137, 0.0
  %v143 = vpack.c.bf16 %v142, %v142
  %s144 = scalar_lea.vmem %s2, 2
  %v145 = vld [vmem:[%s144] sm:$0x3]
  %v146 = vsel %vm77, %v143, %v145
  %147 = vst [vmem:[%s144] sm:$0x3] %v146
  // Predicated region
  $region10: #{manner_block_fwd.10} parent=0 // pred_check
    _
  $region11: #{manner_block_fwd.10} parent=0 // pred_check_branch
    %149 = sbr.rel (0) target = $region13
  $region12: #{manner_block_fwd.10} parent=0 // pred_region
    _
  $region13: #{manner_block_fwd.10} parent=0 // pred_fallthru
    _
  // Predicated region
  $region14: #{manner_block_fwd.10} parent=0 // pred_check
    _
  $region15: #{manner_block_fwd.10} parent=0 // pred_check_branch
    %151 = sbr.rel (0) target = $region17
  $region16: #{manner_block_fwd.10} parent=0 // pred_region
    _
  $region17: #{manner_block_fwd.10} parent=0 // pred_fallthru
    _

// kernel: manner_block_fwd.8
$region0: #{manner_block_fwd.8}
  #allocation0 [shape = 'u32[]', space=smem, size = 0x4, offset = 0x4, fixed_abs, tag = 'smem constant byte address 0x4 - core index']
  #allocation1 [shape = 'u32[144,128]{1,0:T(1,128)}', space=vmem, size = 0x12000, scoped, tag = 'internal scratch']
  #allocation2 [shape = 'f32[2,38,8]{2,1,0:T(8,128)}', space=vmem, size = 0xa000, scoped, tag = 'scratch operand']
  %s0 = inlined_call_operand.vmem [shape: bf16[2,9,8], index: 0, kind: input, shape index: {}]
  %s1 = inlined_call_operand.vmem [shape: bf16[2,9,8], index: 1, kind: input, shape index: {}]
  %s2 = inlined_call_operand.vmem [shape: bf16[32,8], index: 2, kind: input, shape index: {}]
  %s3 = inlined_call_operand.vmem [shape: f32[1,8], index: 3, kind: input, shape index: {}]
  %s4 = inlined_call_operand.vmem [shape: f32[1,8], index: 4, kind: input, shape index: {}]
  %s5 = inlined_call_operand.vmem [shape: f32[1,8], index: 5, kind: input, shape index: {}]
  %s6 = inlined_call_operand.vmem [shape: bf16[8,16], index: 6, kind: input, shape index: {}]
  %s7 = inlined_call_operand.vmem [shape: f32[1,16], index: 7, kind: input, shape index: {}]
  %s8 = inlined_call_operand.vmem [shape: f32[1,16], index: 8, kind: input, shape index: {}]
  %s9 = inlined_call_operand.vmem [shape: f32[1,16], index: 9, kind: input, shape index: {}]
  %s10 = inlined_call_operand.vmem [shape: f32[31,8], index: 10, kind: input, shape index: {}]
  %s11 = inlined_call_operand.vmem [shape: f32[1,8], index: 11, kind: input, shape index: {}]
  %s12 = inlined_call_operand.vmem [shape: f32[1,8], index: 12, kind: input, shape index: {}]
  %s13 = inlined_call_operand.vmem [shape: f32[1,8], index: 13, kind: input, shape index: {}]
  %s14 = inlined_call_operand.vmem [shape: bf16[8,16], index: 14, kind: input, shape index: {}]
  %s15 = inlined_call_operand.vmem [shape: f32[1,16], index: 15, kind: input, shape index: {}]
  %s16 = inlined_call_operand.vmem [shape: f32[1,16], index: 16, kind: input, shape index: {}]
  %s17 = inlined_call_operand.vmem [shape: f32[1,16], index: 17, kind: input, shape index: {}]
  %s18 = inlined_call_operand.vmem [shape: bf16[8,16], index: 18, kind: input, shape index: {}]
  %s19 = inlined_call_operand.vmem [shape: f32[1,16], index: 19, kind: input, shape index: {}]
  %s20 = inlined_call_operand.vmem [shape: bf16[2,8,16], index: 20, kind: output, shape index: {}]
  %s21 = sld [smem:[#allocation0]]
  $region104: #{manner_block_fwd.8} parent=0
    _
  %s23 = ssub.s32 1, %s21
  %s24 = scalar_select 0, %s23, %s21
  // Predicated region
  $region2: #{manner_block_fwd.8} parent=0 // pred_check
    _
  $region3: #{manner_block_fwd.8} parent=0 // pred_check_branch
    %26 = sbr.rel (0) target = $region5
  $region4: #{manner_block_fwd.8} parent=0 // pred_region
    _
  $region5: #{manner_block_fwd.8} parent=0 // pred_fallthru
    _
  // Predicated region
  $region6: #{manner_block_fwd.8} parent=0 // pred_check
    _
  $region7: #{manner_block_fwd.8} parent=0 // pred_check_branch
    %28 = sbr.rel (0) target = $region9
  $region8: #{manner_block_fwd.8} parent=0 // pred_region
    _
  $region9: #{manner_block_fwd.8} parent=0 // pred_fallthru
    _
  // Predicated region
  $region10: #{manner_block_fwd.8} parent=0 // pred_check
    _
  $region11: #{manner_block_fwd.8} parent=0 // pred_check_branch
    %30 = sbr.rel (0) target = $region13
  $region12: #{manner_block_fwd.8} parent=0 // pred_region
    _
  $region13: #{manner_block_fwd.8} parent=0 // pred_fallthru
    _
  // Predicated region
  $region14: #{manner_block_fwd.8} parent=0 // pred_check
    _
  $region15: #{manner_block_fwd.8} parent=0 // pred_check_branch
    %32 = sbr.rel (0) target = $region17
  $region16: #{manner_block_fwd.8} parent=0 // pred_region
    _
  $region17: #{manner_block_fwd.8} parent=0 // pred_fallthru
    _
  // Predicated region
  $region18: #{manner_block_fwd.8} parent=0 // pred_check
    _
  $region19: #{manner_block_fwd.8} parent=0 // pred_check_branch
    %34 = sbr.rel (0) target = $region21
  $region20: #{manner_block_fwd.8} parent=0 // pred_region
    _
  $region21: #{manner_block_fwd.8} parent=0 // pred_fallthru
    _
  // Predicated region
  $region22: #{manner_block_fwd.8} parent=0 // pred_check
    _
  $region23: #{manner_block_fwd.8} parent=0 // pred_check_branch
    %36 = sbr.rel (0) target = $region25
  $region24: #{manner_block_fwd.8} parent=0 // pred_region
    _
  $region25: #{manner_block_fwd.8} parent=0 // pred_fallthru
    _
  // Predicated region
  $region26: #{manner_block_fwd.8} parent=0 // pred_check
    _
  $region27: #{manner_block_fwd.8} parent=0 // pred_check_branch
    %38 = sbr.rel (0) target = $region29
  $region28: #{manner_block_fwd.8} parent=0 // pred_region
    _
  $region29: #{manner_block_fwd.8} parent=0 // pred_fallthru
    _
  // Predicated region
  $region30: #{manner_block_fwd.8} parent=0 // pred_check
    _
  $region31: #{manner_block_fwd.8} parent=0 // pred_check_branch
    %40 = sbr.rel (0) target = $region33
  $region32: #{manner_block_fwd.8} parent=0 // pred_region
    _
  $region33: #{manner_block_fwd.8} parent=0 // pred_fallthru
    _
  // Predicated region
  $region34: #{manner_block_fwd.8} parent=0 // pred_check
    _
  $region35: #{manner_block_fwd.8} parent=0 // pred_check_branch
    %42 = sbr.rel (0) target = $region37
  $region36: #{manner_block_fwd.8} parent=0 // pred_region
    _
  $region37: #{manner_block_fwd.8} parent=0 // pred_fallthru
    _
  // Predicated region
  $region38: #{manner_block_fwd.8} parent=0 // pred_check
    _
  $region39: #{manner_block_fwd.8} parent=0 // pred_check_branch
    %44 = sbr.rel (0) target = $region41
  $region40: #{manner_block_fwd.8} parent=0 // pred_region
    _
  $region41: #{manner_block_fwd.8} parent=0 // pred_fallthru
    _
  // Predicated region
  $region42: #{manner_block_fwd.8} parent=0 // pred_check
    _
  $region43: #{manner_block_fwd.8} parent=0 // pred_check_branch
    %46 = sbr.rel (0) target = $region45
  $region44: #{manner_block_fwd.8} parent=0 // pred_region
    _
  $region45: #{manner_block_fwd.8} parent=0 // pred_fallthru
    _
  // Predicated region
  $region46: #{manner_block_fwd.8} parent=0 // pred_check
    _
  $region47: #{manner_block_fwd.8} parent=0 // pred_check_branch
    %48 = sbr.rel (0) target = $region49
  $region48: #{manner_block_fwd.8} parent=0 // pred_region
    _
  $region49: #{manner_block_fwd.8} parent=0 // pred_fallthru
    _
  // Predicated region
  $region50: #{manner_block_fwd.8} parent=0 // pred_check
    _
  $region51: #{manner_block_fwd.8} parent=0 // pred_check_branch
    %50 = sbr.rel (0) target = $region53
  $region52: #{manner_block_fwd.8} parent=0 // pred_region
    _
  $region53: #{manner_block_fwd.8} parent=0 // pred_fallthru
    _
  // Predicated region
  $region54: #{manner_block_fwd.8} parent=0 // pred_check
    _
  $region55: #{manner_block_fwd.8} parent=0 // pred_check_branch
    %52 = sbr.rel (0) target = $region57
  $region56: #{manner_block_fwd.8} parent=0 // pred_region
    _
  $region57: #{manner_block_fwd.8} parent=0 // pred_fallthru
    _
  // Predicated region
  $region58: #{manner_block_fwd.8} parent=0 // pred_check
    _
  $region59: #{manner_block_fwd.8} parent=0 // pred_check_branch
    %54 = sbr.rel (0) target = $region61
  $region60: #{manner_block_fwd.8} parent=0 // pred_region
    _
  $region61: #{manner_block_fwd.8} parent=0 // pred_fallthru
    _
  // Predicated region
  $region62: #{manner_block_fwd.8} parent=0 // pred_check
    _
  $region63: #{manner_block_fwd.8} parent=0 // pred_check_branch
    %56 = sbr.rel (0) target = $region65
  $region64: #{manner_block_fwd.8} parent=0 // pred_region
    _
  $region65: #{manner_block_fwd.8} parent=0 // pred_fallthru
    _
  // Predicated region
  $region66: #{manner_block_fwd.8} parent=0 // pred_check
    _
  $region67: #{manner_block_fwd.8} parent=0 // pred_check_branch
    %58 = sbr.rel (0) target = $region69
  $region68: #{manner_block_fwd.8} parent=0 // pred_region
    _
  $region69: #{manner_block_fwd.8} parent=0 // pred_fallthru
    _
  // Predicated region
  $region70: #{manner_block_fwd.8} parent=0 // pred_check
    _
  $region71: #{manner_block_fwd.8} parent=0 // pred_check_branch
    %60 = sbr.rel (0) target = $region73
  $region72: #{manner_block_fwd.8} parent=0 // pred_region
    _
  $region73: #{manner_block_fwd.8} parent=0 // pred_fallthru
    _
  // Predicated region
  $region74: #{manner_block_fwd.8} parent=0 // pred_check
    _
  $region75: #{manner_block_fwd.8} parent=0 // pred_check_branch
    %62 = sbr.rel (0) target = $region77
  $region76: #{manner_block_fwd.8} parent=0 // pred_region
    _
  $region77: #{manner_block_fwd.8} parent=0 // pred_fallthru
    _
  // Predicated region
  $region78: #{manner_block_fwd.8} parent=0 // pred_check
    _
  $region79: #{manner_block_fwd.8} parent=0 // pred_check_branch
    %64 = sbr.rel (0) target = $region81
  $region80: #{manner_block_fwd.8} parent=0 // pred_region
    _
  $region81: #{manner_block_fwd.8} parent=0 // pred_fallthru
    _
  %v66 = vld [vmem:[%s0] sm:$0xf]
  %v67 = vld [vmem:[%s1] sm:$0xf]
  %v68 = vld [vmem:[%s0 + $0x4] sm:$0x1]
  %v69 = vld [vmem:[%s1 + $0x4] sm:$0x1]
  %v71 = vunpack.c.l.b16 %v67
  %v72 = vpack.c.b16 %v71, %v71
  %73 = vrot.lane.b32.xlu0 %v72, 8
  %v74 = vpop.permute.xlu0 %73
  %v77 = vunpack.c.l.b16 %v66
  %v78 = vunpack.c.l.b16 %v68
  %v79 = vpack.c.b16 %v78, %v77
  %v81 = vshrl.u32 %v79, 16
  %v83 = vshll.u32 %v79, 16
  %v85 = vrot.slane %v83, 1
  %v86 = vor.u32 %v81, %v85
  %87 = vrot.lane.b32.xlu0 %v86, 16
  %v88 = vpop.permute.xlu0 %87
  %v90 = vunpack.c.l.b16 %v69
  %v91 = vpack.c.b16 %v90, %v71
  %v93 = vshrl.u32 %v91, 16
  %v95 = vshll.u32 %v91, 16
  %v97 = vrot.slane %v95, 1
  %v98 = vor.u32 %v93, %v97
  %99 = vrot.lane.b32.xlu0 %v98, 24
  %v100 = vpop.permute.xlu0 %99
  %vm101 = vcmask 64512
  %v104 = vsel %vm101, %v66, %v74
  %vm105 = vcmask 130048
  %v107 = vsel %vm105, %v104, %v88
  %vm108 = vcmask 195584
  %v110 = vsel %vm108, %v107, %v100
  %v111 = vld [vmem:[%s2] sm:$0xf]
  %v112 = vld [vmem:[%s2 + $0x4] sm:$0xf]
  %v113 = vld [vmem:[%s2 + $0x8] sm:$0xf]
  %v114 = vld [vmem:[%s2 + $0xc] sm:$0xf]
  %v115 = vld [vmem:[%s3] sm:$0x1]
  %v117 = vlaneseq
  %v118 = vshrl.u32 %v117, 7
  %v119 = vsub.s32 0, %v118
  %v120 = vrot.slane %v115, %v119
  %v126 = vunpack.c.l.b16 %v111
  %v127 = vunpack.c.l.b16 %v112
  %v128 = vunpack.c.l.b16 %v113
  %v129 = vunpack.c.l.b16 %v114
  %v130 = vpack.c.b16 %v127, %v126
  %v131 = vpack.c.b16 %v129, %v128
  %vm134 = vcmask 261120
  %v135 = vsel %vm134, %v110, 0
  %137 = vmatprep.subr.bf16.mxu0 0
  %138 = vmatpush1.bf16.msra.mxu0 %v130
  %139 = vmatprep.subr.bf16.mxu0 0
  %140 = vmatpush1.bf16.msra.mxu0 %v131
  %141 = vmatprep.subr.bf16.mxu0 0
  %142 = vmatpush1.bf16.msra.mxu0 0
  %143 = vmatprep.subr.bf16.mxu0 0
  %144 = vmatpush1.bf16.msra.mxu0 0
  %145 = vmatprep.subr.bf16.mxu0 0
  %146 = vmatpush1.bf16.msra.mxu0 0
  %147 = vmatprep.subr.bf16.mxu0 0
  %148 = vmatpush1.bf16.msra.mxu0 0
  %149 = vmatprep.subr.bf16.mxu0 0
  %150 = vmatpush1.bf16.msra.mxu0 0
  %151 = vmatprep.subr.bf16.mxu0 0
  %152 = vmatpush1.bf16.msra.mxu0 0
  %153 = vmatprep.subr.bf16.mxu0 0
  %154 = vmatpush1.bf16.msra.mxu0 0
  %155 = vmatprep.subr.bf16.mxu0 0
  %156 = vmatpush1.bf16.msra.mxu0 0
  %157 = vmatprep.subr.bf16.mxu0 0
  %158 = vmatpush1.bf16.msra.mxu0 0
  %159 = vmatprep.subr.bf16.mxu0 0
  %160 = vmatpush1.bf16.msra.mxu0 0
  %161 = vmatprep.subr.bf16.mxu0 0
  %162 = vmatpush1.bf16.msra.mxu0 0
  %163 = vmatprep.subr.bf16.mxu0 0
  %164 = vmatpush1.bf16.msra.mxu0 0
  %165 = vmatprep.subr.bf16.mxu0 0
  %166 = vmatpush1.bf16.msra.mxu0 0
  %167 = vmatprep.subr.bf16.mxu0 0
  %168 = vmatpush1.bf16.msra.mxu0 0
  %169 = vmatprep.mubr.bf16.mxu0 0
  %170 = vmatmul.mubr.bf16.gmra.mrb[0].mxu0 %v135
  %v171 = vpop.f32.mrb[0].mxu0
  %v172 = vadd.f32 %v120, %v171
  %v173 = vpop.f32.mrb[0].mxu0
  %v174 = vpop.f32.mrb[0].mxu0
  %v175 = vpop.f32.mrb[0].mxu0
  %176 = vdwg.mxu0
  %s177 = scalar_lea.vmem %s0, 8
  %v178 = vld [vmem:[%s177] sm:$0xf]
  %s179 = scalar_lea.vmem %s1, 8
  %v180 = vld [vmem:[%s179] sm:$0xf]
  %v181 = vld [vmem:[%s177 + $0x4] sm:$0x1]
  %v182 = vld [vmem:[%s179 + $0x4] sm:$0x1]
  %v184 = vunpack.c.l.b16 %v180
  %v185 = vpack.c.b16 %v184, %v184
  %186 = vrot.lane.b32.xlu0 %v185, 8
  %v187 = vpop.permute.xlu0 %186
  %v190 = vunpack.c.l.b16 %v178
  %v191 = vunpack.c.l.b16 %v181
  %v192 = vpack.c.b16 %v191, %v190
  %v194 = vshrl.u32 %v192, 16
  %v196 = vshll.u32 %v192, 16
  %v198 = vrot.slane %v196, 1
  %v199 = vor.u32 %v194, %v198
  %200 = vrot.lane.b32.xlu0 %v199, 16
  %v201 = vpop.permute.xlu0 %200
  %v203 = vunpack.c.l.b16 %v182
  %v204 = vpack.c.b16 %v203, %v184
  %v206 = vshrl.u32 %v204, 16
  %v208 = vshll.u32 %v204, 16
  %v210 = vrot.slane %v208, 1
  %v211 = vor.u32 %v206, %v210
  %212 = vrot.lane.b32.xlu0 %v211, 24
  %v213 = vpop.permute.xlu0 %212
  %v216 = vsel %vm101, %v178, %v187
  %v218 = vsel %vm105, %v216, %v201
  %v220 = vsel %vm108, %v218, %v213
  %v221 = vsel %vm134, %v220, 0
  %223 = vmatprep.subr.bf16.mxu0 0
  %224 = vmatpush1.bf16.msra.mxu0 %v130
  %225 = vmatprep.subr.bf16.mxu0 0
  %226 = vmatpush1.bf16.msra.mxu0 %v131
  %227 = vmatprep.subr.bf16.mxu0 0
  %228 = vmatpush1.bf16.msra.mxu0 0
  %229 = vmatprep.subr.bf16.mxu0 0
  %230 = vmatpush1.bf16.msra.mxu0 0
  %231 = vmatprep.subr.bf16.mxu0 0
  %232 = vmatpush1.bf16.msra.mxu0 0
  %233 = vmatprep.subr.bf16.mxu0 0
  %234 = vmatpush1.bf16.msra.mxu0 0
  %235 = vmatprep.subr.bf16.mxu0 0
  %236 = vmatpush1.bf16.msra.mxu0 0
  %237 = vmatprep.subr.bf16.mxu0 0
  %238 = vmatpush1.bf16.msra.mxu0 0
  %239 = vmatprep.subr.bf16.mxu0 0
  %240 = vmatpush1.bf16.msra.mxu0 0
  %241 = vmatprep.subr.bf16.mxu0 0
  %242 = vmatpush1.bf16.msra.mxu0 0
  %243 = vmatprep.subr.bf16.mxu0 0
  %244 = vmatpush1.bf16.msra.mxu0 0
  %245 = vmatprep.subr.bf16.mxu0 0
  %246 = vmatpush1.bf16.msra.mxu0 0
  %247 = vmatprep.subr.bf16.mxu0 0
  %248 = vmatpush1.bf16.msra.mxu0 0
  %249 = vmatprep.subr.bf16.mxu0 0
  %250 = vmatpush1.bf16.msra.mxu0 0
  %251 = vmatprep.subr.bf16.mxu0 0
  %252 = vmatpush1.bf16.msra.mxu0 0
  %253 = vmatprep.subr.bf16.mxu0 0
  %254 = vmatpush1.bf16.msra.mxu0 0
  %255 = vmatprep.mubr.bf16.mxu0 0
  %256 = vmatmul.mubr.bf16.gmra.mrb[0].mxu0 %v221
  %v257 = vpop.f32.mrb[0].mxu0
  %v258 = vadd.f32 %v120, %v257
  %v259 = vpop.f32.mrb[0].mxu0
  %v260 = vpop.f32.mrb[0].mxu0
  %v261 = vpop.f32.mrb[0].mxu0
  %262 = vdwg.mxu0
  %v263 = vld [vmem:[%s4] sm:$0x1]
  %v264 = vld [vmem:[%s5] sm:$0x1]
  %v265 = vsel %vm101, %v172, 0.0
  %v266 = vrot.slane %v265, 4
  %v267 = vadd.f32 %v265, %v266
  %v268 = vrot.slane %v267, 2
  %v269 = vadd.f32 %v267, %v268
  %v270 = vrot.slane %v269, 1
  %v271 = vadd.f32 %v269, %v270
  %v272 = vadd.f32 %v271, 0.0
  %v273 = vsel %vm101, %v258, 0.0
  %v274 = vrot.slane %v273, 4
  %v275 = vadd.f32 %v273, %v274
  %v276 = vrot.slane %v275, 2
  %v277 = vadd.f32 %v275, %v276
  %v278 = vrot.slane %v277, 1
  %v279 = vadd.f32 %v277, %v278
  %v280 = vadd.f32 %v272, %v279
  %v281 = vrcp.pop 16.0
  %v282 = vmul.f32 %v280, %v281
  %v283 = vsub.f32 %v172, %v282
  %v284 = vmul.f32 %v283, %v283
  %v285 = vsel %vm101, %v284, 0.0
  %v286 = vrot.slane %v285, 4
  %v287 = vadd.f32 %v285, %v286
  %v288 = vrot.slane %v287, 2
  %v289 = vadd.f32 %v287, %v288
  %v290 = vrot.slane %v289, 1
  %v291 = vadd.f32 %v289, %v290
  %v292 = vadd.f32 %v291, 0.0
  %v293 = vsub.f32 %v258, %v282
  %v294 = vmul.f32 %v293, %v293
  %v295 = vsel %vm101, %v294, 0.0
  %v296 = vrot.slane %v295, 4
  %v297 = vadd.f32 %v295, %v296
  %v298 = vrot.slane %v297, 2
  %v299 = vadd.f32 %v297, %v298
  %v300 = vrot.slane %v299, 1
  %v301 = vadd.f32 %v299, %v300
  %v302 = vadd.f32 %v292, %v301
  %v303 = vmul.f32 %v302, %v281
  %v304 = vadd.f32 %v303, 1e-05
  %v305 = vrsqrt.pop %v304
  %v306 = vmul.f32 %v283, %v305
  %v308 = vlaneseq
  %v309 = vshrl.u32 %v308, 7
  %v310 = vsub.s32 0, %v309
  %v311 = vrot.slane %v263, %v310
  %v313 = vmul.f32 %v306, %v311
  %v315 = vlaneseq
  %v316 = vshrl.u32 %v315, 7
  %v317 = vsub.s32 0, %v316
  %v318 = vrot.slane %v264, %v317
  %v320 = vadd.f32 %v313, %v318
  %v321 = vmul.f32 %v293, %v305
  %v322 = vmul.f32 %v321, %v311
  %v323 = vadd.f32 %v322, %v318
  %v324 = vmax.f32 %v320, 0.0
  %v325 = vmax.f32 %v323, 0.0
  %v326 = vld [vmem:[%s6] sm:$0xf]
  %v327 = vpack.c.bf16 %v324, %v324
  %v328 = vld [vmem:[%s7] sm:$0x1]
  %v330 = vlaneseq
  %v331 = vshrl.u32 %v330, 7
  %v332 = vsub.s32 0, %v331
  %v333 = vrot.slane %v328, %v332
  %v336 = vsel %vm101, %v327, 0
  %vm338 = vcmask 1043456
  %v340 = vsel %vm338, %v326, 0
  %342 = vmatprep.subr.bf16.mxu0 0
  %343 = vmatpush1.bf16.msra.mxu0 %v340
  %344 = vmatprep.subr.bf16.mxu0 0
  %345 = vmatpush1.bf16.msra.mxu0 0
  %346 = vmatprep.subr.bf16.mxu0 0
  %347 = vmatpush1.bf16.msra.mxu0 0
  %348 = vmatprep.subr.bf16.mxu0 0
  %349 = vmatpush1.bf16.msra.mxu0 0
  %350 = vmatprep.subr.bf16.mxu0 0
  %351 = vmatpush1.bf16.msra.mxu0 0
  %352 = vmatprep.subr.bf16.mxu0 0
  %353 = vmatpush1.bf16.msra.mxu0 0
  %354 = vmatprep.subr.bf16.mxu0 0
  %355 = vmatpush1.bf16.msra.mxu0 0
  %356 = vmatprep.subr.bf16.mxu0 0
  %357 = vmatpush1.bf16.msra.mxu0 0
  %358 = vmatprep.subr.bf16.mxu0 0
  %359 = vmatpush1.bf16.msra.mxu0 0
  %360 = vmatprep.subr.bf16.mxu0 0
  %361 = vmatpush1.bf16.msra.mxu0 0
  %362 = vmatprep.subr.bf16.mxu0 0
  %363 = vmatpush1.bf16.msra.mxu0 0
  %364 = vmatprep.subr.bf16.mxu0 0
  %365 = vmatpush1.bf16.msra.mxu0 0
  %366 = vmatprep.subr.bf16.mxu0 0
  %367 = vmatpush1.bf16.msra.mxu0 0
  %368 = vmatprep.subr.bf16.mxu0 0
  %369 = vmatpush1.bf16.msra.mxu0 0
  %370 = vmatprep.subr.bf16.mxu0 0
  %371 = vmatpush1.bf16.msra.mxu0 0
  %372 = vmatprep.subr.bf16.mxu0 0
  %373 = vmatpush1.bf16.msra.mxu0 0
  %374 = vmatprep.mubr.bf16.mxu0 0
  %375 = vmatmul.mubr.bf16.gmra.mrb[0].mxu0 %v336
  %v376 = vpop.f32.mrb[0].mxu0
  %v377 = vadd.f32 %v333, %v376
  %v378 = vpop.f32.mrb[0].mxu0
  %v379 = vpop.f32.mrb[0].mxu0
  %v380 = vpop.f32.mrb[0].mxu0
  %381 = vdwg.mxu0
  %v382 = vpack.c.bf16 %v325, %v325
  %v384 = vsel %vm101, %v382, 0
  %386 = vmatprep.subr.bf16.mxu0 0
  %387 = vmatpush1.bf16.msra.mxu0 %v340
  %388 = vmatprep.subr.bf16.mxu0 0
  %389 = vmatpush1.bf16.msra.mxu0 0
  %390 = vmatprep.subr.bf16.mxu0 0
  %391 = vmatpush1.bf16.msra.mxu0 0
  %392 = vmatprep.subr.bf16.mxu0 0
  %393 = vmatpush1.bf16.msra.mxu0 0
  %394 = vmatprep.subr.bf16.mxu0 0
  %395 = vmatpush1.bf16.msra.mxu0 0
  %396 = vmatprep.subr.bf16.mxu0 0
  %397 = vmatpush1.bf16.msra.mxu0 0
  %398 = vmatprep.subr.bf16.mxu0 0
  %399 = vmatpush1.bf16.msra.mxu0 0
  %400 = vmatprep.subr.bf16.mxu0 0
  %401 = vmatpush1.bf16.msra.mxu0 0
  %402 = vmatprep.subr.bf16.mxu0 0
  %403 = vmatpush1.bf16.msra.mxu0 0
  %404 = vmatprep.subr.bf16.mxu0 0
  %405 = vmatpush1.bf16.msra.mxu0 0
  %406 = vmatprep.subr.bf16.mxu0 0
  %407 = vmatpush1.bf16.msra.mxu0 0
  %408 = vmatprep.subr.bf16.mxu0 0
  %409 = vmatpush1.bf16.msra.mxu0 0
  %410 = vmatprep.subr.bf16.mxu0 0
  %411 = vmatpush1.bf16.msra.mxu0 0
  %412 = vmatprep.subr.bf16.mxu0 0
  %413 = vmatpush1.bf16.msra.mxu0 0
  %414 = vmatprep.subr.bf16.mxu0 0
  %415 = vmatpush1.bf16.msra.mxu0 0
  %416 = vmatprep.subr.bf16.mxu0 0
  %417 = vmatpush1.bf16.msra.mxu0 0
  %418 = vmatprep.mubr.bf16.mxu0 0
  %419 = vmatmul.mubr.bf16.gmra.mrb[0].mxu0 %v384
  %v420 = vpop.f32.mrb[0].mxu0
  %v421 = vadd.f32 %v333, %v420
  %v422 = vpop.f32.mrb[0].mxu0
  %v423 = vpop.f32.mrb[0].mxu0
  %v424 = vpop.f32.mrb[0].mxu0
  %425 = vdwg.mxu0
  %v426 = vld [vmem:[%s8] sm:$0x1]
  %v427 = vld [vmem:[%s9] sm:$0x1]
  %v428 = vsel %vm105, %v377, 0.0
  %v429 = vrot.slane %v428, 4
  %v430 = vadd.f32 %v428, %v429
  %v431 = vrot.slane %v430, 2
  %v432 = vadd.f32 %v430, %v431
  %v433 = vrot.slane %v432, 1
  %v434 = vadd.f32 %v432, %v433
  %v435 = vadd.f32 %v434, 0.0
  %v436 = vsel %vm105, %v421, 0.0
  %v437 = vrot.slane %v436, 4
  %v438 = vadd.f32 %v436, %v437
  %v439 = vrot.slane %v438, 2
  %v440 = vadd.f32 %v438, %v439
  %v441 = vrot.slane %v440, 1
  %v442 = vadd.f32 %v440, %v441
  %v443 = vadd.f32 %v435, %v442
  %v444 = vmul.f32 %v443, %v281
  %v445 = vsub.f32 %v377, %v444
  %v446 = vmul.f32 %v445, %v445
  %v447 = vsel %vm105, %v446, 0.0
  %v448 = vrot.slane %v447, 4
  %v449 = vadd.f32 %v447, %v448
  %v450 = vrot.slane %v449, 2
  %v451 = vadd.f32 %v449, %v450
  %v452 = vrot.slane %v451, 1
  %v453 = vadd.f32 %v451, %v452
  %v454 = vadd.f32 %v453, 0.0
  %v455 = vsub.f32 %v421, %v444
  %v456 = vmul.f32 %v455, %v455
  %v457 = vsel %vm105, %v456, 0.0
  %v458 = vrot.slane %v457, 4
  %v459 = vadd.f32 %v457, %v458
  %v460 = vrot.slane %v459, 2
  %v461 = vadd.f32 %v459, %v460
  %v462 = vrot.slane %v461, 1
  %v463 = vadd.f32 %v461, %v462
  %v464 = vadd.f32 %v454, %v463
  %v465 = vmul.f32 %v464, %v281
  %v466 = vadd.f32 %v465, 1e-05
  %v467 = vrsqrt.pop %v466
  %v468 = vmul.f32 %v445, %v467
  %v470 = vlaneseq
  %v471 = vshrl.u32 %v470, 7
  %v472 = vsub.s32 0, %v471
  %v473 = vrot.slane %v426, %v472
  %v475 = vmul.f32 %v468, %v473
  %v477 = vlaneseq
  %v478 = vshrl.u32 %v477, 7
  %v479 = vsub.s32 0, %v478
  %v480 = vrot.slane %v427, %v479
  %v482 = vadd.f32 %v475, %v480
  %v483 = vmul.f32 %v455, %v467
  %v484 = vmul.f32 %v483, %v473
  %v485 = vadd.f32 %v484, %v480
  %v486 = vxor.u32 %v482, 2147483648
  %v487 = vmul.f32 %v486, 1.442695
  %v488 = vpow.pop %v487
  %v489 = vadd.f32 %v488, 1.0
  %v490 = vrcp.pop %v489
  %v491 = vmul.f32 1.0, %v490
  %493 = vrot.lane.b32.xlu0 %v491, 120
  %v494 = vpop.permute.xlu0 %493
  %v496 = vmul.f32 %v482, %v494
  %v497 = vxor.u32 %v485, 2147483648
  %v498 = vmul.f32 %v497, 1.442695
  %v499 = vpow.pop %v498
  %v500 = vadd.f32 %v499, 1.0
  %v501 = vrcp.pop %v500
  %v502 = vmul.f32 1.0, %v501
  %504 = vrot.lane.b32.xlu0 %v502, 120
  %v505 = vpop.permute.xlu0 %504
  %v507 = vmul.f32 %v485, %v505
  %508 = vst.msk [vmem:[#allocation2] sm:$0xff] %vm101, 0.0
  %vm509 = vcmask 63488
  %510 = vst.msk [vmem:[#allocation2 + $0x8] sm:$0x7f] %vm509, 0.0
  %511 = vst.msk [vmem:[#allocation2 + $0x17] sm:$0xff] %vm101, 0.0
  %512 = vst.msk [vmem:[#allocation2 + $0x1f] sm:$0x7f] %vm509, 0.0
  %513 = vst.msk [vmem:[#allocation2 + $0xf] sm:$0xff] %vm101, %v496
  loop: start=0, step=1, limit=31
  $region82: #{manner_block_fwd.8} parent=0 // loop_pre_header
    _
  $region83: #{manner_block_fwd.8} parent=0 // loop_header
    %s515 = sphi 0, %s519
    %p516 = scmp.ge.s32.totalorder %s515, 31
    %v520 = vphi 0.0, %v530
  $region84: #{manner_block_fwd.8} parent=0 // loop_header_branch
    %518 = sbr.rel (%p516) target = $region88
  $region85: #{manner_block_fwd.8} parent=0 // loop_body
    %s521 = scalar_lea.vmem [#allocation2], %s515
    %v522 = vld [vmem:[%s521] sm:$0xff]
    %s523 = scalar_lea.vmem %s10, %s515
    %v524 = vld [vmem:[%s523] sm:$0x1]
    %v525 = vlaneseq
    %v526 = vshrl.u32 %v525, 7
    %v527 = vsub.s32 0, %v526
    %v528 = vrot.slane %v524, %v527
    %v529 = vmul.f32 %v522, %v528
    %v530 = vadd.f32 %v520, %v529
  $region86: #{manner_block_fwd.8} parent=0 // loop_footer
    %s519 = sadd.s32 1, %s515
  $region87: #{manner_block_fwd.8} parent=0 // loop_footer_branch
    %514 = sbr.rel target = $region83
  $region88: #{manner_block_fwd.8} parent=0 // loop_exit
    _
  %v531 = vld [vmem:[%s11] sm:$0x1]
  %v533 = vlaneseq
  %v534 = vshrl.u32 %v533, 7
  %v535 = vsub.s32 0, %v534
  %v536 = vrot.slane %v531, %v535
  %v538 = vadd.f32 %v520, %v536
  %s539 = scalar_lea.vmem [#allocation2], 40
  %540 = vst.msk [vmem:[%s539] sm:$0xff] %vm101, 0.0
  %541 = vst.msk [vmem:[%s539 + $0x8] sm:$0x7f] %vm509, 0.0
  %542 = vst.msk [vmem:[%s539 + $0x17] sm:$0xff] %vm101, 0.0
  %543 = vst.msk [vmem:[%s539 + $0x1f] sm:$0x7f] %vm509, 0.0
  %544 = vst.msk [vmem:[%s539 + $0xf] sm:$0xff] %vm101, %v507
  loop: start=0, step=1, limit=31
  $region89: #{manner_block_fwd.8} parent=0 // loop_pre_header
    _
  $region90: #{manner_block_fwd.8} parent=0 // loop_header
    %s546 = sphi 0, %s550
    %p547 = scmp.ge.s32.totalorder %s546, 31
    %v551 = vphi 0.0, %v562
  $region91: #{manner_block_fwd.8} parent=0 // loop_header_branch
    %549 = sbr.rel (%p547) target = $region95
  $region92: #{manner_block_fwd.8} parent=0 // loop_body
    %s552 = sadd.s32 %s546, 40
    %s553 = scalar_lea.vmem [#allocation2], %s552
    %v554 = vld [vmem:[%s553] sm:$0xff]
    %s555 = scalar_lea.vmem %s10, %s546
    %v556 = vld [vmem:[%s555] sm:$0x1]
    %v557 = vlaneseq
    %v558 = vshrl.u32 %v557, 7
    %v559 = vsub.s32 0, %v558
    %v560 = vrot.slane %v556, %v559
    %v561 = vmul.f32 %v554, %v560
    %v562 = vadd.f32 %v551, %v561
  $region93: #{manner_block_fwd.8} parent=0 // loop_footer
    %s550 = sadd.s32 1, %s546
  $region94: #{manner_block_fwd.8} parent=0 // loop_footer_branch
    %545 = sbr.rel target = $region90
  $region95: #{manner_block_fwd.8} parent=0 // loop_exit
    _
  %v563 = vld [vmem:[%s11] sm:$0x1]
  %v565 = vlaneseq
  %v566 = vshrl.u32 %v565, 7
  %v567 = vsub.s32 0, %v566
  %v568 = vrot.slane %v563, %v567
  %v570 = vadd.f32 %v551, %v568
  %v571 = vld [vmem:[%s12] sm:$0x1]
  %v572 = vld [vmem:[%s13] sm:$0x1]
  %v573 = vsel %vm101, %v538, 0.0
  %v574 = vrot.slane %v573, 4
  %v575 = vadd.f32 %v573, %v574
  %v576 = vrot.slane %v575, 2
  %v577 = vadd.f32 %v575, %v576
  %v578 = vrot.slane %v577, 1
  %v579 = vadd.f32 %v577, %v578
  %v580 = vadd.f32 %v579, 0.0
  %v581 = vsel %vm101, %v570, 0.0
  %v582 = vrot.slane %v581, 4
  %v583 = vadd.f32 %v581, %v582
  %v584 = vrot.slane %v583, 2
  %v585 = vadd.f32 %v583, %v584
  %v586 = vrot.slane %v585, 1
  %v587 = vadd.f32 %v585, %v586
  %v588 = vadd.f32 %v580, %v587
  %v589 = vmul.f32 %v588, %v281
  %v590 = vsub.f32 %v538, %v589
  %v591 = vmul.f32 %v590, %v590
  %v592 = vsel %vm101, %v591, 0.0
  %v593 = vrot.slane %v592, 4
  %v594 = vadd.f32 %v592, %v593
  %v595 = vrot.slane %v594, 2
  %v596 = vadd.f32 %v594, %v595
  %v597 = vrot.slane %v596, 1
  %v598 = vadd.f32 %v596, %v597
  %v599 = vadd.f32 %v598, 0.0
  %v600 = vsub.f32 %v570, %v589
  %v601 = vmul.f32 %v600, %v600
  %v602 = vsel %vm101, %v601, 0.0
  %v603 = vrot.slane %v602, 4
  %v604 = vadd.f32 %v602, %v603
  %v605 = vrot.slane %v604, 2
  %v606 = vadd.f32 %v604, %v605
  %v607 = vrot.slane %v606, 1
  %v608 = vadd.f32 %v606, %v607
  %v609 = vadd.f32 %v599, %v608
  %v610 = vmul.f32 %v609, %v281
  %v611 = vadd.f32 %v610, 1e-05
  %v612 = vrsqrt.pop %v611
  %v613 = vmul.f32 %v590, %v612
  %v615 = vlaneseq
  %v616 = vshrl.u32 %v615, 7
  %v617 = vsub.s32 0, %v616
  %v618 = vrot.slane %v571, %v617
  %v620 = vmul.f32 %v613, %v618
  %v622 = vlaneseq
  %v623 = vshrl.u32 %v622, 7
  %v624 = vsub.s32 0, %v623
  %v625 = vrot.slane %v572, %v624
  %v627 = vadd.f32 %v620, %v625
  %v628 = vmul.f32 %v600, %v612
  %v629 = vmul.f32 %v628, %v618
  %v630 = vadd.f32 %v629, %v625
  %v631 = vxor.u32 %v627, 2147483648
  %v632 = vmul.f32 %v631, 1.442695
  %v633 = vpow.pop %v632
  %v634 = vadd.f32 %v633, 1.0
  %v635 = vrcp.pop %v634
  %v636 = vmul.f32 1.0, %v635
  %v637 = vmul.f32 %v627, %v636
  %v638 = vxor.u32 %v630, 2147483648
  %v639 = vmul.f32 %v638, 1.442695
  %v640 = vpow.pop %v639
  %v641 = vadd.f32 %v640, 1.0
  %v642 = vrcp.pop %v641
  %v643 = vmul.f32 1.0, %v642
  %v644 = vmul.f32 %v630, %v643
  %v645 = vld [vmem:[%s14] sm:$0xf]
  %v646 = vpack.c.bf16 %v637, %v637
  %v647 = vld [vmem:[%s15] sm:$0x1]
  %v649 = vlaneseq
  %v650 = vshrl.u32 %v649, 7
  %v651 = vsub.s32 0, %v650
  %v652 = vrot.slane %v647, %v651
  %v655 = vsel %vm101, %v646, 0
  %v658 = vsel %vm338, %v645, 0
  %660 = vmatprep.subr.bf16.mxu0 0
  %661 = vmatpush1.bf16.msra.mxu0 %v658
  %662 = vmatprep.subr.bf16.mxu0 0
  %663 = vmatpush1.bf16.msra.mxu0 0
  %664 = vmatprep.subr.bf16.mxu0 0
  %665 = vmatpush1.bf16.msra.mxu0 0
  %666 = vmatprep.subr.bf16.mxu0 0
  %667 = vmatpush1.bf16.msra.mxu0 0
  %668 = vmatprep.subr.bf16.mxu0 0
  %669 = vmatpush1.bf16.msra.mxu0 0
  %670 = vmatprep.subr.bf16.mxu0 0
  %671 = vmatpush1.bf16.msra.mxu0 0
  %672 = vmatprep.subr.bf16.mxu0 0
  %673 = vmatpush1.bf16.msra.mxu0 0
  %674 = vmatprep.subr.bf16.mxu0 0
  %675 = vmatpush1.bf16.msra.mxu0 0
  %676 = vmatprep.subr.bf16.mxu0 0
  %677 = vmatpush1.bf16.msra.mxu0 0
  %678 = vmatprep.subr.bf16.mxu0 0
  %679 = vmatpush1.bf16.msra.mxu0 0
  %680 = vmatprep.subr.bf16.mxu0 0
  %681 = vmatpush1.bf16.msra.mxu0 0
  %682 = vmatprep.subr.bf16.mxu0 0
  %683 = vmatpush1.bf16.msra.mxu0 0
  %684 = vmatprep.subr.bf16.mxu0 0
  %685 = vmatpush1.bf16.msra.mxu0 0
  %686 = vmatprep.subr.bf16.mxu0 0
  %687 = vmatpush1.bf16.msra.mxu0 0
  %688 = vmatprep.subr.bf16.mxu0 0
  %689 = vmatpush1.bf16.msra.mxu0 0
  %690 = vmatprep.subr.bf16.mxu0 0
  %691 = vmatpush1.bf16.msra.mxu0 0
  %692 = vmatprep.mubr.bf16.mxu0 0
  %693 = vmatmul.mubr.bf16.gmra.mrb[0].mxu0 %v655
  %v694 = vpop.f32.mrb[0].mxu0
  %v695 = vadd.f32 %v652, %v694
  %v696 = vpop.f32.mrb[0].mxu0
  %v697 = vpop.f32.mrb[0].mxu0
  %v698 = vpop.f32.mrb[0].mxu0
  %699 = vdwg.mxu0
  %v700 = vpack.c.bf16 %v644, %v644
  %v702 = vsel %vm101, %v700, 0
  %704 = vmatprep.subr.bf16.mxu0 0
  %705 = vmatpush1.bf16.msra.mxu0 %v658
  %706 = vmatprep.subr.bf16.mxu0 0
  %707 = vmatpush1.bf16.msra.mxu0 0
  %708 = vmatprep.subr.bf16.mxu0 0
  %709 = vmatpush1.bf16.msra.mxu0 0
  %710 = vmatprep.subr.bf16.mxu0 0
  %711 = vmatpush1.bf16.msra.mxu0 0
  %712 = vmatprep.subr.bf16.mxu0 0
  %713 = vmatpush1.bf16.msra.mxu0 0
  %714 = vmatprep.subr.bf16.mxu0 0
  %715 = vmatpush1.bf16.msra.mxu0 0
  %716 = vmatprep.subr.bf16.mxu0 0
  %717 = vmatpush1.bf16.msra.mxu0 0
  %718 = vmatprep.subr.bf16.mxu0 0
  %719 = vmatpush1.bf16.msra.mxu0 0
  %720 = vmatprep.subr.bf16.mxu0 0
  %721 = vmatpush1.bf16.msra.mxu0 0
  %722 = vmatprep.subr.bf16.mxu0 0
  %723 = vmatpush1.bf16.msra.mxu0 0
  %724 = vmatprep.subr.bf16.mxu0 0
  %725 = vmatpush1.bf16.msra.mxu0 0
  %726 = vmatprep.subr.bf16.mxu0 0
  %727 = vmatpush1.bf16.msra.mxu0 0
  %728 = vmatprep.subr.bf16.mxu0 0
  %729 = vmatpush1.bf16.msra.mxu0 0
  %730 = vmatprep.subr.bf16.mxu0 0
  %731 = vmatpush1.bf16.msra.mxu0 0
  %732 = vmatprep.subr.bf16.mxu0 0
  %733 = vmatpush1.bf16.msra.mxu0 0
  %734 = vmatprep.subr.bf16.mxu0 0
  %735 = vmatpush1.bf16.msra.mxu0 0
  %736 = vmatprep.mubr.bf16.mxu0 0
  %737 = vmatmul.mubr.bf16.gmra.mrb[0].mxu0 %v702
  %v738 = vpop.f32.mrb[0].mxu0
  %v739 = vadd.f32 %v652, %v738
  %v740 = vpop.f32.mrb[0].mxu0
  %v741 = vpop.f32.mrb[0].mxu0
  %v742 = vpop.f32.mrb[0].mxu0
  %743 = vdwg.mxu0
  %v744 = vld [vmem:[%s16] sm:$0x1]
  %v745 = vld [vmem:[%s17] sm:$0x1]
  %v746 = vsel %vm105, %v695, 0.0
  %v747 = vrot.slane %v746, 4
  %v748 = vadd.f32 %v746, %v747
  %v749 = vrot.slane %v748, 2
  %v750 = vadd.f32 %v748, %v749
  %v751 = vrot.slane %v750, 1
  %v752 = vadd.f32 %v750, %v751
  %v753 = vadd.f32 %v752, 0.0
  %v754 = vsel %vm105, %v739, 0.0
  %v755 = vrot.slane %v754, 4
  %v756 = vadd.f32 %v754, %v755
  %v757 = vrot.slane %v756, 2
  %v758 = vadd.f32 %v756, %v757
  %v759 = vrot.slane %v758, 1
  %v760 = vadd.f32 %v758, %v759
  %v761 = vadd.f32 %v753, %v760
  %v762 = vmul.f32 %v761, %v281
  %v763 = vsub.f32 %v695, %v762
  %v764 = vmul.f32 %v763, %v763
  %v765 = vsel %vm105, %v764, 0.0
  %v766 = vrot.slane %v765, 4
  %v767 = vadd.f32 %v765, %v766
  %v768 = vrot.slane %v767, 2
  %v769 = vadd.f32 %v767, %v768
  %v770 = vrot.slane %v769, 1
  %v771 = vadd.f32 %v769, %v770
  %v772 = vadd.f32 %v771, 0.0
  %v773 = vsub.f32 %v739, %v762
  %v774 = vmul.f32 %v773, %v773
  %v775 = vsel %vm105, %v774, 0.0
  %v776 = vrot.slane %v775, 4
  %v777 = vadd.f32 %v775, %v776
  %v778 = vrot.slane %v777, 2
  %v779 = vadd.f32 %v777, %v778
  %v780 = vrot.slane %v779, 1
  %v781 = vadd.f32 %v779, %v780
  %v782 = vadd.f32 %v772, %v781
  %v783 = vmul.f32 %v782, %v281
  %v784 = vadd.f32 %v783, 1e-05
  %v785 = vrsqrt.pop %v784
  %v786 = vmul.f32 %v763, %v785
  %v788 = vlaneseq
  %v789 = vshrl.u32 %v788, 7
  %v790 = vsub.s32 0, %v789
  %v791 = vrot.slane %v744, %v790
  %v793 = vmul.f32 %v786, %v791
  %v795 = vlaneseq
  %v796 = vshrl.u32 %v795, 7
  %v797 = vsub.s32 0, %v796
  %v798 = vrot.slane %v745, %v797
  %v800 = vadd.f32 %v793, %v798
  %v801 = vmul.f32 %v773, %v785
  %v802 = vmul.f32 %v801, %v791
  %v803 = vadd.f32 %v802, %v798
  %v804 = vxor.u32 %v800, 2147483648
  %v805 = vmul.f32 %v804, 1.442695
  %v806 = vpow.pop %v805
  %v807 = vadd.f32 %v806, 1.0
  %v808 = vrcp.pop %v807
  %v809 = vmul.f32 1.0, %v808
  %v810 = vmul.f32 %v800, %v809
  %v811 = vxor.u32 %v803, 2147483648
  %v812 = vmul.f32 %v811, 1.442695
  %v813 = vpow.pop %v812
  %v814 = vadd.f32 %v813, 1.0
  %v815 = vrcp.pop %v814
  %v816 = vmul.f32 1.0, %v815
  %v817 = vmul.f32 %v803, %v816
  %v818 = vld [vmem:[%s18] sm:$0xf]
  %v820 = vsel %vm338, %v818, 0
  %822 = vmatprep.subr.bf16.mxu0 0
  %823 = vmatpush1.bf16.msra.mxu0 %v820
  %824 = vmatprep.subr.bf16.mxu0 0
  %825 = vmatpush1.bf16.msra.mxu0 0
  %826 = vmatprep.subr.bf16.mxu0 0
  %827 = vmatpush1.bf16.msra.mxu0 0
  %828 = vmatprep.subr.bf16.mxu0 0
  %829 = vmatpush1.bf16.msra.mxu0 0
  %830 = vmatprep.subr.bf16.mxu0 0
  %831 = vmatpush1.bf16.msra.mxu0 0
  %832 = vmatprep.subr.bf16.mxu0 0
  %833 = vmatpush1.bf16.msra.mxu0 0
  %834 = vmatprep.subr.bf16.mxu0 0
  %835 = vmatpush1.bf16.msra.mxu0 0
  %836 = vmatprep.subr.bf16.mxu0 0
  %837 = vmatpush1.bf16.msra.mxu0 0
  %838 = vmatprep.subr.bf16.mxu0 0
  %839 = vmatpush1.bf16.msra.mxu0 0
  %840 = vmatprep.subr.bf16.mxu0 0
  %841 = vmatpush1.bf16.msra.mxu0 0
  %842 = vmatprep.subr.bf16.mxu0 0
  %843 = vmatpush1.bf16.msra.mxu0 0
  %844 = vmatprep.subr.bf16.mxu0 0
  %845 = vmatpush1.bf16.msra.mxu0 0
  %846 = vmatprep.subr.bf16.mxu0 0
  %847 = vmatpush1.bf16.msra.mxu0 0
  %848 = vmatprep.subr.bf16.mxu0 0
  %849 = vmatpush1.bf16.msra.mxu0 0
  %850 = vmatprep.subr.bf16.mxu0 0
  %851 = vmatpush1.bf16.msra.mxu0 0
  %852 = vmatprep.subr.bf16.mxu0 0
  %853 = vmatpush1.bf16.msra.mxu0 0
  %854 = vmatprep.mubr.bf16.mxu0 0
  %855 = vmatmul.mubr.bf16.gmra.mrb[0].mxu0 %v336
  %v856 = vpop.f32.mrb[0].mxu0
  %v857 = vadd.f32 0.0, %v856
  %v858 = vpop.f32.mrb[0].mxu0
  %v859 = vpop.f32.mrb[0].mxu0
  %v860 = vpop.f32.mrb[0].mxu0
  %861 = vdwg.mxu0
  %v862 = vadd.f32 %v810, %v857
  %v863 = vld [vmem:[%s19] sm:$0x1]
  %v865 = vlaneseq
  %v866 = vshrl.u32 %v865, 7
  %v867 = vsub.s32 0, %v866
  %v868 = vrot.slane %v863, %v867
  %v870 = vadd.f32 %v862, %v868
  %871 = vmatprep.subr.bf16.mxu0 0
  %872 = vmatpush1.bf16.msra.mxu0 %v820
  %873 = vmatprep.subr.bf16.mxu0 0
  %874 = vmatpush1.bf16.msra.mxu0 0
  %875 = vmatprep.subr.bf16.mxu0 0
  %876 = vmatpush1.bf16.msra.mxu0 0
  %877 = vmatprep.subr.bf16.mxu0 0
  %878 = vmatpush1.bf16.msra.mxu0 0
  %879 = vmatprep.subr.bf16.mxu0 0
  %880 = vmatpush1.bf16.msra.mxu0 0
  %881 = vmatprep.subr.bf16.mxu0 0
  %882 = vmatpush1.bf16.msra.mxu0 0
  %883 = vmatprep.subr.bf16.mxu0 0
  %884 = vmatpush1.bf16.msra.mxu0 0
  %885 = vmatprep.subr.bf16.mxu0 0
  %886 = vmatpush1.bf16.msra.mxu0 0
  %887 = vmatprep.subr.bf16.mxu0 0
  %888 = vmatpush1.bf16.msra.mxu0 0
  %889 = vmatprep.subr.bf16.mxu0 0
  %890 = vmatpush1.bf16.msra.mxu0 0
  %891 = vmatprep.subr.bf16.mxu0 0
  %892 = vmatpush1.bf16.msra.mxu0 0
  %893 = vmatprep.subr.bf16.mxu0 0
  %894 = vmatpush1.bf16.msra.mxu0 0
  %895 = vmatprep.subr.bf16.mxu0 0
  %896 = vmatpush1.bf16.msra.mxu0 0
  %897 = vmatprep.subr.bf16.mxu0 0
  %898 = vmatpush1.bf16.msra.mxu0 0
  %899 = vmatprep.subr.bf16.mxu0 0
  %900 = vmatpush1.bf16.msra.mxu0 0
  %901 = vmatprep.subr.bf16.mxu0 0
  %902 = vmatpush1.bf16.msra.mxu0 0
  %903 = vmatprep.mubr.bf16.mxu0 0
  %904 = vmatmul.mubr.bf16.gmra.mrb[0].mxu0 %v384
  %v905 = vpop.f32.mrb[0].mxu0
  %v906 = vadd.f32 0.0, %v905
  %v907 = vpop.f32.mrb[0].mxu0
  %v908 = vpop.f32.mrb[0].mxu0
  %v909 = vpop.f32.mrb[0].mxu0
  %910 = vdwg.mxu0
  %v911 = vadd.f32 %v817, %v906
  %v912 = vadd.f32 %v911, %v868
  %v913 = vpack.c.bf16 %v870, %v870
  %vm914 = vcmask 125952
  %915 = vst.msk [vmem:[%s20] sm:$0xf] %vm914, %v913
  %v916 = vpack.c.bf16 %v912, %v912
  %s917 = scalar_lea.vmem %s20, 4
  %918 = vst.msk [vmem:[%s917] sm:$0xf] %vm914, %v916
  // Predicated region
  $region96: #{manner_block_fwd.8} parent=0 // pred_check
    _
  $region97: #{manner_block_fwd.8} parent=0 // pred_check_branch
    %920 = sbr.rel (0) target = $region99
  $region98: #{manner_block_fwd.8} parent=0 // pred_region
    _
  $region99: #{manner_block_fwd.8} parent=0 // pred_fallthru
    _
  // Predicated region
  $region100: #{manner_block_fwd.8} parent=0 // pred_check
    _
  $region101: #{manner_block_fwd.8} parent=0 // pred_check_branch
    %922 = sbr.rel (0) target = $region103
  $region102: #{manner_block_fwd.8} parent=0 // pred_region
    _
  $region103: #{manner_block_fwd.8} parent=0 // pred_fallthru
    _

// kernel: manner_block_fwd.9
$region0: #{manner_block_fwd.9}
  #allocation0 [shape = 'u32[]', space=smem, size = 0x4, offset = 0x4, fixed_abs, tag = 'smem constant byte address 0x4 - core index']
  #allocation1 [shape = 'u32[144,128]{1,0:T(1,128)}', space=vmem, size = 0x12000, scoped, tag = 'internal scratch']
  #allocation2 [shape = 'f32[2,33,16]{2,1,0:T(8,128)}', space=vmem, size = 0xa000, scoped, tag = 'scratch operand']
  %s0 = inlined_call_operand.vmem [shape: bf16[2,4,16], index: 0, kind: input, shape index: {}]
  %s1 = inlined_call_operand.vmem [shape: bf16[2,4,16], index: 1, kind: input, shape index: {}]
  %s2 = inlined_call_operand.vmem [shape: bf16[64,16], index: 2, kind: input, shape index: {}]
  %s3 = inlined_call_operand.vmem [shape: f32[1,16], index: 3, kind: input, shape index: {}]
  %s4 = inlined_call_operand.vmem [shape: f32[1,16], index: 4, kind: input, shape index: {}]
  %s5 = inlined_call_operand.vmem [shape: f32[1,16], index: 5, kind: input, shape index: {}]
  %s6 = inlined_call_operand.vmem [shape: bf16[16,32], index: 6, kind: input, shape index: {}]
  %s7 = inlined_call_operand.vmem [shape: f32[1,32], index: 7, kind: input, shape index: {}]
  %s8 = inlined_call_operand.vmem [shape: f32[1,32], index: 8, kind: input, shape index: {}]
  %s9 = inlined_call_operand.vmem [shape: f32[1,32], index: 9, kind: input, shape index: {}]
  %s10 = inlined_call_operand.vmem [shape: f32[31,16], index: 10, kind: input, shape index: {}]
  %s11 = inlined_call_operand.vmem [shape: f32[1,16], index: 11, kind: input, shape index: {}]
  %s12 = inlined_call_operand.vmem [shape: f32[1,16], index: 12, kind: input, shape index: {}]
  %s13 = inlined_call_operand.vmem [shape: f32[1,16], index: 13, kind: input, shape index: {}]
  %s14 = inlined_call_operand.vmem [shape: bf16[16,32], index: 14, kind: input, shape index: {}]
  %s15 = inlined_call_operand.vmem [shape: f32[1,32], index: 15, kind: input, shape index: {}]
  %s16 = inlined_call_operand.vmem [shape: f32[1,32], index: 16, kind: input, shape index: {}]
  %s17 = inlined_call_operand.vmem [shape: f32[1,32], index: 17, kind: input, shape index: {}]
  %s18 = inlined_call_operand.vmem [shape: bf16[16,32], index: 18, kind: input, shape index: {}]
  %s19 = inlined_call_operand.vmem [shape: f32[1,32], index: 19, kind: input, shape index: {}]
  %s20 = inlined_call_operand.vmem [shape: bf16[2,3,32], index: 20, kind: output, shape index: {}]
  %s21 = sld [smem:[#allocation0]]
  $region104: #{manner_block_fwd.9} parent=0
    _
  %s23 = ssub.s32 1, %s21
  %s24 = scalar_select 0, %s23, %s21
  // Predicated region
  $region2: #{manner_block_fwd.9} parent=0 // pred_check
    _
  $region3: #{manner_block_fwd.9} parent=0 // pred_check_branch
    %26 = sbr.rel (0) target = $region5
  $region4: #{manner_block_fwd.9} parent=0 // pred_region
    _
  $region5: #{manner_block_fwd.9} parent=0 // pred_fallthru
    _
  // Predicated region
  $region6: #{manner_block_fwd.9} parent=0 // pred_check
    _
  $region7: #{manner_block_fwd.9} parent=0 // pred_check_branch
    %28 = sbr.rel (0) target = $region9
  $region8: #{manner_block_fwd.9} parent=0 // pred_region
    _
  $region9: #{manner_block_fwd.9} parent=0 // pred_fallthru
    _
  // Predicated region
  $region10: #{manner_block_fwd.9} parent=0 // pred_check
    _
  $region11: #{manner_block_fwd.9} parent=0 // pred_check_branch
    %30 = sbr.rel (0) target = $region13
  $region12: #{manner_block_fwd.9} parent=0 // pred_region
    _
  $region13: #{manner_block_fwd.9} parent=0 // pred_fallthru
    _
  // Predicated region
  $region14: #{manner_block_fwd.9} parent=0 // pred_check
    _
  $region15: #{manner_block_fwd.9} parent=0 // pred_check_branch
    %32 = sbr.rel (0) target = $region17
  $region16: #{manner_block_fwd.9} parent=0 // pred_region
    _
  $region17: #{manner_block_fwd.9} parent=0 // pred_fallthru
    _
  // Predicated region
  $region18: #{manner_block_fwd.9} parent=0 // pred_check
    _
  $region19: #{manner_block_fwd.9} parent=0 // pred_check_branch
    %34 = sbr.rel (0) target = $region21
  $region20: #{manner_block_fwd.9} parent=0 // pred_region
    _
  $region21: #{manner_block_fwd.9} parent=0 // pred_fallthru
    _
  // Predicated region
  $region22: #{manner_block_fwd.9} parent=0 // pred_check
    _
  $region23: #{manner_block_fwd.9} parent=0 // pred_check_branch
    %36 = sbr.rel (0) target = $region25
  $region24: #{manner_block_fwd.9} parent=0 // pred_region
    _
  $region25: #{manner_block_fwd.9} parent=0 // pred_fallthru
    _
  // Predicated region
  $region26: #{manner_block_fwd.9} parent=0 // pred_check
    _
  $region27: #{manner_block_fwd.9} parent=0 // pred_check_branch
    %38 = sbr.rel (0) target = $region29
  $region28: #{manner_block_fwd.9} parent=0 // pred_region
    _
  $region29: #{manner_block_fwd.9} parent=0 // pred_fallthru
    _
  // Predicated region
  $region30: #{manner_block_fwd.9} parent=0 // pred_check
    _
  $region31: #{manner_block_fwd.9} parent=0 // pred_check_branch
    %40 = sbr.rel (0) target = $region33
  $region32: #{manner_block_fwd.9} parent=0 // pred_region
    _
  $region33: #{manner_block_fwd.9} parent=0 // pred_fallthru
    _
  // Predicated region
  $region34: #{manner_block_fwd.9} parent=0 // pred_check
    _
  $region35: #{manner_block_fwd.9} parent=0 // pred_check_branch
    %42 = sbr.rel (0) target = $region37
  $region36: #{manner_block_fwd.9} parent=0 // pred_region
    _
  $region37: #{manner_block_fwd.9} parent=0 // pred_fallthru
    _
  // Predicated region
  $region38: #{manner_block_fwd.9} parent=0 // pred_check
    _
  $region39: #{manner_block_fwd.9} parent=0 // pred_check_branch
    %44 = sbr.rel (0) target = $region41
  $region40: #{manner_block_fwd.9} parent=0 // pred_region
    _
  $region41: #{manner_block_fwd.9} parent=0 // pred_fallthru
    _
  // Predicated region
  $region42: #{manner_block_fwd.9} parent=0 // pred_check
    _
  $region43: #{manner_block_fwd.9} parent=0 // pred_check_branch
    %46 = sbr.rel (0) target = $region45
  $region44: #{manner_block_fwd.9} parent=0 // pred_region
    _
  $region45: #{manner_block_fwd.9} parent=0 // pred_fallthru
    _
  // Predicated region
  $region46: #{manner_block_fwd.9} parent=0 // pred_check
    _
  $region47: #{manner_block_fwd.9} parent=0 // pred_check_branch
    %48 = sbr.rel (0) target = $region49
  $region48: #{manner_block_fwd.9} parent=0 // pred_region
    _
  $region49: #{manner_block_fwd.9} parent=0 // pred_fallthru
    _
  // Predicated region
  $region50: #{manner_block_fwd.9} parent=0 // pred_check
    _
  $region51: #{manner_block_fwd.9} parent=0 // pred_check_branch
    %50 = sbr.rel (0) target = $region53
  $region52: #{manner_block_fwd.9} parent=0 // pred_region
    _
  $region53: #{manner_block_fwd.9} parent=0 // pred_fallthru
    _
  // Predicated region
  $region54: #{manner_block_fwd.9} parent=0 // pred_check
    _
  $region55: #{manner_block_fwd.9} parent=0 // pred_check_branch
    %52 = sbr.rel (0) target = $region57
  $region56: #{manner_block_fwd.9} parent=0 // pred_region
    _
  $region57: #{manner_block_fwd.9} parent=0 // pred_fallthru
    _
  // Predicated region
  $region58: #{manner_block_fwd.9} parent=0 // pred_check
    _
  $region59: #{manner_block_fwd.9} parent=0 // pred_check_branch
    %54 = sbr.rel (0) target = $region61
  $region60: #{manner_block_fwd.9} parent=0 // pred_region
    _
  $region61: #{manner_block_fwd.9} parent=0 // pred_fallthru
    _
  // Predicated region
  $region62: #{manner_block_fwd.9} parent=0 // pred_check
    _
  $region63: #{manner_block_fwd.9} parent=0 // pred_check_branch
    %56 = sbr.rel (0) target = $region65
  $region64: #{manner_block_fwd.9} parent=0 // pred_region
    _
  $region65: #{manner_block_fwd.9} parent=0 // pred_fallthru
    _
  // Predicated region
  $region66: #{manner_block_fwd.9} parent=0 // pred_check
    _
  $region67: #{manner_block_fwd.9} parent=0 // pred_check_branch
    %58 = sbr.rel (0) target = $region69
  $region68: #{manner_block_fwd.9} parent=0 // pred_region
    _
  $region69: #{manner_block_fwd.9} parent=0 // pred_fallthru
    _
  // Predicated region
  $region70: #{manner_block_fwd.9} parent=0 // pred_check
    _
  $region71: #{manner_block_fwd.9} parent=0 // pred_check_branch
    %60 = sbr.rel (0) target = $region73
  $region72: #{manner_block_fwd.9} parent=0 // pred_region
    _
  $region73: #{manner_block_fwd.9} parent=0 // pred_fallthru
    _
  // Predicated region
  $region74: #{manner_block_fwd.9} parent=0 // pred_check
    _
  $region75: #{manner_block_fwd.9} parent=0 // pred_check_branch
    %62 = sbr.rel (0) target = $region77
  $region76: #{manner_block_fwd.9} parent=0 // pred_region
    _
  $region77: #{manner_block_fwd.9} parent=0 // pred_fallthru
    _
  // Predicated region
  $region78: #{manner_block_fwd.9} parent=0 // pred_check
    _
  $region79: #{manner_block_fwd.9} parent=0 // pred_check_branch
    %64 = sbr.rel (0) target = $region81
  $region80: #{manner_block_fwd.9} parent=0 // pred_region
    _
  $region81: #{manner_block_fwd.9} parent=0 // pred_fallthru
    _
  %v66 = vld [vmem:[%s0] sm:$0x3]
  %v67 = vld [vmem:[%s1] sm:$0x3]
  %v70 = vunpack.c.l.s4 1983009808
  %v71 = vunpack.c.0.s8 %v70
  %v72 = vlaneseq
  %v73 = vshrl.u32 %v72, 7
  %v74 = vsub.s32 %v71, %v73
  %v75 = vrot.slane %v67, %v74
  %76 = vrot.lane.b32.xlu0 %v75, 16
  %v77 = vpop.permute.xlu0 %76
  %v80 = vunpack.c.l.s4 1983009808
  %v81 = vunpack.c.0.s8 %v80
  %v82 = vlaneseq
  %v83 = vshrl.u32 %v82, 7
  %v84 = vsub.s32 %v81, %v83
  %v85 = vrot.slane %v66, %v84
  %v87 = vshrl.u32 %v85, 16
  %v89 = vshll.u32 %v85, 16
  %v91 = vrot.slane %v89, 1
  %v92 = vor.u32 %v87, %v91
  %93 = vrot.lane.b32.xlu0 %v92, 32
  %v94 = vpop.permute.xlu0 %93
  %v96 = vshrl.u32 %v75, 16
  %v98 = vshll.u32 %v75, 16
  %v100 = vrot.slane %v98, 1
  %v101 = vor.u32 %v96, %v100
  %102 = vrot.lane.b32.xlu0 %v101, 48
  %v103 = vpop.permute.xlu0 %102
  %vm104 = vcmask 130048
  %v107 = vsel %vm104, %v66, %v77
  %vm108 = vcmask 261120
  %v110 = vsel %vm108, %v107, %v94
  %vm111 = vcmask 392192
  %v113 = vsel %vm111, %v110, %v103
  %v114 = vld [vmem:[%s2] sm:$0xf]
  %v115 = vld [vmem:[%s2 + $0x4] sm:$0xf]
  %v116 = vld [vmem:[%s2 + $0x8] sm:$0xf]
  %v117 = vld [vmem:[%s2 + $0xc] sm:$0xf]
  %v118 = vld [vmem:[%s2 + $0x10] sm:$0xf]
  %v119 = vld [vmem:[%s2 + $0x14] sm:$0xf]
  %v120 = vld [vmem:[%s2 + $0x18] sm:$0xf]
  %v121 = vld [vmem:[%s2 + $0x1c] sm:$0xf]
  %v122 = vld [vmem:[%s3] sm:$0x1]
  %v124 = vlaneseq
  %v125 = vshrl.u32 %v124, 7
  %v126 = vsub.s32 0, %v125
  %v127 = vrot.slane %v122, %v126
  %v137 = vunpack.c.l.b16 %v114
  %v138 = vunpack.c.l.b16 %v115
  %v139 = vunpack.c.l.b16 %v116
  %v140 = vunpack.c.l.b16 %v117
  %v141 = vunpack.c.l.b16 %v118
  %v142 = vunpack.c.l.b16 %v119
  %v143 = vunpack.c.l.b16 %v120
  %v144 = vunpack.c.l.b16 %v121
  %v145 = vpack.c.b16 %v138, %v137
  %v146 = vpack.c.b16 %v140, %v139
  %v147 = vpack.c.b16 %v142, %v141
  %v148 = vpack.c.b16 %v144, %v143
  %vm153 = vcmask 523264
  %v154 = vsel %vm153, %v113, 0
  %156 = vmatprep.subr.bf16.mxu0 0
  %157 = vmatpush1.bf16.msra.mxu0 %v145
  %158 = vmatprep.subr.bf16.mxu0 0
  %159 = vmatpush1.bf16.msra.mxu0 %v146
  %160 = vmatprep.subr.bf16.mxu0 0
  %161 = vmatpush1.bf16.msra.mxu0 %v147
  %162 = vmatprep.subr.bf16.mxu0 0
  %163 = vmatpush1.bf16.msra.mxu0 %v148
  %164 = vmatprep.subr.bf16.mxu0 0
  %165 = vmatpush1.bf16.msra.mxu0 0
  %166 = vmatprep.subr.bf16.mxu0 0
  %167 = vmatpush1.bf16.msra.mxu0 0
  %168 = vmatprep.subr.bf16.mxu0 0
  %169 = vmatpush1.bf16.msra.mxu0 0
  %170 = vmatprep.subr.bf16.mxu0 0
  %171 = vmatpush1.bf16.msra.mxu0 0
  %172 = vmatprep.subr.bf16.mxu0 0
  %173 = vmatpush1.bf16.msra.mxu0 0
  %174 = vmatprep.subr.bf16.mxu0 0
  %175 = vmatpush1.bf16.msra.mxu0 0
  %176 = vmatprep.subr.bf16.mxu0 0
  %177 = vmatpush1.bf16.msra.mxu0 0
  %178 = vmatprep.subr.bf16.mxu0 0
  %179 = vmatpush1.bf16.msra.mxu0 0
  %180 = vmatprep.subr.bf16.mxu0 0
  %181 = vmatpush1.bf16.msra.mxu0 0
  %182 = vmatprep.subr.bf16.mxu0 0
  %183 = vmatpush1.bf16.msra.mxu0 0
  %184 = vmatprep.subr.bf16.mxu0 0
  %185 = vmatpush1.bf16.msra.mxu0 0
  %186 = vmatprep.subr.bf16.mxu0 0
  %187 = vmatpush1.bf16.msra.mxu0 0
  %188 = vmatprep.mubr.bf16.mxu0 0
  %189 = vmatmul.mubr.bf16.gmra.mrb[0].mxu0 %v154
  %v190 = vpop.f32.mrb[0].mxu0
  %v191 = vadd.f32 %v127, %v190
  %v192 = vpop.f32.mrb[0].mxu0
  %v193 = vpop.f32.mrb[0].mxu0
  %v194 = vpop.f32.mrb[0].mxu0
  %195 = vdwg.mxu0
  %s196 = scalar_lea.vmem %s0, 2
  %v197 = vld [vmem:[%s196] sm:$0x3]
  %s198 = scalar_lea.vmem %s1, 2
  %v199 = vld [vmem:[%s198] sm:$0x3]
  %v202 = vunpack.c.l.s4 1983009808
  %v203 = vunpack.c.0.s8 %v202
  %v204 = vlaneseq
  %v205 = vshrl.u32 %v204, 7
  %v206 = vsub.s32 %v203, %v205
  %v207 = vrot.slane %v199, %v206
  %208 = vrot.lane.b32.xlu0 %v207, 16
  %v209 = vpop.permute.xlu0 %208
  %v212 = vunpack.c.l.s4 1983009808
  %v213 = vunpack.c.0.s8 %v212
  %v214 = vlaneseq
  %v215 = vshrl.u32 %v214, 7
  %v216 = vsub.s32 %v213, %v215
  %v217 = vrot.slane %v197, %v216
  %v219 = vshrl.u32 %v217, 16
  %v221 = vshll.u32 %v217, 16
  %v223 = vrot.slane %v221, 1
  %v224 = vor.u32 %v219, %v223
  %225 = vrot.lane.b32.xlu0 %v224, 32
  %v226 = vpop.permute.xlu0 %225
  %v228 = vshrl.u32 %v207, 16
  %v230 = vshll.u32 %v207, 16
  %v232 = vrot.slane %v230, 1
  %v233 = vor.u32 %v228, %v232
  %234 = vrot.lane.b32.xlu0 %v233, 48
  %v235 = vpop.permute.xlu0 %234
  %v238 = vsel %vm104, %v197, %v209
  %v240 = vsel %vm108, %v238, %v226
  %v242 = vsel %vm111, %v240, %v235
  %v243 = vsel %vm153, %v242, 0
  %245 = vmatprep.subr.bf16.mxu0 0
  %246 = vmatpush1.bf16.msra.mxu0 %v145
  %247 = vmatprep.subr.bf16.mxu0 0
  %248 = vmatpush1.bf16.msra.mxu0 %v146
  %249 = vmatprep.subr.bf16.mxu0 0
  %250 = vmatpush1.bf16.msra.mxu0 %v147
  %251 = vmatprep.subr.bf16.mxu0 0
  %252 = vmatpush1.bf16.msra.mxu0 %v148
  %253 = vmatprep.subr.bf16.mxu0 0
  %254 = vmatpush1.bf16.msra.mxu0 0
  %255 = vmatprep.subr.bf16.mxu0 0
  %256 = vmatpush1.bf16.msra.mxu0 0
  %257 = vmatprep.subr.bf16.mxu0 0
  %258 = vmatpush1.bf16.msra.mxu0 0
  %259 = vmatprep.subr.bf16.mxu0 0
  %260 = vmatpush1.bf16.msra.mxu0 0
  %261 = vmatprep.subr.bf16.mxu0 0
  %262 = vmatpush1.bf16.msra.mxu0 0
  %263 = vmatprep.subr.bf16.mxu0 0
  %264 = vmatpush1.bf16.msra.mxu0 0
  %265 = vmatprep.subr.bf16.mxu0 0
  %266 = vmatpush1.bf16.msra.mxu0 0
  %267 = vmatprep.subr.bf16.mxu0 0
  %268 = vmatpush1.bf16.msra.mxu0 0
  %269 = vmatprep.subr.bf16.mxu0 0
  %270 = vmatpush1.bf16.msra.mxu0 0
  %271 = vmatprep.subr.bf16.mxu0 0
  %272 = vmatpush1.bf16.msra.mxu0 0
  %273 = vmatprep.subr.bf16.mxu0 0
  %274 = vmatpush1.bf16.msra.mxu0 0
  %275 = vmatprep.subr.bf16.mxu0 0
  %276 = vmatpush1.bf16.msra.mxu0 0
  %277 = vmatprep.mubr.bf16.mxu0 0
  %278 = vmatmul.mubr.bf16.gmra.mrb[0].mxu0 %v243
  %v279 = vpop.f32.mrb[0].mxu0
  %v280 = vadd.f32 %v127, %v279
  %v281 = vpop.f32.mrb[0].mxu0
  %v282 = vpop.f32.mrb[0].mxu0
  %v283 = vpop.f32.mrb[0].mxu0
  %284 = vdwg.mxu0
  %v285 = vld [vmem:[%s4] sm:$0x1]
  %v286 = vld [vmem:[%s5] sm:$0x1]
  %vm287 = vcmask 124928
  %v288 = vsel %vm287, %v191, 0.0
  %v289 = vrot.slane %v288, 4
  %v290 = vadd.f32 %v288, %v289
  %v291 = vrot.slane %v290, 2
  %v292 = vadd.f32 %v290, %v291
  %v293 = vrot.slane %v292, 1
  %v294 = vadd.f32 %v292, %v293
  %v295 = vadd.f32 %v294, 0.0
  %v296 = vsel %vm287, %v280, 0.0
  %v297 = vrot.slane %v296, 4
  %v298 = vadd.f32 %v296, %v297
  %v299 = vrot.slane %v298, 2
  %v300 = vadd.f32 %v298, %v299
  %v301 = vrot.slane %v300, 1
  %v302 = vadd.f32 %v300, %v301
  %v303 = vadd.f32 %v295, %v302
  %v304 = vrcp.pop 6.0
  %v305 = vmul.f32 %v303, %v304
  %v306 = vsub.f32 %v191, %v305
  %v307 = vmul.f32 %v306, %v306
  %v308 = vsel %vm287, %v307, 0.0
  %v309 = vrot.slane %v308, 4
  %v310 = vadd.f32 %v308, %v309
  %v311 = vrot.slane %v310, 2
  %v312 = vadd.f32 %v310, %v311
  %v313 = vrot.slane %v312, 1
  %v314 = vadd.f32 %v312, %v313
  %v315 = vadd.f32 %v314, 0.0
  %v316 = vsub.f32 %v280, %v305
  %v317 = vmul.f32 %v316, %v316
  %v318 = vsel %vm287, %v317, 0.0
  %v319 = vrot.slane %v318, 4
  %v320 = vadd.f32 %v318, %v319
  %v321 = vrot.slane %v320, 2
  %v322 = vadd.f32 %v320, %v321
  %v323 = vrot.slane %v322, 1
  %v324 = vadd.f32 %v322, %v323
  %v325 = vadd.f32 %v315, %v324
  %v326 = vmul.f32 %v325, %v304
  %v327 = vadd.f32 %v326, 1e-05
  %v328 = vrsqrt.pop %v327
  %v329 = vmul.f32 %v306, %v328
  %v331 = vlaneseq
  %v332 = vshrl.u32 %v331, 7
  %v333 = vsub.s32 0, %v332
  %v334 = vrot.slane %v285, %v333
  %v336 = vmul.f32 %v329, %v334
  %v338 = vlaneseq
  %v339 = vshrl.u32 %v338, 7
  %v340 = vsub.s32 0, %v339
  %v341 = vrot.slane %v286, %v340
  %v343 = vadd.f32 %v336, %v341
  %v344 = vmul.f32 %v316, %v328
  %v345 = vmul.f32 %v344, %v334
  %v346 = vadd.f32 %v345, %v341
  %v347 = vmax.f32 %v343, 0.0
  %v348 = vmax.f32 %v346, 0.0
  %v349 = vld [vmem:[%s6] sm:$0xf]
  %v350 = vld [vmem:[%s6 + $0x4] sm:$0xf]
  %v351 = vpack.c.bf16 %v347, %v347
  %v352 = vld [vmem:[%s7] sm:$0x1]
  %v354 = vlaneseq
  %v355 = vshrl.u32 %v354, 7
  %v356 = vsub.s32 0, %v355
  %v357 = vrot.slane %v352, %v356
  %v361 = vunpack.c.l.b16 %v349
  %v362 = vunpack.c.l.b16 %v350
  %v363 = vpack.c.b16 %v362, %v361
  %v366 = vsel %vm104, %v351, 0
  %368 = vmatprep.subr.bf16.mxu0 0
  %369 = vmatpush1.bf16.msra.mxu0 %v363
  %370 = vmatprep.subr.bf16.mxu0 0
  %371 = vmatpush1.bf16.msra.mxu0 0
  %372 = vmatprep.subr.bf16.mxu0 0
  %373 = vmatpush1.bf16.msra.mxu0 0
  %374 = vmatprep.subr.bf16.mxu0 0
  %375 = vmatpush1.bf16.msra.mxu0 0
  %376 = vmatprep.subr.bf16.mxu0 0
  %377 = vmatpush1.bf16.msra.mxu0 0
  %378 = vmatprep.subr.bf16.mxu0 0
  %379 = vmatpush1.bf16.msra.mxu0 0
  %380 = vmatprep.subr.bf16.mxu0 0
  %381 = vmatpush1.bf16.msra.mxu0 0
  %382 = vmatprep.subr.bf16.mxu0 0
  %383 = vmatpush1.bf16.msra.mxu0 0
  %384 = vmatprep.subr.bf16.mxu0 0
  %385 = vmatpush1.bf16.msra.mxu0 0
  %386 = vmatprep.subr.bf16.mxu0 0
  %387 = vmatpush1.bf16.msra.mxu0 0
  %388 = vmatprep.subr.bf16.mxu0 0
  %389 = vmatpush1.bf16.msra.mxu0 0
  %390 = vmatprep.subr.bf16.mxu0 0
  %391 = vmatpush1.bf16.msra.mxu0 0
  %392 = vmatprep.subr.bf16.mxu0 0
  %393 = vmatpush1.bf16.msra.mxu0 0
  %394 = vmatprep.subr.bf16.mxu0 0
  %395 = vmatpush1.bf16.msra.mxu0 0
  %396 = vmatprep.subr.bf16.mxu0 0
  %397 = vmatpush1.bf16.msra.mxu0 0
  %398 = vmatprep.subr.bf16.mxu0 0
  %399 = vmatpush1.bf16.msra.mxu0 0
  %400 = vmatprep.mubr.bf16.mxu0 0
  %401 = vmatmul.mubr.bf16.gmra.mrb[0].mxu0 %v366
  %v402 = vpop.f32.mrb[0].mxu0
  %v403 = vadd.f32 %v357, %v402
  %v404 = vpop.f32.mrb[0].mxu0
  %v405 = vpop.f32.mrb[0].mxu0
  %v406 = vpop.f32.mrb[0].mxu0
  %407 = vdwg.mxu0
  %v408 = vpack.c.bf16 %v348, %v348
  %v410 = vsel %vm104, %v408, 0
  %412 = vmatprep.subr.bf16.mxu0 0
  %413 = vmatpush1.bf16.msra.mxu0 %v363
  %414 = vmatprep.subr.bf16.mxu0 0
  %415 = vmatpush1.bf16.msra.mxu0 0
  %416 = vmatprep.subr.bf16.mxu0 0
  %417 = vmatpush1.bf16.msra.mxu0 0
  %418 = vmatprep.subr.bf16.mxu0 0
  %419 = vmatpush1.bf16.msra.mxu0 0
  %420 = vmatprep.subr.bf16.mxu0 0
  %421 = vmatpush1.bf16.msra.mxu0 0
  %422 = vmatprep.subr.bf16.mxu0 0
  %423 = vmatpush1.bf16.msra.mxu0 0
  %424 = vmatprep.subr.bf16.mxu0 0
  %425 = vmatpush1.bf16.msra.mxu0 0
  %426 = vmatprep.subr.bf16.mxu0 0
  %427 = vmatpush1.bf16.msra.mxu0 0
  %428 = vmatprep.subr.bf16.mxu0 0
  %429 = vmatpush1.bf16.msra.mxu0 0
  %430 = vmatprep.subr.bf16.mxu0 0
  %431 = vmatpush1.bf16.msra.mxu0 0
  %432 = vmatprep.subr.bf16.mxu0 0
  %433 = vmatpush1.bf16.msra.mxu0 0
  %434 = vmatprep.subr.bf16.mxu0 0
  %435 = vmatpush1.bf16.msra.mxu0 0
  %436 = vmatprep.subr.bf16.mxu0 0
  %437 = vmatpush1.bf16.msra.mxu0 0
  %438 = vmatprep.subr.bf16.mxu0 0
  %439 = vmatpush1.bf16.msra.mxu0 0
  %440 = vmatprep.subr.bf16.mxu0 0
  %441 = vmatpush1.bf16.msra.mxu0 0
  %442 = vmatprep.subr.bf16.mxu0 0
  %443 = vmatpush1.bf16.msra.mxu0 0
  %444 = vmatprep.mubr.bf16.mxu0 0
  %445 = vmatmul.mubr.bf16.gmra.mrb[0].mxu0 %v410
  %v446 = vpop.f32.mrb[0].mxu0
  %v447 = vadd.f32 %v357, %v446
  %v448 = vpop.f32.mrb[0].mxu0
  %v449 = vpop.f32.mrb[0].mxu0
  %v450 = vpop.f32.mrb[0].mxu0
  %451 = vdwg.mxu0
  %v452 = vld [vmem:[%s8] sm:$0x1]
  %v453 = vld [vmem:[%s9] sm:$0x1]
  %vm454 = vcmask 256000
  %v455 = vsel %vm454, %v403, 0.0
  %v456 = vrot.slane %v455, 4
  %v457 = vadd.f32 %v455, %v456
  %v458 = vrot.slane %v457, 2
  %v459 = vadd.f32 %v457, %v458
  %v460 = vrot.slane %v459, 1
  %v461 = vadd.f32 %v459, %v460
  %v462 = vadd.f32 %v461, 0.0
  %v463 = vsel %vm454, %v447, 0.0
  %v464 = vrot.slane %v463, 4
  %v465 = vadd.f32 %v463, %v464
  %v466 = vrot.slane %v465, 2
  %v467 = vadd.f32 %v465, %v466
  %v468 = vrot.slane %v467, 1
  %v469 = vadd.f32 %v467, %v468
  %v470 = vadd.f32 %v462, %v469
  %v471 = vmul.f32 %v470, %v304
  %v472 = vsub.f32 %v403, %v471
  %v473 = vmul.f32 %v472, %v472
  %v474 = vsel %vm454, %v473, 0.0
  %v475 = vrot.slane %v474, 4
  %v476 = vadd.f32 %v474, %v475
  %v477 = vrot.slane %v476, 2
  %v478 = vadd.f32 %v476, %v477
  %v479 = vrot.slane %v478, 1
  %v480 = vadd.f32 %v478, %v479
  %v481 = vadd.f32 %v480, 0.0
  %v482 = vsub.f32 %v447, %v471
  %v483 = vmul.f32 %v482, %v482
  %v484 = vsel %vm454, %v483, 0.0
  %v485 = vrot.slane %v484, 4
  %v486 = vadd.f32 %v484, %v485
  %v487 = vrot.slane %v486, 2
  %v488 = vadd.f32 %v486, %v487
  %v489 = vrot.slane %v488, 1
  %v490 = vadd.f32 %v488, %v489
  %v491 = vadd.f32 %v481, %v490
  %v492 = vmul.f32 %v491, %v304
  %v493 = vadd.f32 %v492, 1e-05
  %v494 = vrsqrt.pop %v493
  %v495 = vmul.f32 %v472, %v494
  %v497 = vlaneseq
  %v498 = vshrl.u32 %v497, 7
  %v499 = vsub.s32 0, %v498
  %v500 = vrot.slane %v452, %v499
  %v502 = vmul.f32 %v495, %v500
  %v504 = vlaneseq
  %v505 = vshrl.u32 %v504, 7
  %v506 = vsub.s32 0, %v505
  %v507 = vrot.slane %v453, %v506
  %v509 = vadd.f32 %v502, %v507
  %v510 = vmul.f32 %v482, %v494
  %v511 = vmul.f32 %v510, %v500
  %v512 = vadd.f32 %v511, %v507
  %v513 = vxor.u32 %v509, 2147483648
  %v514 = vmul.f32 %v513, 1.442695
  %v515 = vpow.pop %v514
  %v516 = vadd.f32 %v515, 1.0
  %v517 = vrcp.pop %v516
  %v518 = vmul.f32 1.0, %v517
  %520 = vrot.lane.b32.xlu0 %v518, 112
  %v521 = vpop.permute.xlu0 %520
  %v523 = vmul.f32 %v509, %v521
  %v524 = vxor.u32 %v512, 2147483648
  %v525 = vmul.f32 %v524, 1.442695
  %v526 = vpow.pop %v525
  %v527 = vadd.f32 %v526, 1.0
  %v528 = vrcp.pop %v527
  %v529 = vmul.f32 1.0, %v528
  %531 = vrot.lane.b32.xlu0 %v529, 112
  %v532 = vpop.permute.xlu0 %531
  %v534 = vmul.f32 %v512, %v532
  %535 = vst.msk [vmem:[#allocation2] sm:$0xff] %vm104, 0.0
  %vm536 = vcmask 129024
  %537 = vst.msk [vmem:[#allocation2 + $0x8] sm:$0x7f] %vm536, 0.0
  %538 = vst.msk [vmem:[#allocation2 + $0x12] sm:$0xff] %vm104, 0.0
  %539 = vst.msk [vmem:[#allocation2 + $0x1a] sm:$0x7f] %vm536, 0.0
  %540 = vst.msk [vmem:[#allocation2 + $0xf] sm:$0x7] %vm287, %v523
  loop: start=0, step=1, limit=31
  $region82: #{manner_block_fwd.9} parent=0 // loop_pre_header
    _
  $region83: #{manner_block_fwd.9} parent=0 // loop_header
    %s542 = sphi 0, %s546
    %p543 = scmp.ge.s32.totalorder %s542, 31
    %v547 = vphi 0.0, %v557
  $region84: #{manner_block_fwd.9} parent=0 // loop_header_branch
    %545 = sbr.rel (%p543) target = $region88
  $region85: #{manner_block_fwd.9} parent=0 // loop_body
    %s548 = scalar_lea.vmem [#allocation2], %s542
    %v549 = vld [vmem:[%s548] sm:$0x7]
    %s550 = scalar_lea.vmem %s10, %s542
    %v551 = vld [vmem:[%s550] sm:$0x1]
    %v552 = vlaneseq
    %v553 = vshrl.u32 %v552, 7
    %v554 = vsub.s32 0, %v553
    %v555 = vrot.slane %v551, %v554
    %v556 = vmul.f32 %v549, %v555
    %v557 = vadd.f32 %v547, %v556
  $region86: #{manner_block_fwd.9} parent=0 // loop_footer
    %s546 = sadd.s32 1, %s542
  $region87: #{manner_block_fwd.9} parent=0 // loop_footer_branch
    %541 = sbr.rel target = $region83
  $region88: #{manner_block_fwd.9} parent=0 // loop_exit
    _
  %v558 = vld [vmem:[%s11] sm:$0x1]
  %v560 = vlaneseq
  %v561 = vshrl.u32 %v560, 7
  %v562 = vsub.s32 0, %v561
  %v563 = vrot.slane %v558, %v562
  %v565 = vadd.f32 %v547, %v563
  %s566 = scalar_lea.vmem [#allocation2], 40
  %567 = vst.msk [vmem:[%s566] sm:$0xff] %vm104, 0.0
  %568 = vst.msk [vmem:[%s566 + $0x8] sm:$0x7f] %vm536, 0.0
  %569 = vst.msk [vmem:[%s566 + $0x12] sm:$0xff] %vm104, 0.0
  %570 = vst.msk [vmem:[%s566 + $0x1a] sm:$0x7f] %vm536, 0.0
  %571 = vst.msk [vmem:[%s566 + $0xf] sm:$0x7] %vm287, %v534
  loop: start=0, step=1, limit=31
  $region89: #{manner_block_fwd.9} parent=0 // loop_pre_header
    _
  $region90: #{manner_block_fwd.9} parent=0 // loop_header
    %s573 = sphi 0, %s577
    %p574 = scmp.ge.s32.totalorder %s573, 31
    %v578 = vphi 0.0, %v589
  $region91: #{manner_block_fwd.9} parent=0 // loop_header_branch
    %576 = sbr.rel (%p574) target = $region95
  $region92: #{manner_block_fwd.9} parent=0 // loop_body
    %s579 = sadd.s32 %s573, 40
    %s580 = scalar_lea.vmem [#allocation2], %s579
    %v581 = vld [vmem:[%s580] sm:$0x7]
    %s582 = scalar_lea.vmem %s10, %s573
    %v583 = vld [vmem:[%s582] sm:$0x1]
    %v584 = vlaneseq
    %v585 = vshrl.u32 %v584, 7
    %v586 = vsub.s32 0, %v585
    %v587 = vrot.slane %v583, %v586
    %v588 = vmul.f32 %v581, %v587
    %v589 = vadd.f32 %v578, %v588
  $region93: #{manner_block_fwd.9} parent=0 // loop_footer
    %s577 = sadd.s32 1, %s573
  $region94: #{manner_block_fwd.9} parent=0 // loop_footer_branch
    %572 = sbr.rel target = $region90
  $region95: #{manner_block_fwd.9} parent=0 // loop_exit
    _
  %v590 = vld [vmem:[%s11] sm:$0x1]
  %v592 = vlaneseq
  %v593 = vshrl.u32 %v592, 7
  %v594 = vsub.s32 0, %v593
  %v595 = vrot.slane %v590, %v594
  %v597 = vadd.f32 %v578, %v595
  %v598 = vld [vmem:[%s12] sm:$0x1]
  %v599 = vld [vmem:[%s13] sm:$0x1]
  %v600 = vsel %vm287, %v565, 0.0
  %v601 = vrot.slane %v600, 4
  %v602 = vadd.f32 %v600, %v601
  %v603 = vrot.slane %v602, 2
  %v604 = vadd.f32 %v602, %v603
  %v605 = vrot.slane %v604, 1
  %v606 = vadd.f32 %v604, %v605
  %v607 = vadd.f32 %v606, 0.0
  %v608 = vsel %vm287, %v597, 0.0
  %v609 = vrot.slane %v608, 4
  %v610 = vadd.f32 %v608, %v609
  %v611 = vrot.slane %v610, 2
  %v612 = vadd.f32 %v610, %v611
  %v613 = vrot.slane %v612, 1
  %v614 = vadd.f32 %v612, %v613
  %v615 = vadd.f32 %v607, %v614
  %v616 = vmul.f32 %v615, %v304
  %v617 = vsub.f32 %v565, %v616
  %v618 = vmul.f32 %v617, %v617
  %v619 = vsel %vm287, %v618, 0.0
  %v620 = vrot.slane %v619, 4
  %v621 = vadd.f32 %v619, %v620
  %v622 = vrot.slane %v621, 2
  %v623 = vadd.f32 %v621, %v622
  %v624 = vrot.slane %v623, 1
  %v625 = vadd.f32 %v623, %v624
  %v626 = vadd.f32 %v625, 0.0
  %v627 = vsub.f32 %v597, %v616
  %v628 = vmul.f32 %v627, %v627
  %v629 = vsel %vm287, %v628, 0.0
  %v630 = vrot.slane %v629, 4
  %v631 = vadd.f32 %v629, %v630
  %v632 = vrot.slane %v631, 2
  %v633 = vadd.f32 %v631, %v632
  %v634 = vrot.slane %v633, 1
  %v635 = vadd.f32 %v633, %v634
  %v636 = vadd.f32 %v626, %v635
  %v637 = vmul.f32 %v636, %v304
  %v638 = vadd.f32 %v637, 1e-05
  %v639 = vrsqrt.pop %v638
  %v640 = vmul.f32 %v617, %v639
  %v642 = vlaneseq
  %v643 = vshrl.u32 %v642, 7
  %v644 = vsub.s32 0, %v643
  %v645 = vrot.slane %v598, %v644
  %v647 = vmul.f32 %v640, %v645
  %v649 = vlaneseq
  %v650 = vshrl.u32 %v649, 7
  %v651 = vsub.s32 0, %v650
  %v652 = vrot.slane %v599, %v651
  %v654 = vadd.f32 %v647, %v652
  %v655 = vmul.f32 %v627, %v639
  %v656 = vmul.f32 %v655, %v645
  %v657 = vadd.f32 %v656, %v652
  %v658 = vxor.u32 %v654, 2147483648
  %v659 = vmul.f32 %v658, 1.442695
  %v660 = vpow.pop %v659
  %v661 = vadd.f32 %v660, 1.0
  %v662 = vrcp.pop %v661
  %v663 = vmul.f32 1.0, %v662
  %v664 = vmul.f32 %v654, %v663
  %v665 = vxor.u32 %v657, 2147483648
  %v666 = vmul.f32 %v665, 1.442695
  %v667 = vpow.pop %v666
  %v668 = vadd.f32 %v667, 1.0
  %v669 = vrcp.pop %v668
  %v670 = vmul.f32 1.0, %v669
  %v671 = vmul.f32 %v657, %v670
  %v672 = vld [vmem:[%s14] sm:$0xf]
  %v673 = vld [vmem:[%s14 + $0x4] sm:$0xf]
  %v674 = vpack.c.bf16 %v664, %v664
  %v675 = vld [vmem:[%s15] sm:$0x1]
  %v677 = vlaneseq
  %v678 = vshrl.u32 %v677, 7
  %v679 = vsub.s32 0, %v678
  %v680 = vrot.slane %v675, %v679
  %v684 = vunpack.c.l.b16 %v672
  %v685 = vunpack.c.l.b16 %v673
  %v686 = vpack.c.b16 %v685, %v684
  %v689 = vsel %vm104, %v674, 0
  %691 = vmatprep.subr.bf16.mxu0 0
  %692 = vmatpush1.bf16.msra.mxu0 %v686
  %693 = vmatprep.subr.bf16.mxu0 0
  %694 = vmatpush1.bf16.msra.mxu0 0
  %695 = vmatprep.subr.bf16.mxu0 0
  %696 = vmatpush1.bf16.msra.mxu0 0
  %697 = vmatprep.subr.bf16.mxu0 0
  %698 = vmatpush1.bf16.msra.mxu0 0
  %699 = vmatprep.subr.bf16.mxu0 0
  %700 = vmatpush1.bf16.msra.mxu0 0
  %701 = vmatprep.subr.bf16.mxu0 0
  %702 = vmatpush1.bf16.msra.mxu0 0
  %703 = vmatprep.subr.bf16.mxu0 0
  %704 = vmatpush1.bf16.msra.mxu0 0
  %705 = vmatprep.subr.bf16.mxu0 0
  %706 = vmatpush1.bf16.msra.mxu0 0
  %707 = vmatprep.subr.bf16.mxu0 0
  %708 = vmatpush1.bf16.msra.mxu0 0
  %709 = vmatprep.subr.bf16.mxu0 0
  %710 = vmatpush1.bf16.msra.mxu0 0
  %711 = vmatprep.subr.bf16.mxu0 0
  %712 = vmatpush1.bf16.msra.mxu0 0
  %713 = vmatprep.subr.bf16.mxu0 0
  %714 = vmatpush1.bf16.msra.mxu0 0
  %715 = vmatprep.subr.bf16.mxu0 0
  %716 = vmatpush1.bf16.msra.mxu0 0
  %717 = vmatprep.subr.bf16.mxu0 0
  %718 = vmatpush1.bf16.msra.mxu0 0
  %719 = vmatprep.subr.bf16.mxu0 0
  %720 = vmatpush1.bf16.msra.mxu0 0
  %721 = vmatprep.subr.bf16.mxu0 0
  %722 = vmatpush1.bf16.msra.mxu0 0
  %723 = vmatprep.mubr.bf16.mxu0 0
  %724 = vmatmul.mubr.bf16.gmra.mrb[0].mxu0 %v689
  %v725 = vpop.f32.mrb[0].mxu0
  %v726 = vadd.f32 %v680, %v725
  %v727 = vpop.f32.mrb[0].mxu0
  %v728 = vpop.f32.mrb[0].mxu0
  %v729 = vpop.f32.mrb[0].mxu0
  %730 = vdwg.mxu0
  %v731 = vpack.c.bf16 %v671, %v671
  %v733 = vsel %vm104, %v731, 0
  %735 = vmatprep.subr.bf16.mxu0 0
  %736 = vmatpush1.bf16.msra.mxu0 %v686
  %737 = vmatprep.subr.bf16.mxu0 0
  %738 = vmatpush1.bf16.msra.mxu0 0
  %739 = vmatprep.subr.bf16.mxu0 0
  %740 = vmatpush1.bf16.msra.mxu0 0
  %741 = vmatprep.subr.bf16.mxu0 0
  %742 = vmatpush1.bf16.msra.mxu0 0
  %743 = vmatprep.subr.bf16.mxu0 0
  %744 = vmatpush1.bf16.msra.mxu0 0
  %745 = vmatprep.subr.bf16.mxu0 0
  %746 = vmatpush1.bf16.msra.mxu0 0
  %747 = vmatprep.subr.bf16.mxu0 0
  %748 = vmatpush1.bf16.msra.mxu0 0
  %749 = vmatprep.subr.bf16.mxu0 0
  %750 = vmatpush1.bf16.msra.mxu0 0
  %751 = vmatprep.subr.bf16.mxu0 0
  %752 = vmatpush1.bf16.msra.mxu0 0
  %753 = vmatprep.subr.bf16.mxu0 0
  %754 = vmatpush1.bf16.msra.mxu0 0
  %755 = vmatprep.subr.bf16.mxu0 0
  %756 = vmatpush1.bf16.msra.mxu0 0
  %757 = vmatprep.subr.bf16.mxu0 0
  %758 = vmatpush1.bf16.msra.mxu0 0
  %759 = vmatprep.subr.bf16.mxu0 0
  %760 = vmatpush1.bf16.msra.mxu0 0
  %761 = vmatprep.subr.bf16.mxu0 0
  %762 = vmatpush1.bf16.msra.mxu0 0
  %763 = vmatprep.subr.bf16.mxu0 0
  %764 = vmatpush1.bf16.msra.mxu0 0
  %765 = vmatprep.subr.bf16.mxu0 0
  %766 = vmatpush1.bf16.msra.mxu0 0
  %767 = vmatprep.mubr.bf16.mxu0 0
  %768 = vmatmul.mubr.bf16.gmra.mrb[0].mxu0 %v733
  %v769 = vpop.f32.mrb[0].mxu0
  %v770 = vadd.f32 %v680, %v769
  %v771 = vpop.f32.mrb[0].mxu0
  %v772 = vpop.f32.mrb[0].mxu0
  %v773 = vpop.f32.mrb[0].mxu0
  %774 = vdwg.mxu0
  %v775 = vld [vmem:[%s16] sm:$0x1]
  %v776 = vld [vmem:[%s17] sm:$0x1]
  %v777 = vsel %vm454, %v726, 0.0
  %v778 = vrot.slane %v777, 4
  %v779 = vadd.f32 %v777, %v778
  %v780 = vrot.slane %v779, 2
  %v781 = vadd.f32 %v779, %v780
  %v782 = vrot.slane %v781, 1
  %v783 = vadd.f32 %v781, %v782
  %v784 = vadd.f32 %v783, 0.0
  %v785 = vsel %vm454, %v770, 0.0
  %v786 = vrot.slane %v785, 4
  %v787 = vadd.f32 %v785, %v786
  %v788 = vrot.slane %v787, 2
  %v789 = vadd.f32 %v787, %v788
  %v790 = vrot.slane %v789, 1
  %v791 = vadd.f32 %v789, %v790
  %v792 = vadd.f32 %v784, %v791
  %v793 = vmul.f32 %v792, %v304
  %v794 = vsub.f32 %v726, %v793
  %v795 = vmul.f32 %v794, %v794
  %v796 = vsel %vm454, %v795, 0.0
  %v797 = vrot.slane %v796, 4
  %v798 = vadd.f32 %v796, %v797
  %v799 = vrot.slane %v798, 2
  %v800 = vadd.f32 %v798, %v799
  %v801 = vrot.slane %v800, 1
  %v802 = vadd.f32 %v800, %v801
  %v803 = vadd.f32 %v802, 0.0
  %v804 = vsub.f32 %v770, %v793
  %v805 = vmul.f32 %v804, %v804
  %v806 = vsel %vm454, %v805, 0.0
  %v807 = vrot.slane %v806, 4
  %v808 = vadd.f32 %v806, %v807
  %v809 = vrot.slane %v808, 2
  %v810 = vadd.f32 %v808, %v809
  %v811 = vrot.slane %v810, 1
  %v812 = vadd.f32 %v810, %v811
  %v813 = vadd.f32 %v803, %v812
  %v814 = vmul.f32 %v813, %v304
  %v815 = vadd.f32 %v814, 1e-05
  %v816 = vrsqrt.pop %v815
  %v817 = vmul.f32 %v794, %v816
  %v819 = vlaneseq
  %v820 = vshrl.u32 %v819, 7
  %v821 = vsub.s32 0, %v820
  %v822 = vrot.slane %v775, %v821
  %v824 = vmul.f32 %v817, %v822
  %v826 = vlaneseq
  %v827 = vshrl.u32 %v826, 7
  %v828 = vsub.s32 0, %v827
  %v829 = vrot.slane %v776, %v828
  %v831 = vadd.f32 %v824, %v829
  %v832 = vmul.f32 %v804, %v816
  %v833 = vmul.f32 %v832, %v822
  %v834 = vadd.f32 %v833, %v829
  %v835 = vxor.u32 %v831, 2147483648
  %v836 = vmul.f32 %v835, 1.442695
  %v837 = vpow.pop %v836
  %v838 = vadd.f32 %v837, 1.0
  %v839 = vrcp.pop %v838
  %v840 = vmul.f32 1.0, %v839
  %v841 = vmul.f32 %v831, %v840
  %v842 = vxor.u32 %v834, 2147483648
  %v843 = vmul.f32 %v842, 1.442695
  %v844 = vpow.pop %v843
  %v845 = vadd.f32 %v844, 1.0
  %v846 = vrcp.pop %v845
  %v847 = vmul.f32 1.0, %v846
  %v848 = vmul.f32 %v834, %v847
  %v849 = vld [vmem:[%s18] sm:$0xf]
  %v850 = vld [vmem:[%s18 + $0x4] sm:$0xf]
  %v853 = vunpack.c.l.b16 %v849
  %v854 = vunpack.c.l.b16 %v850
  %v855 = vpack.c.b16 %v854, %v853
  %857 = vmatprep.subr.bf16.mxu0 0
  %858 = vmatpush1.bf16.msra.mxu0 %v855
  %859 = vmatprep.subr.bf16.mxu0 0
  %860 = vmatpush1.bf16.msra.mxu0 0
  %861 = vmatprep.subr.bf16.mxu0 0
  %862 = vmatpush1.bf16.msra.mxu0 0
  %863 = vmatprep.subr.bf16.mxu0 0
  %864 = vmatpush1.bf16.msra.mxu0 0
  %865 = vmatprep.subr.bf16.mxu0 0
  %866 = vmatpush1.bf16.msra.mxu0 0
  %867 = vmatprep.subr.bf16.mxu0 0
  %868 = vmatpush1.bf16.msra.mxu0 0
  %869 = vmatprep.subr.bf16.mxu0 0
  %870 = vmatpush1.bf16.msra.mxu0 0
  %871 = vmatprep.subr.bf16.mxu0 0
  %872 = vmatpush1.bf16.msra.mxu0 0
  %873 = vmatprep.subr.bf16.mxu0 0
  %874 = vmatpush1.bf16.msra.mxu0 0
  %875 = vmatprep.subr.bf16.mxu0 0
  %876 = vmatpush1.bf16.msra.mxu0 0
  %877 = vmatprep.subr.bf16.mxu0 0
  %878 = vmatpush1.bf16.msra.mxu0 0
  %879 = vmatprep.subr.bf16.mxu0 0
  %880 = vmatpush1.bf16.msra.mxu0 0
  %881 = vmatprep.subr.bf16.mxu0 0
  %882 = vmatpush1.bf16.msra.mxu0 0
  %883 = vmatprep.subr.bf16.mxu0 0
  %884 = vmatpush1.bf16.msra.mxu0 0
  %885 = vmatprep.subr.bf16.mxu0 0
  %886 = vmatpush1.bf16.msra.mxu0 0
  %887 = vmatprep.subr.bf16.mxu0 0
  %888 = vmatpush1.bf16.msra.mxu0 0
  %889 = vmatprep.mubr.bf16.mxu0 0
  %890 = vmatmul.mubr.bf16.gmra.mrb[0].mxu0 %v366
  %v891 = vpop.f32.mrb[0].mxu0
  %v892 = vadd.f32 0.0, %v891
  %v893 = vpop.f32.mrb[0].mxu0
  %v894 = vpop.f32.mrb[0].mxu0
  %v895 = vpop.f32.mrb[0].mxu0
  %896 = vdwg.mxu0
  %v897 = vadd.f32 %v841, %v892
  %v898 = vld [vmem:[%s19] sm:$0x1]
  %v900 = vlaneseq
  %v901 = vshrl.u32 %v900, 7
  %v902 = vsub.s32 0, %v901
  %v903 = vrot.slane %v898, %v902
  %v905 = vadd.f32 %v897, %v903
  %906 = vmatprep.subr.bf16.mxu0 0
  %907 = vmatpush1.bf16.msra.mxu0 %v855
  %908 = vmatprep.subr.bf16.mxu0 0
  %909 = vmatpush1.bf16.msra.mxu0 0
  %910 = vmatprep.subr.bf16.mxu0 0
  %911 = vmatpush1.bf16.msra.mxu0 0
  %912 = vmatprep.subr.bf16.mxu0 0
  %913 = vmatpush1.bf16.msra.mxu0 0
  %914 = vmatprep.subr.bf16.mxu0 0
  %915 = vmatpush1.bf16.msra.mxu0 0
  %916 = vmatprep.subr.bf16.mxu0 0
  %917 = vmatpush1.bf16.msra.mxu0 0
  %918 = vmatprep.subr.bf16.mxu0 0
  %919 = vmatpush1.bf16.msra.mxu0 0
  %920 = vmatprep.subr.bf16.mxu0 0
  %921 = vmatpush1.bf16.msra.mxu0 0
  %922 = vmatprep.subr.bf16.mxu0 0
  %923 = vmatpush1.bf16.msra.mxu0 0
  %924 = vmatprep.subr.bf16.mxu0 0
  %925 = vmatpush1.bf16.msra.mxu0 0
  %926 = vmatprep.subr.bf16.mxu0 0
  %927 = vmatpush1.bf16.msra.mxu0 0
  %928 = vmatprep.subr.bf16.mxu0 0
  %929 = vmatpush1.bf16.msra.mxu0 0
  %930 = vmatprep.subr.bf16.mxu0 0
  %931 = vmatpush1.bf16.msra.mxu0 0
  %932 = vmatprep.subr.bf16.mxu0 0
  %933 = vmatpush1.bf16.msra.mxu0 0
  %934 = vmatprep.subr.bf16.mxu0 0
  %935 = vmatpush1.bf16.msra.mxu0 0
  %936 = vmatprep.subr.bf16.mxu0 0
  %937 = vmatpush1.bf16.msra.mxu0 0
  %938 = vmatprep.mubr.bf16.mxu0 0
  %939 = vmatmul.mubr.bf16.gmra.mrb[0].mxu0 %v410
  %v940 = vpop.f32.mrb[0].mxu0
  %v941 = vadd.f32 0.0, %v940
  %v942 = vpop.f32.mrb[0].mxu0
  %v943 = vpop.f32.mrb[0].mxu0
  %v944 = vpop.f32.mrb[0].mxu0
  %945 = vdwg.mxu0
  %v946 = vadd.f32 %v848, %v941
  %v947 = vadd.f32 %v946, %v903
  %v948 = vpack.c.bf16 %v905, %v905
  %vm949 = vcmask 254976
  %vm950 = vsmask.f32 1280
  %vm951 = vmand %vm949, %vm950
  %v952 = vld [vmem:[%s20] sm:$0x3]
  %v953 = vsel %vm951, %v948, %v952
  %954 = vst [vmem:[%s20] sm:$0x3] %v953
  %v955 = vpack.c.bf16 %v947, %v947
  %s956 = scalar_lea.vmem %s20, 2
  %v957 = vld [vmem:[%s956] sm:$0x3]
  %v958 = vsel %vm951, %v955, %v957
  %959 = vst [vmem:[%s956] sm:$0x3] %v958
  // Predicated region
  $region96: #{manner_block_fwd.9} parent=0 // pred_check
    _
  $region97: #{manner_block_fwd.9} parent=0 // pred_check_branch
    %961 = sbr.rel (0) target = $region99
  $region98: #{manner_block_fwd.9} parent=0 // pred_region
    _
  $region99: #{manner_block_fwd.9} parent=0 // pred_fallthru
    _
  // Predicated region
  $region100: #{manner_block_fwd.9} parent=0 // pred_check
    _
  $region101: #{manner_block_fwd.9} parent=0 // pred_check_branch
    %963 = sbr.rel (0) target = $region103
  $region102: #{manner_block_fwd.9} parent=0 // pred_region
    _
  $region103: #{manner_block_fwd.9} parent=0 // pred_fallthru
    _

// kernel: manner_block_fwd.11
$region0: #{manner_block_fwd.11}
  #allocation0 [shape = 'u32[]', space=smem, size = 0x4, offset = 0x4, fixed_abs, tag = 'smem constant byte address 0x4 - core index']
  #allocation1 [shape = 'u32[144,128]{1,0:T(1,128)}', space=vmem, size = 0x12000, scoped, tag = 'internal scratch']
  #allocation2 [shape = 'f32[2,33,32]{2,1,0:T(8,128)}', space=vmem, size = 0xa000, scoped, tag = 'scratch operand']
  #allocation3 [shape = 'f32[2,5,16]{2,1,0:T(8,128)}', space=vmem, size = 0x2000, scoped, tag = 'scratch operand']
  %s0 = inlined_call_operand.vmem [shape: bf16[2,3,32], index: 0, kind: input, shape index: {}]
  %s1 = inlined_call_operand.vmem [shape: bf16[2,3,32], index: 1, kind: input, shape index: {}]
  %s2 = inlined_call_operand.vmem [shape: bf16[32,64], index: 2, kind: input, shape index: {}]
  %s3 = inlined_call_operand.vmem [shape: f32[1,64], index: 3, kind: input, shape index: {}]
  %s4 = inlined_call_operand.vmem [shape: f32[1,64], index: 4, kind: input, shape index: {}]
  %s5 = inlined_call_operand.vmem [shape: f32[1,64], index: 5, kind: input, shape index: {}]
  %s6 = inlined_call_operand.vmem [shape: f32[31,32], index: 6, kind: input, shape index: {}]
  %s7 = inlined_call_operand.vmem [shape: f32[1,32], index: 7, kind: input, shape index: {}]
  %s8 = inlined_call_operand.vmem [shape: f32[1,32], index: 8, kind: input, shape index: {}]
  %s9 = inlined_call_operand.vmem [shape: f32[1,32], index: 9, kind: input, shape index: {}]
  %s10 = inlined_call_operand.vmem [shape: bf16[32,16], index: 10, kind: input, shape index: {}]
  %s11 = inlined_call_operand.vmem [shape: f32[1,16], index: 11, kind: input, shape index: {}]
  %s12 = inlined_call_operand.vmem [shape: f32[1,16], index: 12, kind: input, shape index: {}]
  %s13 = inlined_call_operand.vmem [shape: f32[1,16], index: 13, kind: input, shape index: {}]
  %s14 = inlined_call_operand.vmem [shape: bf16[32,16], index: 14, kind: input, shape index: {}]
  %s15 = inlined_call_operand.vmem [shape: f32[1,16], index: 15, kind: input, shape index: {}]
  %s16 = inlined_call_operand.vmem [shape: bf16[32,32], index: 16, kind: input, shape index: {}]
  %s17 = inlined_call_operand.vmem [shape: f32[1,32], index: 17, kind: input, shape index: {}]
  %s18 = inlined_call_operand.vmem [shape: f32[1,32], index: 18, kind: input, shape index: {}]
  %s19 = inlined_call_operand.vmem [shape: f32[1,32], index: 19, kind: input, shape index: {}]
  %s20 = inlined_call_operand.vmem [shape: bf16[2,4,32], index: 20, kind: output, shape index: {}]
  %s21 = sld [smem:[#allocation0]]
  $region104: #{manner_block_fwd.11} parent=0
    _
  %s23 = ssub.s32 1, %s21
  %s24 = scalar_select 0, %s23, %s21
  // Predicated region
  $region2: #{manner_block_fwd.11} parent=0 // pred_check
    _
  $region3: #{manner_block_fwd.11} parent=0 // pred_check_branch
    %26 = sbr.rel (0) target = $region5
  $region4: #{manner_block_fwd.11} parent=0 // pred_region
    _
  $region5: #{manner_block_fwd.11} parent=0 // pred_fallthru
    _
  // Predicated region
  $region6: #{manner_block_fwd.11} parent=0 // pred_check
    _
  $region7: #{manner_block_fwd.11} parent=0 // pred_check_branch
    %28 = sbr.rel (0) target = $region9
  $region8: #{manner_block_fwd.11} parent=0 // pred_region
    _
  $region9: #{manner_block_fwd.11} parent=0 // pred_fallthru
    _
  // Predicated region
  $region10: #{manner_block_fwd.11} parent=0 // pred_check
    _
  $region11: #{manner_block_fwd.11} parent=0 // pred_check_branch
    %30 = sbr.rel (0) target = $region13
  $region12: #{manner_block_fwd.11} parent=0 // pred_region
    _
  $region13: #{manner_block_fwd.11} parent=0 // pred_fallthru
    _
  // Predicated region
  $region14: #{manner_block_fwd.11} parent=0 // pred_check
    _
  $region15: #{manner_block_fwd.11} parent=0 // pred_check_branch
    %32 = sbr.rel (0) target = $region17
  $region16: #{manner_block_fwd.11} parent=0 // pred_region
    _
  $region17: #{manner_block_fwd.11} parent=0 // pred_fallthru
    _
  // Predicated region
  $region18: #{manner_block_fwd.11} parent=0 // pred_check
    _
  $region19: #{manner_block_fwd.11} parent=0 // pred_check_branch
    %34 = sbr.rel (0) target = $region21
  $region20: #{manner_block_fwd.11} parent=0 // pred_region
    _
  $region21: #{manner_block_fwd.11} parent=0 // pred_fallthru
    _
  // Predicated region
  $region22: #{manner_block_fwd.11} parent=0 // pred_check
    _
  $region23: #{manner_block_fwd.11} parent=0 // pred_check_branch
    %36 = sbr.rel (0) target = $region25
  $region24: #{manner_block_fwd.11} parent=0 // pred_region
    _
  $region25: #{manner_block_fwd.11} parent=0 // pred_fallthru
    _
  // Predicated region
  $region26: #{manner_block_fwd.11} parent=0 // pred_check
    _
  $region27: #{manner_block_fwd.11} parent=0 // pred_check_branch
    %38 = sbr.rel (0) target = $region29
  $region28: #{manner_block_fwd.11} parent=0 // pred_region
    _
  $region29: #{manner_block_fwd.11} parent=0 // pred_fallthru
    _
  // Predicated region
  $region30: #{manner_block_fwd.11} parent=0 // pred_check
    _
  $region31: #{manner_block_fwd.11} parent=0 // pred_check_branch
    %40 = sbr.rel (0) target = $region33
  $region32: #{manner_block_fwd.11} parent=0 // pred_region
    _
  $region33: #{manner_block_fwd.11} parent=0 // pred_fallthru
    _
  // Predicated region
  $region34: #{manner_block_fwd.11} parent=0 // pred_check
    _
  $region35: #{manner_block_fwd.11} parent=0 // pred_check_branch
    %42 = sbr.rel (0) target = $region37
  $region36: #{manner_block_fwd.11} parent=0 // pred_region
    _
  $region37: #{manner_block_fwd.11} parent=0 // pred_fallthru
    _
  // Predicated region
  $region38: #{manner_block_fwd.11} parent=0 // pred_check
    _
  $region39: #{manner_block_fwd.11} parent=0 // pred_check_branch
    %44 = sbr.rel (0) target = $region41
  $region40: #{manner_block_fwd.11} parent=0 // pred_region
    _
  $region41: #{manner_block_fwd.11} parent=0 // pred_fallthru
    _
  // Predicated region
  $region42: #{manner_block_fwd.11} parent=0 // pred_check
    _
  $region43: #{manner_block_fwd.11} parent=0 // pred_check_branch
    %46 = sbr.rel (0) target = $region45
  $region44: #{manner_block_fwd.11} parent=0 // pred_region
    _
  $region45: #{manner_block_fwd.11} parent=0 // pred_fallthru
    _
  // Predicated region
  $region46: #{manner_block_fwd.11} parent=0 // pred_check
    _
  $region47: #{manner_block_fwd.11} parent=0 // pred_check_branch
    %48 = sbr.rel (0) target = $region49
  $region48: #{manner_block_fwd.11} parent=0 // pred_region
    _
  $region49: #{manner_block_fwd.11} parent=0 // pred_fallthru
    _
  // Predicated region
  $region50: #{manner_block_fwd.11} parent=0 // pred_check
    _
  $region51: #{manner_block_fwd.11} parent=0 // pred_check_branch
    %50 = sbr.rel (0) target = $region53
  $region52: #{manner_block_fwd.11} parent=0 // pred_region
    _
  $region53: #{manner_block_fwd.11} parent=0 // pred_fallthru
    _
  // Predicated region
  $region54: #{manner_block_fwd.11} parent=0 // pred_check
    _
  $region55: #{manner_block_fwd.11} parent=0 // pred_check_branch
    %52 = sbr.rel (0) target = $region57
  $region56: #{manner_block_fwd.11} parent=0 // pred_region
    _
  $region57: #{manner_block_fwd.11} parent=0 // pred_fallthru
    _
  // Predicated region
  $region58: #{manner_block_fwd.11} parent=0 // pred_check
    _
  $region59: #{manner_block_fwd.11} parent=0 // pred_check_branch
    %54 = sbr.rel (0) target = $region61
  $region60: #{manner_block_fwd.11} parent=0 // pred_region
    _
  $region61: #{manner_block_fwd.11} parent=0 // pred_fallthru
    _
  // Predicated region
  $region62: #{manner_block_fwd.11} parent=0 // pred_check
    _
  $region63: #{manner_block_fwd.11} parent=0 // pred_check_branch
    %56 = sbr.rel (0) target = $region65
  $region64: #{manner_block_fwd.11} parent=0 // pred_region
    _
  $region65: #{manner_block_fwd.11} parent=0 // pred_fallthru
    _
  // Predicated region
  $region66: #{manner_block_fwd.11} parent=0 // pred_check
    _
  $region67: #{manner_block_fwd.11} parent=0 // pred_check_branch
    %58 = sbr.rel (0) target = $region69
  $region68: #{manner_block_fwd.11} parent=0 // pred_region
    _
  $region69: #{manner_block_fwd.11} parent=0 // pred_fallthru
    _
  // Predicated region
  $region70: #{manner_block_fwd.11} parent=0 // pred_check
    _
  $region71: #{manner_block_fwd.11} parent=0 // pred_check_branch
    %60 = sbr.rel (0) target = $region73
  $region72: #{manner_block_fwd.11} parent=0 // pred_region
    _
  $region73: #{manner_block_fwd.11} parent=0 // pred_fallthru
    _
  // Predicated region
  $region74: #{manner_block_fwd.11} parent=0 // pred_check
    _
  $region75: #{manner_block_fwd.11} parent=0 // pred_check_branch
    %62 = sbr.rel (0) target = $region77
  $region76: #{manner_block_fwd.11} parent=0 // pred_region
    _
  $region77: #{manner_block_fwd.11} parent=0 // pred_fallthru
    _
  // Predicated region
  $region78: #{manner_block_fwd.11} parent=0 // pred_check
    _
  $region79: #{manner_block_fwd.11} parent=0 // pred_check_branch
    %64 = sbr.rel (0) target = $region81
  $region80: #{manner_block_fwd.11} parent=0 // pred_region
    _
  $region81: #{manner_block_fwd.11} parent=0 // pred_fallthru
    _
  %v66 = vld [vmem:[%s0] sm:$0x3]
  %v67 = vunpack.c.l.bf16 %v66
  %v68 = vld [vmem:[%s1] sm:$0x3]
  %v69 = vunpack.c.l.bf16 %v68
  %v70 = vadd.f32 %v67, %v69
  %s71 = scalar_lea.vmem %s0, 2
  %v72 = vld [vmem:[%s71] sm:$0x3]
  %v73 = vunpack.c.l.bf16 %v72
  %s74 = scalar_lea.vmem %s1, 2
  %v75 = vld [vmem:[%s74] sm:$0x3]
  %v76 = vunpack.c.l.bf16 %v75
  %v77 = vadd.f32 %v73, %v76
  %v78 = vld [vmem:[%s2] sm:$0xf]
  %v79 = vld [vmem:[%s2 + $0x4] sm:$0xf]
  %v80 = vld [vmem:[%s2 + $0x8] sm:$0xf]
  %v81 = vld [vmem:[%s2 + $0xc] sm:$0xf]
  %v82 = vpack.c.bf16 %v70, %v70
  %v83 = vld [vmem:[%s3] sm:$0x1]
  %v85 = vlaneseq
  %v86 = vshrl.u32 %v85, 7
  %v87 = vsub.s32 0, %v86
  %v88 = vrot.slane %v83, %v87
  %v94 = vunpack.c.l.b16 %v78
  %v95 = vunpack.c.l.b16 %v79
  %v96 = vunpack.c.l.b16 %v80
  %v97 = vunpack.c.l.b16 %v81
  %v98 = vpack.c.b16 %v95, %v94
  %v99 = vpack.c.b16 %v97, %v96
  %vm102 = vcmask 261120
  %v104 = vsel %vm102, %v82, 0
  %106 = vmatprep.subr.bf16.mxu0 0
  %107 = vmatpush1.bf16.msra.mxu0 %v98
  %108 = vmatprep.subr.bf16.mxu0 0
  %109 = vmatpush1.bf16.msra.mxu0 %v99
  %110 = vmatprep.subr.bf16.mxu0 0
  %111 = vmatpush1.bf16.msra.mxu0 0
  %112 = vmatprep.subr.bf16.mxu0 0
  %113 = vmatpush1.bf16.msra.mxu0 0
  %114 = vmatprep.subr.bf16.mxu0 0
  %115 = vmatpush1.bf16.msra.mxu0 0
  %116 = vmatprep.subr.bf16.mxu0 0
  %117 = vmatpush1.bf16.msra.mxu0 0
  %118 = vmatprep.subr.bf16.mxu0 0
  %119 = vmatpush1.bf16.msra.mxu0 0
  %120 = vmatprep.subr.bf16.mxu0 0
  %121 = vmatpush1.bf16.msra.mxu0 0
  %122 = vmatprep.subr.bf16.mxu0 0
  %123 = vmatpush1.bf16.msra.mxu0 0
  %124 = vmatprep.subr.bf16.mxu0 0
  %125 = vmatpush1.bf16.msra.mxu0 0
  %126 = vmatprep.subr.bf16.mxu0 0
  %127 = vmatpush1.bf16.msra.mxu0 0
  %128 = vmatprep.subr.bf16.mxu0 0
  %129 = vmatpush1.bf16.msra.mxu0 0
  %130 = vmatprep.subr.bf16.mxu0 0
  %131 = vmatpush1.bf16.msra.mxu0 0
  %132 = vmatprep.subr.bf16.mxu0 0
  %133 = vmatpush1.bf16.msra.mxu0 0
  %134 = vmatprep.subr.bf16.mxu0 0
  %135 = vmatpush1.bf16.msra.mxu0 0
  %136 = vmatprep.subr.bf16.mxu0 0
  %137 = vmatpush1.bf16.msra.mxu0 0
  %138 = vmatprep.mubr.bf16.mxu0 0
  %139 = vmatmul.mubr.bf16.gmra.mrb[0].mxu0 %v104
  %v140 = vpop.f32.mrb[0].mxu0
  %v141 = vadd.f32 %v88, %v140
  %v142 = vpop.f32.mrb[0].mxu0
  %v143 = vpop.f32.mrb[0].mxu0
  %v144 = vpop.f32.mrb[0].mxu0
  %145 = vdwg.mxu0
  %v146 = vpack.c.bf16 %v77, %v77
  %v148 = vsel %vm102, %v146, 0
  %150 = vmatprep.subr.bf16.mxu0 0
  %151 = vmatpush1.bf16.msra.mxu0 %v98
  %152 = vmatprep.subr.bf16.mxu0 0
  %153 = vmatpush1.bf16.msra.mxu0 %v99
  %154 = vmatprep.subr.bf16.mxu0 0
  %155 = vmatpush1.bf16.msra.mxu0 0
  %156 = vmatprep.subr.bf16.mxu0 0
  %157 = vmatpush1.bf16.msra.mxu0 0
  %158 = vmatprep.subr.bf16.mxu0 0
  %159 = vmatpush1.bf16.msra.mxu0 0
  %160 = vmatprep.subr.bf16.mxu0 0
  %161 = vmatpush1.bf16.msra.mxu0 0
  %162 = vmatprep.subr.bf16.mxu0 0
  %163 = vmatpush1.bf16.msra.mxu0 0
  %164 = vmatprep.subr.bf16.mxu0 0
  %165 = vmatpush1.bf16.msra.mxu0 0
  %166 = vmatprep.subr.bf16.mxu0 0
  %167 = vmatpush1.bf16.msra.mxu0 0
  %168 = vmatprep.subr.bf16.mxu0 0
  %169 = vmatpush1.bf16.msra.mxu0 0
  %170 = vmatprep.subr.bf16.mxu0 0
  %171 = vmatpush1.bf16.msra.mxu0 0
  %172 = vmatprep.subr.bf16.mxu0 0
  %173 = vmatpush1.bf16.msra.mxu0 0
  %174 = vmatprep.subr.bf16.mxu0 0
  %175 = vmatpush1.bf16.msra.mxu0 0
  %176 = vmatprep.subr.bf16.mxu0 0
  %177 = vmatpush1.bf16.msra.mxu0 0
  %178 = vmatprep.subr.bf16.mxu0 0
  %179 = vmatpush1.bf16.msra.mxu0 0
  %180 = vmatprep.subr.bf16.mxu0 0
  %181 = vmatpush1.bf16.msra.mxu0 0
  %182 = vmatprep.mubr.bf16.mxu0 0
  %183 = vmatmul.mubr.bf16.gmra.mrb[0].mxu0 %v148
  %v184 = vpop.f32.mrb[0].mxu0
  %v185 = vadd.f32 %v88, %v184
  %v186 = vpop.f32.mrb[0].mxu0
  %v187 = vpop.f32.mrb[0].mxu0
  %v188 = vpop.f32.mrb[0].mxu0
  %189 = vdwg.mxu0
  %v190 = vld [vmem:[%s4] sm:$0x1]
  %v191 = vld [vmem:[%s5] sm:$0x1]
  %vm192 = vcmask 518144
  %v193 = vsel %vm192, %v141, 0.0
  %v194 = vrot.slane %v193, 4
  %v195 = vadd.f32 %v193, %v194
  %v196 = vrot.slane %v195, 2
  %v197 = vadd.f32 %v195, %v196
  %v198 = vrot.slane %v197, 1
  %v199 = vadd.f32 %v197, %v198
  %v200 = vadd.f32 %v199, 0.0
  %v201 = vsel %vm192, %v185, 0.0
  %v202 = vrot.slane %v201, 4
  %v203 = vadd.f32 %v201, %v202
  %v204 = vrot.slane %v203, 2
  %v205 = vadd.f32 %v203, %v204
  %v206 = vrot.slane %v205, 1
  %v207 = vadd.f32 %v205, %v206
  %v208 = vadd.f32 %v200, %v207
  %v209 = vrcp.pop 6.0
  %v210 = vmul.f32 %v208, %v209
  %v211 = vsub.f32 %v141, %v210
  %v212 = vmul.f32 %v211, %v211
  %v213 = vsel %vm192, %v212, 0.0
  %v214 = vrot.slane %v213, 4
  %v215 = vadd.f32 %v213, %v214
  %v216 = vrot.slane %v215, 2
  %v217 = vadd.f32 %v215, %v216
  %v218 = vrot.slane %v217, 1
  %v219 = vadd.f32 %v217, %v218
  %v220 = vadd.f32 %v219, 0.0
  %v221 = vsub.f32 %v185, %v210
  %v222 = vmul.f32 %v221, %v221
  %v223 = vsel %vm192, %v222, 0.0
  %v224 = vrot.slane %v223, 4
  %v225 = vadd.f32 %v223, %v224
  %v226 = vrot.slane %v225, 2
  %v227 = vadd.f32 %v225, %v226
  %v228 = vrot.slane %v227, 1
  %v229 = vadd.f32 %v227, %v228
  %v230 = vadd.f32 %v220, %v229
  %v231 = vmul.f32 %v230, %v209
  %v232 = vadd.f32 %v231, 1e-05
  %v233 = vrsqrt.pop %v232
  %v234 = vmul.f32 %v211, %v233
  %v236 = vlaneseq
  %v237 = vshrl.u32 %v236, 7
  %v238 = vsub.s32 0, %v237
  %v239 = vrot.slane %v190, %v238
  %v241 = vmul.f32 %v234, %v239
  %v243 = vlaneseq
  %v244 = vshrl.u32 %v243, 7
  %v245 = vsub.s32 0, %v244
  %v246 = vrot.slane %v191, %v245
  %v248 = vadd.f32 %v241, %v246
  %v249 = vmul.f32 %v221, %v233
  %v250 = vmul.f32 %v249, %v239
  %v251 = vadd.f32 %v250, %v246
  %v252 = vxor.u32 %v248, 2147483648
  %v253 = vmul.f32 %v252, 1.442695
  %v254 = vpow.pop %v253
  %v255 = vadd.f32 %v254, 1.0
  %v256 = vrcp.pop %v255
  %v257 = vmul.f32 1.0, %v256
  %259 = vrot.lane.b32.xlu0 %v257, 96
  %v260 = vpop.permute.xlu0 %259
  %v262 = vmul.f32 %v248, %v260
  %v263 = vxor.u32 %v251, 2147483648
  %v264 = vmul.f32 %v263, 1.442695
  %v265 = vpow.pop %v264
  %v266 = vadd.f32 %v265, 1.0
  %v267 = vrcp.pop %v266
  %v268 = vmul.f32 1.0, %v267
  %270 = vrot.lane.b32.xlu0 %v268, 96
  %v271 = vpop.permute.xlu0 %270
  %v273 = vmul.f32 %v251, %v271
  %274 = vst.msk [vmem:[#allocation2] sm:$0xff] %vm102, 0.0
  %vm275 = vcmask 260096
  %276 = vst.msk [vmem:[#allocation2 + $0x8] sm:$0x7f] %vm275, 0.0
  %277 = vst.msk [vmem:[#allocation2 + $0x12] sm:$0xff] %vm102, 0.0
  %278 = vst.msk [vmem:[#allocation2 + $0x1a] sm:$0x7f] %vm275, 0.0
  %vm279 = vcmask 256000
  %280 = vst.msk [vmem:[#allocation2 + $0xf] sm:$0x7] %vm279, %v262
  loop: start=0, step=1, limit=31
  $region82: #{manner_block_fwd.11} parent=0 // loop_pre_header
    _
  $region83: #{manner_block_fwd.11} parent=0 // loop_header
    %s282 = sphi 0, %s286
    %p283 = scmp.ge.s32.totalorder %s282, 31
    %v287 = vphi 0.0, %v297
  $region84: #{manner_block_fwd.11} parent=0 // loop_header_branch
    %285 = sbr.rel (%p283) target = $region88
  $region85: #{manner_block_fwd.11} parent=0 // loop_body
    %s288 = scalar_lea.vmem [#allocation2], %s282
    %v289 = vld [vmem:[%s288] sm:$0x7]
    %s290 = scalar_lea.vmem %s6, %s282
    %v291 = vld [vmem:[%s290] sm:$0x1]
    %v292 = vlaneseq
    %v293 = vshrl.u32 %v292, 7
    %v294 = vsub.s32 0, %v293
    %v295 = vrot.slane %v291, %v294
    %v296 = vmul.f32 %v289, %v295
    %v297 = vadd.f32 %v287, %v296
  $region86: #{manner_block_fwd.11} parent=0 // loop_footer
    %s286 = sadd.s32 1, %s282
  $region87: #{manner_block_fwd.11} parent=0 // loop_footer_branch
    %281 = sbr.rel target = $region83
  $region88: #{manner_block_fwd.11} parent=0 // loop_exit
    _
  %v298 = vld [vmem:[%s7] sm:$0x1]
  %v300 = vlaneseq
  %v301 = vshrl.u32 %v300, 7
  %v302 = vsub.s32 0, %v301
  %v303 = vrot.slane %v298, %v302
  %v305 = vadd.f32 %v287, %v303
  %s306 = scalar_lea.vmem [#allocation2], 40
  %307 = vst.msk [vmem:[%s306] sm:$0xff] %vm102, 0.0
  %308 = vst.msk [vmem:[%s306 + $0x8] sm:$0x7f] %vm275, 0.0
  %309 = vst.msk [vmem:[%s306 + $0x12] sm:$0xff] %vm102, 0.0
  %310 = vst.msk [vmem:[%s306 + $0x1a] sm:$0x7f] %vm275, 0.0
  %311 = vst.msk [vmem:[%s306 + $0xf] sm:$0x7] %vm279, %v273
  loop: start=0, step=1, limit=31
  $region89: #{manner_block_fwd.11} parent=0 // loop_pre_header
    _
  $region90: #{manner_block_fwd.11} parent=0 // loop_header
    %s313 = sphi 0, %s317
    %p314 = scmp.ge.s32.totalorder %s313, 31
    %v318 = vphi 0.0, %v329
  $region91: #{manner_block_fwd.11} parent=0 // loop_header_branch
    %316 = sbr.rel (%p314) target = $region95
  $region92: #{manner_block_fwd.11} parent=0 // loop_body
    %s319 = sadd.s32 %s313, 40
    %s320 = scalar_lea.vmem [#allocation2], %s319
    %v321 = vld [vmem:[%s320] sm:$0x7]
    %s322 = scalar_lea.vmem %s6, %s313
    %v323 = vld [vmem:[%s322] sm:$0x1]
    %v324 = vlaneseq
    %v325 = vshrl.u32 %v324, 7
    %v326 = vsub.s32 0, %v325
    %v327 = vrot.slane %v323, %v326
    %v328 = vmul.f32 %v321, %v327
    %v329 = vadd.f32 %v318, %v328
  $region93: #{manner_block_fwd.11} parent=0 // loop_footer
    %s317 = sadd.s32 1, %s313
  $region94: #{manner_block_fwd.11} parent=0 // loop_footer_branch
    %312 = sbr.rel target = $region90
  $region95: #{manner_block_fwd.11} parent=0 // loop_exit
    _
  %v330 = vld [vmem:[%s7] sm:$0x1]
  %v332 = vlaneseq
  %v333 = vshrl.u32 %v332, 7
  %v334 = vsub.s32 0, %v333
  %v335 = vrot.slane %v330, %v334
  %v337 = vadd.f32 %v318, %v335
  %v338 = vld [vmem:[%s8] sm:$0x1]
  %v339 = vld [vmem:[%s9] sm:$0x1]
  %v340 = vsel %vm279, %v305, 0.0
  %v341 = vrot.slane %v340, 4
  %v342 = vadd.f32 %v340, %v341
  %v343 = vrot.slane %v342, 2
  %v344 = vadd.f32 %v342, %v343
  %v345 = vrot.slane %v344, 1
  %v346 = vadd.f32 %v344, %v345
  %v347 = vadd.f32 %v346, 0.0
  %v348 = vsel %vm279, %v337, 0.0
  %v349 = vrot.slane %v348, 4
  %v350 = vadd.f32 %v348, %v349
  %v351 = vrot.slane %v350, 2
  %v352 = vadd.f32 %v350, %v351
  %v353 = vrot.slane %v352, 1
  %v354 = vadd.f32 %v352, %v353
  %v355 = vadd.f32 %v347, %v354
  %v356 = vmul.f32 %v355, %v209
  %v357 = vsub.f32 %v305, %v356
  %v358 = vmul.f32 %v357, %v357
  %v359 = vsel %vm279, %v358, 0.0
  %v360 = vrot.slane %v359, 4
  %v361 = vadd.f32 %v359, %v360
  %v362 = vrot.slane %v361, 2
  %v363 = vadd.f32 %v361, %v362
  %v364 = vrot.slane %v363, 1
  %v365 = vadd.f32 %v363, %v364
  %v366 = vadd.f32 %v365, 0.0
  %v367 = vsub.f32 %v337, %v356
  %v368 = vmul.f32 %v367, %v367
  %v369 = vsel %vm279, %v368, 0.0
  %v370 = vrot.slane %v369, 4
  %v371 = vadd.f32 %v369, %v370
  %v372 = vrot.slane %v371, 2
  %v373 = vadd.f32 %v371, %v372
  %v374 = vrot.slane %v373, 1
  %v375 = vadd.f32 %v373, %v374
  %v376 = vadd.f32 %v366, %v375
  %v377 = vmul.f32 %v376, %v209
  %v378 = vadd.f32 %v377, 1e-05
  %v379 = vrsqrt.pop %v378
  %v380 = vmul.f32 %v357, %v379
  %v382 = vlaneseq
  %v383 = vshrl.u32 %v382, 7
  %v384 = vsub.s32 0, %v383
  %v385 = vrot.slane %v338, %v384
  %v387 = vmul.f32 %v380, %v385
  %v389 = vlaneseq
  %v390 = vshrl.u32 %v389, 7
  %v391 = vsub.s32 0, %v390
  %v392 = vrot.slane %v339, %v391
  %v394 = vadd.f32 %v387, %v392
  %v395 = vmul.f32 %v367, %v379
  %v396 = vmul.f32 %v395, %v385
  %v397 = vadd.f32 %v396, %v392
  %v398 = vxor.u32 %v394, 2147483648
  %v399 = vmul.f32 %v398, 1.442695
  %v400 = vpow.pop %v399
  %v401 = vadd.f32 %v400, 1.0
  %v402 = vrcp.pop %v401
  %v403 = vmul.f32 1.0, %v402
  %v404 = vmul.f32 %v394, %v403
  %v405 = vxor.u32 %v397, 2147483648
  %v406 = vmul.f32 %v405, 1.442695
  %v407 = vpow.pop %v406
  %v408 = vadd.f32 %v407, 1.0
  %v409 = vrcp.pop %v408
  %v410 = vmul.f32 1.0, %v409
  %v411 = vmul.f32 %v397, %v410
  %v412 = vld [vmem:[%s10] sm:$0xf]
  %v413 = vld [vmem:[%s10 + $0x4] sm:$0xf]
  %v414 = vld [vmem:[%s10 + $0x8] sm:$0xf]
  %v415 = vld [vmem:[%s10 + $0xc] sm:$0xf]
  %v416 = vpack.c.bf16 %v404, %v404
  %v417 = vld [vmem:[%s11] sm:$0x1]
  %v419 = vlaneseq
  %v420 = vshrl.u32 %v419, 7
  %v421 = vsub.s32 0, %v420
  %v422 = vrot.slane %v417, %v421
  %v428 = vunpack.c.l.b16 %v412
  %v429 = vunpack.c.l.b16 %v413
  %v430 = vunpack.c.l.b16 %v414
  %v431 = vunpack.c.l.b16 %v415
  %v432 = vpack.c.b16 %v429, %v428
  %v433 = vpack.c.b16 %v431, %v430
  %v437 = vsel %vm102, %v416, 0
  %439 = vmatprep.subr.bf16.mxu0 0
  %440 = vmatpush1.bf16.msra.mxu0 %v432
  %441 = vmatprep.subr.bf16.mxu0 0
  %442 = vmatpush1.bf16.msra.mxu0 %v433
  %443 = vmatprep.subr.bf16.mxu0 0
  %444 = vmatpush1.bf16.msra.mxu0 0
  %445 = vmatprep.subr.bf16.mxu0 0
  %446 = vmatpush1.bf16.msra.mxu0 0
  %447 = vmatprep.subr.bf16.mxu0 0
  %448 = vmatpush1.bf16.msra.mxu0 0
  %449 = vmatprep.subr.bf16.mxu0 0
  %450 = vmatpush1.bf16.msra.mxu0 0
  %451 = vmatprep.subr.bf16.mxu0 0
  %452 = vmatpush1.bf16.msra.mxu0 0
  %453 = vmatprep.subr.bf16.mxu0 0
  %454 = vmatpush1.bf16.msra.mxu0 0
  %455 = vmatprep.subr.bf16.mxu0 0
  %456 = vmatpush1.bf16.msra.mxu0 0
  %457 = vmatprep.subr.bf16.mxu0 0
  %458 = vmatpush1.bf16.msra.mxu0 0
  %459 = vmatprep.subr.bf16.mxu0 0
  %460 = vmatpush1.bf16.msra.mxu0 0
  %461 = vmatprep.subr.bf16.mxu0 0
  %462 = vmatpush1.bf16.msra.mxu0 0
  %463 = vmatprep.subr.bf16.mxu0 0
  %464 = vmatpush1.bf16.msra.mxu0 0
  %465 = vmatprep.subr.bf16.mxu0 0
  %466 = vmatpush1.bf16.msra.mxu0 0
  %467 = vmatprep.subr.bf16.mxu0 0
  %468 = vmatpush1.bf16.msra.mxu0 0
  %469 = vmatprep.subr.bf16.mxu0 0
  %470 = vmatpush1.bf16.msra.mxu0 0
  %471 = vmatprep.mubr.bf16.mxu0 0
  %472 = vmatmul.mubr.bf16.gmra.mrb[0].mxu0 %v437
  %v473 = vpop.f32.mrb[0].mxu0
  %v474 = vadd.f32 %v422, %v473
  %v475 = vpop.f32.mrb[0].mxu0
  %v476 = vpop.f32.mrb[0].mxu0
  %v477 = vpop.f32.mrb[0].mxu0
  %478 = vdwg.mxu0
  %v479 = vpack.c.bf16 %v411, %v411
  %v481 = vsel %vm102, %v479, 0
  %483 = vmatprep.subr.bf16.mxu0 0
  %484 = vmatpush1.bf16.msra.mxu0 %v432
  %485 = vmatprep.subr.bf16.mxu0 0
  %486 = vmatpush1.bf16.msra.mxu0 %v433
  %487 = vmatprep.subr.bf16.mxu0 0
  %488 = vmatpush1.bf16.msra.mxu0 0
  %489 = vmatprep.subr.bf16.mxu0 0
  %490 = vmatpush1.bf16.msra.mxu0 0
  %491 = vmatprep.subr.bf16.mxu0 0
  %492 = vmatpush1.bf16.msra.mxu0 0
  %493 = vmatprep.subr.bf16.mxu0 0
  %494 = vmatpush1.bf16.msra.mxu0 0
  %495 = vmatprep.subr.bf16.mxu0 0
  %496 = vmatpush1.bf16.msra.mxu0 0
  %497 = vmatprep.subr.bf16.mxu0 0
  %498 = vmatpush1.bf16.msra.mxu0 0
  %499 = vmatprep.subr.bf16.mxu0 0
  %500 = vmatpush1.bf16.msra.mxu0 0
  %501 = vmatprep.subr.bf16.mxu0 0
  %502 = vmatpush1.bf16.msra.mxu0 0
  %503 = vmatprep.subr.bf16.mxu0 0
  %504 = vmatpush1.bf16.msra.mxu0 0
  %505 = vmatprep.subr.bf16.mxu0 0
  %506 = vmatpush1.bf16.msra.mxu0 0
  %507 = vmatprep.subr.bf16.mxu0 0
  %508 = vmatpush1.bf16.msra.mxu0 0
  %509 = vmatprep.subr.bf16.mxu0 0
  %510 = vmatpush1.bf16.msra.mxu0 0
  %511 = vmatprep.subr.bf16.mxu0 0
  %512 = vmatpush1.bf16.msra.mxu0 0
  %513 = vmatprep.subr.bf16.mxu0 0
  %514 = vmatpush1.bf16.msra.mxu0 0
  %515 = vmatprep.mubr.bf16.mxu0 0
  %516 = vmatmul.mubr.bf16.gmra.mrb[0].mxu0 %v481
  %v517 = vpop.f32.mrb[0].mxu0
  %v518 = vadd.f32 %v422, %v517
  %v519 = vpop.f32.mrb[0].mxu0
  %v520 = vpop.f32.mrb[0].mxu0
  %v521 = vpop.f32.mrb[0].mxu0
  %522 = vdwg.mxu0
  %v523 = vld [vmem:[%s12] sm:$0x1]
  %v524 = vld [vmem:[%s13] sm:$0x1]
  %vm525 = vcmask 124928
  %v526 = vsel %vm525, %v474, 0.0
  %v527 = vrot.slane %v526, 4
  %v528 = vadd.f32 %v526, %v527
  %v529 = vrot.slane %v528, 2
  %v530 = vadd.f32 %v528, %v529
  %v531 = vrot.slane %v530, 1
  %v532 = vadd.f32 %v530, %v531
  %v533 = vadd.f32 %v532, 0.0
  %v534 = vsel %vm525, %v518, 0.0
  %v535 = vrot.slane %v534, 4
  %v536 = vadd.f32 %v534, %v535
  %v537 = vrot.slane %v536, 2
  %v538 = vadd.f32 %v536, %v537
  %v539 = vrot.slane %v538, 1
  %v540 = vadd.f32 %v538, %v539
  %v541 = vadd.f32 %v533, %v540
  %v542 = vmul.f32 %v541, %v209
  %v543 = vsub.f32 %v474, %v542
  %v544 = vmul.f32 %v543, %v543
  %v545 = vsel %vm525, %v544, 0.0
  %v546 = vrot.slane %v545, 4
  %v547 = vadd.f32 %v545, %v546
  %v548 = vrot.slane %v547, 2
  %v549 = vadd.f32 %v547, %v548
  %v550 = vrot.slane %v549, 1
  %v551 = vadd.f32 %v549, %v550
  %v552 = vadd.f32 %v551, 0.0
  %v553 = vsub.f32 %v518, %v542
  %v554 = vmul.f32 %v553, %v553
  %v555 = vsel %vm525, %v554, 0.0
  %v556 = vrot.slane %v555, 4
  %v557 = vadd.f32 %v555, %v556
  %v558 = vrot.slane %v557, 2
  %v559 = vadd.f32 %v557, %v558
  %v560 = vrot.slane %v559, 1
  %v561 = vadd.f32 %v559, %v560
  %v562 = vadd.f32 %v552, %v561
  %v563 = vmul.f32 %v562, %v209
  %v564 = vadd.f32 %v563, 1e-05
  %v565 = vrsqrt.pop %v564
  %v566 = vmul.f32 %v543, %v565
  %v568 = vlaneseq
  %v569 = vshrl.u32 %v568, 7
  %v570 = vsub.s32 0, %v569
  %v571 = vrot.slane %v523, %v570
  %v573 = vmul.f32 %v566, %v571
  %v575 = vlaneseq
  %v576 = vshrl.u32 %v575, 7
  %v577 = vsub.s32 0, %v576
  %v578 = vrot.slane %v524, %v577
  %v580 = vadd.f32 %v573, %v578
  %v581 = vmul.f32 %v553, %v565
  %v582 = vmul.f32 %v581, %v571
  %v583 = vadd.f32 %v582, %v578
  %v584 = vxor.u32 %v580, 2147483648
  %v585 = vmul.f32 %v584, 1.442695
  %v586 = vpow.pop %v585
  %v587 = vadd.f32 %v586, 1.0
  %v588 = vrcp.pop %v587
  %v589 = vmul.f32 1.0, %v588
  %v590 = vmul.f32 %v580, %v589
  %v591 = vxor.u32 %v583, 2147483648
  %v592 = vmul.f32 %v591, 1.442695
  %v593 = vpow.pop %v592
  %v594 = vadd.f32 %v593, 1.0
  %v595 = vrcp.pop %v594
  %v596 = vmul.f32 1.0, %v595
  %v597 = vmul.f32 %v583, %v596
  %v598 = vld [vmem:[%s14] sm:$0xf]
  %v599 = vld [vmem:[%s14 + $0x4] sm:$0xf]
  %v600 = vld [vmem:[%s14 + $0x8] sm:$0xf]
  %v601 = vld [vmem:[%s14 + $0xc] sm:$0xf]
  %v606 = vunpack.c.l.b16 %v598
  %v607 = vunpack.c.l.b16 %v599
  %v608 = vunpack.c.l.b16 %v600
  %v609 = vunpack.c.l.b16 %v601
  %v610 = vpack.c.b16 %v607, %v606
  %v611 = vpack.c.b16 %v609, %v608
  %614 = vmatprep.subr.bf16.mxu0 0
  %615 = vmatpush1.bf16.msra.mxu0 %v610
  %616 = vmatprep.subr.bf16.mxu0 0
  %617 = vmatpush1.bf16.msra.mxu0 %v611
  %618 = vmatprep.subr.bf16.mxu0 0
  %619 = vmatpush1.bf16.msra.mxu0 0
  %620 = vmatprep.subr.bf16.mxu0 0
  %621 = vmatpush1.bf16.msra.mxu0 0
  %622 = vmatprep.subr.bf16.mxu0 0
  %623 = vmatpush1.bf16.msra.mxu0 0
  %624 = vmatprep.subr.bf16.mxu0 0
  %625 = vmatpush1.bf16.msra.mxu0 0
  %626 = vmatprep.subr.bf16.mxu0 0
  %627 = vmatpush1.bf16.msra.mxu0 0
  %628 = vmatprep.subr.bf16.mxu0 0
  %629 = vmatpush1.bf16.msra.mxu0 0
  %630 = vmatprep.subr.bf16.mxu0 0
  %631 = vmatpush1.bf16.msra.mxu0 0
  %632 = vmatprep.subr.bf16.mxu0 0
  %633 = vmatpush1.bf16.msra.mxu0 0
  %634 = vmatprep.subr.bf16.mxu0 0
  %635 = vmatpush1.bf16.msra.mxu0 0
  %636 = vmatprep.subr.bf16.mxu0 0
  %637 = vmatpush1.bf16.msra.mxu0 0
  %638 = vmatprep.subr.bf16.mxu0 0
  %639 = vmatpush1.bf16.msra.mxu0 0
  %640 = vmatprep.subr.bf16.mxu0 0
  %641 = vmatpush1.bf16.msra.mxu0 0
  %642 = vmatprep.subr.bf16.mxu0 0
  %643 = vmatpush1.bf16.msra.mxu0 0
  %644 = vmatprep.subr.bf16.mxu0 0
  %645 = vmatpush1.bf16.msra.mxu0 0
  %646 = vmatprep.mubr.bf16.mxu0 0
  %647 = vmatmul.mubr.bf16.gmra.mrb[0].mxu0 %v104
  %v648 = vpop.f32.mrb[0].mxu0
  %v649 = vadd.f32 0.0, %v648
  %v650 = vpop.f32.mrb[0].mxu0
  %v651 = vpop.f32.mrb[0].mxu0
  %v652 = vpop.f32.mrb[0].mxu0
  %653 = vdwg.mxu0
  %v654 = vadd.f32 %v590, %v649
  %v655 = vld [vmem:[%s15] sm:$0x1]
  %v657 = vlaneseq
  %v658 = vshrl.u32 %v657, 7
  %v659 = vsub.s32 0, %v658
  %v660 = vrot.slane %v655, %v659
  %v662 = vadd.f32 %v654, %v660
  %663 = vmatprep.subr.bf16.mxu0 0
  %664 = vmatpush1.bf16.msra.mxu0 %v610
  %665 = vmatprep.subr.bf16.mxu0 0
  %666 = vmatpush1.bf16.msra.mxu0 %v611
  %667 = vmatprep.subr.bf16.mxu0 0
  %668 = vmatpush1.bf16.msra.mxu0 0
  %669 = vmatprep.subr.bf16.mxu0 0
  %670 = vmatpush1.bf16.msra.mxu0 0
  %671 = vmatprep.subr.bf16.mxu0 0
  %672 = vmatpush1.bf16.msra.mxu0 0
  %673 = vmatprep.subr.bf16.mxu0 0
  %674 = vmatpush1.bf16.msra.mxu0 0
  %675 = vmatprep.subr.bf16.mxu0 0
  %676 = vmatpush1.bf16.msra.mxu0 0
  %677 = vmatprep.subr.bf16.mxu0 0
  %678 = vmatpush1.bf16.msra.mxu0 0
  %679 = vmatprep.subr.bf16.mxu0 0
  %680 = vmatpush1.bf16.msra.mxu0 0
  %681 = vmatprep.subr.bf16.mxu0 0
  %682 = vmatpush1.bf16.msra.mxu0 0
  %683 = vmatprep.subr.bf16.mxu0 0
  %684 = vmatpush1.bf16.msra.mxu0 0
  %685 = vmatprep.subr.bf16.mxu0 0
  %686 = vmatpush1.bf16.msra.mxu0 0
  %687 = vmatprep.subr.bf16.mxu0 0
  %688 = vmatpush1.bf16.msra.mxu0 0
  %689 = vmatprep.subr.bf16.mxu0 0
  %690 = vmatpush1.bf16.msra.mxu0 0
  %691 = vmatprep.subr.bf16.mxu0 0
  %692 = vmatpush1.bf16.msra.mxu0 0
  %693 = vmatprep.subr.bf16.mxu0 0
  %694 = vmatpush1.bf16.msra.mxu0 0
  %695 = vmatprep.mubr.bf16.mxu0 0
  %696 = vmatmul.mubr.bf16.gmra.mrb[0].mxu0 %v148
  %v697 = vpop.f32.mrb[0].mxu0
  %v698 = vadd.f32 0.0, %v697
  %v699 = vpop.f32.mrb[0].mxu0
  %v700 = vpop.f32.mrb[0].mxu0
  %v701 = vpop.f32.mrb[0].mxu0
  %702 = vdwg.mxu0
  %v703 = vadd.f32 %v597, %v698
  %v704 = vadd.f32 %v703, %v660
  %vm705 = vcmask 122880
  %706 = vst.msk [vmem:[#allocation3] sm:$0x1] %vm705, 0.0
  %707 = vst.msk [vmem:[#allocation3 + $0x4] sm:$0x1] %vm705, 0.0
  %708 = vst.msk [vmem:[#allocation3 + $0x1] sm:$0x7] %vm525, %v662
  %v709 = vld [vmem:[#allocation3 + $0x1] sm:$0xf]
  %v710 = vld [vmem:[#allocation3] sm:$0xf]
  %712 = vrot.lane.b32.xlu0 %v710, 16
  %v713 = vpop.permute.xlu0 %712
  %vm715 = vcmask 130048
  %v716 = vsel %vm715, %v709, %v713
  %v717 = vld [vmem:[%s16] sm:$0xf]
  %v718 = vld [vmem:[%s16 + $0x4] sm:$0xf]
  %v719 = vld [vmem:[%s16 + $0x8] sm:$0xf]
  %v720 = vld [vmem:[%s16 + $0xc] sm:$0xf]
  %v721 = vpack.c.bf16 %v716, %v716
  %v722 = vld [vmem:[%s17] sm:$0x1]
  %v724 = vlaneseq
  %v725 = vshrl.u32 %v724, 7
  %v726 = vsub.s32 0, %v725
  %v727 = vrot.slane %v722, %v726
  %v733 = vunpack.c.l.b16 %v717
  %v734 = vunpack.c.l.b16 %v718
  %v735 = vunpack.c.l.b16 %v719
  %v736 = vunpack.c.l.b16 %v720
  %v737 = vpack.c.b16 %v734, %v733
  %v738 = vpack.c.b16 %v736, %v735
  %v742 = vsel %vm102, %v721, 0
  %744 = vmatprep.subr.bf16.mxu0 0
  %745 = vmatpush1.bf16.msra.mxu0 %v737
  %746 = vmatprep.subr.bf16.mxu0 0
  %747 = vmatpush1.bf16.msra.mxu0 %v738
  %748 = vmatprep.subr.bf16.mxu0 0
  %749 = vmatpush1.bf16.msra.mxu0 0
  %750 = vmatprep.subr.bf16.mxu0 0
  %751 = vmatpush1.bf16.msra.mxu0 0
  %752 = vmatprep.subr.bf16.mxu0 0
  %753 = vmatpush1.bf16.msra.mxu0 0
  %754 = vmatprep.subr.bf16.mxu0 0
  %755 = vmatpush1.bf16.msra.mxu0 0
  %756 = vmatprep.subr.bf16.mxu0 0
  %757 = vmatpush1.bf16.msra.mxu0 0
  %758 = vmatprep.subr.bf16.mxu0 0
  %759 = vmatpush1.bf16.msra.mxu0 0
  %760 = vmatprep.subr.bf16.mxu0 0
  %761 = vmatpush1.bf16.msra.mxu0 0
  %762 = vmatprep.subr.bf16.mxu0 0
  %763 = vmatpush1.bf16.msra.mxu0 0
  %764 = vmatprep.subr.bf16.mxu0 0
  %765 = vmatpush1.bf16.msra.mxu0 0
  %766 = vmatprep.subr.bf16.mxu0 0
  %767 = vmatpush1.bf16.msra.mxu0 0
  %768 = vmatprep.subr.bf16.mxu0 0
  %769 = vmatpush1.bf16.msra.mxu0 0
  %770 = vmatprep.subr.bf16.mxu0 0
  %771 = vmatpush1.bf16.msra.mxu0 0
  %772 = vmatprep.subr.bf16.mxu0 0
  %773 = vmatpush1.bf16.msra.mxu0 0
  %774 = vmatprep.subr.bf16.mxu0 0
  %775 = vmatpush1.bf16.msra.mxu0 0
  %776 = vmatprep.mubr.bf16.mxu0 0
  %777 = vmatmul.mubr.bf16.gmra.mrb[0].mxu0 %v742
  %v778 = vpop.f32.mrb[0].mxu0
  %v779 = vadd.f32 %v727, %v778
  %v780 = vpop.f32.mrb[0].mxu0
  %v781 = vpop.f32.mrb[0].mxu0
  %v782 = vpop.f32.mrb[0].mxu0
  %783 = vdwg.mxu0
  %s784 = scalar_lea.vmem [#allocation3], 8
  %785 = vst.msk [vmem:[%s784] sm:$0x1] %vm705, 0.0
  %786 = vst.msk [vmem:[%s784 + $0x4] sm:$0x1] %vm705, 0.0
  %787 = vst.msk [vmem:[%s784 + $0x1] sm:$0x7] %vm525, %v704
  %v788 = vld [vmem:[%s784 + $0x1] sm:$0xf]
  %v789 = vld [vmem:[%s784] sm:$0xf]
  %791 = vrot.lane.b32.xlu0 %v789, 16
  %v792 = vpop.permute.xlu0 %791
  %v794 = vsel %vm715, %v788, %v792
  %v795 = vld [vmem:[%s16] sm:$0xf]
  %v796 = vld [vmem:[%s16 + $0x4] sm:$0xf]
  %v797 = vld [vmem:[%s16 + $0x8] sm:$0xf]
  %v798 = vld [vmem:[%s16 + $0xc] sm:$0xf]
  %v799 = vpack.c.bf16 %v794, %v794
  %v800 = vld [vmem:[%s17] sm:$0x1]
  %v802 = vlaneseq
  %v803 = vshrl.u32 %v802, 7
  %v804 = vsub.s32 0, %v803
  %v805 = vrot.slane %v800, %v804
  %v811 = vunpack.c.l.b16 %v795
  %v812 = vunpack.c.l.b16 %v796
  %v813 = vunpack.c.l.b16 %v797
  %v814 = vunpack.c.l.b16 %v798
  %v815 = vpack.c.b16 %v812, %v811
  %v816 = vpack.c.b16 %v814, %v813
  %v820 = vsel %vm102, %v799, 0
  %822 = vmatprep.subr.bf16.mxu0 0
  %823 = vmatpush1.bf16.msra.mxu0 %v815
  %824 = vmatprep.subr.bf16.mxu0 0
  %825 = vmatpush1.bf16.msra.mxu0 %v816
  %826 = vmatprep.subr.bf16.mxu0 0
  %827 = vmatpush1.bf16.msra.mxu0 0
  %828 = vmatprep.subr.bf16.mxu0 0
  %829 = vmatpush1.bf16.msra.mxu0 0
  %830 = vmatprep.subr.bf16.mxu0 0
  %831 = vmatpush1.bf16.msra.mxu0 0
  %832 = vmatprep.subr.bf16.mxu0 0
  %833 = vmatpush1.bf16.msra.mxu0 0
  %834 = vmatprep.subr.bf16.mxu0 0
  %835 = vmatpush1.bf16.msra.mxu0 0
  %836 = vmatprep.subr.bf16.mxu0 0
  %837 = vmatpush1.bf16.msra.mxu0 0
  %838 = vmatprep.subr.bf16.mxu0 0
  %839 = vmatpush1.bf16.msra.mxu0 0
  %840 = vmatprep.subr.bf16.mxu0 0
  %841 = vmatpush1.bf16.msra.mxu0 0
  %842 = vmatprep.subr.bf16.mxu0 0
  %843 = vmatpush1.bf16.msra.mxu0 0
  %844 = vmatprep.subr.bf16.mxu0 0
  %845 = vmatpush1.bf16.msra.mxu0 0
  %846 = vmatprep.subr.bf16.mxu0 0
  %847 = vmatpush1.bf16.msra.mxu0 0
  %848 = vmatprep.subr.bf16.mxu0 0
  %849 = vmatpush1.bf16.msra.mxu0 0
  %850 = vmatprep.subr.bf16.mxu0 0
  %851 = vmatpush1.bf16.msra.mxu0 0
  %852 = vmatprep.subr.bf16.mxu0 0
  %853 = vmatpush1.bf16.msra.mxu0 0
  %854 = vmatprep.mubr.bf16.mxu0 0
  %855 = vmatmul.mubr.bf16.gmra.mrb[0].mxu0 %v820
  %v856 = vpop.f32.mrb[0].mxu0
  %v857 = vadd.f32 %v805, %v856
  %v858 = vpop.f32.mrb[0].mxu0
  %v859 = vpop.f32.mrb[0].mxu0
  %v860 = vpop.f32.mrb[0].mxu0
  %861 = vdwg.mxu0
  %vm862 = vcmask 257024
  %v863 = vsel %vm862, %v779, 0.0
  %v864 = vrot.slane %v863, 4
  %v865 = vadd.f32 %v863, %v864
  %v866 = vrot.slane %v865, 2
  %v867 = vadd.f32 %v865, %v866
  %v868 = vrot.slane %v867, 1
  %v869 = vadd.f32 %v867, %v868
  %v870 = vadd.f32 %v869, 0.0
  %v871 = vsel %vm862, %v857, 0.0
  %v872 = vrot.slane %v871, 4
  %v873 = vadd.f32 %v871, %v872
  %v874 = vrot.slane %v873, 2
  %v875 = vadd.f32 %v873, %v874
  %v876 = vrot.slane %v875, 1
  %v877 = vadd.f32 %v875, %v876
  %v878 = vadd.f32 %v870, %v877
  %v879 = vadd.f32 %v878, 0.0
  %881 = vrot.lane.b32.xlu0 %v878, 112
  %v882 = vpop.permute.xlu0 %881
  %v884 = vadd.f32 %v879, %v882
  %v885 = vrcp.pop 16.0
  %v886 = vmul.f32 %v884, %v885
  %888 = vrot.lane.b32.xlu0 %v886, 16
  %v889 = vpop.permute.xlu0 %888
  %v891 = vsel %vm715, %v886, %v889
  %v892 = vlaneseq
  %v893 = vshrl.u32 %v892, 7
  %v894 = vsub.s32 0, %v893
  %v895 = vrot.slane %v891, %v894
  %v896 = vsub.f32 %v779, %v895
  %v897 = vmul.f32 %v896, %v896
  %v898 = vsel %vm862, %v897, 0.0
  %v899 = vrot.slane %v898, 4
  %v900 = vadd.f32 %v898, %v899
  %v901 = vrot.slane %v900, 2
  %v902 = vadd.f32 %v900, %v901
  %v903 = vrot.slane %v902, 1
  %v904 = vadd.f32 %v902, %v903
  %v905 = vadd.f32 %v904, 0.0
  %v906 = vsub.f32 %v857, %v895
  %v907 = vmul.f32 %v906, %v906
  %v908 = vsel %vm862, %v907, 0.0
  %v909 = vrot.slane %v908, 4
  %v910 = vadd.f32 %v908, %v909
  %v911 = vrot.slane %v910, 2
  %v912 = vadd.f32 %v910, %v911
  %v913 = vrot.slane %v912, 1
  %v914 = vadd.f32 %v912, %v913
  %v915 = vadd.f32 %v905, %v914
  %v916 = vadd.f32 %v915, 0.0
  %918 = vrot.lane.b32.xlu0 %v915, 112
  %v919 = vpop.permute.xlu0 %918
  %v921 = vadd.f32 %v916, %v919
  %v922 = vmul.f32 %v921, %v885
  %v923 = vadd.f32 %v922, 1e-05
  %v924 = vrsqrt.pop %v923
  %926 = vrot.lane.b32.xlu0 %v924, 16
  %v927 = vpop.permute.xlu0 %926
  %v929 = vsel %vm715, %v924, %v927
  %v930 = vlaneseq
  %v931 = vshrl.u32 %v930, 7
  %v932 = vsub.s32 0, %v931
  %v933 = vrot.slane %v929, %v932
  %v934 = vmul.f32 %v896, %v933
  %v935 = vld [vmem:[%s18] sm:$0x1]
  %v937 = vlaneseq
  %v938 = vshrl.u32 %v937, 7
  %v939 = vsub.s32 0, %v938
  %v940 = vrot.slane %v935, %v939
  %v942 = vmul.f32 %v934, %v940
  %v943 = vld [vmem:[%s19] sm:$0x1]
  %v945 = vlaneseq
  %v946 = vshrl.u32 %v945, 7
  %v947 = vsub.s32 0, %v946
  %v948 = vrot.slane %v943, %v947
  %v950 = vadd.f32 %v942, %v948
  %v951 = vmax.f32 %v950, 0.0
  %v952 = vpack.c.bf16 %v951, %v951
  %vm953 = vcmask 254976
  %954 = vst.msk [vmem:[%s20] sm:$0x3] %vm953, %v952
  %v955 = vmul.f32 %v906, %v933
  %v956 = vld [vmem:[%s18] sm:$0x1]
  %v958 = vlaneseq
  %v959 = vshrl.u32 %v958, 7
  %v960 = vsub.s32 0, %v959
  %v961 = vrot.slane %v956, %v960
  %v963 = vmul.f32 %v955, %v961
  %v964 = vld [vmem:[%s19] sm:$0x1]
  %v966 = vlaneseq
  %v967 = vshrl.u32 %v966, 7
  %v968 = vsub.s32 0, %v967
  %v969 = vrot.slane %v964, %v968
  %v971 = vadd.f32 %v963, %v969
  %v972 = vmax.f32 %v971, 0.0
  %v973 = vpack.c.bf16 %v972, %v972
  %s974 = scalar_lea.vmem %s20, 2
  %975 = vst.msk [vmem:[%s974] sm:$0x3] %vm953, %v973
  // Predicated region
  $region96: #{manner_block_fwd.11} parent=0 // pred_check
    _
  $region97: #{manner_block_fwd.11} parent=0 // pred_check_branch
    %977 = sbr.rel (0) target = $region99
  $region98: #{manner_block_fwd.11} parent=0 // pred_region
    _
  $region99: #{manner_block_fwd.11} parent=0 // pred_fallthru
    _
  // Predicated region
  $region100: #{manner_block_fwd.11} parent=0 // pred_check
    _
  $region101: #{manner_block_fwd.11} parent=0 // pred_check_branch
    %979 = sbr.rel (0) target = $region103
  $region102: #{manner_block_fwd.11} parent=0 // pred_region
    _
  $region103: #{manner_block_fwd.11} parent=0 // pred_fallthru
    _

// kernel: manner_block_fwd.13
$region0: #{manner_block_fwd.13}
  #allocation0 [shape = 'u32[]', space=smem, size = 0x4, offset = 0x4, fixed_abs, tag = 'smem constant byte address 0x4 - core index']
  #allocation1 [shape = 'u32[144,128]{1,0:T(1,128)}', space=vmem, size = 0x12000, scoped, tag = 'internal scratch']
  #allocation2 [shape = 'f32[2,20,8]{2,1,0:T(8,128)}', space=vmem, size = 0x6000, scoped, tag = 'scratch operand']
  #allocation3 [shape = 'f32[1,1]{1,0:T(1,128)S(1)}', space=vmem, size = 0x200, scoped, tag = 'scoped memory for manner_block_fwd.13']
  %s0 = inlined_call_operand.vmem [shape: bf16[2,18,8], index: 0, kind: input, shape index: {}]
  %s1 = inlined_call_operand.vmem [shape: bf16[2,18,8], index: 1, kind: input, shape index: {}]
  %s2 = inlined_call_operand.vmem [shape: bf16[8,8], index: 2, kind: input, shape index: {}]
  %s3 = inlined_call_operand.vmem [shape: f32[1,8], index: 3, kind: input, shape index: {}]
  %s4 = inlined_call_operand.vmem [shape: bf16[8,8], index: 4, kind: input, shape index: {}]
  %s5 = inlined_call_operand.vmem [shape: f32[1,8], index: 5, kind: input, shape index: {}]
  %s6 = inlined_call_operand.vmem [shape: bf16[8,8], index: 6, kind: input, shape index: {}]
  %s7 = inlined_call_operand.vmem [shape: f32[1,8], index: 7, kind: input, shape index: {}]
  %s8 = inlined_call_operand.vmem [shape: bf16[24,1], index: 8, kind: input, shape index: {}]
  %s9 = inlined_call_operand.<no memory space> [shape: f32[1,1], index: 9, kind: input, shape index: {}]
  %s10 = inlined_call_operand.vmem [shape: f32[2,18,1], index: 10, kind: output, shape index: {}]
  %s11 = sld [smem:[#allocation0]]
  $region50: #{manner_block_fwd.13} parent=0
    _
  %s13 = ssub.s32 1, %s11
  %s14 = scalar_select 0, %s13, %s11
  %v15 = vstv %s9
  %16 = vst [vmem:[#allocation3] sm:$0x1] %v15
  // Predicated region
  $region2: #{manner_block_fwd.13} parent=0 // pred_check
    _
  $region3: #{manner_block_fwd.13} parent=0 // pred_check_branch
    %18 = sbr.rel (0) target = $region5
  $region4: #{manner_block_fwd.13} parent=0 // pred_region
    _
  $region5: #{manner_block_fwd.13} parent=0 // pred_fallthru
    _
  // Predicated region
  $region6: #{manner_block_fwd.13} parent=0 // pred_check
    _
  $region7: #{manner_block_fwd.13} parent=0 // pred_check_branch
    %20 = sbr.rel (0) target = $region9
  $region8: #{manner_block_fwd.13} parent=0 // pred_region
    _
  $region9: #{manner_block_fwd.13} parent=0 // pred_fallthru
    _
  // Predicated region
  $region10: #{manner_block_fwd.13} parent=0 // pred_check
    _
  $region11: #{manner_block_fwd.13} parent=0 // pred_check_branch
    %22 = sbr.rel (0) target = $region13
  $region12: #{manner_block_fwd.13} parent=0 // pred_region
    _
  $region13: #{manner_block_fwd.13} parent=0 // pred_fallthru
    _
  // Predicated region
  $region14: #{manner_block_fwd.13} parent=0 // pred_check
    _
  $region15: #{manner_block_fwd.13} parent=0 // pred_check_branch
    %24 = sbr.rel (0) target = $region17
  $region16: #{manner_block_fwd.13} parent=0 // pred_region
    _
  $region17: #{manner_block_fwd.13} parent=0 // pred_fallthru
    _
  // Predicated region
  $region18: #{manner_block_fwd.13} parent=0 // pred_check
    _
  $region19: #{manner_block_fwd.13} parent=0 // pred_check_branch
    %26 = sbr.rel (0) target = $region21
  $region20: #{manner_block_fwd.13} parent=0 // pred_region
    _
  $region21: #{manner_block_fwd.13} parent=0 // pred_fallthru
    _
  // Predicated region
  $region22: #{manner_block_fwd.13} parent=0 // pred_check
    _
  $region23: #{manner_block_fwd.13} parent=0 // pred_check_branch
    %28 = sbr.rel (0) target = $region25
  $region24: #{manner_block_fwd.13} parent=0 // pred_region
    _
  $region25: #{manner_block_fwd.13} parent=0 // pred_fallthru
    _
  // Predicated region
  $region26: #{manner_block_fwd.13} parent=0 // pred_check
    _
  $region27: #{manner_block_fwd.13} parent=0 // pred_check_branch
    %30 = sbr.rel (0) target = $region29
  $region28: #{manner_block_fwd.13} parent=0 // pred_region
    _
  $region29: #{manner_block_fwd.13} parent=0 // pred_fallthru
    _
  // Predicated region
  $region30: #{manner_block_fwd.13} parent=0 // pred_check
    _
  $region31: #{manner_block_fwd.13} parent=0 // pred_check_branch
    %32 = sbr.rel (0) target = $region33
  $region32: #{manner_block_fwd.13} parent=0 // pred_region
    _
  $region33: #{manner_block_fwd.13} parent=0 // pred_fallthru
    _
  // Predicated region
  $region34: #{manner_block_fwd.13} parent=0 // pred_check
    _
  $region35: #{manner_block_fwd.13} parent=0 // pred_check_branch
    %34 = sbr.rel (0) target = $region37
  $region36: #{manner_block_fwd.13} parent=0 // pred_region
    _
  $region37: #{manner_block_fwd.13} parent=0 // pred_fallthru
    _
  // Predicated region
  $region38: #{manner_block_fwd.13} parent=0 // pred_check
    _
  $region39: #{manner_block_fwd.13} parent=0 // pred_check_branch
    %36 = sbr.rel (0) target = $region41
  $region40: #{manner_block_fwd.13} parent=0 // pred_region
    _
  $region41: #{manner_block_fwd.13} parent=0 // pred_fallthru
    _
  %v38 = vld [vmem:[%s0] sm:$0xf]
  %v39 = vld [vmem:[%s0 + $0x4] sm:$0xf]
  %v40 = vld [vmem:[%s0 + $0x8] sm:$0x1]
  %v41 = vld [vmem:[%s2] sm:$0xf]
  %v42 = vld [vmem:[%s3] sm:$0x1]
  %v44 = vlaneseq
  %v45 = vshrl.u32 %v44, 7
  %v46 = vsub.s32 0, %v45
  %v47 = vrot.slane %v42, %v46
  %v52 = vunpack.c.l.b16 %v38
  %v53 = vunpack.c.l.b16 %v39
  %v54 = vunpack.c.l.b16 %v40
  %v55 = vpack.c.b16 %v53, %v52
  %v56 = vpack.c.b16 %v54, %v54
  %vm57 = vcmask 64512
  %v59 = vsel %vm57, %v55, 0
  %v62 = vsel %vm57, %v56, 0
  %vm64 = vcmask 1043456
  %v66 = vsel %vm64, %v41, 0
  %68 = vmatprep.subr.bf16.mxu0 0
  %69 = vmatpush1.bf16.msra.mxu0 %v66
  %70 = vmatprep.subr.bf16.mxu0 0
  %71 = vmatpush1.bf16.msra.mxu0 0
  %72 = vmatprep.subr.bf16.mxu0 0
  %73 = vmatpush1.bf16.msra.mxu0 0
  %74 = vmatprep.subr.bf16.mxu0 0
  %75 = vmatpush1.bf16.msra.mxu0 0
  %76 = vmatprep.subr.bf16.mxu0 0
  %77 = vmatpush1.bf16.msra.mxu0 0
  %78 = vmatprep.subr.bf16.mxu0 0
  %79 = vmatpush1.bf16.msra.mxu0 0
  %80 = vmatprep.subr.bf16.mxu0 0
  %81 = vmatpush1.bf16.msra.mxu0 0
  %82 = vmatprep.subr.bf16.mxu0 0
  %83 = vmatpush1.bf16.msra.mxu0 0
  %84 = vmatprep.subr.bf16.mxu0 0
  %85 = vmatpush1.bf16.msra.mxu0 0
  %86 = vmatprep.subr.bf16.mxu0 0
  %87 = vmatpush1.bf16.msra.mxu0 0
  %88 = vmatprep.subr.bf16.mxu0 0
  %89 = vmatpush1.bf16.msra.mxu0 0
  %90 = vmatprep.subr.bf16.mxu0 0
  %91 = vmatpush1.bf16.msra.mxu0 0
  %92 = vmatprep.subr.bf16.mxu0 0
  %93 = vmatpush1.bf16.msra.mxu0 0
  %94 = vmatprep.subr.bf16.mxu0 0
  %95 = vmatpush1.bf16.msra.mxu0 0
  %96 = vmatprep.subr.bf16.mxu0 0
  %97 = vmatpush1.bf16.msra.mxu0 0
  %98 = vmatprep.subr.bf16.mxu0 0
  %99 = vmatpush1.bf16.msra.mxu0 0
  %100 = vmatprep.mubr.bf16.mxu0 0
  %101 = vmatmul.mubr.bf16.gmra.mrb[0].mxu0 %v59
  %v102 = vpop.f32.mrb[0].mxu0
  %v103 = vadd.f32 %v47, %v102
  %v104 = vpop.f32.mrb[0].mxu0
  %v105 = vpop.f32.mrb[0].mxu0
  %v106 = vadd.f32 %v47, %v105
  %v107 = vpop.f32.mrb[0].mxu0
  %108 = vmatprep.mubr.bf16.mxu0 0
  %109 = vmatmul.mubr.bf16.gmra.mrb[0].mxu0 %v62
  %v110 = vpop.f32.mrb[0].mxu0
  %v111 = vadd.f32 %v47, %v110
  %v112 = vpop.f32.mrb[0].mxu0
  %v113 = vpop.f32.mrb[0].mxu0
  %v114 = vpop.f32.mrb[0].mxu0
  %115 = vdwg.mxu0
  %v116 = vtanh.pop %v103
  %v117 = vtanh.pop %v106
  %v118 = vtanh.pop %v111
  %v119 = vld [vmem:[%s4] sm:$0xf]
  %v120 = vld [vmem:[%s5] sm:$0x1]
  %v122 = vlaneseq
  %v123 = vshrl.u32 %v122, 7
  %v124 = vsub.s32 0, %v123
  %v125 = vrot.slane %v120, %v124
  %v128 = vsel %vm64, %v119, 0
  %130 = vmatprep.subr.bf16.mxu0 0
  %131 = vmatpush1.bf16.msra.mxu0 %v128
  %132 = vmatprep.subr.bf16.mxu0 0
  %133 = vmatpush1.bf16.msra.mxu0 0
  %134 = vmatprep.subr.bf16.mxu0 0
  %135 = vmatpush1.bf16.msra.mxu0 0
  %136 = vmatprep.subr.bf16.mxu0 0
  %137 = vmatpush1.bf16.msra.mxu0 0
  %138 = vmatprep.subr.bf16.mxu0 0
  %139 = vmatpush1.bf16.msra.mxu0 0
  %140 = vmatprep.subr.bf16.mxu0 0
  %141 = vmatpush1.bf16.msra.mxu0 0
  %142 = vmatprep.subr.bf16.mxu0 0
  %143 = vmatpush1.bf16.msra.mxu0 0
  %144 = vmatprep.subr.bf16.mxu0 0
  %145 = vmatpush1.bf16.msra.mxu0 0
  %146 = vmatprep.subr.bf16.mxu0 0
  %147 = vmatpush1.bf16.msra.mxu0 0
  %148 = vmatprep.subr.bf16.mxu0 0
  %149 = vmatpush1.bf16.msra.mxu0 0
  %150 = vmatprep.subr.bf16.mxu0 0
  %151 = vmatpush1.bf16.msra.mxu0 0
  %152 = vmatprep.subr.bf16.mxu0 0
  %153 = vmatpush1.bf16.msra.mxu0 0
  %154 = vmatprep.subr.bf16.mxu0 0
  %155 = vmatpush1.bf16.msra.mxu0 0
  %156 = vmatprep.subr.bf16.mxu0 0
  %157 = vmatpush1.bf16.msra.mxu0 0
  %158 = vmatprep.subr.bf16.mxu0 0
  %159 = vmatpush1.bf16.msra.mxu0 0
  %160 = vmatprep.subr.bf16.mxu0 0
  %161 = vmatpush1.bf16.msra.mxu0 0
  %162 = vmatprep.mubr.bf16.mxu0 0
  %163 = vmatmul.mubr.bf16.gmra.mrb[0].mxu0 %v59
  %v164 = vpop.f32.mrb[0].mxu0
  %v165 = vadd.f32 %v125, %v164
  %v166 = vpop.f32.mrb[0].mxu0
  %v167 = vpop.f32.mrb[0].mxu0
  %v168 = vadd.f32 %v125, %v167
  %v169 = vpop.f32.mrb[0].mxu0
  %170 = vmatprep.mubr.bf16.mxu0 0
  %171 = vmatmul.mubr.bf16.gmra.mrb[0].mxu0 %v62
  %v172 = vpop.f32.mrb[0].mxu0
  %v173 = vadd.f32 %v125, %v172
  %v174 = vpop.f32.mrb[0].mxu0
  %v175 = vpop.f32.mrb[0].mxu0
  %v176 = vpop.f32.mrb[0].mxu0
  %177 = vdwg.mxu0
  %v178 = vxor.u32 %v165, 2147483648
  %v179 = vxor.u32 %v168, 2147483648
  %v180 = vxor.u32 %v173, 2147483648
  %v181 = vmul.f32 %v178, 1.442695
  %v182 = vpow.pop %v181
  %v183 = vmul.f32 %v179, 1.442695
  %v184 = vpow.pop %v183
  %v185 = vmul.f32 %v180, 1.442695
  %v186 = vpow.pop %v185
  %v187 = vadd.f32 %v182, 1.0
  %v188 = vadd.f32 %v184, 1.0
  %v189 = vadd.f32 %v186, 1.0
  %v190 = vrcp.pop %v187
  %v191 = vmul.f32 1.0, %v190
  %v192 = vrcp.pop %v188
  %v193 = vmul.f32 1.0, %v192
  %v194 = vrcp.pop %v189
  %v195 = vmul.f32 1.0, %v194
  %v196 = vmul.f32 %v116, %v191
  %v197 = vmul.f32 %v117, %v193
  %v198 = vmul.f32 %v118, %v195
  %v199 = vld [vmem:[%s6] sm:$0xf]
  %v200 = vpack.c.bf16 %v197, %v196
  %v201 = vpack.c.bf16 %v198, %v198
  %v202 = vld [vmem:[%s7] sm:$0x1]
  %v204 = vlaneseq
  %v205 = vshrl.u32 %v204, 7
  %v206 = vsub.s32 0, %v205
  %v207 = vrot.slane %v202, %v206
  %v210 = vsel %vm57, %v200, 0
  %v213 = vsel %vm57, %v201, 0
  %v216 = vsel %vm64, %v199, 0
  %218 = vmatprep.subr.bf16.mxu0 0
  %219 = vmatpush1.bf16.msra.mxu0 %v216
  %220 = vmatprep.subr.bf16.mxu0 0
  %221 = vmatpush1.bf16.msra.mxu0 0
  %222 = vmatprep.subr.bf16.mxu0 0
  %223 = vmatpush1.bf16.msra.mxu0 0
  %224 = vmatprep.subr.bf16.mxu0 0
  %225 = vmatpush1.bf16.msra.mxu0 0
  %226 = vmatprep.subr.bf16.mxu0 0
  %227 = vmatpush1.bf16.msra.mxu0 0
  %228 = vmatprep.subr.bf16.mxu0 0
  %229 = vmatpush1.bf16.msra.mxu0 0
  %230 = vmatprep.subr.bf16.mxu0 0
  %231 = vmatpush1.bf16.msra.mxu0 0
  %232 = vmatprep.subr.bf16.mxu0 0
  %233 = vmatpush1.bf16.msra.mxu0 0
  %234 = vmatprep.subr.bf16.mxu0 0
  %235 = vmatpush1.bf16.msra.mxu0 0
  %236 = vmatprep.subr.bf16.mxu0 0
  %237 = vmatpush1.bf16.msra.mxu0 0
  %238 = vmatprep.subr.bf16.mxu0 0
  %239 = vmatpush1.bf16.msra.mxu0 0
  %240 = vmatprep.subr.bf16.mxu0 0
  %241 = vmatpush1.bf16.msra.mxu0 0
  %242 = vmatprep.subr.bf16.mxu0 0
  %243 = vmatpush1.bf16.msra.mxu0 0
  %244 = vmatprep.subr.bf16.mxu0 0
  %245 = vmatpush1.bf16.msra.mxu0 0
  %246 = vmatprep.subr.bf16.mxu0 0
  %247 = vmatpush1.bf16.msra.mxu0 0
  %248 = vmatprep.subr.bf16.mxu0 0
  %249 = vmatpush1.bf16.msra.mxu0 0
  %250 = vmatprep.mubr.bf16.mxu0 0
  %251 = vmatmul.mubr.bf16.gmra.mrb[0].mxu0 %v210
  %v252 = vpop.f32.mrb[0].mxu0
  %v253 = vadd.f32 %v207, %v252
  %v254 = vpop.f32.mrb[0].mxu0
  %v255 = vpop.f32.mrb[0].mxu0
  %v256 = vadd.f32 %v207, %v255
  %v257 = vpop.f32.mrb[0].mxu0
  %258 = vmatprep.mubr.bf16.mxu0 0
  %259 = vmatmul.mubr.bf16.gmra.mrb[0].mxu0 %v213
  %v260 = vpop.f32.mrb[0].mxu0
  %v261 = vadd.f32 %v207, %v260
  %v262 = vpop.f32.mrb[0].mxu0
  %v263 = vpop.f32.mrb[0].mxu0
  %v264 = vpop.f32.mrb[0].mxu0
  %265 = vdwg.mxu0
  %v266 = vmax.f32 %v253, 0.0
  %v267 = vmax.f32 %v256, 0.0
  %v268 = vmax.f32 %v261, 0.0
  %vm269 = vcmask 57344
  %270 = vst.msk [vmem:[#allocation2] sm:$0x1] %vm269, 0.0
  %271 = vst.msk [vmem:[#allocation2 + $0x13] sm:$0x1] %vm269, 0.0
  %v272 = vld [vmem:[%s1] sm:$0xf]
  %v273 = vld [vmem:[%s1 + $0x4] sm:$0xf]
  %v274 = vld [vmem:[%s1 + $0x8] sm:$0x1]
  %v275 = vunpack.c.l.bf16 %v272
  %v276 = vunpack.c.l.bf16 %v273
  %v277 = vunpack.c.l.bf16 %v274
  %v278 = vmul.f32 %v275, %v266
  %v279 = vmul.f32 %v276, %v267
  %v280 = vmul.f32 %v277, %v268
  %281 = vst.msk [vmem:[#allocation2 + $0x1] sm:$0xff] %vm57, %v278
  %282 = vst.msk [vmem:[#allocation2 + $0x9] sm:$0xff] %vm57, %v279
  %vm283 = vcmask 58368
  %284 = vst.msk [vmem:[#allocation2 + $0x11] sm:$0x3] %vm283, %v280
  %s285 = scalar_lea.vmem %s0, 12
  %v286 = vld [vmem:[%s285] sm:$0xf]
  %v287 = vld [vmem:[%s285 + $0x4] sm:$0xf]
  %v288 = vld [vmem:[%s285 + $0x8] sm:$0x1]
  %v289 = vld [vmem:[%s2] sm:$0xf]
  %v290 = vld [vmem:[%s3] sm:$0x1]
  %v292 = vlaneseq
  %v293 = vshrl.u32 %v292, 7
  %v294 = vsub.s32 0, %v293
  %v295 = vrot.slane %v290, %v294
  %v300 = vunpack.c.l.b16 %v286
  %v301 = vunpack.c.l.b16 %v287
  %v302 = vunpack.c.l.b16 %v288
  %v303 = vpack.c.b16 %v301, %v300
  %v304 = vpack.c.b16 %v302, %v302
  %v306 = vsel %vm57, %v303, 0
  %v309 = vsel %vm57, %v304, 0
  %v312 = vsel %vm64, %v289, 0
  %314 = vmatprep.subr.bf16.mxu0 0
  %315 = vmatpush1.bf16.msra.mxu0 %v312
  %316 = vmatprep.subr.bf16.mxu0 0
  %317 = vmatpush1.bf16.msra.mxu0 0
  %318 = vmatprep.subr.bf16.mxu0 0
  %319 = vmatpush1.bf16.msra.mxu0 0
  %320 = vmatprep.subr.bf16.mxu0 0
  %321 = vmatpush1.bf16.msra.mxu0 0
  %322 = vmatprep.subr.bf16.mxu0 0
  %323 = vmatpush1.bf16.msra.mxu0 0
  %324 = vmatprep.subr.bf16.mxu0 0
  %325 = vmatpush1.bf16.msra.mxu0 0
  %326 = vmatprep.subr.bf16.mxu0 0
  %327 = vmatpush1.bf16.msra.mxu0 0
  %328 = vmatprep.subr.bf16.mxu0 0
  %329 = vmatpush1.bf16.msra.mxu0 0
  %330 = vmatprep.subr.bf16.mxu0 0
  %331 = vmatpush1.bf16.msra.mxu0 0
  %332 = vmatprep.subr.bf16.mxu0 0
  %333 = vmatpush1.bf16.msra.mxu0 0
  %334 = vmatprep.subr.bf16.mxu0 0
  %335 = vmatpush1.bf16.msra.mxu0 0
  %336 = vmatprep.subr.bf16.mxu0 0
  %337 = vmatpush1.bf16.msra.mxu0 0
  %338 = vmatprep.subr.bf16.mxu0 0
  %339 = vmatpush1.bf16.msra.mxu0 0
  %340 = vmatprep.subr.bf16.mxu0 0
  %341 = vmatpush1.bf16.msra.mxu0 0
  %342 = vmatprep.subr.bf16.mxu0 0
  %343 = vmatpush1.bf16.msra.mxu0 0
  %344 = vmatprep.subr.bf16.mxu0 0
  %345 = vmatpush1.bf16.msra.mxu0 0
  %346 = vmatprep.mubr.bf16.mxu0 0
  %347 = vmatmul.mubr.bf16.gmra.mrb[0].mxu0 %v306
  %v348 = vpop.f32.mrb[0].mxu0
  %v349 = vadd.f32 %v295, %v348
  %v350 = vpop.f32.mrb[0].mxu0
  %v351 = vpop.f32.mrb[0].mxu0
  %v352 = vadd.f32 %v295, %v351
  %v353 = vpop.f32.mrb[0].mxu0
  %354 = vmatprep.mubr.bf16.mxu0 0
  %355 = vmatmul.mubr.bf16.gmra.mrb[0].mxu0 %v309
  %v356 = vpop.f32.mrb[0].mxu0
  %v357 = vadd.f32 %v295, %v356
  %v358 = vpop.f32.mrb[0].mxu0
  %v359 = vpop.f32.mrb[0].mxu0
  %v360 = vpop.f32.mrb[0].mxu0
  %361 = vdwg.mxu0
  %v362 = vtanh.pop %v349
  %v363 = vtanh.pop %v352
  %v364 = vtanh.pop %v357
  %v365 = vld [vmem:[%s4] sm:$0xf]
  %v366 = vld [vmem:[%s5] sm:$0x1]
  %v368 = vlaneseq
  %v369 = vshrl.u32 %v368, 7
  %v370 = vsub.s32 0, %v369
  %v371 = vrot.slane %v366, %v370
  %v374 = vsel %vm64, %v365, 0
  %376 = vmatprep.subr.bf16.mxu0 0
  %377 = vmatpush1.bf16.msra.mxu0 %v374
  %378 = vmatprep.subr.bf16.mxu0 0
  %379 = vmatpush1.bf16.msra.mxu0 0
  %380 = vmatprep.subr.bf16.mxu0 0
  %381 = vmatpush1.bf16.msra.mxu0 0
  %382 = vmatprep.subr.bf16.mxu0 0
  %383 = vmatpush1.bf16.msra.mxu0 0
  %384 = vmatprep.subr.bf16.mxu0 0
  %385 = vmatpush1.bf16.msra.mxu0 0
  %386 = vmatprep.subr.bf16.mxu0 0
  %387 = vmatpush1.bf16.msra.mxu0 0
  %388 = vmatprep.subr.bf16.mxu0 0
  %389 = vmatpush1.bf16.msra.mxu0 0
  %390 = vmatprep.subr.bf16.mxu0 0
  %391 = vmatpush1.bf16.msra.mxu0 0
  %392 = vmatprep.subr.bf16.mxu0 0
  %393 = vmatpush1.bf16.msra.mxu0 0
  %394 = vmatprep.subr.bf16.mxu0 0
  %395 = vmatpush1.bf16.msra.mxu0 0
  %396 = vmatprep.subr.bf16.mxu0 0
  %397 = vmatpush1.bf16.msra.mxu0 0
  %398 = vmatprep.subr.bf16.mxu0 0
  %399 = vmatpush1.bf16.msra.mxu0 0
  %400 = vmatprep.subr.bf16.mxu0 0
  %401 = vmatpush1.bf16.msra.mxu0 0
  %402 = vmatprep.subr.bf16.mxu0 0
  %403 = vmatpush1.bf16.msra.mxu0 0
  %404 = vmatprep.subr.bf16.mxu0 0
  %405 = vmatpush1.bf16.msra.mxu0 0
  %406 = vmatprep.subr.bf16.mxu0 0
  %407 = vmatpush1.bf16.msra.mxu0 0
  %408 = vmatprep.mubr.bf16.mxu0 0
  %409 = vmatmul.mubr.bf16.gmra.mrb[0].mxu0 %v306
  %v410 = vpop.f32.mrb[0].mxu0
  %v411 = vadd.f32 %v371, %v410
  %v412 = vpop.f32.mrb[0].mxu0
  %v413 = vpop.f32.mrb[0].mxu0
  %v414 = vadd.f32 %v371, %v413
  %v415 = vpop.f32.mrb[0].mxu0
  %416 = vmatprep.mubr.bf16.mxu0 0
  %417 = vmatmul.mubr.bf16.gmra.mrb[0].mxu0 %v309
  %v418 = vpop.f32.mrb[0].mxu0
  %v419 = vadd.f32 %v371, %v418
  %v420 = vpop.f32.mrb[0].mxu0
  %v421 = vpop.f32.mrb[0].mxu0
  %v422 = vpop.f32.mrb[0].mxu0
  %423 = vdwg.mxu0
  %v424 = vxor.u32 %v411, 2147483648
  %v425 = vxor.u32 %v414, 2147483648
  %v426 = vxor.u32 %v419, 2147483648
  %v427 = vmul.f32 %v424, 1.442695
  %v428 = vpow.pop %v427
  %v429 = vmul.f32 %v425, 1.442695
  %v430 = vpow.pop %v429
  %v431 = vmul.f32 %v426, 1.442695
  %v432 = vpow.pop %v431
  %v433 = vadd.f32 %v428, 1.0
  %v434 = vadd.f32 %v430, 1.0
  %v435 = vadd.f32 %v432, 1.0
  %v436 = vrcp.pop %v433
  %v437 = vmul.f32 1.0, %v436
  %v438 = vrcp.pop %v434
  %v439 = vmul.f32 1.0, %v438
  %v440 = vrcp.pop %v435
  %v441 = vmul.f32 1.0, %v440
  %v442 = vmul.f32 %v362, %v437
  %v443 = vmul.f32 %v363, %v439
  %v444 = vmul.f32 %v364, %v441
  %v445 = vld [vmem:[%s6] sm:$0xf]
  %v446 = vpack.c.bf16 %v443, %v442
  %v447 = vpack.c.bf16 %v444, %v444
  %v448 = vld [vmem:[%s7] sm:$0x1]
  %v450 = vlaneseq
  %v451 = vshrl.u32 %v450, 7
  %v452 = vsub.s32 0, %v451
  %v453 = vrot.slane %v448, %v452
  %v456 = vsel %vm57, %v446, 0
  %v459 = vsel %vm57, %v447, 0
  %v462 = vsel %vm64, %v445, 0
  %464 = vmatprep.subr.bf16.mxu0 0
  %465 = vmatpush1.bf16.msra.mxu0 %v462
  %466 = vmatprep.subr.bf16.mxu0 0
  %467 = vmatpush1.bf16.msra.mxu0 0
  %468 = vmatprep.subr.bf16.mxu0 0
  %469 = vmatpush1.bf16.msra.mxu0 0
  %470 = vmatprep.subr.bf16.mxu0 0
  %471 = vmatpush1.bf16.msra.mxu0 0
  %472 = vmatprep.subr.bf16.mxu0 0
  %473 = vmatpush1.bf16.msra.mxu0 0
  %474 = vmatprep.subr.bf16.mxu0 0
  %475 = vmatpush1.bf16.msra.mxu0 0
  %476 = vmatprep.subr.bf16.mxu0 0
  %477 = vmatpush1.bf16.msra.mxu0 0
  %478 = vmatprep.subr.bf16.mxu0 0
  %479 = vmatpush1.bf16.msra.mxu0 0
  %480 = vmatprep.subr.bf16.mxu0 0
  %481 = vmatpush1.bf16.msra.mxu0 0
  %482 = vmatprep.subr.bf16.mxu0 0
  %483 = vmatpush1.bf16.msra.mxu0 0
  %484 = vmatprep.subr.bf16.mxu0 0
  %485 = vmatpush1.bf16.msra.mxu0 0
  %486 = vmatprep.subr.bf16.mxu0 0
  %487 = vmatpush1.bf16.msra.mxu0 0
  %488 = vmatprep.subr.bf16.mxu0 0
  %489 = vmatpush1.bf16.msra.mxu0 0
  %490 = vmatprep.subr.bf16.mxu0 0
  %491 = vmatpush1.bf16.msra.mxu0 0
  %492 = vmatprep.subr.bf16.mxu0 0
  %493 = vmatpush1.bf16.msra.mxu0 0
  %494 = vmatprep.subr.bf16.mxu0 0
  %495 = vmatpush1.bf16.msra.mxu0 0
  %496 = vmatprep.mubr.bf16.mxu0 0
  %497 = vmatmul.mubr.bf16.gmra.mrb[0].mxu0 %v456
  %v498 = vpop.f32.mrb[0].mxu0
  %v499 = vadd.f32 %v453, %v498
  %v500 = vpop.f32.mrb[0].mxu0
  %v501 = vpop.f32.mrb[0].mxu0
  %v502 = vadd.f32 %v453, %v501
  %v503 = vpop.f32.mrb[0].mxu0
  %504 = vmatprep.mubr.bf16.mxu0 0
  %505 = vmatmul.mubr.bf16.gmra.mrb[0].mxu0 %v459
  %v506 = vpop.f32.mrb[0].mxu0
  %v507 = vadd.f32 %v453, %v506
  %v508 = vpop.f32.mrb[0].mxu0
  %v509 = vpop.f32.mrb[0].mxu0
  %v510 = vpop.f32.mrb[0].mxu0
  %511 = vdwg.mxu0
  %v512 = vmax.f32 %v499, 0.0
  %v513 = vmax.f32 %v502, 0.0
  %v514 = vmax.f32 %v507, 0.0
  %s515 = scalar_lea.vmem [#allocation2], 24
  %516 = vst.msk [vmem:[%s515] sm:$0x1] %vm269, 0.0
  %517 = vst.msk [vmem:[%s515 + $0x13] sm:$0x1] %vm269, 0.0
  %s518 = scalar_lea.vmem %s1, 12
  %v519 = vld [vmem:[%s518] sm:$0xf]
  %v520 = vld [vmem:[%s518 + $0x4] sm:$0xf]
  %v521 = vld [vmem:[%s518 + $0x8] sm:$0x1]
  %v522 = vunpack.c.l.bf16 %v519
  %v523 = vunpack.c.l.bf16 %v520
  %v524 = vunpack.c.l.bf16 %v521
  %v525 = vmul.f32 %v522, %v512
  %v526 = vmul.f32 %v523, %v513
  %v527 = vmul.f32 %v524, %v514
  %528 = vst.msk [vmem:[%s515 + $0x1] sm:$0xff] %vm57, %v525
  %529 = vst.msk [vmem:[%s515 + $0x9] sm:$0xff] %vm57, %v526
  %530 = vst.msk [vmem:[%s515 + $0x11] sm:$0x3] %vm283, %v527
  %v531 = vld [vmem:[#allocation2] sm:$0xff]
  %v532 = vld [vmem:[#allocation2 + $0x8] sm:$0xff]
  %v533 = vld [vmem:[#allocation2 + $0x10] sm:$0x3]
  %v534 = vld [vmem:[#allocation2 + $0x1] sm:$0xff]
  %v535 = vld [vmem:[#allocation2 + $0x9] sm:$0xff]
  %v536 = vld [vmem:[#allocation2 + $0x11] sm:$0x3]
  %v537 = vld [vmem:[#allocation2 + $0x2] sm:$0xff]
  %v538 = vld [vmem:[#allocation2 + $0xa] sm:$0xff]
  %v539 = vld [vmem:[#allocation2 + $0x12] sm:$0x3]
  %543 = vrot.lane.b32.xlu0 %v534, 8
  %v544 = vpop.permute.xlu0 %543
  %545 = vrot.lane.b32.xlu0 %v535, 8
  %v546 = vpop.permute.xlu0 %545
  %547 = vrot.lane.b32.xlu0 %v536, 8
  %v548 = vpop.permute.xlu0 %547
  %555 = vrot.lane.b32.xlu0 %v537, 16
  %v556 = vpop.permute.xlu0 %555
  %557 = vrot.lane.b32.xlu0 %v538, 16
  %v558 = vpop.permute.xlu0 %557
  %559 = vrot.lane.b32.xlu0 %v539, 16
  %v560 = vpop.permute.xlu0 %559
  %v564 = vsel %vm57, %v531, %v544
  %v565 = vsel %vm57, %v532, %v546
  %v566 = vsel %vm57, %v533, %v548
  %vm567 = vcmask 130048
  %v568 = vsel %vm567, %v564, %v556
  %v569 = vsel %vm567, %v565, %v558
  %v570 = vsel %vm567, %v566, %v560
  %v571 = vld [vmem:[%s8] sm:$0xf]
  %v572 = vld [vmem:[%s8 + $0x4] sm:$0xf]
  %v573 = vld [vmem:[%s8 + $0x8] sm:$0xf]
  %v574 = vpack.c.bf16 %v569, %v568
  %v575 = vpack.c.bf16 %v570, %v570
  %v576 = vld [vmem:[#allocation3] sm:$0x1]
  %v578 = vlaneseq
  %v579 = vshrl.u32 %v578, 7
  %v580 = vsub.s32 0, %v579
  %v581 = vrot.slane %v576, %v580
  %v586 = vunpack.c.l.b16 %v571
  %v587 = vunpack.c.l.b16 %v572
  %v588 = vunpack.c.l.b16 %v573
  %v589 = vpack.c.b16 %v587, %v586
  %v590 = vpack.c.b16 %v588, %v588
  %vm592 = vcmask 195584
  %v594 = vsel %vm592, %v574, 0
  %v597 = vsel %vm592, %v575, 0
  %v600 = vsel %vm64, %v590, 0
  %602 = vmatprep.subr.bf16.mxu0 0
  %603 = vmatpush1.bf16.msra.mxu0 %v589
  %604 = vmatprep.subr.bf16.mxu0 0
  %605 = vmatpush1.bf16.msra.mxu0 %v600
  %606 = vmatprep.subr.bf16.mxu0 0
  %607 = vmatpush1.bf16.msra.mxu0 0
  %608 = vmatprep.subr.bf16.mxu0 0
  %609 = vmatpush1.bf16.msra.mxu0 0
  %610 = vmatprep.subr.bf16.mxu0 0
  %611 = vmatpush1.bf16.msra.mxu0 0
  %612 = vmatprep.subr.bf16.mxu0 0
  %613 = vmatpush1.bf16.msra.mxu0 0
  %614 = vmatprep.subr.bf16.mxu0 0
  %615 = vmatpush1.bf16.msra.mxu0 0
  %616 = vmatprep.subr.bf16.mxu0 0
  %617 = vmatpush1.bf16.msra.mxu0 0
  %618 = vmatprep.subr.bf16.mxu0 0
  %619 = vmatpush1.bf16.msra.mxu0 0
  %620 = vmatprep.subr.bf16.mxu0 0
  %621 = vmatpush1.bf16.msra.mxu0 0
  %622 = vmatprep.subr.bf16.mxu0 0
  %623 = vmatpush1.bf16.msra.mxu0 0
  %624 = vmatprep.subr.bf16.mxu0 0
  %625 = vmatpush1.bf16.msra.mxu0 0
  %626 = vmatprep.subr.bf16.mxu0 0
  %627 = vmatpush1.bf16.msra.mxu0 0
  %628 = vmatprep.subr.bf16.mxu0 0
  %629 = vmatpush1.bf16.msra.mxu0 0
  %630 = vmatprep.subr.bf16.mxu0 0
  %631 = vmatpush1.bf16.msra.mxu0 0
  %632 = vmatprep.subr.bf16.mxu0 0
  %633 = vmatpush1.bf16.msra.mxu0 0
  %634 = vmatprep.mubr.bf16.mxu0 0
  %635 = vmatmul.mubr.bf16.gmra.mrb[0].mxu0 %v594
  %v636 = vpop.f32.mrb[0].mxu0
  %v637 = vadd.f32 %v581, %v636
  %v638 = vpop.f32.mrb[0].mxu0
  %v639 = vpop.f32.mrb[0].mxu0
  %v640 = vadd.f32 %v581, %v639
  %v641 = vpop.f32.mrb[0].mxu0
  %642 = vmatprep.mubr.bf16.mxu0 0
  %643 = vmatmul.mubr.bf16.gmra.mrb[0].mxu0 %v597
  %v644 = vpop.f32.mrb[0].mxu0
  %v645 = vadd.f32 %v581, %v644
  %v646 = vpop.f32.mrb[0].mxu0
  %v647 = vpop.f32.mrb[0].mxu0
  %v648 = vpop.f32.mrb[0].mxu0
  %649 = vdwg.mxu0
  %vm650 = vcmask 7168
  %651 = vst.msk [vmem:[%s10] sm:$0xff] %vm650, %v637
  %652 = vst.msk [vmem:[%s10 + $0x8] sm:$0xff] %vm650, %v640
  %vm653 = vcmask 1024
  %654 = vst.msk [vmem:[%s10 + $0x10] sm:$0x3] %vm653, %v645
  %v655 = vld [vmem:[%s515] sm:$0xff]
  %v656 = vld [vmem:[%s515 + $0x8] sm:$0xff]
  %v657 = vld [vmem:[%s515 + $0x10] sm:$0x3]
  %v658 = vld [vmem:[%s515 + $0x1] sm:$0xff]
  %v659 = vld [vmem:[%s515 + $0x9] sm:$0xff]
  %v660 = vld [vmem:[%s515 + $0x11] sm:$0x3]
  %v661 = vld [vmem:[%s515 + $0x2] sm:$0xff]
  %v662 = vld [vmem:[%s515 + $0xa] sm:$0xff]
  %v663 = vld [vmem:[%s515 + $0x12] sm:$0x3]
  %667 = vrot.lane.b32.xlu0 %v658, 8
  %v668 = vpop.permute.xlu0 %667
  %669 = vrot.lane.b32.xlu0 %v659, 8
  %v670 = vpop.permute.xlu0 %669
  %671 = vrot.lane.b32.xlu0 %v660, 8
  %v672 = vpop.permute.xlu0 %671
  %679 = vrot.lane.b32.xlu0 %v661, 16
  %v680 = vpop.permute.xlu0 %679
  %681 = vrot.lane.b32.xlu0 %v662, 16
  %v682 = vpop.permute.xlu0 %681
  %683 = vrot.lane.b32.xlu0 %v663, 16
  %v684 = vpop.permute.xlu0 %683
  %v688 = vsel %vm57, %v655, %v668
  %v689 = vsel %vm57, %v656, %v670
  %v690 = vsel %vm57, %v657, %v672
  %v691 = vsel %vm567, %v688, %v680
  %v692 = vsel %vm567, %v689, %v682
  %v693 = vsel %vm567, %v690, %v684
  %v694 = vld [vmem:[%s8] sm:$0xf]
  %v695 = vld [vmem:[%s8 + $0x4] sm:$0xf]
  %v696 = vld [vmem:[%s8 + $0x8] sm:$0xf]
  %v697 = vpack.c.bf16 %v692, %v691
  %v698 = vpack.c.bf16 %v693, %v693
  %v699 = vld [vmem:[#allocation3] sm:$0x1]
  %v701 = vlaneseq
  %v702 = vshrl.u32 %v701, 7
  %v703 = vsub.s32 0, %v702
  %v704 = vrot.slane %v699, %v703
  %v709 = vunpack.c.l.b16 %v694
  %v710 = vunpack.c.l.b16 %v695
  %v711 = vunpack.c.l.b16 %v696
  %v712 = vpack.c.b16 %v710, %v709
  %v713 = vpack.c.b16 %v711, %v711
  %v716 = vsel %vm592, %v697, 0
  %v719 = vsel %vm592, %v698, 0
  %v722 = vsel %vm64, %v713, 0
  %724 = vmatprep.subr.bf16.mxu0 0
  %725 = vmatpush1.bf16.msra.mxu0 %v712
  %726 = vmatprep.subr.bf16.mxu0 0
  %727 = vmatpush1.bf16.msra.mxu0 %v722
  %728 = vmatprep.subr.bf16.mxu0 0
  %729 = vmatpush1.bf16.msra.mxu0 0
  %730 = vmatprep.subr.bf16.mxu0 0
  %731 = vmatpush1.bf16.msra.mxu0 0
  %732 = vmatprep.subr.bf16.mxu0 0
  %733 = vmatpush1.bf16.msra.mxu0 0
  %734 = vmatprep.subr.bf16.mxu0 0
  %735 = vmatpush1.bf16.msra.mxu0 0
  %736 = vmatprep.subr.bf16.mxu0 0
  %737 = vmatpush1.bf16.msra.mxu0 0
  %738 = vmatprep.subr.bf16.mxu0 0
  %739 = vmatpush1.bf16.msra.mxu0 0
  %740 = vmatprep.subr.bf16.mxu0 0
  %741 = vmatpush1.bf16.msra.mxu0 0
  %742 = vmatprep.subr.bf16.mxu0 0
  %743 = vmatpush1.bf16.msra.mxu0 0
  %744 = vmatprep.subr.bf16.mxu0 0
  %745 = vmatpush1.bf16.msra.mxu0 0
  %746 = vmatprep.subr.bf16.mxu0 0
  %747 = vmatpush1.bf16.msra.mxu0 0
  %748 = vmatprep.subr.bf16.mxu0 0
  %749 = vmatpush1.bf16.msra.mxu0 0
  %750 = vmatprep.subr.bf16.mxu0 0
  %751 = vmatpush1.bf16.msra.mxu0 0
  %752 = vmatprep.subr.bf16.mxu0 0
  %753 = vmatpush1.bf16.msra.mxu0 0
  %754 = vmatprep.subr.bf16.mxu0 0
  %755 = vmatpush1.bf16.msra.mxu0 0
  %756 = vmatprep.mubr.bf16.mxu0 0
  %757 = vmatmul.mubr.bf16.gmra.mrb[0].mxu0 %v716
  %v758 = vpop.f32.mrb[0].mxu0
  %v759 = vadd.f32 %v704, %v758
  %v760 = vpop.f32.mrb[0].mxu0
  %v761 = vpop.f32.mrb[0].mxu0
  %v762 = vadd.f32 %v704, %v761
  %v763 = vpop.f32.mrb[0].mxu0
  %764 = vmatprep.mubr.bf16.mxu0 0
  %765 = vmatmul.mubr.bf16.gmra.mrb[0].mxu0 %v719
  %v766 = vpop.f32.mrb[0].mxu0
  %v767 = vadd.f32 %v704, %v766
  %v768 = vpop.f32.mrb[0].mxu0
  %v769 = vpop.f32.mrb[0].mxu0
  %v770 = vpop.f32.mrb[0].mxu0
  %771 = vdwg.mxu0
  %s772 = scalar_lea.vmem %s10, 24
  %773 = vst.msk [vmem:[%s772] sm:$0xff] %vm650, %v759
  %774 = vst.msk [vmem:[%s772 + $0x8] sm:$0xff] %vm650, %v762
  %775 = vst.msk [vmem:[%s772 + $0x10] sm:$0x3] %vm653, %v767
  // Predicated region
  $region42: #{manner_block_fwd.13} parent=0 // pred_check
    _
  $region43: #{manner_block_fwd.13} parent=0 // pred_check_branch
    %777 = sbr.rel (0) target = $region45
  $region44: #{manner_block_fwd.13} parent=0 // pred_region
    _
  $region45: #{manner_block_fwd.13} parent=0 // pred_fallthru
    _
  // Predicated region
  $region46: #{manner_block_fwd.13} parent=0 // pred_check
    _
  $region47: #{manner_block_fwd.13} parent=0 // pred_check_branch
    %779 = sbr.rel (0) target = $region49
  $region48: #{manner_block_fwd.13} parent=0 // pred_region
    _
  $region49: #{manner_block_fwd.13} parent=0 // pred_fallthru
    _

// kernel: manner_block_fwd.12
$region0: #{manner_block_fwd.12}
  #allocation0 [shape = 'u32[]', space=smem, size = 0x4, offset = 0x4, fixed_abs, tag = 'smem constant byte address 0x4 - core index']
  #allocation1 [shape = 'u32[144,128]{1,0:T(1,128)}', space=vmem, size = 0x12000, scoped, tag = 'internal scratch']
  #allocation2 [shape = 'f32[2,38,16]{2,1,0:T(8,128)}', space=vmem, size = 0xa000, scoped, tag = 'scratch operand']
  #allocation3 [shape = 'f32[2,10,8]{2,1,0:T(8,128)}', space=vmem, size = 0x4000, scoped, tag = 'scratch operand']
  %s0 = inlined_call_operand.vmem [shape: bf16[2,8,16], index: 0, kind: input, shape index: {}]
  %s1 = inlined_call_operand.vmem [shape: bf16[2,8,16], index: 1, kind: input, shape index: {}]
  %s2 = inlined_call_operand.vmem [shape: bf16[16,32], index: 2, kind: input, shape index: {}]
  %s3 = inlined_call_operand.vmem [shape: f32[1,32], index: 3, kind: input, shape index: {}]
  %s4 = inlined_call_operand.vmem [shape: f32[1,32], index: 4, kind: input, shape index: {}]
  %s5 = inlined_call_operand.vmem [shape: f32[1,32], index: 5, kind: input, shape index: {}]
  %s6 = inlined_call_operand.vmem [shape: f32[31,16], index: 6, kind: input, shape index: {}]
  %s7 = inlined_call_operand.vmem [shape: f32[1,16], index: 7, kind: input, shape index: {}]
  %s8 = inlined_call_operand.vmem [shape: f32[1,16], index: 8, kind: input, shape index: {}]
  %s9 = inlined_call_operand.vmem [shape: f32[1,16], index: 9, kind: input, shape index: {}]
  %s10 = inlined_call_operand.vmem [shape: bf16[16,8], index: 10, kind: input, shape index: {}]
  %s11 = inlined_call_operand.vmem [shape: f32[1,8], index: 11, kind: input, shape index: {}]
  %s12 = inlined_call_operand.vmem [shape: f32[1,8], index: 12, kind: input, shape index: {}]
  %s13 = inlined_call_operand.vmem [shape: f32[1,8], index: 13, kind: input, shape index: {}]
  %s14 = inlined_call_operand.vmem [shape: bf16[16,8], index: 14, kind: input, shape index: {}]
  %s15 = inlined_call_operand.vmem [shape: f32[1,8], index: 15, kind: input, shape index: {}]
  %s16 = inlined_call_operand.vmem [shape: bf16[16,16], index: 16, kind: input, shape index: {}]
  %s17 = inlined_call_operand.vmem [shape: f32[1,16], index: 17, kind: input, shape index: {}]
  %s18 = inlined_call_operand.vmem [shape: f32[1,16], index: 18, kind: input, shape index: {}]
  %s19 = inlined_call_operand.vmem [shape: f32[1,16], index: 19, kind: input, shape index: {}]
  %s20 = inlined_call_operand.vmem [shape: bf16[2,9,16], index: 20, kind: output, shape index: {}]
  %s21 = sld [smem:[#allocation0]]
  $region104: #{manner_block_fwd.12} parent=0
    _
  %s23 = ssub.s32 1, %s21
  %s24 = scalar_select 0, %s23, %s21
  // Predicated region
  $region2: #{manner_block_fwd.12} parent=0 // pred_check
    _
  $region3: #{manner_block_fwd.12} parent=0 // pred_check_branch
    %26 = sbr.rel (0) target = $region5
  $region4: #{manner_block_fwd.12} parent=0 // pred_region
    _
  $region5: #{manner_block_fwd.12} parent=0 // pred_fallthru
    _
  // Predicated region
  $region6: #{manner_block_fwd.12} parent=0 // pred_check
    _
  $region7: #{manner_block_fwd.12} parent=0 // pred_check_branch
    %28 = sbr.rel (0) target = $region9
  $region8: #{manner_block_fwd.12} parent=0 // pred_region
    _
  $region9: #{manner_block_fwd.12} parent=0 // pred_fallthru
    _
  // Predicated region
  $region10: #{manner_block_fwd.12} parent=0 // pred_check
    _
  $region11: #{manner_block_fwd.12} parent=0 // pred_check_branch
    %30 = sbr.rel (0) target = $region13
  $region12: #{manner_block_fwd.12} parent=0 // pred_region
    _
  $region13: #{manner_block_fwd.12} parent=0 // pred_fallthru
    _
  // Predicated region
  $region14: #{manner_block_fwd.12} parent=0 // pred_check
    _
  $region15: #{manner_block_fwd.12} parent=0 // pred_check_branch
    %32 = sbr.rel (0) target = $region17
  $region16: #{manner_block_fwd.12} parent=0 // pred_region
    _
  $region17: #{manner_block_fwd.12} parent=0 // pred_fallthru
    _
  // Predicated region
  $region18: #{manner_block_fwd.12} parent=0 // pred_check
    _
  $region19: #{manner_block_fwd.12} parent=0 // pred_check_branch
    %34 = sbr.rel (0) target = $region21
  $region20: #{manner_block_fwd.12} parent=0 // pred_region
    _
  $region21: #{manner_block_fwd.12} parent=0 // pred_fallthru
    _
  // Predicated region
  $region22: #{manner_block_fwd.12} parent=0 // pred_check
    _
  $region23: #{manner_block_fwd.12} parent=0 // pred_check_branch
    %36 = sbr.rel (0) target = $region25
  $region24: #{manner_block_fwd.12} parent=0 // pred_region
    _
  $region25: #{manner_block_fwd.12} parent=0 // pred_fallthru
    _
  // Predicated region
  $region26: #{manner_block_fwd.12} parent=0 // pred_check
    _
  $region27: #{manner_block_fwd.12} parent=0 // pred_check_branch
    %38 = sbr.rel (0) target = $region29
  $region28: #{manner_block_fwd.12} parent=0 // pred_region
    _
  $region29: #{manner_block_fwd.12} parent=0 // pred_fallthru
    _
  // Predicated region
  $region30: #{manner_block_fwd.12} parent=0 // pred_check
    _
  $region31: #{manner_block_fwd.12} parent=0 // pred_check_branch
    %40 = sbr.rel (0) target = $region33
  $region32: #{manner_block_fwd.12} parent=0 // pred_region
    _
  $region33: #{manner_block_fwd.12} parent=0 // pred_fallthru
    _
  // Predicated region
  $region34: #{manner_block_fwd.12} parent=0 // pred_check
    _
  $region35: #{manner_block_fwd.12} parent=0 // pred_check_branch
    %42 = sbr.rel (0) target = $region37
  $region36: #{manner_block_fwd.12} parent=0 // pred_region
    _
  $region37: #{manner_block_fwd.12} parent=0 // pred_fallthru
    _
  // Predicated region
  $region38: #{manner_block_fwd.12} parent=0 // pred_check
    _
  $region39: #{manner_block_fwd.12} parent=0 // pred_check_branch
    %44 = sbr.rel (0) target = $region41
  $region40: #{manner_block_fwd.12} parent=0 // pred_region
    _
  $region41: #{manner_block_fwd.12} parent=0 // pred_fallthru
    _
  // Predicated region
  $region42: #{manner_block_fwd.12} parent=0 // pred_check
    _
  $region43: #{manner_block_fwd.12} parent=0 // pred_check_branch
    %46 = sbr.rel (0) target = $region45
  $region44: #{manner_block_fwd.12} parent=0 // pred_region
    _
  $region45: #{manner_block_fwd.12} parent=0 // pred_fallthru
    _
  // Predicated region
  $region46: #{manner_block_fwd.12} parent=0 // pred_check
    _
  $region47: #{manner_block_fwd.12} parent=0 // pred_check_branch
    %48 = sbr.rel (0) target = $region49
  $region48: #{manner_block_fwd.12} parent=0 // pred_region
    _
  $region49: #{manner_block_fwd.12} parent=0 // pred_fallthru
    _
  // Predicated region
  $region50: #{manner_block_fwd.12} parent=0 // pred_check
    _
  $region51: #{manner_block_fwd.12} parent=0 // pred_check_branch
    %50 = sbr.rel (0) target = $region53
  $region52: #{manner_block_fwd.12} parent=0 // pred_region
    _
  $region53: #{manner_block_fwd.12} parent=0 // pred_fallthru
    _
  // Predicated region
  $region54: #{manner_block_fwd.12} parent=0 // pred_check
    _
  $region55: #{manner_block_fwd.12} parent=0 // pred_check_branch
    %52 = sbr.rel (0) target = $region57
  $region56: #{manner_block_fwd.12} parent=0 // pred_region
    _
  $region57: #{manner_block_fwd.12} parent=0 // pred_fallthru
    _
  // Predicated region
  $region58: #{manner_block_fwd.12} parent=0 // pred_check
    _
  $region59: #{manner_block_fwd.12} parent=0 // pred_check_branch
    %54 = sbr.rel (0) target = $region61
  $region60: #{manner_block_fwd.12} parent=0 // pred_region
    _
  $region61: #{manner_block_fwd.12} parent=0 // pred_fallthru
    _
  // Predicated region
  $region62: #{manner_block_fwd.12} parent=0 // pred_check
    _
  $region63: #{manner_block_fwd.12} parent=0 // pred_check_branch
    %56 = sbr.rel (0) target = $region65
  $region64: #{manner_block_fwd.12} parent=0 // pred_region
    _
  $region65: #{manner_block_fwd.12} parent=0 // pred_fallthru
    _
  // Predicated region
  $region66: #{manner_block_fwd.12} parent=0 // pred_check
    _
  $region67: #{manner_block_fwd.12} parent=0 // pred_check_branch
    %58 = sbr.rel (0) target = $region69
  $region68: #{manner_block_fwd.12} parent=0 // pred_region
    _
  $region69: #{manner_block_fwd.12} parent=0 // pred_fallthru
    _
  // Predicated region
  $region70: #{manner_block_fwd.12} parent=0 // pred_check
    _
  $region71: #{manner_block_fwd.12} parent=0 // pred_check_branch
    %60 = sbr.rel (0) target = $region73
  $region72: #{manner_block_fwd.12} parent=0 // pred_region
    _
  $region73: #{manner_block_fwd.12} parent=0 // pred_fallthru
    _
  // Predicated region
  $region74: #{manner_block_fwd.12} parent=0 // pred_check
    _
  $region75: #{manner_block_fwd.12} parent=0 // pred_check_branch
    %62 = sbr.rel (0) target = $region77
  $region76: #{manner_block_fwd.12} parent=0 // pred_region
    _
  $region77: #{manner_block_fwd.12} parent=0 // pred_fallthru
    _
  // Predicated region
  $region78: #{manner_block_fwd.12} parent=0 // pred_check
    _
  $region79: #{manner_block_fwd.12} parent=0 // pred_check_branch
    %64 = sbr.rel (0) target = $region81
  $region80: #{manner_block_fwd.12} parent=0 // pred_region
    _
  $region81: #{manner_block_fwd.12} parent=0 // pred_fallthru
    _
  %v66 = vld [vmem:[%s0] sm:$0xf]
  %v67 = vunpack.c.l.bf16 %v66
  %v68 = vld [vmem:[%s1] sm:$0xf]
  %v69 = vunpack.c.l.bf16 %v68
  %v70 = vadd.f32 %v67, %v69
  %s71 = scalar_lea.vmem %s0, 4
  %v72 = vld [vmem:[%s71] sm:$0xf]
  %v73 = vunpack.c.l.bf16 %v72
  %s74 = scalar_lea.vmem %s1, 4
  %v75 = vld [vmem:[%s74] sm:$0xf]
  %v76 = vunpack.c.l.bf16 %v75
  %v77 = vadd.f32 %v73, %v76
  %v78 = vld [vmem:[%s2] sm:$0xf]
  %v79 = vld [vmem:[%s2 + $0x4] sm:$0xf]
  %v80 = vpack.c.bf16 %v70, %v70
  %v81 = vld [vmem:[%s3] sm:$0x1]
  %v83 = vlaneseq
  %v84 = vshrl.u32 %v83, 7
  %v85 = vsub.s32 0, %v84
  %v86 = vrot.slane %v81, %v85
  %v90 = vunpack.c.l.b16 %v78
  %v91 = vunpack.c.l.b16 %v79
  %v92 = vpack.c.b16 %v91, %v90
  %vm94 = vcmask 130048
  %v96 = vsel %vm94, %v80, 0
  %98 = vmatprep.subr.bf16.mxu0 0
  %99 = vmatpush1.bf16.msra.mxu0 %v92
  %100 = vmatprep.subr.bf16.mxu0 0
  %101 = vmatpush1.bf16.msra.mxu0 0
  %102 = vmatprep.subr.bf16.mxu0 0
  %103 = vmatpush1.bf16.msra.mxu0 0
  %104 = vmatprep.subr.bf16.mxu0 0
  %105 = vmatpush1.bf16.msra.mxu0 0
  %106 = vmatprep.subr.bf16.mxu0 0
  %107 = vmatpush1.bf16.msra.mxu0 0
  %108 = vmatprep.subr.bf16.mxu0 0
  %109 = vmatpush1.bf16.msra.mxu0 0
  %110 = vmatprep.subr.bf16.mxu0 0
  %111 = vmatpush1.bf16.msra.mxu0 0
  %112 = vmatprep.subr.bf16.mxu0 0
  %113 = vmatpush1.bf16.msra.mxu0 0
  %114 = vmatprep.subr.bf16.mxu0 0
  %115 = vmatpush1.bf16.msra.mxu0 0
  %116 = vmatprep.subr.bf16.mxu0 0
  %117 = vmatpush1.bf16.msra.mxu0 0
  %118 = vmatprep.subr.bf16.mxu0 0
  %119 = vmatpush1.bf16.msra.mxu0 0
  %120 = vmatprep.subr.bf16.mxu0 0
  %121 = vmatpush1.bf16.msra.mxu0 0
  %122 = vmatprep.subr.bf16.mxu0 0
  %123 = vmatpush1.bf16.msra.mxu0 0
  %124 = vmatprep.subr.bf16.mxu0 0
  %125 = vmatpush1.bf16.msra.mxu0 0
  %126 = vmatprep.subr.bf16.mxu0 0
  %127 = vmatpush1.bf16.msra.mxu0 0
  %128 = vmatprep.subr.bf16.mxu0 0
  %129 = vmatpush1.bf16.msra.mxu0 0
  %130 = vmatprep.mubr.bf16.mxu0 0
  %131 = vmatmul.mubr.bf16.gmra.mrb[0].mxu0 %v96
  %v132 = vpop.f32.mrb[0].mxu0
  %v133 = vadd.f32 %v86, %v132
  %v134 = vpop.f32.mrb[0].mxu0
  %v135 = vpop.f32.mrb[0].mxu0
  %v136 = vpop.f32.mrb[0].mxu0
  %137 = vdwg.mxu0
  %v138 = vpack.c.bf16 %v77, %v77
  %v140 = vsel %vm94, %v138, 0
  %142 = vmatprep.subr.bf16.mxu0 0
  %143 = vmatpush1.bf16.msra.mxu0 %v92
  %144 = vmatprep.subr.bf16.mxu0 0
  %145 = vmatpush1.bf16.msra.mxu0 0
  %146 = vmatprep.subr.bf16.mxu0 0
  %147 = vmatpush1.bf16.msra.mxu0 0
  %148 = vmatprep.subr.bf16.mxu0 0
  %149 = vmatpush1.bf16.msra.mxu0 0
  %150 = vmatprep.subr.bf16.mxu0 0
  %151 = vmatpush1.bf16.msra.mxu0 0
  %152 = vmatprep.subr.bf16.mxu0 0
  %153 = vmatpush1.bf16.msra.mxu0 0
  %154 = vmatprep.subr.bf16.mxu0 0
  %155 = vmatpush1.bf16.msra.mxu0 0
  %156 = vmatprep.subr.bf16.mxu0 0
  %157 = vmatpush1.bf16.msra.mxu0 0
  %158 = vmatprep.subr.bf16.mxu0 0
  %159 = vmatpush1.bf16.msra.mxu0 0
  %160 = vmatprep.subr.bf16.mxu0 0
  %161 = vmatpush1.bf16.msra.mxu0 0
  %162 = vmatprep.subr.bf16.mxu0 0
  %163 = vmatpush1.bf16.msra.mxu0 0
  %164 = vmatprep.subr.bf16.mxu0 0
  %165 = vmatpush1.bf16.msra.mxu0 0
  %166 = vmatprep.subr.bf16.mxu0 0
  %167 = vmatpush1.bf16.msra.mxu0 0
  %168 = vmatprep.subr.bf16.mxu0 0
  %169 = vmatpush1.bf16.msra.mxu0 0
  %170 = vmatprep.subr.bf16.mxu0 0
  %171 = vmatpush1.bf16.msra.mxu0 0
  %172 = vmatprep.subr.bf16.mxu0 0
  %173 = vmatpush1.bf16.msra.mxu0 0
  %174 = vmatprep.mubr.bf16.mxu0 0
  %175 = vmatmul.mubr.bf16.gmra.mrb[0].mxu0 %v140
  %v176 = vpop.f32.mrb[0].mxu0
  %v177 = vadd.f32 %v86, %v176
  %v178 = vpop.f32.mrb[0].mxu0
  %v179 = vpop.f32.mrb[0].mxu0
  %v180 = vpop.f32.mrb[0].mxu0
  %181 = vdwg.mxu0
  %v182 = vld [vmem:[%s4] sm:$0x1]
  %v183 = vld [vmem:[%s5] sm:$0x1]
  %vm184 = vcmask 261120
  %v185 = vsel %vm184, %v133, 0.0
  %v186 = vrot.slane %v185, 4
  %v187 = vadd.f32 %v185, %v186
  %v188 = vrot.slane %v187, 2
  %v189 = vadd.f32 %v187, %v188
  %v190 = vrot.slane %v189, 1
  %v191 = vadd.f32 %v189, %v190
  %v192 = vadd.f32 %v191, 0.0
  %v193 = vsel %vm184, %v177, 0.0
  %v194 = vrot.slane %v193, 4
  %v195 = vadd.f32 %v193, %v194
  %v196 = vrot.slane %v195, 2
  %v197 = vadd.f32 %v195, %v196
  %v198 = vrot.slane %v197, 1
  %v199 = vadd.f32 %v197, %v198
  %v200 = vadd.f32 %v192, %v199
  %v201 = vrcp.pop 16.0
  %v202 = vmul.f32 %v200, %v201
  %v203 = vsub.f32 %v133, %v202
  %v204 = vmul.f32 %v203, %v203
  %v205 = vsel %vm184, %v204, 0.0
  %v206 = vrot.slane %v205, 4
  %v207 = vadd.f32 %v205, %v206
  %v208 = vrot.slane %v207, 2
  %v209 = vadd.f32 %v207, %v208
  %v210 = vrot.slane %v209, 1
  %v211 = vadd.f32 %v209, %v210
  %v212 = vadd.f32 %v211, 0.0
  %v213 = vsub.f32 %v177, %v202
  %v214 = vmul.f32 %v213, %v213
  %v215 = vsel %vm184, %v214, 0.0
  %v216 = vrot.slane %v215, 4
  %v217 = vadd.f32 %v215, %v216
  %v218 = vrot.slane %v217, 2
  %v219 = vadd.f32 %v217, %v218
  %v220 = vrot.slane %v219, 1
  %v221 = vadd.f32 %v219, %v220
  %v222 = vadd.f32 %v212, %v221
  %v223 = vmul.f32 %v222, %v201
  %v224 = vadd.f32 %v223, 1e-05
  %v225 = vrsqrt.pop %v224
  %v226 = vmul.f32 %v203, %v225
  %v228 = vlaneseq
  %v229 = vshrl.u32 %v228, 7
  %v230 = vsub.s32 0, %v229
  %v231 = vrot.slane %v182, %v230
  %v233 = vmul.f32 %v226, %v231
  %v235 = vlaneseq
  %v236 = vshrl.u32 %v235, 7
  %v237 = vsub.s32 0, %v236
  %v238 = vrot.slane %v183, %v237
  %v240 = vadd.f32 %v233, %v238
  %v241 = vmul.f32 %v213, %v225
  %v242 = vmul.f32 %v241, %v231
  %v243 = vadd.f32 %v242, %v238
  %v244 = vxor.u32 %v240, 2147483648
  %v245 = vmul.f32 %v244, 1.442695
  %v246 = vpow.pop %v245
  %v247 = vadd.f32 %v246, 1.0
  %v248 = vrcp.pop %v247
  %v249 = vmul.f32 1.0, %v248
  %251 = vrot.lane.b32.xlu0 %v249, 112
  %v252 = vpop.permute.xlu0 %251
  %v254 = vmul.f32 %v240, %v252
  %v255 = vxor.u32 %v243, 2147483648
  %v256 = vmul.f32 %v255, 1.442695
  %v257 = vpow.pop %v256
  %v258 = vadd.f32 %v257, 1.0
  %v259 = vrcp.pop %v258
  %v260 = vmul.f32 1.0, %v259
  %262 = vrot.lane.b32.xlu0 %v260, 112
  %v263 = vpop.permute.xlu0 %262
  %v265 = vmul.f32 %v243, %v263
  %266 = vst.msk [vmem:[#allocation2] sm:$0xff] %vm94, 0.0
  %vm267 = vcmask 129024
  %268 = vst.msk [vmem:[#allocation2 + $0x8] sm:$0x7f] %vm267, 0.0
  %269 = vst.msk [vmem:[#allocation2 + $0x17] sm:$0xff] %vm94, 0.0
  %270 = vst.msk [vmem:[#allocation2 + $0x1f] sm:$0x7f] %vm267, 0.0
  %271 = vst.msk [vmem:[#allocation2 + $0xf] sm:$0xff] %vm94, %v254
  loop: start=0, step=1, limit=31
  $region82: #{manner_block_fwd.12} parent=0 // loop_pre_header
    _
  $region83: #{manner_block_fwd.12} parent=0 // loop_header
    %s273 = sphi 0, %s277
    %p274 = scmp.ge.s32.totalorder %s273, 31
    %v278 = vphi 0.0, %v288
  $region84: #{manner_block_fwd.12} parent=0 // loop_header_branch
    %276 = sbr.rel (%p274) target = $region88
  $region85: #{manner_block_fwd.12} parent=0 // loop_body
    %s279 = scalar_lea.vmem [#allocation2], %s273
    %v280 = vld [vmem:[%s279] sm:$0xff]
    %s281 = scalar_lea.vmem %s6, %s273
    %v282 = vld [vmem:[%s281] sm:$0x1]
    %v283 = vlaneseq
    %v284 = vshrl.u32 %v283, 7
    %v285 = vsub.s32 0, %v284
    %v286 = vrot.slane %v282, %v285
    %v287 = vmul.f32 %v280, %v286
    %v288 = vadd.f32 %v278, %v287
  $region86: #{manner_block_fwd.12} parent=0 // loop_footer
    %s277 = sadd.s32 1, %s273
  $region87: #{manner_block_fwd.12} parent=0 // loop_footer_branch
    %272 = sbr.rel target = $region83
  $region88: #{manner_block_fwd.12} parent=0 // loop_exit
    _
  %v289 = vld [vmem:[%s7] sm:$0x1]
  %v291 = vlaneseq
  %v292 = vshrl.u32 %v291, 7
  %v293 = vsub.s32 0, %v292
  %v294 = vrot.slane %v289, %v293
  %v296 = vadd.f32 %v278, %v294
  %s297 = scalar_lea.vmem [#allocation2], 40
  %298 = vst.msk [vmem:[%s297] sm:$0xff] %vm94, 0.0
  %299 = vst.msk [vmem:[%s297 + $0x8] sm:$0x7f] %vm267, 0.0
  %300 = vst.msk [vmem:[%s297 + $0x17] sm:$0xff] %vm94, 0.0
  %301 = vst.msk [vmem:[%s297 + $0x1f] sm:$0x7f] %vm267, 0.0
  %302 = vst.msk [vmem:[%s297 + $0xf] sm:$0xff] %vm94, %v265
  loop: start=0, step=1, limit=31
  $region89: #{manner_block_fwd.12} parent=0 // loop_pre_header
    _
  $region90: #{manner_block_fwd.12} parent=0 // loop_header
    %s304 = sphi 0, %s308
    %p305 = scmp.ge.s32.totalorder %s304, 31
    %v309 = vphi 0.0, %v320
  $region91: #{manner_block_fwd.12} parent=0 // loop_header_branch
    %307 = sbr.rel (%p305) target = $region95
  $region92: #{manner_block_fwd.12} parent=0 // loop_body
    %s310 = sadd.s32 %s304, 40
    %s311 = scalar_lea.vmem [#allocation2], %s310
    %v312 = vld [vmem:[%s311] sm:$0xff]
    %s313 = scalar_lea.vmem %s6, %s304
    %v314 = vld [vmem:[%s313] sm:$0x1]
    %v315 = vlaneseq
    %v316 = vshrl.u32 %v315, 7
    %v317 = vsub.s32 0, %v316
    %v318 = vrot.slane %v314, %v317
    %v319 = vmul.f32 %v312, %v318
    %v320 = vadd.f32 %v309, %v319
  $region93: #{manner_block_fwd.12} parent=0 // loop_footer
    %s308 = sadd.s32 1, %s304
  $region94: #{manner_block_fwd.12} parent=0 // loop_footer_branch
    %303 = sbr.rel target = $region90
  $region95: #{manner_block_fwd.12} parent=0 // loop_exit
    _
  %v321 = vld [vmem:[%s7] sm:$0x1]
  %v323 = vlaneseq
  %v324 = vshrl.u32 %v323, 7
  %v325 = vsub.s32 0, %v324
  %v326 = vrot.slane %v321, %v325
  %v328 = vadd.f32 %v309, %v326
  %v329 = vld [vmem:[%s8] sm:$0x1]
  %v330 = vld [vmem:[%s9] sm:$0x1]
  %v331 = vsel %vm94, %v296, 0.0
  %v332 = vrot.slane %v331, 4
  %v333 = vadd.f32 %v331, %v332
  %v334 = vrot.slane %v333, 2
  %v335 = vadd.f32 %v333, %v334
  %v336 = vrot.slane %v335, 1
  %v337 = vadd.f32 %v335, %v336
  %v338 = vadd.f32 %v337, 0.0
  %v339 = vsel %vm94, %v328, 0.0
  %v340 = vrot.slane %v339, 4
  %v341 = vadd.f32 %v339, %v340
  %v342 = vrot.slane %v341, 2
  %v343 = vadd.f32 %v341, %v342
  %v344 = vrot.slane %v343, 1
  %v345 = vadd.f32 %v343, %v344
  %v346 = vadd.f32 %v338, %v345
  %v347 = vmul.f32 %v346, %v201
  %v348 = vsub.f32 %v296, %v347
  %v349 = vmul.f32 %v348, %v348
  %v350 = vsel %vm94, %v349, 0.0
  %v351 = vrot.slane %v350, 4
  %v352 = vadd.f32 %v350, %v351
  %v353 = vrot.slane %v352, 2
  %v354 = vadd.f32 %v352, %v353
  %v355 = vrot.slane %v354, 1
  %v356 = vadd.f32 %v354, %v355
  %v357 = vadd.f32 %v356, 0.0
  %v358 = vsub.f32 %v328, %v347
  %v359 = vmul.f32 %v358, %v358
  %v360 = vsel %vm94, %v359, 0.0
  %v361 = vrot.slane %v360, 4
  %v362 = vadd.f32 %v360, %v361
  %v363 = vrot.slane %v362, 2
  %v364 = vadd.f32 %v362, %v363
  %v365 = vrot.slane %v364, 1
  %v366 = vadd.f32 %v364, %v365
  %v367 = vadd.f32 %v357, %v366
  %v368 = vmul.f32 %v367, %v201
  %v369 = vadd.f32 %v368, 1e-05
  %v370 = vrsqrt.pop %v369
  %v371 = vmul.f32 %v348, %v370
  %v373 = vlaneseq
  %v374 = vshrl.u32 %v373, 7
  %v375 = vsub.s32 0, %v374
  %v376 = vrot.slane %v329, %v375
  %v378 = vmul.f32 %v371, %v376
  %v380 = vlaneseq
  %v381 = vshrl.u32 %v380, 7
  %v382 = vsub.s32 0, %v381
  %v383 = vrot.slane %v330, %v382
  %v385 = vadd.f32 %v378, %v383
  %v386 = vmul.f32 %v358, %v370
  %v387 = vmul.f32 %v386, %v376
  %v388 = vadd.f32 %v387, %v383
  %v389 = vxor.u32 %v385, 2147483648
  %v390 = vmul.f32 %v389, 1.442695
  %v391 = vpow.pop %v390
  %v392 = vadd.f32 %v391, 1.0
  %v393 = vrcp.pop %v392
  %v394 = vmul.f32 1.0, %v393
  %v395 = vmul.f32 %v385, %v394
  %v396 = vxor.u32 %v388, 2147483648
  %v397 = vmul.f32 %v396, 1.442695
  %v398 = vpow.pop %v397
  %v399 = vadd.f32 %v398, 1.0
  %v400 = vrcp.pop %v399
  %v401 = vmul.f32 1.0, %v400
  %v402 = vmul.f32 %v388, %v401
  %v403 = vld [vmem:[%s10] sm:$0xf]
  %v404 = vld [vmem:[%s10 + $0x4] sm:$0xf]
  %v405 = vpack.c.bf16 %v395, %v395
  %v406 = vld [vmem:[%s11] sm:$0x1]
  %v408 = vlaneseq
  %v409 = vshrl.u32 %v408, 7
  %v410 = vsub.s32 0, %v409
  %v411 = vrot.slane %v406, %v410
  %v415 = vunpack.c.l.b16 %v403
  %v416 = vunpack.c.l.b16 %v404
  %v417 = vpack.c.b16 %v416, %v415
  %v420 = vsel %vm94, %v405, 0
  %422 = vmatprep.subr.bf16.mxu0 0
  %423 = vmatpush1.bf16.msra.mxu0 %v417
  %424 = vmatprep.subr.bf16.mxu0 0
  %425 = vmatpush1.bf16.msra.mxu0 0
  %426 = vmatprep.subr.bf16.mxu0 0
  %427 = vmatpush1.bf16.msra.mxu0 0
  %428 = vmatprep.subr.bf16.mxu0 0
  %429 = vmatpush1.bf16.msra.mxu0 0
  %430 = vmatprep.subr.bf16.mxu0 0
  %431 = vmatpush1.bf16.msra.mxu0 0
  %432 = vmatprep.subr.bf16.mxu0 0
  %433 = vmatpush1.bf16.msra.mxu0 0
  %434 = vmatprep.subr.bf16.mxu0 0
  %435 = vmatpush1.bf16.msra.mxu0 0
  %436 = vmatprep.subr.bf16.mxu0 0
  %437 = vmatpush1.bf16.msra.mxu0 0
  %438 = vmatprep.subr.bf16.mxu0 0
  %439 = vmatpush1.bf16.msra.mxu0 0
  %440 = vmatprep.subr.bf16.mxu0 0
  %441 = vmatpush1.bf16.msra.mxu0 0
  %442 = vmatprep.subr.bf16.mxu0 0
  %443 = vmatpush1.bf16.msra.mxu0 0
  %444 = vmatprep.subr.bf16.mxu0 0
  %445 = vmatpush1.bf16.msra.mxu0 0
  %446 = vmatprep.subr.bf16.mxu0 0
  %447 = vmatpush1.bf16.msra.mxu0 0
  %448 = vmatprep.subr.bf16.mxu0 0
  %449 = vmatpush1.bf16.msra.mxu0 0
  %450 = vmatprep.subr.bf16.mxu0 0
  %451 = vmatpush1.bf16.msra.mxu0 0
  %452 = vmatprep.subr.bf16.mxu0 0
  %453 = vmatpush1.bf16.msra.mxu0 0
  %454 = vmatprep.mubr.bf16.mxu0 0
  %455 = vmatmul.mubr.bf16.gmra.mrb[0].mxu0 %v420
  %v456 = vpop.f32.mrb[0].mxu0
  %v457 = vadd.f32 %v411, %v456
  %v458 = vpop.f32.mrb[0].mxu0
  %v459 = vpop.f32.mrb[0].mxu0
  %v460 = vpop.f32.mrb[0].mxu0
  %461 = vdwg.mxu0
  %v462 = vpack.c.bf16 %v402, %v402
  %v464 = vsel %vm94, %v462, 0
  %466 = vmatprep.subr.bf16.mxu0 0
  %467 = vmatpush1.bf16.msra.mxu0 %v417
  %468 = vmatprep.subr.bf16.mxu0 0
  %469 = vmatpush1.bf16.msra.mxu0 0
  %470 = vmatprep.subr.bf16.mxu0 0
  %471 = vmatpush1.bf16.msra.mxu0 0
  %472 = vmatprep.subr.bf16.mxu0 0
  %473 = vmatpush1.bf16.msra.mxu0 0
  %474 = vmatprep.subr.bf16.mxu0 0
  %475 = vmatpush1.bf16.msra.mxu0 0
  %476 = vmatprep.subr.bf16.mxu0 0
  %477 = vmatpush1.bf16.msra.mxu0 0
  %478 = vmatprep.subr.bf16.mxu0 0
  %479 = vmatpush1.bf16.msra.mxu0 0
  %480 = vmatprep.subr.bf16.mxu0 0
  %481 = vmatpush1.bf16.msra.mxu0 0
  %482 = vmatprep.subr.bf16.mxu0 0
  %483 = vmatpush1.bf16.msra.mxu0 0
  %484 = vmatprep.subr.bf16.mxu0 0
  %485 = vmatpush1.bf16.msra.mxu0 0
  %486 = vmatprep.subr.bf16.mxu0 0
  %487 = vmatpush1.bf16.msra.mxu0 0
  %488 = vmatprep.subr.bf16.mxu0 0
  %489 = vmatpush1.bf16.msra.mxu0 0
  %490 = vmatprep.subr.bf16.mxu0 0
  %491 = vmatpush1.bf16.msra.mxu0 0
  %492 = vmatprep.subr.bf16.mxu0 0
  %493 = vmatpush1.bf16.msra.mxu0 0
  %494 = vmatprep.subr.bf16.mxu0 0
  %495 = vmatpush1.bf16.msra.mxu0 0
  %496 = vmatprep.subr.bf16.mxu0 0
  %497 = vmatpush1.bf16.msra.mxu0 0
  %498 = vmatprep.mubr.bf16.mxu0 0
  %499 = vmatmul.mubr.bf16.gmra.mrb[0].mxu0 %v464
  %v500 = vpop.f32.mrb[0].mxu0
  %v501 = vadd.f32 %v411, %v500
  %v502 = vpop.f32.mrb[0].mxu0
  %v503 = vpop.f32.mrb[0].mxu0
  %v504 = vpop.f32.mrb[0].mxu0
  %505 = vdwg.mxu0
  %v506 = vld [vmem:[%s12] sm:$0x1]
  %v507 = vld [vmem:[%s13] sm:$0x1]
  %vm508 = vcmask 64512
  %v509 = vsel %vm508, %v457, 0.0
  %v510 = vrot.slane %v509, 4
  %v511 = vadd.f32 %v509, %v510
  %v512 = vrot.slane %v511, 2
  %v513 = vadd.f32 %v511, %v512
  %v514 = vrot.slane %v513, 1
  %v515 = vadd.f32 %v513, %v514
  %v516 = vadd.f32 %v515, 0.0
  %v517 = vsel %vm508, %v501, 0.0
  %v518 = vrot.slane %v517, 4
  %v519 = vadd.f32 %v517, %v518
  %v520 = vrot.slane %v519, 2
  %v521 = vadd.f32 %v519, %v520
  %v522 = vrot.slane %v521, 1
  %v523 = vadd.f32 %v521, %v522
  %v524 = vadd.f32 %v516, %v523
  %v525 = vmul.f32 %v524, %v201
  %v526 = vsub.f32 %v457, %v525
  %v527 = vmul.f32 %v526, %v526
  %v528 = vsel %vm508, %v527, 0.0
  %v529 = vrot.slane %v528, 4
  %v530 = vadd.f32 %v528, %v529
  %v531 = vrot.slane %v530, 2
  %v532 = vadd.f32 %v530, %v531
  %v533 = vrot.slane %v532, 1
  %v534 = vadd.f32 %v532, %v533
  %v535 = vadd.f32 %v534, 0.0
  %v536 = vsub.f32 %v501, %v525
  %v537 = vmul.f32 %v536, %v536
  %v538 = vsel %vm508, %v537, 0.0
  %v539 = vrot.slane %v538, 4
  %v540 = vadd.f32 %v538, %v539
  %v541 = vrot.slane %v540, 2
  %v542 = vadd.f32 %v540, %v541
  %v543 = vrot.slane %v542, 1
  %v544 = vadd.f32 %v542, %v543
  %v545 = vadd.f32 %v535, %v544
  %v546 = vmul.f32 %v545, %v201
  %v547 = vadd.f32 %v546, 1e-05
  %v548 = vrsqrt.pop %v547
  %v549 = vmul.f32 %v526, %v548
  %v551 = vlaneseq
  %v552 = vshrl.u32 %v551, 7
  %v553 = vsub.s32 0, %v552
  %v554 = vrot.slane %v506, %v553
  %v556 = vmul.f32 %v549, %v554
  %v558 = vlaneseq
  %v559 = vshrl.u32 %v558, 7
  %v560 = vsub.s32 0, %v559
  %v561 = vrot.slane %v507, %v560
  %v563 = vadd.f32 %v556, %v561
  %v564 = vmul.f32 %v536, %v548
  %v565 = vmul.f32 %v564, %v554
  %v566 = vadd.f32 %v565, %v561
  %v567 = vxor.u32 %v563, 2147483648
  %v568 = vmul.f32 %v567, 1.442695
  %v569 = vpow.pop %v568
  %v570 = vadd.f32 %v569, 1.0
  %v571 = vrcp.pop %v570
  %v572 = vmul.f32 1.0, %v571
  %v573 = vmul.f32 %v563, %v572
  %v574 = vxor.u32 %v566, 2147483648
  %v575 = vmul.f32 %v574, 1.442695
  %v576 = vpow.pop %v575
  %v577 = vadd.f32 %v576, 1.0
  %v578 = vrcp.pop %v577
  %v579 = vmul.f32 1.0, %v578
  %v580 = vmul.f32 %v566, %v579
  %v581 = vld [vmem:[%s14] sm:$0xf]
  %v582 = vld [vmem:[%s14 + $0x4] sm:$0xf]
  %v585 = vunpack.c.l.b16 %v581
  %v586 = vunpack.c.l.b16 %v582
  %v587 = vpack.c.b16 %v586, %v585
  %589 = vmatprep.subr.bf16.mxu0 0
  %590 = vmatpush1.bf16.msra.mxu0 %v587
  %591 = vmatprep.subr.bf16.mxu0 0
  %592 = vmatpush1.bf16.msra.mxu0 0
  %593 = vmatprep.subr.bf16.mxu0 0
  %594 = vmatpush1.bf16.msra.mxu0 0
  %595 = vmatprep.subr.bf16.mxu0 0
  %596 = vmatpush1.bf16.msra.mxu0 0
  %597 = vmatprep.subr.bf16.mxu0 0
  %598 = vmatpush1.bf16.msra.mxu0 0
  %599 = vmatprep.subr.bf16.mxu0 0
  %600 = vmatpush1.bf16.msra.mxu0 0
  %601 = vmatprep.subr.bf16.mxu0 0
  %602 = vmatpush1.bf16.msra.mxu0 0
  %603 = vmatprep.subr.bf16.mxu0 0
  %604 = vmatpush1.bf16.msra.mxu0 0
  %605 = vmatprep.subr.bf16.mxu0 0
  %606 = vmatpush1.bf16.msra.mxu0 0
  %607 = vmatprep.subr.bf16.mxu0 0
  %608 = vmatpush1.bf16.msra.mxu0 0
  %609 = vmatprep.subr.bf16.mxu0 0
  %610 = vmatpush1.bf16.msra.mxu0 0
  %611 = vmatprep.subr.bf16.mxu0 0
  %612 = vmatpush1.bf16.msra.mxu0 0
  %613 = vmatprep.subr.bf16.mxu0 0
  %614 = vmatpush1.bf16.msra.mxu0 0
  %615 = vmatprep.subr.bf16.mxu0 0
  %616 = vmatpush1.bf16.msra.mxu0 0
  %617 = vmatprep.subr.bf16.mxu0 0
  %618 = vmatpush1.bf16.msra.mxu0 0
  %619 = vmatprep.subr.bf16.mxu0 0
  %620 = vmatpush1.bf16.msra.mxu0 0
  %621 = vmatprep.mubr.bf16.mxu0 0
  %622 = vmatmul.mubr.bf16.gmra.mrb[0].mxu0 %v96
  %v623 = vpop.f32.mrb[0].mxu0
  %v624 = vadd.f32 0.0, %v623
  %v625 = vpop.f32.mrb[0].mxu0
  %v626 = vpop.f32.mrb[0].mxu0
  %v627 = vpop.f32.mrb[0].mxu0
  %628 = vdwg.mxu0
  %v629 = vadd.f32 %v573, %v624
  %v630 = vld [vmem:[%s15] sm:$0x1]
  %v632 = vlaneseq
  %v633 = vshrl.u32 %v632, 7
  %v634 = vsub.s32 0, %v633
  %v635 = vrot.slane %v630, %v634
  %v637 = vadd.f32 %v629, %v635
  %638 = vmatprep.subr.bf16.mxu0 0
  %639 = vmatpush1.bf16.msra.mxu0 %v587
  %640 = vmatprep.subr.bf16.mxu0 0
  %641 = vmatpush1.bf16.msra.mxu0 0
  %642 = vmatprep.subr.bf16.mxu0 0
  %643 = vmatpush1.bf16.msra.mxu0 0
  %644 = vmatprep.subr.bf16.mxu0 0
  %645 = vmatpush1.bf16.msra.mxu0 0
  %646 = vmatprep.subr.bf16.mxu0 0
  %647 = vmatpush1.bf16.msra.mxu0 0
  %648 = vmatprep.subr.bf16.mxu0 0
  %649 = vmatpush1.bf16.msra.mxu0 0
  %650 = vmatprep.subr.bf16.mxu0 0
  %651 = vmatpush1.bf16.msra.mxu0 0
  %652 = vmatprep.subr.bf16.mxu0 0
  %653 = vmatpush1.bf16.msra.mxu0 0
  %654 = vmatprep.subr.bf16.mxu0 0
  %655 = vmatpush1.bf16.msra.mxu0 0
  %656 = vmatprep.subr.bf16.mxu0 0
  %657 = vmatpush1.bf16.msra.mxu0 0
  %658 = vmatprep.subr.bf16.mxu0 0
  %659 = vmatpush1.bf16.msra.mxu0 0
  %660 = vmatprep.subr.bf16.mxu0 0
  %661 = vmatpush1.bf16.msra.mxu0 0
  %662 = vmatprep.subr.bf16.mxu0 0
  %663 = vmatpush1.bf16.msra.mxu0 0
  %664 = vmatprep.subr.bf16.mxu0 0
  %665 = vmatpush1.bf16.msra.mxu0 0
  %666 = vmatprep.subr.bf16.mxu0 0
  %667 = vmatpush1.bf16.msra.mxu0 0
  %668 = vmatprep.subr.bf16.mxu0 0
  %669 = vmatpush1.bf16.msra.mxu0 0
  %670 = vmatprep.mubr.bf16.mxu0 0
  %671 = vmatmul.mubr.bf16.gmra.mrb[0].mxu0 %v140
  %v672 = vpop.f32.mrb[0].mxu0
  %v673 = vadd.f32 0.0, %v672
  %v674 = vpop.f32.mrb[0].mxu0
  %v675 = vpop.f32.mrb[0].mxu0
  %v676 = vpop.f32.mrb[0].mxu0
  %677 = vdwg.mxu0
  %v678 = vadd.f32 %v580, %v673
  %v679 = vadd.f32 %v678, %v635
  %vm680 = vcmask 57344
  %681 = vst.msk [vmem:[#allocation3] sm:$0x1] %vm680, 0.0
  %682 = vst.msk [vmem:[#allocation3 + $0x9] sm:$0x1] %vm680, 0.0
  %683 = vst.msk [vmem:[#allocation3 + $0x1] sm:$0xff] %vm508, %v637
  %v684 = vld [vmem:[#allocation3 + $0x1] sm:$0xff]
  %v685 = vld [vmem:[#allocation3 + $0x9] sm:$0x1]
  %v686 = vld [vmem:[#allocation3] sm:$0xff]
  %v687 = vld [vmem:[#allocation3 + $0x8] sm:$0x1]
  %690 = vrot.lane.b32.xlu0 %v686, 8
  %v691 = vpop.permute.xlu0 %690
  %692 = vrot.lane.b32.xlu0 %v687, 8
  %v693 = vpop.permute.xlu0 %692
  %v696 = vsel %vm508, %v684, %v691
  %v697 = vsel %vm508, %v685, %v693
  %v698 = vld [vmem:[%s16] sm:$0xf]
  %v699 = vld [vmem:[%s16 + $0x4] sm:$0xf]
  %v700 = vpack.c.bf16 %v697, %v696
  %v701 = vld [vmem:[%s17] sm:$0x1]
  %v703 = vlaneseq
  %v704 = vshrl.u32 %v703, 7
  %v705 = vsub.s32 0, %v704
  %v706 = vrot.slane %v701, %v705
  %v710 = vunpack.c.l.b16 %v698
  %v711 = vunpack.c.l.b16 %v699
  %v712 = vpack.c.b16 %v711, %v710
  %v715 = vsel %vm94, %v700, 0
  %717 = vmatprep.subr.bf16.mxu0 0
  %718 = vmatpush1.bf16.msra.mxu0 %v712
  %719 = vmatprep.subr.bf16.mxu0 0
  %720 = vmatpush1.bf16.msra.mxu0 0
  %721 = vmatprep.subr.bf16.mxu0 0
  %722 = vmatpush1.bf16.msra.mxu0 0
  %723 = vmatprep.subr.bf16.mxu0 0
  %724 = vmatpush1.bf16.msra.mxu0 0
  %725 = vmatprep.subr.bf16.mxu0 0
  %726 = vmatpush1.bf16.msra.mxu0 0
  %727 = vmatprep.subr.bf16.mxu0 0
  %728 = vmatpush1.bf16.msra.mxu0 0
  %729 = vmatprep.subr.bf16.mxu0 0
  %730 = vmatpush1.bf16.msra.mxu0 0
  %731 = vmatprep.subr.bf16.mxu0 0
  %732 = vmatpush1.bf16.msra.mxu0 0
  %733 = vmatprep.subr.bf16.mxu0 0
  %734 = vmatpush1.bf16.msra.mxu0 0
  %735 = vmatprep.subr.bf16.mxu0 0
  %736 = vmatpush1.bf16.msra.mxu0 0
  %737 = vmatprep.subr.bf16.mxu0 0
  %738 = vmatpush1.bf16.msra.mxu0 0
  %739 = vmatprep.subr.bf16.mxu0 0
  %740 = vmatpush1.bf16.msra.mxu0 0
  %741 = vmatprep.subr.bf16.mxu0 0
  %742 = vmatpush1.bf16.msra.mxu0 0
  %743 = vmatprep.subr.bf16.mxu0 0
  %744 = vmatpush1.bf16.msra.mxu0 0
  %745 = vmatprep.subr.bf16.mxu0 0
  %746 = vmatpush1.bf16.msra.mxu0 0
  %747 = vmatprep.subr.bf16.mxu0 0
  %748 = vmatpush1.bf16.msra.mxu0 0
  %749 = vmatprep.mubr.bf16.mxu0 0
  %750 = vmatmul.mubr.bf16.gmra.mrb[0].mxu0 %v715
  %v751 = vpop.f32.mrb[0].mxu0
  %v752 = vadd.f32 %v706, %v751
  %v753 = vpop.f32.mrb[0].mxu0
  %v754 = vpop.f32.mrb[0].mxu0
  %v755 = vadd.f32 %v706, %v754
  %v756 = vpop.f32.mrb[0].mxu0
  %757 = vdwg.mxu0
  %s758 = scalar_lea.vmem [#allocation3], 16
  %759 = vst.msk [vmem:[%s758] sm:$0x1] %vm680, 0.0
  %760 = vst.msk [vmem:[%s758 + $0x9] sm:$0x1] %vm680, 0.0
  %761 = vst.msk [vmem:[%s758 + $0x1] sm:$0xff] %vm508, %v679
  %v762 = vld [vmem:[%s758 + $0x1] sm:$0xff]
  %v763 = vld [vmem:[%s758 + $0x9] sm:$0x1]
  %v764 = vld [vmem:[%s758] sm:$0xff]
  %v765 = vld [vmem:[%s758 + $0x8] sm:$0x1]
  %768 = vrot.lane.b32.xlu0 %v764, 8
  %v769 = vpop.permute.xlu0 %768
  %770 = vrot.lane.b32.xlu0 %v765, 8
  %v771 = vpop.permute.xlu0 %770
  %v774 = vsel %vm508, %v762, %v769
  %v775 = vsel %vm508, %v763, %v771
  %v776 = vld [vmem:[%s16] sm:$0xf]
  %v777 = vld [vmem:[%s16 + $0x4] sm:$0xf]
  %v778 = vpack.c.bf16 %v775, %v774
  %v779 = vld [vmem:[%s17] sm:$0x1]
  %v781 = vlaneseq
  %v782 = vshrl.u32 %v781, 7
  %v783 = vsub.s32 0, %v782
  %v784 = vrot.slane %v779, %v783
  %v788 = vunpack.c.l.b16 %v776
  %v789 = vunpack.c.l.b16 %v777
  %v790 = vpack.c.b16 %v789, %v788
  %v793 = vsel %vm94, %v778, 0
  %795 = vmatprep.subr.bf16.mxu0 0
  %796 = vmatpush1.bf16.msra.mxu0 %v790
  %797 = vmatprep.subr.bf16.mxu0 0
  %798 = vmatpush1.bf16.msra.mxu0 0
  %799 = vmatprep.subr.bf16.mxu0 0
  %800 = vmatpush1.bf16.msra.mxu0 0
  %801 = vmatprep.subr.bf16.mxu0 0
  %802 = vmatpush1.bf16.msra.mxu0 0
  %803 = vmatprep.subr.bf16.mxu0 0
  %804 = vmatpush1.bf16.msra.mxu0 0
  %805 = vmatprep.subr.bf16.mxu0 0
  %806 = vmatpush1.bf16.msra.mxu0 0
  %807 = vmatprep.subr.bf16.mxu0 0
  %808 = vmatpush1.bf16.msra.mxu0 0
  %809 = vmatprep.subr.bf16.mxu0 0
  %810 = vmatpush1.bf16.msra.mxu0 0
  %811 = vmatprep.subr.bf16.mxu0 0
  %812 = vmatpush1.bf16.msra.mxu0 0
  %813 = vmatprep.subr.bf16.mxu0 0
  %814 = vmatpush1.bf16.msra.mxu0 0
  %815 = vmatprep.subr.bf16.mxu0 0
  %816 = vmatpush1.bf16.msra.mxu0 0
  %817 = vmatprep.subr.bf16.mxu0 0
  %818 = vmatpush1.bf16.msra.mxu0 0
  %819 = vmatprep.subr.bf16.mxu0 0
  %820 = vmatpush1.bf16.msra.mxu0 0
  %821 = vmatprep.subr.bf16.mxu0 0
  %822 = vmatpush1.bf16.msra.mxu0 0
  %823 = vmatprep.subr.bf16.mxu0 0
  %824 = vmatpush1.bf16.msra.mxu0 0
  %825 = vmatprep.subr.bf16.mxu0 0
  %826 = vmatpush1.bf16.msra.mxu0 0
  %827 = vmatprep.mubr.bf16.mxu0 0
  %828 = vmatmul.mubr.bf16.gmra.mrb[0].mxu0 %v793
  %v829 = vpop.f32.mrb[0].mxu0
  %v830 = vadd.f32 %v784, %v829
  %v831 = vpop.f32.mrb[0].mxu0
  %v832 = vpop.f32.mrb[0].mxu0
  %v833 = vadd.f32 %v784, %v832
  %v834 = vpop.f32.mrb[0].mxu0
  %835 = vdwg.mxu0
  %v836 = vsel %vm94, %v752, 0.0
  %vm837 = vcmask 122880
  %v838 = vsel %vm837, %v755, 0.0
  %v839 = vadd.f32 %v836, %v838
  %v840 = vrot.slane %v839, 4
  %v841 = vadd.f32 %v839, %v840
  %v842 = vrot.slane %v841, 2
  %v843 = vadd.f32 %v841, %v842
  %v844 = vrot.slane %v843, 1
  %v845 = vadd.f32 %v843, %v844
  %v846 = vadd.f32 %v845, 0.0
  %v847 = vsel %vm94, %v830, 0.0
  %v848 = vsel %vm837, %v833, 0.0
  %v849 = vadd.f32 %v847, %v848
  %v850 = vrot.slane %v849, 4
  %v851 = vadd.f32 %v849, %v850
  %v852 = vrot.slane %v851, 2
  %v853 = vadd.f32 %v851, %v852
  %v854 = vrot.slane %v853, 1
  %v855 = vadd.f32 %v853, %v854
  %v856 = vadd.f32 %v846, %v855
  %v857 = vadd.f32 %v856, 0.0
  %859 = vrot.lane.b32.xlu0 %v856, 120
  %v860 = vpop.permute.xlu0 %859
  %v862 = vadd.f32 %v857, %v860
  %v863 = vrcp.pop 36.0
  %v864 = vmul.f32 %v862, %v863
  %866 = vrot.lane.b32.xlu0 %v864, 8
  %v867 = vpop.permute.xlu0 %866
  %v869 = vsel %vm508, %v864, %v867
  %v870 = vlaneseq
  %v871 = vshrl.u32 %v870, 7
  %v872 = vsub.s32 0, %v871
  %v873 = vrot.slane %v869, %v872
  %v874 = vsub.f32 %v752, %v873
  %v875 = vsub.f32 %v755, %v873
  %v876 = vmul.f32 %v874, %v874
  %v877 = vmul.f32 %v875, %v875
  %v878 = vsel %vm94, %v876, 0.0
  %v879 = vsel %vm837, %v877, 0.0
  %v880 = vadd.f32 %v878, %v879
  %v881 = vrot.slane %v880, 4
  %v882 = vadd.f32 %v880, %v881
  %v883 = vrot.slane %v882, 2
  %v884 = vadd.f32 %v882, %v883
  %v885 = vrot.slane %v884, 1
  %v886 = vadd.f32 %v884, %v885
  %v887 = vadd.f32 %v886, 0.0
  %v888 = vsub.f32 %v830, %v873
  %v889 = vsub.f32 %v833, %v873
  %v890 = vmul.f32 %v888, %v888
  %v891 = vmul.f32 %v889, %v889
  %v892 = vsel %vm94, %v890, 0.0
  %v893 = vsel %vm837, %v891, 0.0
  %v894 = vadd.f32 %v892, %v893
  %v895 = vrot.slane %v894, 4
  %v896 = vadd.f32 %v894, %v895
  %v897 = vrot.slane %v896, 2
  %v898 = vadd.f32 %v896, %v897
  %v899 = vrot.slane %v898, 1
  %v900 = vadd.f32 %v898, %v899
  %v901 = vadd.f32 %v887, %v900
  %v902 = vadd.f32 %v901, 0.0
  %904 = vrot.lane.b32.xlu0 %v901, 120
  %v905 = vpop.permute.xlu0 %904
  %v907 = vadd.f32 %v902, %v905
  %v908 = vmul.f32 %v907, %v863
  %v909 = vadd.f32 %v908, 1e-05
  %v910 = vrsqrt.pop %v909
  %912 = vrot.lane.b32.xlu0 %v910, 8
  %v913 = vpop.permute.xlu0 %912
  %v915 = vsel %vm508, %v910, %v913
  %v916 = vlaneseq
  %v917 = vshrl.u32 %v916, 7
  %v918 = vsub.s32 0, %v917
  %v919 = vrot.slane %v915, %v918
  %v920 = vmul.f32 %v874, %v919
  %v921 = vmul.f32 %v875, %v919
  %v922 = vld [vmem:[%s18] sm:$0x1]
  %v924 = vlaneseq
  %v925 = vshrl.u32 %v924, 7
  %v926 = vsub.s32 0, %v925
  %v927 = vrot.slane %v922, %v926
  %v929 = vmul.f32 %v920, %v927
  %v930 = vmul.f32 %v921, %v927
  %v931 = vld [vmem:[%s19] sm:$0x1]
  %v933 = vlaneseq
  %v934 = vshrl.u32 %v933, 7
  %v935 = vsub.s32 0, %v934
  %v936 = vrot.slane %v931, %v935
  %v938 = vadd.f32 %v929, %v936
  %v939 = vadd.f32 %v930, %v936
  %v940 = vmax.f32 %v938, 0.0
  %v941 = vmax.f32 %v939, 0.0
  %v942 = vpack.c.bf16 %v941, %v940
  %v944 = vunpack.c.l.b16 %v942
  %v945 = vunpack.c.h.b16 %v942
  %v946 = vpack.c.b16 %v944, %v944
  %v947 = vpack.c.b16 %v945, %v945
  %vm950 = vcmask 125952
  %951 = vst.msk [vmem:[%s20] sm:$0xf] %vm950, %v946
  %vm952 = vcmask 122880
  %vm953 = vsmask.f32 256
  %vm954 = vmand %vm952, %vm953
  %v955 = vld [vmem:[%s20 + $0x4] sm:$0x1]
  %v956 = vsel %vm954, %v947, %v955
  %957 = vst [vmem:[%s20 + $0x4] sm:$0x1] %v956
  %v958 = vmul.f32 %v888, %v919
  %v959 = vmul.f32 %v889, %v919
  %v960 = vld [vmem:[%s18] sm:$0x1]
  %v962 = vlaneseq
  %v963 = vshrl.u32 %v962, 7
  %v964 = vsub.s32 0, %v963
  %v965 = vrot.slane %v960, %v964
  %v967 = vmul.f32 %v958, %v965
  %v968 = vmul.f32 %v959, %v965
  %v969 = vld [vmem:[%s19] sm:$0x1]
  %v971 = vlaneseq
  %v972 = vshrl.u32 %v971, 7
  %v973 = vsub.s32 0, %v972
  %v974 = vrot.slane %v969, %v973
  %v976 = vadd.f32 %v967, %v974
  %v977 = vadd.f32 %v968, %v974
  %v978 = vmax.f32 %v976, 0.0
  %v979 = vmax.f32 %v977, 0.0
  %v980 = vpack.c.bf16 %v979, %v978
  %v982 = vunpack.c.l.b16 %v980
  %v983 = vunpack.c.h.b16 %v980
  %v984 = vpack.c.b16 %v982, %v982
  %v985 = vpack.c.b16 %v983, %v983
  %s988 = scalar_lea.vmem %s20, 8
  %989 = vst.msk [vmem:[%s988] sm:$0xf] %vm950, %v984
  %v990 = vld [vmem:[%s988 + $0x4] sm:$0x1]
  %v991 = vsel %vm954, %v985, %v990
  %992 = vst [vmem:[%s988 + $0x4] sm:$0x1] %v991
  // Predicated region
  $region96: #{manner_block_fwd.12} parent=0 // pred_check
    _
  $region97: #{manner_block_fwd.12} parent=0 // pred_check_branch
    %994 = sbr.rel (0) target = $region99
  $region98: #{manner_block_fwd.12} parent=0 // pred_region
    _
  $region99: #{manner_block_fwd.12} parent=0 // pred_fallthru
    _
  // Predicated region
  $region100: #{manner_block_fwd.12} parent=0 // pred_check
    _
  $region101: #{manner_block_fwd.12} parent=0 // pred_check_branch
    %996 = sbr.rel (0) target = $region103
  $region102: #{manner_block_fwd.12} parent=0 // pred_region
    _
  $region103: #{manner_block_fwd.12} parent=0 // pred_fallthru
    _

</llo_original>
